<compile_context>
chip_gen: v7x
topology: tpu7x:2x2x1
jax: 0.10.0
libtpu: 0.0.40
codegen_flags: <defaults>
</compile_context>

<pallas_src>
import functools

import numpy as np

import jax
import jax.numpy as jnp
from jax import lax
from jax.experimental import pallas as pl
from jax.experimental.pallas import tpu as pltpu

_GUARD = 128  # zero guard lanes on each side of the flattened x1 halo strip


def _rbdp_main_kernel(C_in, C_out, TH, Wp, d,
                      x_ref, vmask_ref, w1_ref, b1_ref, wstk_ref, ybias_ref,
                      z_ref, stats_ref, x1h_ref, xsh_ref, p_ref):
    G = _GUARD
    Lh = (TH + 6 * d) * Wp            # halo window: TH rows + 3*d rows above/below
    Lc = TH * Wp                      # output tile (lane-dense, row stride Wp)
    r = pl.program_id(1)
    row0 = pl.multiple_of(r * Lc, 128)        # window start in the padded image

    # Zero the guards so flattened tap windows that run past either end of the
    # halo strip read exact zeros (never stale / NaN scratch contents).
    x1h_ref[:, :G] = jnp.zeros((C_out, G), jnp.bfloat16)
    x1h_ref[:, G + Lh:] = jnp.zeros((C_out, G), jnp.bfloat16)

    # 1x1 input conv over the halo rows: bf16 MXU, f32 accumulation.  The
    # valid-position mask zeroes every padded position (including the +b1), so
    # the dilated-conv taps below see proper zero padding everywhere.
    xh = x_ref[:, pl.ds(row0, Lh)]                              # (C_in, Lh) bf16
    mh = vmask_ref[:, pl.ds(row0, Lh)]                          # (1, Lh)   f32
    x1h = (jnp.dot(w1_ref[...], xh, preferred_element_type=jnp.float32)
           + b1_ref[...]) * mh                                  # (C_out, Lh) f32
    x1h_ref[:, G:G + Lh] = x1h.astype(jnp.bfloat16)

    # Stack the 49 dilated-conv taps + the identity (residual) tap along the
    # MXU contraction axis.  One lane-rotated copy per dx; the 7 dy windows of
    # each copy start at multiples of Wp (a multiple of 128) -> lane aligned.
    for j in range(-3, 4):
        xsh_ref[...] = x1h_ref[:, pl.ds(G + j * d, Lh)]
        for i in range(-3, 4):
            t = (i + 3) * 7 + (j + 3)
            p_ref[t * C_out:(t + 1) * C_out, :] = (
                xsh_ref[:, pl.ds((3 + i) * d * Wp, Lc)])
    p_ref[49 * C_out:50 * C_out, :] = x1h_ref[:, pl.ds(G + 3 * d * Wp, Lc)]

    # One deep matmul = 3 gated branch convs + final 1x1 conv + residual x1.
    y = jnp.dot(wstk_ref[...], p_ref[...],
                preferred_element_type=jnp.float32) + ybias_ref[...]
    z_ref[...] = y.astype(z_ref.dtype)

    # Masked per-channel sum / sum-of-squares for the training-mode batchnorm
    # (pad columns / pad rows contribute nothing).
    mc = vmask_ref[:, pl.ds(pl.multiple_of(row0 + 3 * d * Wp, 128), Lc)]
    yv = y * mc
    stats_ref[:, 0:1] = jnp.sum(yv, axis=1, keepdims=True)
    stats_ref[:, 1:2] = jnp.sum(yv * yv, axis=1, keepdims=True)
    stats_ref[:, 2:8] = jnp.zeros((C_out, 6), jnp.float32)


def _bn_apply_kernel(z_ref, scale_ref, shift_ref, o_ref):
    o_ref[...] = jnp.maximum(
        z_ref[...].astype(jnp.float32) * scale_ref[...] + shift_ref[...], 0.0)


def _pick_tile_rows(C_in, C_out, H, d, Wp, budget=36 * 1024 * 1024):
    """Largest row tile TH whose estimated per-step VMEM footprint fits budget."""
    def est(th):
        n_tiles = -(-H // th)
        hp2 = n_tiles * th + 6 * d
        lh = (th + 6 * d) * Wp
        lc = th * Wp
        b = 2 * C_in * hp2 * Wp * 2            # resident padded input (bf16), dbl buf
        b += 2 * hp2 * Wp * 4                  # valid-position mask (f32), dbl buf
        b += 2 * C_out * 50 * C_out * 2        # stacked per-batch weights (bf16)
        b += 2 * C_out * lc * 2                # z output block (bf16), dbl buf
        b += C_out * (lh + 2 * _GUARD) * 2     # x1 halo scratch (bf16)
        b += C_out * lh * 2                    # dx-shift scratch (bf16)
        b += 50 * C_out * lc * 2               # stacked tap buffer (bf16)
        b += C_out * lh * 4 + 3 * C_out * lc * 4   # f32 temporaries (x1, y, stats)
        return b
    th = 1
    for cand in range(1, H + 1):
        if est(cand) <= budget:
            th = cand
    return th, est(th)


def rbdp_forward(x, params, *, dirate=1):
    B, C_in, H, W = x.shape
    C_out = params["w1"].shape[0]
    d = int(dirate)
    assert 3 * d <= _GUARD, "dirate too large for the fixed halo guard"

    # padded row stride: lane aligned and >= W + 3*d so horizontal tap shifts
    # always land in zero columns (no per-tap masks, no wrap into valid data).
    Wp = pl.cdiv(W + 3 * d, 128) * 128
    TH, vmem_est = _pick_tile_rows(C_in, C_out, H, d, Wp)
    R = pl.cdiv(H, TH)
    Hv = R * TH                      # rows rounded up to the tile
    Hp2 = Hv + 6 * d                 # plus the vertical zero halo
    Lh = (TH + 6 * d) * Wp

    # ---------------- gate + weight folding (tiny, plain JAX) ----------------
    w1 = params["w1"].reshape(C_out, C_in).astype(jnp.float32)
    b1 = params["b1"].astype(jnp.float32)
    wf = params["wf"].reshape(C_out, 3 * C_out).astype(jnp.float32)
    wf3, wf5, wf7 = wf[:, :C_out], wf[:, C_out:2 * C_out], wf[:, 2 * C_out:]

    # GAP(conv1x1(x)) == w1 @ GAP(x) + b1 by linearity -> gate hoisted here.
    xmean = jnp.mean(x.astype(jnp.float32), axis=(2, 3))                 # (B, C_in)
    g = jnp.maximum(xmean @ w1.T + b1, 0.0)                              # (B, C_out)
    gate = jax.nn.softmax(
        g @ params["wl"].astype(jnp.float32).T
        + params["bl"].astype(jnp.float32), axis=1)                      # (B, 3)

    def fold(wf_blk, w_conv):        # final-1x1 folded into each conv tap
        K = w_conv.shape[-1]
        taps = jnp.transpose(w_conv.astype(jnp.float32), (2, 3, 0, 1))
        taps = taps.reshape(K * K, C_out, C_out)
        return jnp.einsum("oc,tcd->tod", wf_blk, taps)

    m3 = fold(wf3, params["w3"]).reshape(3, 3, C_out, C_out)
    m5 = fold(wf5, params["w5"]).reshape(5, 5, C_out, C_out)
    m7 = fold(wf7, params["w7"]).reshape(7, 7, C_out, C_out)
    m3e = jnp.zeros((7, 7, C_out, C_out), jnp.float32).at[2:5, 2:5].set(m3)
    m5e = jnp.zeros((7, 7, C_out, C_out), jnp.float32).at[1:6, 1:6].set(m5)

    # per-batch gate-combined tap weights + identity tap for the residual x1
    gb = gate.reshape(B, 3, 1, 1, 1, 1)
    weff = gb[:, 0] * m3e + gb[:, 1] * m5e + gb[:, 2] * m7               # (B,7,7,C,C)
    weff = weff.reshape(B, 49, C_out, C_out)
    ident = jnp.broadcast_to(jnp.eye(C_out, dtype=jnp.float32)[None, None],
                             (B, 1, C_out, C_out))
    wstk = jnp.concatenate([weff, ident], axis=1)                        # (B,50,C,C)
    wstk = jnp.transpose(wstk, (0, 2, 1, 3)).reshape(B, C_out, 50 * C_out)
    wstk = wstk.astype(jnp.bfloat16)

    # branch-conv biases folded through the final 1x1 + gate, plus its bias
    vb = jnp.stack([wf3 @ params["b3"].astype(jnp.float32),
                    wf5 @ params["b5"].astype(jnp.float32),
                    wf7 @ params["b7"].astype(jnp.float32)], axis=1)     # (C_out, 3)
    ybias = (gate @ vb.T + params["bf"].astype(jnp.float32)).reshape(B, C_out, 1)

    # ---------------- padded, lane-dense input + valid mask ----------------
    x_pad = jnp.zeros((B, C_in, Hp2, Wp), jnp.bfloat16)
    x_pad = x_pad.at[:, :, 3 * d:3 * d + H, :W].set(x.astype(jnp.bfloat16))
    x_pad = x_pad.reshape(B, C_in, Hp2 * Wp)

    vm = np.zeros((Hp2, Wp), np.float32)
    vm[3 * d:3 * d + H, :W] = 1.0
    vmask = jnp.asarray(vm.reshape(1, Hp2 * Wp))

    w1_bf = w1.astype(jnp.bfloat16)
    b1_2d = b1.reshape(C_out, 1)

    # ---------------- kernel 1: conv1x1 + gated dilated convs + fuse ----------------
    kernel1 = functools.partial(_rbdp_main_kernel, C_in, C_out, TH, Wp, d)
    vlim = int(min(max(vmem_est * 5 // 4, 32 * 1024 * 1024), 100 * 1024 * 1024))

    z, stats = pl.pallas_call(
        kernel1,
        out_shape=(
            jax.ShapeDtypeStruct((B, C_out, Hv * Wp), jnp.bfloat16),
            jax.ShapeDtypeStruct((B, R, C_out, 8), jnp.float32),
        ),
        grid=(B, R),
        in_specs=[
            pl.BlockSpec((None, C_in, Hp2 * Wp), lambda b, r: (b, 0, 0)),
            pl.BlockSpec((1, Hp2 * Wp), lambda b, r: (0, 0)),
            pl.BlockSpec((C_out, C_in), lambda b, r: (0, 0)),
            pl.BlockSpec((C_out, 1), lambda b, r: (0, 0)),
            pl.BlockSpec((None, C_out, 50 * C_out), lambda b, r: (b, 0, 0)),
            pl.BlockSpec((None, C_out, 1), lambda b, r: (b, 0, 0)),
        ],
        out_specs=(
            pl.BlockSpec((None, C_out, TH * Wp), lambda b, r: (b, 0, r)),
            pl.BlockSpec((None, None, C_out, 8), lambda b, r: (b, r, 0, 0)),
        ),
        scratch_shapes=[
            pltpu.VMEM((C_out, 2 * _GUARD + Lh), jnp.bfloat16),   # x1 halo strip
            pltpu.VMEM((C_out, Lh), jnp.bfloat16),                # dx-shifted copy
            pltpu.VMEM((50 * C_out, TH * Wp), jnp.bfloat16),      # stacked taps
        ],
        compiler_params=pltpu.CompilerParams(
            dimension_semantics=("parallel", "parallel"),
            vmem_limit_bytes=vlim),
    )(x_pad, vmask, w1_bf, b1_2d, wstk, ybias)

    # ---------------- BN statistics: tiny reduction in plain JAX ----------------
    n = float(B * H * W)
    s1 = jnp.sum(stats[..., 0], axis=(0, 1))
    s2 = jnp.sum(stats[..., 1], axis=(0, 1))
    mean = s1 / n
    var = jnp.maximum(s2 / n - mean * mean, 0.0)      # biased (training-mode BN)
    inv = lax.rsqrt(var + 1e-5)
    gamma = params["bn_gamma"].astype(jnp.float32)
    beta = params["bn_beta"].astype(jnp.float32)
    scale = (gamma * inv).reshape(C_out, 1)
    shift = (beta - gamma * mean * inv).reshape(C_out, 1)

    # ---------------- kernel 2: normalize + affine + ReLU ----------------
    out_pad = pl.pallas_call(
        _bn_apply_kernel,
        out_shape=jax.ShapeDtypeStruct((B, C_out, Hv * Wp), jnp.float32),
        grid=(B, R),
        in_specs=[
            pl.BlockSpec((None, C_out, TH * Wp), lambda b, r: (b, 0, r)),
            pl.BlockSpec((C_out, 1), lambda b, r: (0, 0)),
            pl.BlockSpec((C_out, 1), lambda b, r: (0, 0)),
        ],
        out_specs=pl.BlockSpec((None, C_out, TH * Wp), lambda b, r: (b, 0, r)),
        compiler_params=pltpu.CompilerParams(
            dimension_semantics=("parallel", "parallel")),
    )(z, scale, shift)

    # extract the valid rows / columns once at the end (cheap XLA slice)
    return out_pad.reshape(B, C_out, Hv, Wp)[:, :, :H, :W]


def init_params(key, in_ch, out_ch):
    ks = jax.random.split(key, 12)

    def nrm(k, shape, scale=0.1):
        return scale * jax.random.normal(k, shape, jnp.float32)

    return {
        "w1": nrm(ks[0], (out_ch, in_ch, 1, 1)),
        "b1": nrm(ks[1], (out_ch,)),
        "wl": nrm(ks[2], (3, out_ch)),
        "bl": nrm(ks[3], (3,)),
        "w3": nrm(ks[4], (out_ch, out_ch, 3, 3)),
        "b3": nrm(ks[5], (out_ch,)),
        "w5": nrm(ks[6], (out_ch, out_ch, 5, 5)),
        "b5": nrm(ks[7], (out_ch,)),
        "w7": nrm(ks[8], (out_ch, out_ch, 7, 7)),
        "b7": nrm(ks[9], (out_ch,)),
        "wf": nrm(ks[10], (out_ch, 3 * out_ch, 1, 1)),
        "bf": nrm(ks[11], (out_ch,)),
        "bn_gamma": jnp.ones((out_ch,), jnp.float32),
        "bn_beta": jnp.zeros((out_ch,), jnp.float32),
    }


def ref_forward(x, params, *, dirate=1):
    """Pure-JAX f32 reference (lax.conv) for numerical sanity check."""
    dn = ("NCHW", "OIHW", "NCHW")

    def conv(x, w, b, pad, dil):
        y = lax.conv_general_dilated(x, w, (1, 1), [(pad, pad), (pad, pad)],
                                     rhs_dilation=(dil, dil),
                                     dimension_numbers=dn)
        return y + b.reshape(1, -1, 1, 1)

    x1 = conv(x, params["w1"], params["b1"], 0, 1)
    g = jnp.maximum(jnp.mean(x1, axis=(2, 3)), 0.0)
    gate = jax.nn.softmax(g @ params["wl"].T + params["bl"], axis=1)
    o1 = conv(x1, params["w3"], params["b3"], 1 * dirate, dirate) * gate[:, 0].reshape(-1, 1, 1, 1)
    o2 = conv(x1, params["w5"], params["b5"], 2 * dirate, dirate) * gate[:, 1].reshape(-1, 1, 1, 1)
    o3 = conv(x1, params["w7"], params["b7"], 3 * dirate, dirate) * gate[:, 2].reshape(-1, 1, 1, 1)
    fuse = jnp.concatenate([o1, o2, o3], axis=1)
    y = conv(fuse, params["wf"], params["bf"], 0, 1)
    z = y + x1
    mean = jnp.mean(z, axis=(0, 2, 3), keepdims=True)
    var = jnp.mean((z - mean) ** 2, axis=(0, 2, 3), keepdims=True)
    zn = (z - mean) * lax.rsqrt(var + 1e-5)
    zn = zn * params["bn_gamma"].reshape(1, -1, 1, 1) + params["bn_beta"].reshape(1, -1, 1, 1)
    return jnp.maximum(zn, 0.0)


if __name__ == "__main__":
    B, IN_CH, OUT_CH, H, W = 2, 3, 4, 16, 16
    key = jax.random.PRNGKey(0)
    kx, kp = jax.random.split(key)
    x = jax.random.normal(kx, (B, IN_CH, H, W), jnp.float32)
    params = init_params(kp, IN_CH, OUT_CH)

    fwd = jax.jit(functools.partial(rbdp_forward, dirate=1))
    out = jax.block_until_ready(fwd(x, params))
    assert out.shape == (B, OUT_CH, H, W)

    ref = ref_forward(x, params)
    err = float(jnp.max(jnp.abs(out - ref)))
    # bf16 MXU operands + bf16 x / z intermediates vs the all-f32 reference.
    assert err < 4e-2, f"mismatch vs reference: {err}"
    print("KERNEL_OK")
</pallas_src>

<mosaic_0001>
module attributes {stable_mosaic.version = 11 : i64} {
  func.func @_rbdp_main_kernel(%arg0: i32, %arg1: i32, %arg2: memref<1x3x2816xbf16, #tpu.memory_space<vmem>>, %arg3: memref<1x2816xf32, #tpu.memory_space<vmem>>, %arg4: memref<4x3xbf16, #tpu.memory_space<vmem>>, %arg5: memref<4x1xf32, #tpu.memory_space<vmem>>, %arg6: memref<1x4x200xbf16, #tpu.memory_space<vmem>>, %arg7: memref<1x4x1xf32, #tpu.memory_space<vmem>>, %arg8: memref<1x4x2048xbf16, #tpu.memory_space<vmem>>, %arg9: memref<1x1x4x8xf32, #tpu.memory_space<vmem>>, %arg10: memref<4x3072xbf16, #tpu.memory_space<vmem>>, %arg11: memref<4x2816xbf16, #tpu.memory_space<vmem>>, %arg12: memref<200x2048xbf16, #tpu.memory_space<vmem>>) attributes {dimension_semantics = [#tpu.dimension_semantics<parallel>, #tpu.dimension_semantics<parallel>], iteration_bounds = array<i64: 2, 1>, scalar_prefetch = 0 : i64, scratch_operands = 3 : i64, tpu.core_type = #tpu.core_type<tc>, window_params = [{transform_indices = @transform_0, window_bounds = array<i64: 1, 3, 2816>}, {pipeline_mode = #tpu.pipeline_mode<synchronous>, transform_indices = @transform_1, window_bounds = array<i64: 1, 2816>}, {pipeline_mode = #tpu.pipeline_mode<synchronous>, transform_indices = @transform_2, window_bounds = array<i64: 4, 3>}, {pipeline_mode = #tpu.pipeline_mode<synchronous>, transform_indices = @transform_3, window_bounds = array<i64: 4, 1>}, {transform_indices = @transform_4, window_bounds = array<i64: 1, 4, 200>}, {transform_indices = @transform_5, window_bounds = array<i64: 1, 4, 1>}, {transform_indices = @transform_6, window_bounds = array<i64: 1, 4, 2048>}, {transform_indices = @transform_7, window_bounds = array<i64: 1, 1, 4, 8>}]} {
    %c2048_i32 = arith.constant 2048 : i32
    %0 = arith.muli %arg1, %c2048_i32 : i32
    %1 = tpu.assume_multiple %0, 128 : i32
    %cst = arith.constant 0.000000e+00 : bf16
    %2 = vector.broadcast %cst : bf16 to vector<4x128xbf16>
    %c0 = arith.constant 0 : index
    %c0_0 = arith.constant 0 : index
    %3 = vector.load %arg10[%c0, %c0_0] : memref<4x3072xbf16, #tpu.memory_space<vmem>>, vector<4x128xbf16>
    tpu.vector_store %arg10[%c0, %c0_0], %2 {strides = array<i32>} : memref<4x3072xbf16, #tpu.memory_space<vmem>>, vector<4x128xbf16>,
    %cst_1 = arith.constant 0.000000e+00 : bf16
    %4 = vector.broadcast %cst_1 : bf16 to vector<4x128xbf16>
    %c0_2 = arith.constant 0 : index
    %c2944 = arith.constant 2944 : index
    %5 = vector.load %arg10[%c0_2, %c2944] : memref<4x3072xbf16, #tpu.memory_space<vmem>>, vector<4x128xbf16>
    tpu.vector_store %arg10[%c0_2, %c2944], %4 {strides = array<i32>} : memref<4x3072xbf16, #tpu.memory_space<vmem>>, vector<4x128xbf16>,
    %c0_3 = arith.constant 0 : index
    %c0_4 = arith.constant 0 : index
    %6 = arith.index_cast %1 : i32 to index
    %7 = vector.load %arg2[%c0_3, %c0_4, %6] : memref<1x3x2816xbf16, #tpu.memory_space<vmem>>, vector<1x3x2816xbf16>
    %8 = vector.shape_cast %7 : vector<1x3x2816xbf16> to vector<3x2816xbf16>
    %c0_5 = arith.constant 0 : index
    %9 = arith.index_cast %1 : i32 to index
    %10 = vector.load %arg3[%c0_5, %9] : memref<1x2816xf32, #tpu.memory_space<vmem>>, vector<1x2816xf32>
    %c0_6 = arith.constant 0 : index
    %c0_7 = arith.constant 0 : index
    %11 = vector.load %arg4[%c0_6, %c0_7] : memref<4x3xbf16, #tpu.memory_space<vmem>>, vector<4x3xbf16>
    %cst_8 = arith.constant dense<0.000000e+00> : vector<4x2816xf32>
    %12 = tpu.matmul %11, %8, %cst_8 {dimension_numbers = #tpu.dot_dimension_numbers<[1], [0], [0], [1], [0, 0, 1, 1], [], []>} : vector<4x3xbf16>, vector<3x2816xbf16>, vector<4x2816xf32> -> vector<4x2816xf32>
    %c0_9 = arith.constant 0 : index
    %c0_10 = arith.constant 0 : index
    %13 = vector.load %arg5[%c0_9, %c0_10] : memref<4x1xf32, #tpu.memory_space<vmem>>, vector<4x1xf32>
    %14 = vector.broadcast %13 : vector<4x1xf32> to vector<4x2816xf32>
    %15 = arith.addf %12, %14 : vector<4x2816xf32>
    %16 = vector.broadcast %10 : vector<1x2816xf32> to vector<4x2816xf32>
    %17 = arith.mulf %15, %16 : vector<4x2816xf32>
    %18 = arith.truncf %17 : vector<4x2816xf32> to vector<4x2816xbf16>
    %c0_11 = arith.constant 0 : index
    %c128 = arith.constant 128 : index
    %19 = vector.load %arg10[%c0_11, %c128] : memref<4x3072xbf16, #tpu.memory_space<vmem>>, vector<4x2816xbf16>
    tpu.vector_store %arg10[%c0_11, %c128], %18 {strides = array<i32>} : memref<4x3072xbf16, #tpu.memory_space<vmem>>, vector<4x2816xbf16>,
    %c0_12 = arith.constant 0 : index
    %c125 = arith.constant 125 : index
    %20 = vector.load %arg10[%c0_12, %c125] : memref<4x3072xbf16, #tpu.memory_space<vmem>>, vector<4x2816xbf16>
    %c0_13 = arith.constant 0 : index
    %c0_14 = arith.constant 0 : index
    %21 = vector.load %arg11[%c0_13, %c0_14] : memref<4x2816xbf16, #tpu.memory_space<vmem>>, vector<4x2816xbf16>
    tpu.vector_store %arg11[%c0_13, %c0_14], %20 {strides = array<i32>} : memref<4x2816xbf16, #tpu.memory_space<vmem>>, vector<4x2816xbf16>,
    %c0_15 = arith.constant 0 : index
    %c0_16 = arith.constant 0 : index
    %22 = vector.load %arg11[%c0_15, %c0_16] : memref<4x2816xbf16, #tpu.memory_space<vmem>>, vector<4x2048xbf16>
    %c0_17 = arith.constant 0 : index
    %c0_18 = arith.constant 0 : index
    %23 = vector.load %arg12[%c0_17, %c0_18] : memref<200x2048xbf16, #tpu.memory_space<vmem>>, vector<4x2048xbf16>
    tpu.vector_store %arg12[%c0_17, %c0_18], %22 {strides = array<i32>} : memref<200x2048xbf16, #tpu.memory_space<vmem>>, vector<4x2048xbf16>,
    %c0_19 = arith.constant 0 : index
    %c128_20 = arith.constant 128 : index
    %24 = vector.load %arg11[%c0_19, %c128_20] : memref<4x2816xbf16, #tpu.memory_space<vmem>>, vector<4x2048xbf16>
    %c28 = arith.constant 28 : index
    %c0_21 = arith.constant 0 : index
    %25 = vector.load %arg12[%c28, %c0_21] : memref<200x2048xbf16, #tpu.memory_space<vmem>>, vector<4x2048xbf16>
    tpu.vector_store %arg12[%c28, %c0_21], %24 {strides = array<i32>} : memref<200x2048xbf16, #tpu.memory_space<vmem>>, vector<4x2048xbf16>,
    %c0_22 = arith.constant 0 : index
    %c256 = arith.constant 256 : index
    %26 = vector.load %arg11[%c0_22, %c256] : memref<4x2816xbf16, #tpu.memory_space<vmem>>, vector<4x2048xbf16>
    %c56 = arith.constant 56 : index
    %c0_23 = arith.constant 0 : index
    %27 = vector.load %arg12[%c56, %c0_23] : memref<200x2048xbf16, #tpu.memory_space<vmem>>, vector<4x2048xbf16>
    tpu.vector_store %arg12[%c56, %c0_23], %26 {strides = array<i32>} : memref<200x2048xbf16, #tpu.memory_space<vmem>>, vector<4x2048xbf16>,
    %c0_24 = arith.constant 0 : index
    %c384 = arith.constant 384 : index
    %28 = vector.load %arg11[%c0_24, %c384] : memref<4x2816xbf16, #tpu.memory_space<vmem>>, vector<4x2048xbf16>
    %c84 = arith.constant 84 : index
    %c0_25 = arith.constant 0 : index
    %29 = vector.load %arg12[%c84, %c0_25] : memref<200x2048xbf16, #tpu.memory_space<vmem>>, vector<4x2048xbf16>
    tpu.vector_store %arg12[%c84, %c0_25], %28 {strides = array<i32>} : memref<200x2048xbf16, #tpu.memory_space<vmem>>, vector<4x2048xbf16>,
    %c0_26 = arith.constant 0 : index
    %c512 = arith.constant 512 : index
    %30 = vector.load %arg11[%c0_26, %c512] : memref<4x2816xbf16, #tpu.memory_space<vmem>>, vector<4x2048xbf16>
    %c112 = arith.constant 112 : index
    %c0_27 = arith.constant 0 : index
    %31 = vector.load %arg12[%c112, %c0_27] : memref<200x2048xbf16, #tpu.memory_space<vmem>>, vector<4x2048xbf16>
    tpu.vector_store %arg12[%c112, %c0_27], %30 {strides = array<i32>} : memref<200x2048xbf16, #tpu.memory_space<vmem>>, vector<4x2048xbf16>,
    %c0_28 = arith.constant 0 : index
    %c640 = arith.constant 640 : index
    %32 = vector.load %arg11[%c0_28, %c640] : memref<4x2816xbf16, #tpu.memory_space<vmem>>, vector<4x2048xbf16>
    %c140 = arith.constant 140 : index
    %c0_29 = arith.constant 0 : index
    %33 = vector.load %arg12[%c140, %c0_29] : memref<200x2048xbf16, #tpu.memory_space<vmem>>, vector<4x2048xbf16>
    tpu.vector_store %arg12[%c140, %c0_29], %32 {strides = array<i32>} : memref<200x2048xbf16, #tpu.memory_space<vmem>>, vector<4x2048xbf16>,
    %c0_30 = arith.constant 0 : index
    %c768 = arith.constant 768 : index
    %34 = vector.load %arg11[%c0_30, %c768] : memref<4x2816xbf16, #tpu.memory_space<vmem>>, vector<4x2048xbf16>
    %c168 = arith.constant 168 : index
    %c0_31 = arith.constant 0 : index
    %35 = vector.load %arg12[%c168, %c0_31] : memref<200x2048xbf16, #tpu.memory_space<vmem>>, vector<4x2048xbf16>
    tpu.vector_store %arg12[%c168, %c0_31], %34 {strides = array<i32>} : memref<200x2048xbf16, #tpu.memory_space<vmem>>, vector<4x2048xbf16>,
    %c0_32 = arith.constant 0 : index
    %c126 = arith.constant 126 : index
    %36 = vector.load %arg10[%c0_32, %c126] : memref<4x3072xbf16, #tpu.memory_space<vmem>>, vector<4x2816xbf16>
    %c0_33 = arith.constant 0 : index
    %c0_34 = arith.constant 0 : index
    %37 = vector.load %arg11[%c0_33, %c0_34] : memref<4x2816xbf16, #tpu.memory_space<vmem>>, vector<4x2816xbf16>
    tpu.vector_store %arg11[%c0_33, %c0_34], %36 {strides = array<i32>} : memref<4x2816xbf16, #tpu.memory_space<vmem>>, vector<4x2816xbf16>,
    %c0_35 = arith.constant 0 : index
    %c0_36 = arith.constant 0 : index
    %38 = vector.load %arg11[%c0_35, %c0_36] : memref<4x2816xbf16, #tpu.memory_space<vmem>>, vector<4x2048xbf16>
    %c4 = arith.constant 4 : index
    %c0_37 = arith.constant 0 : index
    %39 = vector.load %arg12[%c4, %c0_37] : memref<200x2048xbf16, #tpu.memory_space<vmem>>, vector<4x2048xbf16>
    tpu.vector_store %arg12[%c4, %c0_37], %38 {strides = array<i32>} : memref<200x2048xbf16, #tpu.memory_space<vmem>>, vector<4x2048xbf16>,
    %c0_38 = arith.constant 0 : index
    %c128_39 = arith.constant 128 : index
    %40 = vector.load %arg11[%c0_38, %c128_39] : memref<4x2816xbf16, #tpu.memory_space<vmem>>, vector<4x2048xbf16>
    %c32 = arith.constant 32 : index
    %c0_40 = arith.constant 0 : index
    %41 = vector.load %arg12[%c32, %c0_40] : memref<200x2048xbf16, #tpu.memory_space<vmem>>, vector<4x2048xbf16>
    tpu.vector_store %arg12[%c32, %c0_40], %40 {strides = array<i32>} : memref<200x2048xbf16, #tpu.memory_space<vmem>>, vector<4x2048xbf16>,
    %c0_41 = arith.constant 0 : index
    %c256_42 = arith.constant 256 : index
    %42 = vector.load %arg11[%c0_41, %c256_42] : memref<4x2816xbf16, #tpu.memory_space<vmem>>, vector<4x2048xbf16>
    %c60 = arith.constant 60 : index
    %c0_43 = arith.constant 0 : index
    %43 = vector.load %arg12[%c60, %c0_43] : memref<200x2048xbf16, #tpu.memory_space<vmem>>, vector<4x2048xbf16>
    tpu.vector_store %arg12[%c60, %c0_43], %42 {strides = array<i32>} : memref<200x2048xbf16, #tpu.memory_space<vmem>>, vector<4x2048xbf16>,
    %c0_44 = arith.constant 0 : index
    %c384_45 = arith.constant 384 : index
    %44 = vector.load %arg11[%c0_44, %c384_45] : memref<4x2816xbf16, #tpu.memory_space<vmem>>, vector<4x2048xbf16>
    %c88 = arith.constant 88 : index
    %c0_46 = arith.constant 0 : index
    %45 = vector.load %arg12[%c88, %c0_46] : memref<200x2048xbf16, #tpu.memory_space<vmem>>, vector<4x2048xbf16>
    tpu.vector_store %arg12[%c88, %c0_46], %44 {strides = array<i32>} : memref<200x2048xbf16, #tpu.memory_space<vmem>>, vector<4x2048xbf16>,
    %c0_47 = arith.constant 0 : index
    %c512_48 = arith.constant 512 : index
    %46 = vector.load %arg11[%c0_47, %c512_48] : memref<4x2816xbf16, #tpu.memory_space<vmem>>, vector<4x2048xbf16>
    %c116 = arith.constant 116 : index
    %c0_49 = arith.constant 0 : index
    %47 = vector.load %arg12[%c116, %c0_49] : memref<200x2048xbf16, #tpu.memory_space<vmem>>, vector<4x2048xbf16>
    tpu.vector_store %arg12[%c116, %c0_49], %46 {strides = array<i32>} : memref<200x2048xbf16, #tpu.memory_space<vmem>>, vector<4x2048xbf16>,
    %c0_50 = arith.constant 0 : index
    %c640_51 = arith.constant 640 : index
    %48 = vector.load %arg11[%c0_50, %c640_51] : memref<4x2816xbf16, #tpu.memory_space<vmem>>, vector<4x2048xbf16>
    %c144 = arith.constant 144 : index
    %c0_52 = arith.constant 0 : index
    %49 = vector.load %arg12[%c144, %c0_52] : memref<200x2048xbf16, #tpu.memory_space<vmem>>, vector<4x2048xbf16>
    tpu.vector_store %arg12[%c144, %c0_52], %48 {strides = array<i32>} : memref<200x2048xbf16, #tpu.memory_space<vmem>>, vector<4x2048xbf16>,
    %c0_53 = arith.constant 0 : index
    %c768_54 = arith.constant 768 : index
    %50 = vector.load %arg11[%c0_53, %c768_54] : memref<4x2816xbf16, #tpu.memory_space<vmem>>, vector<4x2048xbf16>
    %c172 = arith.constant 172 : index
    %c0_55 = arith.constant 0 : index
    %51 = vector.load %arg12[%c172, %c0_55] : memref<200x2048xbf16, #tpu.memory_space<vmem>>, vector<4x2048xbf16>
    tpu.vector_store %arg12[%c172, %c0_55], %50 {strides = array<i32>} : memref<200x2048xbf16, #tpu.memory_space<vmem>>, vector<4x2048xbf16>,
    %c0_56 = arith.constant 0 : index
    %c127 = arith.constant 127 : index
    %52 = vector.load %arg10[%c0_56, %c127] : memref<4x3072xbf16, #tpu.memory_space<vmem>>, vector<4x2816xbf16>
    %c0_57 = arith.constant 0 : index
    %c0_58 = arith.constant 0 : index
    %53 = vector.load %arg11[%c0_57, %c0_58] : memref<4x2816xbf16, #tpu.memory_space<vmem>>, vector<4x2816xbf16>
    tpu.vector_store %arg11[%c0_57, %c0_58], %52 {strides = array<i32>} : memref<4x2816xbf16, #tpu.memory_space<vmem>>, vector<4x2816xbf16>,
    %c0_59 = arith.constant 0 : index
    %c0_60 = arith.constant 0 : index
    %54 = vector.load %arg11[%c0_59, %c0_60] : memref<4x2816xbf16, #tpu.memory_space<vmem>>, vector<4x2048xbf16>
    %c8 = arith.constant 8 : index
    %c0_61 = arith.constant 0 : index
    %55 = vector.load %arg12[%c8, %c0_61] : memref<200x2048xbf16, #tpu.memory_space<vmem>>, vector<4x2048xbf16>
    tpu.vector_store %arg12[%c8, %c0_61], %54 {strides = array<i32>} : memref<200x2048xbf16, #tpu.memory_space<vmem>>, vector<4x2048xbf16>,
    %c0_62 = arith.constant 0 : index
    %c128_63 = arith.constant 128 : index
    %56 = vector.load %arg11[%c0_62, %c128_63] : memref<4x2816xbf16, #tpu.memory_space<vmem>>, vector<4x2048xbf16>
    %c36 = arith.constant 36 : index
    %c0_64 = arith.constant 0 : index
    %57 = vector.load %arg12[%c36, %c0_64] : memref<200x2048xbf16, #tpu.memory_space<vmem>>, vector<4x2048xbf16>
    tpu.vector_store %arg12[%c36, %c0_64], %56 {strides = array<i32>} : memref<200x2048xbf16, #tpu.memory_space<vmem>>, vector<4x2048xbf16>,
    %c0_65 = arith.constant 0 : index
    %c256_66 = arith.constant 256 : index
    %58 = vector.load %arg11[%c0_65, %c256_66] : memref<4x2816xbf16, #tpu.memory_space<vmem>>, vector<4x2048xbf16>
    %c64 = arith.constant 64 : index
    %c0_67 = arith.constant 0 : index
    %59 = vector.load %arg12[%c64, %c0_67] : memref<200x2048xbf16, #tpu.memory_space<vmem>>, vector<4x2048xbf16>
    tpu.vector_store %arg12[%c64, %c0_67], %58 {strides = array<i32>} : memref<200x2048xbf16, #tpu.memory_space<vmem>>, vector<4x2048xbf16>,
    %c0_68 = arith.constant 0 : index
    %c384_69 = arith.constant 384 : index
    %60 = vector.load %arg11[%c0_68, %c384_69] : memref<4x2816xbf16, #tpu.memory_space<vmem>>, vector<4x2048xbf16>
    %c92 = arith.constant 92 : index
    %c0_70 = arith.constant 0 : index
    %61 = vector.load %arg12[%c92, %c0_70] : memref<200x2048xbf16, #tpu.memory_space<vmem>>, vector<4x2048xbf16>
    tpu.vector_store %arg12[%c92, %c0_70], %60 {strides = array<i32>} : memref<200x2048xbf16, #tpu.memory_space<vmem>>, vector<4x2048xbf16>,
    %c0_71 = arith.constant 0 : index
    %c512_72 = arith.constant 512 : index
    %62 = vector.load %arg11[%c0_71, %c512_72] : memref<4x2816xbf16, #tpu.memory_space<vmem>>, vector<4x2048xbf16>
    %c120 = arith.constant 120 : index
    %c0_73 = arith.constant 0 : index
    %63 = vector.load %arg12[%c120, %c0_73] : memref<200x2048xbf16, #tpu.memory_space<vmem>>, vector<4x2048xbf16>
    tpu.vector_store %arg12[%c120, %c0_73], %62 {strides = array<i32>} : memref<200x2048xbf16, #tpu.memory_space<vmem>>, vector<4x2048xbf16>,
    %c0_74 = arith.constant 0 : index
    %c640_75 = arith.constant 640 : index
    %64 = vector.load %arg11[%c0_74, %c640_75] : memref<4x2816xbf16, #tpu.memory_space<vmem>>, vector<4x2048xbf16>
    %c148 = arith.constant 148 : index
    %c0_76 = arith.constant 0 : index
    %65 = vector.load %arg12[%c148, %c0_76] : memref<200x2048xbf16, #tpu.memory_space<vmem>>, vector<4x2048xbf16>
    tpu.vector_store %arg12[%c148, %c0_76], %64 {strides = array<i32>} : memref<200x2048xbf16, #tpu.memory_space<vmem>>, vector<4x2048xbf16>,
    %c0_77 = arith.constant 0 : index
    %c768_78 = arith.constant 768 : index
    %66 = vector.load %arg11[%c0_77, %c768_78] : memref<4x2816xbf16, #tpu.memory_space<vmem>>, vector<4x2048xbf16>
    %c176 = arith.constant 176 : index
    %c0_79 = arith.constant 0 : index
    %67 = vector.load %arg12[%c176, %c0_79] : memref<200x2048xbf16, #tpu.memory_space<vmem>>, vector<4x2048xbf16>
    tpu.vector_store %arg12[%c176, %c0_79], %66 {strides = array<i32>} : memref<200x2048xbf16, #tpu.memory_space<vmem>>, vector<4x2048xbf16>,
    %c0_80 = arith.constant 0 : index
    %c128_81 = arith.constant 128 : index
    %68 = vector.load %arg10[%c0_80, %c128_81] : memref<4x3072xbf16, #tpu.memory_space<vmem>>, vector<4x2816xbf16>
    %c0_82 = arith.constant 0 : index
    %c0_83 = arith.constant 0 : index
    %69 = vector.load %arg11[%c0_82, %c0_83] : memref<4x2816xbf16, #tpu.memory_space<vmem>>, vector<4x2816xbf16>
    tpu.vector_store %arg11[%c0_82, %c0_83], %68 {strides = array<i32>} : memref<4x2816xbf16, #tpu.memory_space<vmem>>, vector<4x2816xbf16>,
    %c0_84 = arith.constant 0 : index
    %c0_85 = arith.constant 0 : index
    %70 = vector.load %arg11[%c0_84, %c0_85] : memref<4x2816xbf16, #tpu.memory_space<vmem>>, vector<4x2048xbf16>
    %c12 = arith.constant 12 : index
    %c0_86 = arith.constant 0 : index
    %71 = vector.load %arg12[%c12, %c0_86] : memref<200x2048xbf16, #tpu.memory_space<vmem>>, vector<4x2048xbf16>
    tpu.vector_store %arg12[%c12, %c0_86], %70 {strides = array<i32>} : memref<200x2048xbf16, #tpu.memory_space<vmem>>, vector<4x2048xbf16>,
    %c0_87 = arith.constant 0 : index
    %c128_88 = arith.constant 128 : index
    %72 = vector.load %arg11[%c0_87, %c128_88] : memref<4x2816xbf16, #tpu.memory_space<vmem>>, vector<4x2048xbf16>
    %c40 = arith.constant 40 : index
    %c0_89 = arith.constant 0 : index
    %73 = vector.load %arg12[%c40, %c0_89] : memref<200x2048xbf16, #tpu.memory_space<vmem>>, vector<4x2048xbf16>
    tpu.vector_store %arg12[%c40, %c0_89], %72 {strides = array<i32>} : memref<200x2048xbf16, #tpu.memory_space<vmem>>, vector<4x2048xbf16>,
    %c0_90 = arith.constant 0 : index
    %c256_91 = arith.constant 256 : index
    %74 = vector.load %arg11[%c0_90, %c256_91] : memref<4x2816xbf16, #tpu.memory_space<vmem>>, vector<4x2048xbf16>
    %c68 = arith.constant 68 : index
    %c0_92 = arith.constant 0 : index
    %75 = vector.load %arg12[%c68, %c0_92] : memref<200x2048xbf16, #tpu.memory_space<vmem>>, vector<4x2048xbf16>
    tpu.vector_store %arg12[%c68, %c0_92], %74 {strides = array<i32>} : memref<200x2048xbf16, #tpu.memory_space<vmem>>, vector<4x2048xbf16>,
    %c0_93 = arith.constant 0 : index
    %c384_94 = arith.constant 384 : index
    %76 = vector.load %arg11[%c0_93, %c384_94] : memref<4x2816xbf16, #tpu.memory_space<vmem>>, vector<4x2048xbf16>
    %c96 = arith.constant 96 : index
    %c0_95 = arith.constant 0 : index
    %77 = vector.load %arg12[%c96, %c0_95] : memref<200x2048xbf16, #tpu.memory_space<vmem>>, vector<4x2048xbf16>
    tpu.vector_store %arg12[%c96, %c0_95], %76 {strides = array<i32>} : memref<200x2048xbf16, #tpu.memory_space<vmem>>, vector<4x2048xbf16>,
    %c0_96 = arith.constant 0 : index
    %c512_97 = arith.constant 512 : index
    %78 = vector.load %arg11[%c0_96, %c512_97] : memref<4x2816xbf16, #tpu.memory_space<vmem>>, vector<4x2048xbf16>
    %c124 = arith.constant 124 : index
    %c0_98 = arith.constant 0 : index
    %79 = vector.load %arg12[%c124, %c0_98] : memref<200x2048xbf16, #tpu.memory_space<vmem>>, vector<4x2048xbf16>
    tpu.vector_store %arg12[%c124, %c0_98], %78 {strides = array<i32>} : memref<200x2048xbf16, #tpu.memory_space<vmem>>, vector<4x2048xbf16>,
    %c0_99 = arith.constant 0 : index
    %c640_100 = arith.constant 640 : index
    %80 = vector.load %arg11[%c0_99, %c640_100] : memref<4x2816xbf16, #tpu.memory_space<vmem>>, vector<4x2048xbf16>
    %c152 = arith.constant 152 : index
    %c0_101 = arith.constant 0 : index
    %81 = vector.load %arg12[%c152, %c0_101] : memref<200x2048xbf16, #tpu.memory_space<vmem>>, vector<4x2048xbf16>
    tpu.vector_store %arg12[%c152, %c0_101], %80 {strides = array<i32>} : memref<200x2048xbf16, #tpu.memory_space<vmem>>, vector<4x2048xbf16>,
    %c0_102 = arith.constant 0 : index
    %c768_103 = arith.constant 768 : index
    %82 = vector.load %arg11[%c0_102, %c768_103] : memref<4x2816xbf16, #tpu.memory_space<vmem>>, vector<4x2048xbf16>
    %c180 = arith.constant 180 : index
    %c0_104 = arith.constant 0 : index
    %83 = vector.load %arg12[%c180, %c0_104] : memref<200x2048xbf16, #tpu.memory_space<vmem>>, vector<4x2048xbf16>
    tpu.vector_store %arg12[%c180, %c0_104], %82 {strides = array<i32>} : memref<200x2048xbf16, #tpu.memory_space<vmem>>, vector<4x2048xbf16>,
    %c0_105 = arith.constant 0 : index
    %c129 = arith.constant 129 : index
    %84 = vector.load %arg10[%c0_105, %c129] : memref<4x3072xbf16, #tpu.memory_space<vmem>>, vector<4x2816xbf16>
    %c0_106 = arith.constant 0 : index
    %c0_107 = arith.constant 0 : index
    %85 = vector.load %arg11[%c0_106, %c0_107] : memref<4x2816xbf16, #tpu.memory_space<vmem>>, vector<4x2816xbf16>
    tpu.vector_store %arg11[%c0_106, %c0_107], %84 {strides = array<i32>} : memref<4x2816xbf16, #tpu.memory_space<vmem>>, vector<4x2816xbf16>,
    %c0_108 = arith.constant 0 : index
    %c0_109 = arith.constant 0 : index
    %86 = vector.load %arg11[%c0_108, %c0_109] : memref<4x2816xbf16, #tpu.memory_space<vmem>>, vector<4x2048xbf16>
    %c16 = arith.constant 16 : index
    %c0_110 = arith.constant 0 : index
    %87 = vector.load %arg12[%c16, %c0_110] : memref<200x2048xbf16, #tpu.memory_space<vmem>>, vector<4x2048xbf16>
    tpu.vector_store %arg12[%c16, %c0_110], %86 {strides = array<i32>} : memref<200x2048xbf16, #tpu.memory_space<vmem>>, vector<4x2048xbf16>,
    %c0_111 = arith.constant 0 : index
    %c128_112 = arith.constant 128 : index
    %88 = vector.load %arg11[%c0_111, %c128_112] : memref<4x2816xbf16, #tpu.memory_space<vmem>>, vector<4x2048xbf16>
    %c44 = arith.constant 44 : index
    %c0_113 = arith.constant 0 : index
    %89 = vector.load %arg12[%c44, %c0_113] : memref<200x2048xbf16, #tpu.memory_space<vmem>>, vector<4x2048xbf16>
    tpu.vector_store %arg12[%c44, %c0_113], %88 {strides = array<i32>} : memref<200x2048xbf16, #tpu.memory_space<vmem>>, vector<4x2048xbf16>,
    %c0_114 = arith.constant 0 : index
    %c256_115 = arith.constant 256 : index
    %90 = vector.load %arg11[%c0_114, %c256_115] : memref<4x2816xbf16, #tpu.memory_space<vmem>>, vector<4x2048xbf16>
    %c72 = arith.constant 72 : index
    %c0_116 = arith.constant 0 : index
    %91 = vector.load %arg12[%c72, %c0_116] : memref<200x2048xbf16, #tpu.memory_space<vmem>>, vector<4x2048xbf16>
    tpu.vector_store %arg12[%c72, %c0_116], %90 {strides = array<i32>} : memref<200x2048xbf16, #tpu.memory_space<vmem>>, vector<4x2048xbf16>,
    %c0_117 = arith.constant 0 : index
    %c384_118 = arith.constant 384 : index
    %92 = vector.load %arg11[%c0_117, %c384_118] : memref<4x2816xbf16, #tpu.memory_space<vmem>>, vector<4x2048xbf16>
    %c100 = arith.constant 100 : index
    %c0_119 = arith.constant 0 : index
    %93 = vector.load %arg12[%c100, %c0_119] : memref<200x2048xbf16, #tpu.memory_space<vmem>>, vector<4x2048xbf16>
    tpu.vector_store %arg12[%c100, %c0_119], %92 {strides = array<i32>} : memref<200x2048xbf16, #tpu.memory_space<vmem>>, vector<4x2048xbf16>,
    %c0_120 = arith.constant 0 : index
    %c512_121 = arith.constant 512 : index
    %94 = vector.load %arg11[%c0_120, %c512_121] : memref<4x2816xbf16, #tpu.memory_space<vmem>>, vector<4x2048xbf16>
    %c128_122 = arith.constant 128 : index
    %c0_123 = arith.constant 0 : index
    %95 = vector.load %arg12[%c128_122, %c0_123] : memref<200x2048xbf16, #tpu.memory_space<vmem>>, vector<4x2048xbf16>
    tpu.vector_store %arg12[%c128_122, %c0_123], %94 {strides = array<i32>} : memref<200x2048xbf16, #tpu.memory_space<vmem>>, vector<4x2048xbf16>,
    %c0_124 = arith.constant 0 : index
    %c640_125 = arith.constant 640 : index
    %96 = vector.load %arg11[%c0_124, %c640_125] : memref<4x2816xbf16, #tpu.memory_space<vmem>>, vector<4x2048xbf16>
    %c156 = arith.constant 156 : index
    %c0_126 = arith.constant 0 : index
    %97 = vector.load %arg12[%c156, %c0_126] : memref<200x2048xbf16, #tpu.memory_space<vmem>>, vector<4x2048xbf16>
    tpu.vector_store %arg12[%c156, %c0_126], %96 {strides = array<i32>} : memref<200x2048xbf16, #tpu.memory_space<vmem>>, vector<4x2048xbf16>,
    %c0_127 = arith.constant 0 : index
    %c768_128 = arith.constant 768 : index
    %98 = vector.load %arg11[%c0_127, %c768_128] : memref<4x2816xbf16, #tpu.memory_space<vmem>>, vector<4x2048xbf16>
    %c184 = arith.constant 184 : index
    %c0_129 = arith.constant 0 : index
    %99 = vector.load %arg12[%c184, %c0_129] : memref<200x2048xbf16, #tpu.memory_space<vmem>>, vector<4x2048xbf16>
    tpu.vector_store %arg12[%c184, %c0_129], %98 {strides = array<i32>} : memref<200x2048xbf16, #tpu.memory_space<vmem>>, vector<4x2048xbf16>,
    %c0_130 = arith.constant 0 : index
    %c130 = arith.constant 130 : index
    %100 = vector.load %arg10[%c0_130, %c130] : memref<4x3072xbf16, #tpu.memory_space<vmem>>, vector<4x2816xbf16>
    %c0_131 = arith.constant 0 : index
    %c0_132 = arith.constant 0 : index
    %101 = vector.load %arg11[%c0_131, %c0_132] : memref<4x2816xbf16, #tpu.memory_space<vmem>>, vector<4x2816xbf16>
    tpu.vector_store %arg11[%c0_131, %c0_132], %100 {strides = array<i32>} : memref<4x2816xbf16, #tpu.memory_space<vmem>>, vector<4x2816xbf16>,
    %c0_133 = arith.constant 0 : index
    %c0_134 = arith.constant 0 : index
    %102 = vector.load %arg11[%c0_133, %c0_134] : memref<4x2816xbf16, #tpu.memory_space<vmem>>, vector<4x2048xbf16>
    %c20 = arith.constant 20 : index
    %c0_135 = arith.constant 0 : index
    %103 = vector.load %arg12[%c20, %c0_135] : memref<200x2048xbf16, #tpu.memory_space<vmem>>, vector<4x2048xbf16>
    tpu.vector_store %arg12[%c20, %c0_135], %102 {strides = array<i32>} : memref<200x2048xbf16, #tpu.memory_space<vmem>>, vector<4x2048xbf16>,
    %c0_136 = arith.constant 0 : index
    %c128_137 = arith.constant 128 : index
    %104 = vector.load %arg11[%c0_136, %c128_137] : memref<4x2816xbf16, #tpu.memory_space<vmem>>, vector<4x2048xbf16>
    %c48 = arith.constant 48 : index
    %c0_138 = arith.constant 0 : index
    %105 = vector.load %arg12[%c48, %c0_138] : memref<200x2048xbf16, #tpu.memory_space<vmem>>, vector<4x2048xbf16>
    tpu.vector_store %arg12[%c48, %c0_138], %104 {strides = array<i32>} : memref<200x2048xbf16, #tpu.memory_space<vmem>>, vector<4x2048xbf16>,
    %c0_139 = arith.constant 0 : index
    %c256_140 = arith.constant 256 : index
    %106 = vector.load %arg11[%c0_139, %c256_140] : memref<4x2816xbf16, #tpu.memory_space<vmem>>, vector<4x2048xbf16>
    %c76 = arith.constant 76 : index
    %c0_141 = arith.constant 0 : index
    %107 = vector.load %arg12[%c76, %c0_141] : memref<200x2048xbf16, #tpu.memory_space<vmem>>, vector<4x2048xbf16>
    tpu.vector_store %arg12[%c76, %c0_141], %106 {strides = array<i32>} : memref<200x2048xbf16, #tpu.memory_space<vmem>>, vector<4x2048xbf16>,
    %c0_142 = arith.constant 0 : index
    %c384_143 = arith.constant 384 : index
    %108 = vector.load %arg11[%c0_142, %c384_143] : memref<4x2816xbf16, #tpu.memory_space<vmem>>, vector<4x2048xbf16>
    %c104 = arith.constant 104 : index
    %c0_144 = arith.constant 0 : index
    %109 = vector.load %arg12[%c104, %c0_144] : memref<200x2048xbf16, #tpu.memory_space<vmem>>, vector<4x2048xbf16>
    tpu.vector_store %arg12[%c104, %c0_144], %108 {strides = array<i32>} : memref<200x2048xbf16, #tpu.memory_space<vmem>>, vector<4x2048xbf16>,
    %c0_145 = arith.constant 0 : index
    %c512_146 = arith.constant 512 : index
    %110 = vector.load %arg11[%c0_145, %c512_146] : memref<4x2816xbf16, #tpu.memory_space<vmem>>, vector<4x2048xbf16>
    %c132 = arith.constant 132 : index
    %c0_147 = arith.constant 0 : index
    %111 = vector.load %arg12[%c132, %c0_147] : memref<200x2048xbf16, #tpu.memory_space<vmem>>, vector<4x2048xbf16>
    tpu.vector_store %arg12[%c132, %c0_147], %110 {strides = array<i32>} : memref<200x2048xbf16, #tpu.memory_space<vmem>>, vector<4x2048xbf16>,
    %c0_148 = arith.constant 0 : index
    %c640_149 = arith.constant 640 : index
    %112 = vector.load %arg11[%c0_148, %c640_149] : memref<4x2816xbf16, #tpu.memory_space<vmem>>, vector<4x2048xbf16>
    %c160 = arith.constant 160 : index
    %c0_150 = arith.constant 0 : index
    %113 = vector.load %arg12[%c160, %c0_150] : memref<200x2048xbf16, #tpu.memory_space<vmem>>, vector<4x2048xbf16>
    tpu.vector_store %arg12[%c160, %c0_150], %112 {strides = array<i32>} : memref<200x2048xbf16, #tpu.memory_space<vmem>>, vector<4x2048xbf16>,
    %c0_151 = arith.constant 0 : index
    %c768_152 = arith.constant 768 : index
    %114 = vector.load %arg11[%c0_151, %c768_152] : memref<4x2816xbf16, #tpu.memory_space<vmem>>, vector<4x2048xbf16>
    %c188 = arith.constant 188 : index
    %c0_153 = arith.constant 0 : index
    %115 = vector.load %arg12[%c188, %c0_153] : memref<200x2048xbf16, #tpu.memory_space<vmem>>, vector<4x2048xbf16>
    tpu.vector_store %arg12[%c188, %c0_153], %114 {strides = array<i32>} : memref<200x2048xbf16, #tpu.memory_space<vmem>>, vector<4x2048xbf16>,
    %c0_154 = arith.constant 0 : index
    %c131 = arith.constant 131 : index
    %116 = vector.load %arg10[%c0_154, %c131] : memref<4x3072xbf16, #tpu.memory_space<vmem>>, vector<4x2816xbf16>
    %c0_155 = arith.constant 0 : index
    %c0_156 = arith.constant 0 : index
    %117 = vector.load %arg11[%c0_155, %c0_156] : memref<4x2816xbf16, #tpu.memory_space<vmem>>, vector<4x2816xbf16>
    tpu.vector_store %arg11[%c0_155, %c0_156], %116 {strides = array<i32>} : memref<4x2816xbf16, #tpu.memory_space<vmem>>, vector<4x2816xbf16>,
    %c0_157 = arith.constant 0 : index
    %c0_158 = arith.constant 0 : index
    %118 = vector.load %arg11[%c0_157, %c0_158] : memref<4x2816xbf16, #tpu.memory_space<vmem>>, vector<4x2048xbf16>
    %c24 = arith.constant 24 : index
    %c0_159 = arith.constant 0 : index
    %119 = vector.load %arg12[%c24, %c0_159] : memref<200x2048xbf16, #tpu.memory_space<vmem>>, vector<4x2048xbf16>
    tpu.vector_store %arg12[%c24, %c0_159], %118 {strides = array<i32>} : memref<200x2048xbf16, #tpu.memory_space<vmem>>, vector<4x2048xbf16>,
    %c0_160 = arith.constant 0 : index
    %c128_161 = arith.constant 128 : index
    %120 = vector.load %arg11[%c0_160, %c128_161] : memref<4x2816xbf16, #tpu.memory_space<vmem>>, vector<4x2048xbf16>
    %c52 = arith.constant 52 : index
    %c0_162 = arith.constant 0 : index
    %121 = vector.load %arg12[%c52, %c0_162] : memref<200x2048xbf16, #tpu.memory_space<vmem>>, vector<4x2048xbf16>
    tpu.vector_store %arg12[%c52, %c0_162], %120 {strides = array<i32>} : memref<200x2048xbf16, #tpu.memory_space<vmem>>, vector<4x2048xbf16>,
    %c0_163 = arith.constant 0 : index
    %c256_164 = arith.constant 256 : index
    %122 = vector.load %arg11[%c0_163, %c256_164] : memref<4x2816xbf16, #tpu.memory_space<vmem>>, vector<4x2048xbf16>
    %c80 = arith.constant 80 : index
    %c0_165 = arith.constant 0 : index
    %123 = vector.load %arg12[%c80, %c0_165] : memref<200x2048xbf16, #tpu.memory_space<vmem>>, vector<4x2048xbf16>
    tpu.vector_store %arg12[%c80, %c0_165], %122 {strides = array<i32>} : memref<200x2048xbf16, #tpu.memory_space<vmem>>, vector<4x2048xbf16>,
    %c0_166 = arith.constant 0 : index
    %c384_167 = arith.constant 384 : index
    %124 = vector.load %arg11[%c0_166, %c384_167] : memref<4x2816xbf16, #tpu.memory_space<vmem>>, vector<4x2048xbf16>
    %c108 = arith.constant 108 : index
    %c0_168 = arith.constant 0 : index
    %125 = vector.load %arg12[%c108, %c0_168] : memref<200x2048xbf16, #tpu.memory_space<vmem>>, vector<4x2048xbf16>
    tpu.vector_store %arg12[%c108, %c0_168], %124 {strides = array<i32>} : memref<200x2048xbf16, #tpu.memory_space<vmem>>, vector<4x2048xbf16>,
    %c0_169 = arith.constant 0 : index
    %c512_170 = arith.constant 512 : index
    %126 = vector.load %arg11[%c0_169, %c512_170] : memref<4x2816xbf16, #tpu.memory_space<vmem>>, vector<4x2048xbf16>
    %c136 = arith.constant 136 : index
    %c0_171 = arith.constant 0 : index
    %127 = vector.load %arg12[%c136, %c0_171] : memref<200x2048xbf16, #tpu.memory_space<vmem>>, vector<4x2048xbf16>
    tpu.vector_store %arg12[%c136, %c0_171], %126 {strides = array<i32>} : memref<200x2048xbf16, #tpu.memory_space<vmem>>, vector<4x2048xbf16>,
    %c0_172 = arith.constant 0 : index
    %c640_173 = arith.constant 640 : index
    %128 = vector.load %arg11[%c0_172, %c640_173] : memref<4x2816xbf16, #tpu.memory_space<vmem>>, vector<4x2048xbf16>
    %c164 = arith.constant 164 : index
    %c0_174 = arith.constant 0 : index
    %129 = vector.load %arg12[%c164, %c0_174] : memref<200x2048xbf16, #tpu.memory_space<vmem>>, vector<4x2048xbf16>
    tpu.vector_store %arg12[%c164, %c0_174], %128 {strides = array<i32>} : memref<200x2048xbf16, #tpu.memory_space<vmem>>, vector<4x2048xbf16>,
    %c0_175 = arith.constant 0 : index
    %c768_176 = arith.constant 768 : index
    %130 = vector.load %arg11[%c0_175, %c768_176] : memref<4x2816xbf16, #tpu.memory_space<vmem>>, vector<4x2048xbf16>
    %c192 = arith.constant 192 : index
    %c0_177 = arith.constant 0 : index
    %131 = vector.load %arg12[%c192, %c0_177] : memref<200x2048xbf16, #tpu.memory_space<vmem>>, vector<4x2048xbf16>
    tpu.vector_store %arg12[%c192, %c0_177], %130 {strides = array<i32>} : memref<200x2048xbf16, #tpu.memory_space<vmem>>, vector<4x2048xbf16>,
    %c0_178 = arith.constant 0 : index
    %c512_179 = arith.constant 512 : index
    %132 = vector.load %arg10[%c0_178, %c512_179] : memref<4x3072xbf16, #tpu.memory_space<vmem>>, vector<4x2048xbf16>
    %c196 = arith.constant 196 : index
    %c0_180 = arith.constant 0 : index
    %133 = vector.load %arg12[%c196, %c0_180] : memref<200x2048xbf16, #tpu.memory_space<vmem>>, vector<4x2048xbf16>
    tpu.vector_store %arg12[%c196, %c0_180], %132 {strides = array<i32>} : memref<200x2048xbf16, #tpu.memory_space<vmem>>, vector<4x2048xbf16>,
    %c0_181 = arith.constant 0 : index
    %c0_182 = arith.constant 0 : index
    %c0_183 = arith.constant 0 : index
    %134 = vector.load %arg6[%c0_181, %c0_182, %c0_183] : memref<1x4x200xbf16, #tpu.memory_space<vmem>>, vector<1x4x200xbf16>
    %135 = vector.shape_cast %134 : vector<1x4x200xbf16> to vector<4x200xbf16>
    %c0_184 = arith.constant 0 : index
    %c0_185 = arith.constant 0 : index
    %136 = vector.load %arg12[%c0_184, %c0_185] : memref<200x2048xbf16, #tpu.memory_space<vmem>>, vector<200x2048xbf16>
    %cst_186 = arith.constant dense<0.000000e+00> : vector<4x2048xf32>
    %137 = tpu.matmul %135, %136, %cst_186 {dimension_numbers = #tpu.dot_dimension_numbers<[1], [0], [0], [1], [0, 0, 1, 1], [], []>} : vector<4x200xbf16>, vector<200x2048xbf16>, vector<4x2048xf32> -> vector<4x2048xf32>
    %c0_187 = arith.constant 0 : index
    %c0_188 = arith.constant 0 : index
    %c0_189 = arith.constant 0 : index
    %138 = vector.load %arg7[%c0_187, %c0_188, %c0_189] : memref<1x4x1xf32, #tpu.memory_space<vmem>>, vector<1x4x1xf32>
    %139 = vector.shape_cast %138 : vector<1x4x1xf32> to vector<4x1xf32>
    %140 = vector.broadcast %139 : vector<4x1xf32> to vector<4x2048xf32>
    %141 = arith.addf %137, %140 : vector<4x2048xf32>
    %142 = arith.truncf %141 : vector<4x2048xf32> to vector<4x2048xbf16>
    %c0_190 = arith.constant 0 : index
    %c0_191 = arith.constant 0 : index
    %c0_192 = arith.constant 0 : index
    %143 = vector.load %arg8[%c0_190, %c0_191, %c0_192] : memref<1x4x2048xbf16, #tpu.memory_space<vmem>>, vector<1x4x2048xbf16>
    %144 = vector.shape_cast %143 : vector<1x4x2048xbf16> to vector<4x2048xbf16>
    %145 = vector.shape_cast %142 : vector<4x2048xbf16> to vector<1x4x2048xbf16>
    tpu.vector_store %arg8[%c0_190, %c0_191, %c0_192], %145 {strides = array<i32>} : memref<1x4x2048xbf16, #tpu.memory_space<vmem>>, vector<1x4x2048xbf16>,
    %c384_i32 = arith.constant 384 : i32
    %146 = arith.addi %1, %c384_i32 : i32
    %147 = tpu.assume_multiple %146, 128 : i32
    %c0_193 = arith.constant 0 : index
    %148 = arith.index_cast %147 : i32 to index
    %149 = vector.load %arg3[%c0_193, %148] : memref<1x2816xf32, #tpu.memory_space<vmem>>, vector<1x2048xf32>
    %150 = vector.broadcast %149 : vector<1x2048xf32> to vector<4x2048xf32>
    %151 = arith.mulf %141, %150 : vector<4x2048xf32>
    %cst_194 = arith.constant dense<0.000000e+00> : vector<4xf32>
    %152 = vector.multi_reduction <add>, %151, %cst_194 [1] : vector<4x2048xf32> to vector<4xf32>
    %153 = vector.shape_cast %152 : vector<4xf32> to vector<4x1xf32>
    %c0_195 = arith.constant 0 : index
    %c0_196 = arith.constant 0 : index
    %c0_197 = arith.constant 0 : index
    %c0_198 = arith.constant 0 : index
    %154 = vector.load %arg9[%c0_195, %c0_196, %c0_197, %c0_198] : memref<1x1x4x8xf32, #tpu.memory_space<vmem>>, vector<1x1x4x1xf32>
    %155 = vector.shape_cast %154 : vector<1x1x4x1xf32> to vector<4x1xf32>
    %156 = vector.shape_cast %153 : vector<4x1xf32> to vector<1x1x4x1xf32>
    tpu.vector_store %arg9[%c0_195, %c0_196, %c0_197, %c0_198], %156 {strides = array<i32>} : memref<1x1x4x8xf32, #tpu.memory_space<vmem>>, vector<1x1x4x1xf32>,
    %157 = arith.mulf %151, %151 : vector<4x2048xf32>
    %cst_199 = arith.constant dense<0.000000e+00> : vector<4xf32>
    %158 = vector.multi_reduction <add>, %157, %cst_199 [1] : vector<4x2048xf32> to vector<4xf32>
    %159 = vector.shape_cast %158 : vector<4xf32> to vector<4x1xf32>
    %c0_200 = arith.constant 0 : index
    %c0_201 = arith.constant 0 : index
    %c0_202 = arith.constant 0 : index
    %c1 = arith.constant 1 : index
    %160 = vector.load %arg9[%c0_200, %c0_201, %c0_202, %c1] : memref<1x1x4x8xf32, #tpu.memory_space<vmem>>, vector<1x1x4x1xf32>
    %161 = vector.shape_cast %160 : vector<1x1x4x1xf32> to vector<4x1xf32>
    %162 = vector.shape_cast %159 : vector<4x1xf32> to vector<1x1x4x1xf32>
    tpu.vector_store %arg9[%c0_200, %c0_201, %c0_202, %c1], %162 {strides = array<i32>} : memref<1x1x4x8xf32, #tpu.memory_space<vmem>>, vector<1x1x4x1xf32>,
    %cst_203 = arith.constant 0.000000e+00 : f32
    %163 = vector.broadcast %cst_203 : f32 to vector<4x6xf32>
    %c0_204 = arith.constant 0 : index
    %c0_205 = arith.constant 0 : index
    %c0_206 = arith.constant 0 : index
    %c2 = arith.constant 2 : index
    %164 = vector.load %arg9[%c0_204, %c0_205, %c0_206, %c2] : memref<1x1x4x8xf32, #tpu.memory_space<vmem>>, vector<1x1x4x6xf32>
    %165 = vector.shape_cast %164 : vector<1x1x4x6xf32> to vector<4x6xf32>
    %166 = vector.shape_cast %163 : vector<4x6xf32> to vector<1x1x4x6xf32>
    tpu.vector_store %arg9[%c0_204, %c0_205, %c0_206, %c2], %166 {strides = array<i32>} : memref<1x1x4x8xf32, #tpu.memory_space<vmem>>, vector<1x1x4x6xf32>,
    return
  }
  func.func @transform_0(%arg0: i32, %arg1: i32) -> (i32, i32, i32) {
    %c0_i32 = arith.constant 0 : i32
    %c0_i32_0 = arith.constant 0 : i32
    %c0_i32_1 = arith.constant 0 : i32
    return %arg0, %c0_i32, %c0_i32_0 : i32, i32, i32
  }
  func.func @transform_1(%arg0: i32, %arg1: i32) -> (i32, i32) {
    %c0_i32 = arith.constant 0 : i32
    %c0_i32_0 = arith.constant 0 : i32
    %c0_i32_1 = arith.constant 0 : i32
    return %c0_i32, %c0_i32_0 : i32, i32
  }
  func.func @transform_2(%arg0: i32, %arg1: i32) -> (i32, i32) {
    %c0_i32 = arith.constant 0 : i32
    %c0_i32_0 = arith.constant 0 : i32
    %c0_i32_1 = arith.constant 0 : i32
    return %c0_i32, %c0_i32_0 : i32, i32
  }
  func.func @transform_3(%arg0: i32, %arg1: i32) -> (i32, i32) {
    %c0_i32 = arith.constant 0 : i32
    %c0_i32_0 = arith.constant 0 : i32
    %c0_i32_1 = arith.constant 0 : i32
    return %c0_i32, %c0_i32_0 : i32, i32
  }
  func.func @transform_4(%arg0: i32, %arg1: i32) -> (i32, i32, i32) {
    %c0_i32 = arith.constant 0 : i32
    %c0_i32_0 = arith.constant 0 : i32
    %c0_i32_1 = arith.constant 0 : i32
    return %arg0, %c0_i32, %c0_i32_0 : i32, i32, i32
  }
  func.func @transform_5(%arg0: i32, %arg1: i32) -> (i32, i32, i32) {
    %c0_i32 = arith.constant 0 : i32
    %c0_i32_0 = arith.constant 0 : i32
    %c0_i32_1 = arith.constant 0 : i32
    return %arg0, %c0_i32, %c0_i32_0 : i32, i32, i32
  }
  func.func @transform_6(%arg0: i32, %arg1: i32) -> (i32, i32, i32) {
    %c0_i32 = arith.constant 0 : i32
    %c0_i32_0 = arith.constant 0 : i32
    return %arg0, %c0_i32, %arg1 : i32, i32, i32
  }
  func.func @transform_7(%arg0: i32, %arg1: i32) -> (i32, i32, i32, i32) {
    %c0_i32 = arith.constant 0 : i32
    %c0_i32_0 = arith.constant 0 : i32
    %c0_i32_1 = arith.constant 0 : i32
    return %arg0, %arg1, %c0_i32, %c0_i32_0 : i32, i32, i32, i32
  }
}

module attributes {stable_mosaic.version = 11 : i64} {
  func.func @_bn_apply_kernel(%arg0: i32, %arg1: i32, %arg2: memref<1x4x2048xbf16, #tpu.memory_space<vmem>>, %arg3: memref<4x1xf32, #tpu.memory_space<vmem>>, %arg4: memref<4x1xf32, #tpu.memory_space<vmem>>, %arg5: memref<1x4x2048xf32, #tpu.memory_space<vmem>>) attributes {dimension_semantics = [#tpu.dimension_semantics<parallel>, #tpu.dimension_semantics<parallel>], iteration_bounds = array<i64: 2, 1>, scalar_prefetch = 0 : i64, scratch_operands = 0 : i64, tpu.core_type = #tpu.core_type<tc>, window_params = [{transform_indices = @transform_0, window_bounds = array<i64: 1, 4, 2048>}, {pipeline_mode = #tpu.pipeline_mode<synchronous>, transform_indices = @transform_1, window_bounds = array<i64: 4, 1>}, {pipeline_mode = #tpu.pipeline_mode<synchronous>, transform_indices = @transform_2, window_bounds = array<i64: 4, 1>}, {transform_indices = @transform_3, window_bounds = array<i64: 1, 4, 2048>}]} {
    %c0 = arith.constant 0 : index
    %c0_0 = arith.constant 0 : index
    %c0_1 = arith.constant 0 : index
    %0 = vector.load %arg2[%c0, %c0_0, %c0_1] : memref<1x4x2048xbf16, #tpu.memory_space<vmem>>, vector<1x4x2048xbf16>
    %1 = vector.shape_cast %0 : vector<1x4x2048xbf16> to vector<4x2048xbf16>
    %2 = arith.extf %1 : vector<4x2048xbf16> to vector<4x2048xf32>
    %c0_2 = arith.constant 0 : index
    %c0_3 = arith.constant 0 : index
    %3 = vector.load %arg3[%c0_2, %c0_3] : memref<4x1xf32, #tpu.memory_space<vmem>>, vector<4x1xf32>
    %4 = vector.broadcast %3 : vector<4x1xf32> to vector<4x2048xf32>
    %5 = arith.mulf %2, %4 : vector<4x2048xf32>
    %c0_4 = arith.constant 0 : index
    %c0_5 = arith.constant 0 : index
    %6 = vector.load %arg4[%c0_4, %c0_5] : memref<4x1xf32, #tpu.memory_space<vmem>>, vector<4x1xf32>
    %7 = vector.broadcast %6 : vector<4x1xf32> to vector<4x2048xf32>
    %8 = arith.addf %5, %7 : vector<4x2048xf32>
    %cst = arith.constant 0.000000e+00 : f32
    %9 = vector.broadcast %cst : f32 to vector<4x2048xf32>
    %10 = arith.maximumf %8, %9 : vector<4x2048xf32>
    %c0_6 = arith.constant 0 : index
    %c0_7 = arith.constant 0 : index
    %c0_8 = arith.constant 0 : index
    %11 = vector.load %arg5[%c0_6, %c0_7, %c0_8] : memref<1x4x2048xf32, #tpu.memory_space<vmem>>, vector<1x4x2048xf32>
    %12 = vector.shape_cast %11 : vector<1x4x2048xf32> to vector<4x2048xf32>
    %13 = vector.shape_cast %10 : vector<4x2048xf32> to vector<1x4x2048xf32>
    tpu.vector_store %arg5[%c0_6, %c0_7, %c0_8], %13 {strides = array<i32>} : memref<1x4x2048xf32, #tpu.memory_space<vmem>>, vector<1x4x2048xf32>,
    return
  }
  func.func @transform_0(%arg0: i32, %arg1: i32) -> (i32, i32, i32) {
    %c0_i32 = arith.constant 0 : i32
    %c0_i32_0 = arith.constant 0 : i32
    return %arg0, %c0_i32, %arg1 : i32, i32, i32
  }
  func.func @transform_1(%arg0: i32, %arg1: i32) -> (i32, i32) {
    %c0_i32 = arith.constant 0 : i32
    %c0_i32_0 = arith.constant 0 : i32
    %c0_i32_1 = arith.constant 0 : i32
    return %c0_i32, %c0_i32_0 : i32, i32
  }
  func.func @transform_2(%arg0: i32, %arg1: i32) -> (i32, i32) {
    %c0_i32 = arith.constant 0 : i32
    %c0_i32_0 = arith.constant 0 : i32
    %c0_i32_1 = arith.constant 0 : i32
    return %c0_i32, %c0_i32_0 : i32, i32
  }
  func.func @transform_3(%arg0: i32, %arg1: i32) -> (i32, i32, i32) {
    %c0_i32 = arith.constant 0 : i32
    %c0_i32_0 = arith.constant 0 : i32
    return %arg0, %c0_i32, %arg1 : i32, i32, i32
  }
}

</mosaic_0001>

<llo_original>
// kernel: rbdp_forward.3
$region0: #{rbdp_forward.3}
  #allocation0 [shape = 'u32[]', space=smem, size = 0x4, offset = 0x4, fixed_abs, tag = 'smem constant byte address 0x4 - core index']
  #allocation1 [shape = 'u32[144,128]{1,0:T(1,128)}', space=vmem, size = 0x12000, scoped, tag = 'internal scratch']
  %s0 = inlined_call_operand.vmem [shape: bf16[2,4,2048], index: 0, kind: input, shape index: {}]
  %s1 = inlined_call_operand.vmem [shape: f32[4,1], index: 1, kind: input, shape index: {}]
  %s2 = inlined_call_operand.vmem [shape: f32[4,1], index: 2, kind: input, shape index: {}]
  %s3 = inlined_call_operand.vmem [shape: f32[2,4,2048], index: 3, kind: output, shape index: {}]
  %s4 = sld [smem:[#allocation0]]
  $region45: #{rbdp_forward.3} parent=0
    _
  %s6 = ssub.s32 1, %s4
  %s7 = scalar_select 0, %s6, %s4
  loop: start=0, step=1, limit=4
  $region2: #{rbdp_forward.3} parent=0 // loop_pre_header
    _
  $region3: #{rbdp_forward.3} parent=0 // loop_header
    %s9 = sphi 0, %s13
    %p10 = scmp.ge.s32.totalorder %s9, 4
    %s16 = sphi 0, %s28
    %s17 = sphi 0, %s24
    %s18 = sphi 0, %s16
    %s19 = sphi 0, %s17
    %s20 = sphi 0, %s18
    %s21 = sphi 0, %s19
    %s33 = sphi 0, %s35
    %s36 = sphi 0, %s33
    %s37 = sphi 0, %s36
    %s53 = sphi 0, %s37
    %s57 = sphi 0, %s57
    %s59 = sphi 0, %s57
    %s60 = sphi 0, %s59
    %s74 = sphi 0, %s60
    %s78 = sphi 0, %s78
    %s80 = sphi 0, %s78
    %s81 = sphi 0, %s80
    %s95 = sphi 0, %s81
    %s103 = sphi 0, %s105
    %s106 = sphi 0, %s103
    %s107 = sphi 0, %s106
    %s123 = sphi 0, %s107
  $region4: #{rbdp_forward.3} parent=0 // loop_header_branch
    %12 = sbr.rel (%p10) target = $region8
  $region5: #{rbdp_forward.3} parent=0 // loop_body
    %s14 = ssub.s32 %s9, 1
    %s15 = ssub.s32 %s9, 2
    %s22 = sadd.s32 1, %s17
    %p23 = scmp.ge.s32.totalorder %s22, 1
    %s24 = scalar_select %p23, 0, %s22
    %s25 = sadd.s32 1, %s16
    %s26 = scalar_select %p23, %s25, %s16
    %p27 = scmp.ge.s32.totalorder %s26, 2
    %s28 = scalar_select %p27, 0, %s26
    %s29 = ssub.s32 %s16, %s28
    %s30 = ssub.s32 %s17, %s24
    %s31 = sor.u32 %s29, %s30
    %p32 = scmp.eq.s32.totalorder %s31, 0
    %s34 = sadd.s32 %s33, 1
    %s35 = scalar_select %p32, %s33, %s34
    %p38 = pneg %p32
    %p39 = scmp.eq.s32.totalorder %s9, 1
    %p40 = por %p38, %p39
    %p41 = scmp.ne.s32.totalorder %s33, %s36
    %p42 = scmp.eq.s32.totalorder %s9, 0
    %p43 = por %p41, %p42
    %p44 = scmp.ne.s32.totalorder %s33, %s36
    %p45 = scmp.eq.s32.totalorder %s14, 1
    %p46 = por %p44, %p45
    %p47 = scmp.ne.s32.totalorder %s36, %s37
    %p48 = scmp.eq.s32.totalorder %s14, 0
    %p49 = por %p47, %p48
    %p50 = scmp.ne.s32.totalorder %s36, %s37
    %p51 = scmp.eq.s32.totalorder %s15, 1
    %p52 = por %p50, %p51
    %p54 = scmp.ne.s32.totalorder %s37, %s53
    %p55 = scmp.eq.s32.totalorder %s15, 0
    %p56 = por %p54, %p55
    %s58 = sadd.s32 %s57, 1
    %p61 = scmp.eq.s32.totalorder %s9, 1
    %p62 = scmp.ne.s32.totalorder %s57, %s59
    %p63 = scmp.eq.s32.totalorder %s9, 0
    %p64 = por %p62, %p63
    %p65 = scmp.ne.s32.totalorder %s57, %s59
    %p66 = scmp.eq.s32.totalorder %s14, 1
    %p67 = por %p65, %p66
    %p68 = scmp.ne.s32.totalorder %s59, %s60
    %p69 = scmp.eq.s32.totalorder %s14, 0
    %p70 = por %p68, %p69
    %p71 = scmp.ne.s32.totalorder %s59, %s60
    %p72 = scmp.eq.s32.totalorder %s15, 1
    %p73 = por %p71, %p72
    %p75 = scmp.ne.s32.totalorder %s60, %s74
    %p76 = scmp.eq.s32.totalorder %s15, 0
    %p77 = por %p75, %p76
    %s79 = sadd.s32 %s78, 1
    %p82 = scmp.eq.s32.totalorder %s9, 1
    %p83 = scmp.ne.s32.totalorder %s78, %s80
    %p84 = scmp.eq.s32.totalorder %s9, 0
    %p85 = por %p83, %p84
    %p86 = scmp.ne.s32.totalorder %s78, %s80
    %p87 = scmp.eq.s32.totalorder %s14, 1
    %p88 = por %p86, %p87
    %p89 = scmp.ne.s32.totalorder %s80, %s81
    %p90 = scmp.eq.s32.totalorder %s14, 0
    %p91 = por %p89, %p90
    %p92 = scmp.ne.s32.totalorder %s80, %s81
    %p93 = scmp.eq.s32.totalorder %s15, 1
    %p94 = por %p92, %p93
    %p96 = scmp.ne.s32.totalorder %s81, %s95
    %p97 = scmp.eq.s32.totalorder %s15, 0
    %p98 = por %p96, %p97
    %s99 = ssub.s32 %s16, %s28
    %s100 = ssub.s32 %s17, %s24
    %s101 = sor.u32 %s99, %s100
    %p102 = scmp.eq.s32.totalorder %s101, 0
    %s104 = sadd.s32 %s103, 1
    %s105 = scalar_select %p102, %s103, %s104
    %p108 = pneg %p102
    %p109 = scmp.eq.s32.totalorder %s9, 1
    %p110 = por %p108, %p109
    %p111 = scmp.ne.s32.totalorder %s103, %s106
    %p112 = scmp.eq.s32.totalorder %s9, 0
    %p113 = por %p111, %p112
    %p114 = scmp.ne.s32.totalorder %s103, %s106
    %p115 = scmp.eq.s32.totalorder %s14, 1
    %p116 = por %p114, %p115
    %p117 = scmp.ne.s32.totalorder %s106, %s107
    %p118 = scmp.eq.s32.totalorder %s14, 0
    %p119 = por %p117, %p118
    %p120 = scmp.ne.s32.totalorder %s106, %s107
    %p121 = scmp.eq.s32.totalorder %s15, 1
    %p122 = por %p120, %p121
    %p124 = scmp.ne.s32.totalorder %s107, %s123
    %p125 = scmp.eq.s32.totalorder %s15, 0
    %p126 = por %p124, %p125
    %p127 = scmp.le.s32.totalorder 1, %s9
    %p128 = scmp.lt.s32.totalorder %s9, 3
    %p129 = pnand %p127, %p128
    %p130 = pneg %p129
    // Predicated region
    $region9: #{rbdp_forward.3} parent=5 // pred_check
      _
    $region10: #{rbdp_forward.3} parent=5 // pred_check_branch
      %132 = sbr.rel (%p129) target = $region12
    $region11: #{rbdp_forward.3} parent=5 // pred_region
      %s133 = ssub.s32 %s9, 1
      // Predicated region
      $region13: #{rbdp_forward.3} parent=11 // pred_check
        %p134 = pneg %p70
      $region14: #{rbdp_forward.3} parent=11 // pred_check_branch
        %136 = sbr.rel (%p134) target = $region16
      $region15: #{rbdp_forward.3} parent=11 // pred_region
        _
      $region16: #{rbdp_forward.3} parent=11 // pred_fallthru
        _
      // Predicated region
      $region17: #{rbdp_forward.3} parent=11 // pred_check
        %p137 = pneg %p91
      $region18: #{rbdp_forward.3} parent=11 // pred_check_branch
        %139 = sbr.rel (%p137) target = $region20
      $region19: #{rbdp_forward.3} parent=11 // pred_region
        _
      $region20: #{rbdp_forward.3} parent=11 // pred_fallthru
        _
    $region12: #{rbdp_forward.3} parent=5 // pred_fallthru
      _
    %p140 = scmp.lt.s32.totalorder %s9, 2
    // Predicated region
    $region21: #{rbdp_forward.3} parent=5 // pred_check
      %p141 = pneg %p140
    $region22: #{rbdp_forward.3} parent=5 // pred_check_branch
      %143 = sbr.rel (%p141) target = $region24
    $region23: #{rbdp_forward.3} parent=5 // pred_region
      // Predicated region
      $region25: #{rbdp_forward.3} parent=23 // pred_check
        %p144 = pneg %p43
      $region26: #{rbdp_forward.3} parent=23 // pred_check_branch
        %146 = sbr.rel (%p144) target = $region28
      $region27: #{rbdp_forward.3} parent=23 // pred_region
        %s147 = smul.u32 16, %s17
        %p148 = scmp.lt.s32.totalorder %s16, 1
        %s149 = scalar_select %p148, %s16, 1
        %p150 = scmp.lt.s32.totalorder %s147, 15
        %s151 = scalar_select %p150, %s147, 15
        %s152 = smul.addr %s149, 16
        %s153 = sadd.s32 %s151, %s152
        %s154 = smul.addr %s153, 2
        %s155 = scalar_lea.vmem %s0, %s154
        %s156 = smul.u32 16, %s17
      $region28: #{rbdp_forward.3} parent=23 // pred_fallthru
        _
    $region24: #{rbdp_forward.3} parent=5 // pred_fallthru
      _
    %p157 = scmp.le.s32.totalorder 1, %s9
    %p158 = scmp.lt.s32.totalorder %s9, 3
    %p159 = pnand %p157, %p158
    %p160 = pneg %p159
    // Predicated region
    $region29: #{rbdp_forward.3} parent=5 // pred_check
      _
    $region30: #{rbdp_forward.3} parent=5 // pred_check_branch
      %162 = sbr.rel (%p159) target = $region32
    $region31: #{rbdp_forward.3} parent=5 // pred_region
      %s163 = ssub.s32 %s9, 1
      %s164 = smul.u32 16, %s19
      %p165 = scmp.lt.s32.totalorder %s18, 1
      %s166 = scalar_select %p165, %s18, 1
      %p167 = scmp.lt.s32.totalorder %s164, 15
      %s168 = scalar_select %p167, %s164, 15
      %s169 = smul.addr %s166, 16
      %s170 = sadd.s32 %s168, %s169
      %s171 = smul.addr %s170, 2
      %s172 = scalar_lea.vmem %s0, %s171
      %p173 = pneg %p49
      %p174 = pneg %p46
      %p175 = pneg %p70
      %p176 = pneg %p67
      %p177 = pneg %p91
      %p178 = pneg %p88
      %p179 = pneg %p119
      %p180 = pneg %p116
      %s181 = smul.u32 16, %s19
      %p182 = scmp.lt.s32.totalorder %s18, 1
      %s183 = scalar_select %p182, %s18, 1
      %p184 = scmp.lt.s32.totalorder %s181, 15
      %s185 = scalar_select %p184, %s181, 15
      %s186 = smul.addr %s183, 16
      %s187 = sadd.s32 %s185, %s186
      %s188 = smul.addr %s187, 4
      %s189 = scalar_lea.vmem %s3, %s188
      %s190 = smul.u32 16, %s19
      %p191 = scmp.lt.s32.totalorder %s18, 1
      %s192 = scalar_select %p191, %s18, 1
      %p193 = scmp.lt.s32.totalorder %s190, 15
      %s194 = scalar_select %p193, %s190, 15
      %s195 = smul.addr %s192, 16
      %s196 = sadd.s32 %s194, %s195
      %s197 = smul.addr %s196, 2
      %s198 = scalar_lea.vmem %s0, %s197
      %s199 = smul.u32 16, %s19
      %s200 = smul.u32 16, %s19
      %p201 = scmp.lt.s32.totalorder %s18, 1
      %s202 = scalar_select %p201, %s18, 1
      %p203 = scmp.lt.s32.totalorder %s200, 15
      %s204 = scalar_select %p203, %s200, 15
      %s205 = smul.addr %s202, 16
      %s206 = sadd.s32 %s204, %s205
      %s207 = smul.addr %s206, 4
      %s208 = scalar_lea.vmem %s3, %s207
      %s209 = smul.u32 16, %s19
      %v210 = vld [vmem:[%s198] sm:$0xff]
      %v211 = vld [vmem:[%s198 + $0x8] sm:$0xff]
      %v212 = vld [vmem:[%s198 + $0x10] sm:$0xff]
      %v213 = vld [vmem:[%s198 + $0x18] sm:$0xff]
      %v214 = vunpack.c.l.bf16 %v210
      %v215 = vunpack.c.h.bf16 %v210
      %v216 = vunpack.c.l.bf16 %v211
      %v217 = vunpack.c.h.bf16 %v211
      %v218 = vunpack.c.l.bf16 %v212
      %v219 = vunpack.c.h.bf16 %v212
      %v220 = vunpack.c.l.bf16 %v213
      %v221 = vunpack.c.h.bf16 %v213
      %v222 = vld [vmem:[%s1] sm:$0xf]
      %224 = vset.pattern.permute.xlu0 0
      %225 = vperm.xlu0 %224, %v222
      %v226 = vpop.permute.xlu0 %225
      %v228 = vunpack.c.l.s4 839922192
      %v229 = vunpack.c.0.s8 %v228
      %v230 = vlaneseq
      %v231 = vshrl.u32 %v230, 7
      %v232 = vsub.s32 %v229, %v231
      %v233 = vrot.slane %v226, %v232
      %v235 = vmul.f32 %v214, %v233
      %v236 = vmul.f32 %v215, %v233
      %v237 = vmul.f32 %v216, %v233
      %v238 = vmul.f32 %v217, %v233
      %v239 = vmul.f32 %v218, %v233
      %v240 = vmul.f32 %v219, %v233
      %v241 = vmul.f32 %v220, %v233
      %v242 = vmul.f32 %v221, %v233
      %v243 = vld [vmem:[%s2] sm:$0xf]
      %245 = vset.pattern.permute.xlu0 0
      %246 = vperm.xlu0 %245, %v243
      %v247 = vpop.permute.xlu0 %246
      %v249 = vunpack.c.l.s4 839922192
      %v250 = vunpack.c.0.s8 %v249
      %v251 = vlaneseq
      %v252 = vshrl.u32 %v251, 7
      %v253 = vsub.s32 %v250, %v252
      %v254 = vrot.slane %v247, %v253
      %v256 = vadd.f32 %v235, %v254
      %v257 = vadd.f32 %v236, %v254
      %v258 = vadd.f32 %v237, %v254
      %v259 = vadd.f32 %v238, %v254
      %v260 = vadd.f32 %v239, %v254
      %v261 = vadd.f32 %v240, %v254
      %v262 = vadd.f32 %v241, %v254
      %v263 = vadd.f32 %v242, %v254
      %v264 = vmax.f32 %v256, 0.0
      %v265 = vmax.f32 %v257, 0.0
      %v266 = vmax.f32 %v258, 0.0
      %v267 = vmax.f32 %v259, 0.0
      %v268 = vmax.f32 %v260, 0.0
      %v269 = vmax.f32 %v261, 0.0
      %v270 = vmax.f32 %v262, 0.0
      %v271 = vmax.f32 %v263, 0.0
      %272 = vst [vmem:[%s208] sm:$0xff] %v264
      %273 = vst [vmem:[%s208 + $0x8] sm:$0xff] %v265
      %274 = vst [vmem:[%s208 + $0x10] sm:$0xff] %v266
      %275 = vst [vmem:[%s208 + $0x18] sm:$0xff] %v267
      %276 = vst [vmem:[%s208 + $0x20] sm:$0xff] %v268
      %277 = vst [vmem:[%s208 + $0x28] sm:$0xff] %v269
      %278 = vst [vmem:[%s208 + $0x30] sm:$0xff] %v270
      %279 = vst [vmem:[%s208 + $0x38] sm:$0xff] %v271
      %s280 = smul.u32 16, %s19
      %p281 = scmp.lt.s32.totalorder %s18, 1
      %s282 = scalar_select %p281, %s18, 1
      %p283 = scmp.lt.s32.totalorder %s280, 15
      %s284 = scalar_select %p283, %s280, 15
      %s285 = smul.addr %s282, 16
      %s286 = sadd.s32 %s284, %s285
      %s287 = smul.addr %s286, 4
      %s288 = scalar_lea.vmem %s3, %s287
      // Predicated region
      $region33: #{rbdp_forward.3} parent=31 // pred_check
        %p289 = pneg %p116
      $region34: #{rbdp_forward.3} parent=31 // pred_check_branch
        %291 = sbr.rel (%p289) target = $region36
      $region35: #{rbdp_forward.3} parent=31 // pred_region
        %s292 = smul.u32 16, %s19
      $region36: #{rbdp_forward.3} parent=31 // pred_fallthru
        _
    $region32: #{rbdp_forward.3} parent=5 // pred_fallthru
      _
    %p293 = scmp.le.s32.totalorder 2, %s9
    // Predicated region
    $region37: #{rbdp_forward.3} parent=5 // pred_check
      %p294 = pneg %p293
    $region38: #{rbdp_forward.3} parent=5 // pred_check_branch
      %296 = sbr.rel (%p294) target = $region40
    $region39: #{rbdp_forward.3} parent=5 // pred_region
      %s297 = ssub.s32 %s9, 2
      // Predicated region
      $region41: #{rbdp_forward.3} parent=39 // pred_check
        %p298 = pneg %p122
      $region42: #{rbdp_forward.3} parent=39 // pred_check_branch
        %300 = sbr.rel (%p298) target = $region44
      $region43: #{rbdp_forward.3} parent=39 // pred_region
        %s301 = smul.u32 16, %s21
        %p302 = scmp.lt.s32.totalorder %s20, 1
        %s303 = scalar_select %p302, %s20, 1
        %p304 = scmp.lt.s32.totalorder %s301, 15
        %s305 = scalar_select %p304, %s301, 15
        %s306 = smul.addr %s303, 16
        %s307 = sadd.s32 %s305, %s306
        %s308 = smul.addr %s307, 4
        %s309 = scalar_lea.vmem %s3, %s308
      $region44: #{rbdp_forward.3} parent=39 // pred_fallthru
        _
    $region40: #{rbdp_forward.3} parent=5 // pred_fallthru
      _
  $region6: #{rbdp_forward.3} parent=0 // loop_footer
    %s13 = sadd.s32 1, %s9
  $region7: #{rbdp_forward.3} parent=0 // loop_footer_branch
    %8 = sbr.rel target = $region3
  $region8: #{rbdp_forward.3} parent=0 // loop_exit
    _

// kernel: rbdp_forward.2
$region0: #{rbdp_forward.2}
  #allocation0 [shape = 'u32[]', space=smem, size = 0x4, offset = 0x4, fixed_abs, tag = 'smem constant byte address 0x4 - core index']
  #allocation1 [shape = 'u32[144,128]{1,0:T(1,128)}', space=vmem, size = 0x12000, scoped, tag = 'internal scratch']
  #allocation2 [shape = 'bf16[4,3072]{1,0:T(4,128)(2,1)}', space=vmem, size = 0x6000, scoped, tag = 'scratch operand']
  #allocation3 [shape = 'bf16[4,2816]{1,0:T(4,128)(2,1)}', space=vmem, size = 0x5800, scoped, tag = 'scratch operand']
  #allocation4 [shape = 'bf16[200,2048]{1,0:T(8,128)(2,1)}', space=vmem, size = 0xc8000, scoped, tag = 'scratch operand']
  %s0 = inlined_call_operand.vmem [shape: bf16[2,3,2816], index: 0, kind: input, shape index: {}]
  %s1 = inlined_call_operand.vmem [shape: f32[1,2816], index: 1, kind: input, shape index: {}]
  %s2 = inlined_call_operand.vmem [shape: bf16[4,3], index: 2, kind: input, shape index: {}]
  %s3 = inlined_call_operand.vmem [shape: f32[4,1], index: 3, kind: input, shape index: {}]
  %s4 = inlined_call_operand.vmem [shape: bf16[2,4,200], index: 4, kind: input, shape index: {}]
  %s5 = inlined_call_operand.vmem [shape: f32[2,4,1], index: 5, kind: input, shape index: {}]
  %s6 = inlined_call_operand.vmem [shape: bf16[2,4,2048], index: 6, kind: output, shape index: {0}]
  %s7 = inlined_call_operand.vmem [shape: f32[2,1,4,8], index: 7, kind: output, shape index: {1}]
  %8 = xla_tuple %s6, %s7
  %s9 = sld [smem:[#allocation0]]
  $region65: #{rbdp_forward.2} parent=0
    _
  %s11 = ssub.s32 1, %s9
  %s12 = scalar_select 0, %s11, %s9
  loop: start=0, step=1, limit=4
  $region2: #{rbdp_forward.2} parent=0 // loop_pre_header
    _
  $region3: #{rbdp_forward.2} parent=0 // loop_header
    %s14 = sphi 0, %s18
    %p15 = scmp.ge.s32.totalorder %s14, 4
    %s21 = sphi 0, %s33
    %s22 = sphi 0, %s29
    %s23 = sphi 0, %s21
    %s24 = sphi 0, %s22
    %s25 = sphi 0, %s23
    %s26 = sphi 0, %s24
    %s36 = sphi 0, %s38
    %s39 = sphi 0, %s36
    %s40 = sphi 0, %s39
    %s56 = sphi 0, %s40
    %s60 = sphi 0, %s60
    %s62 = sphi 0, %s60
    %s63 = sphi 0, %s62
    %s77 = sphi 0, %s63
    %s81 = sphi 0, %s81
    %s83 = sphi 0, %s81
    %s84 = sphi 0, %s83
    %s98 = sphi 0, %s84
    %s102 = sphi 0, %s102
    %s104 = sphi 0, %s102
    %s105 = sphi 0, %s104
    %s119 = sphi 0, %s105
    %s125 = sphi 0, %s127
    %s128 = sphi 0, %s125
    %s129 = sphi 0, %s128
    %s145 = sphi 0, %s129
    %s151 = sphi 0, %s153
    %s154 = sphi 0, %s151
    %s155 = sphi 0, %s154
    %s171 = sphi 0, %s155
    %s179 = sphi 0, %s181
    %s182 = sphi 0, %s179
    %s183 = sphi 0, %s182
    %s199 = sphi 0, %s183
    %s207 = sphi 0, %s209
    %s210 = sphi 0, %s207
    %s211 = sphi 0, %s210
    %s227 = sphi 0, %s211
  $region4: #{rbdp_forward.2} parent=0 // loop_header_branch
    %17 = sbr.rel (%p15) target = $region8
  $region5: #{rbdp_forward.2} parent=0 // loop_body
    %s19 = ssub.s32 %s14, 1
    %s20 = ssub.s32 %s14, 2
    %s27 = sadd.s32 1, %s22
    %p28 = scmp.ge.s32.totalorder %s27, 1
    %s29 = scalar_select %p28, 0, %s27
    %s30 = sadd.s32 1, %s21
    %s31 = scalar_select %p28, %s30, %s21
    %p32 = scmp.ge.s32.totalorder %s31, 2
    %s33 = scalar_select %p32, 0, %s31
    %s34 = ssub.s32 %s21, %s33
    %p35 = scmp.eq.s32.totalorder %s34, 0
    %s37 = sadd.s32 %s36, 1
    %s38 = scalar_select %p35, %s36, %s37
    %p41 = pneg %p35
    %p42 = scmp.eq.s32.totalorder %s14, 1
    %p43 = por %p41, %p42
    %p44 = scmp.ne.s32.totalorder %s36, %s39
    %p45 = scmp.eq.s32.totalorder %s14, 0
    %p46 = por %p44, %p45
    %p47 = scmp.ne.s32.totalorder %s36, %s39
    %p48 = scmp.eq.s32.totalorder %s19, 1
    %p49 = por %p47, %p48
    %p50 = scmp.ne.s32.totalorder %s39, %s40
    %p51 = scmp.eq.s32.totalorder %s19, 0
    %p52 = por %p50, %p51
    %p53 = scmp.ne.s32.totalorder %s39, %s40
    %p54 = scmp.eq.s32.totalorder %s20, 1
    %p55 = por %p53, %p54
    %p57 = scmp.ne.s32.totalorder %s40, %s56
    %p58 = scmp.eq.s32.totalorder %s20, 0
    %p59 = por %p57, %p58
    %s61 = sadd.s32 %s60, 1
    %p64 = scmp.eq.s32.totalorder %s14, 1
    %p65 = scmp.ne.s32.totalorder %s60, %s62
    %p66 = scmp.eq.s32.totalorder %s14, 0
    %p67 = por %p65, %p66
    %p68 = scmp.ne.s32.totalorder %s60, %s62
    %p69 = scmp.eq.s32.totalorder %s19, 1
    %p70 = por %p68, %p69
    %p71 = scmp.ne.s32.totalorder %s62, %s63
    %p72 = scmp.eq.s32.totalorder %s19, 0
    %p73 = por %p71, %p72
    %p74 = scmp.ne.s32.totalorder %s62, %s63
    %p75 = scmp.eq.s32.totalorder %s20, 1
    %p76 = por %p74, %p75
    %p78 = scmp.ne.s32.totalorder %s63, %s77
    %p79 = scmp.eq.s32.totalorder %s20, 0
    %p80 = por %p78, %p79
    %s82 = sadd.s32 %s81, 1
    %p85 = scmp.eq.s32.totalorder %s14, 1
    %p86 = scmp.ne.s32.totalorder %s81, %s83
    %p87 = scmp.eq.s32.totalorder %s14, 0
    %p88 = por %p86, %p87
    %p89 = scmp.ne.s32.totalorder %s81, %s83
    %p90 = scmp.eq.s32.totalorder %s19, 1
    %p91 = por %p89, %p90
    %p92 = scmp.ne.s32.totalorder %s83, %s84
    %p93 = scmp.eq.s32.totalorder %s19, 0
    %p94 = por %p92, %p93
    %p95 = scmp.ne.s32.totalorder %s83, %s84
    %p96 = scmp.eq.s32.totalorder %s20, 1
    %p97 = por %p95, %p96
    %p99 = scmp.ne.s32.totalorder %s84, %s98
    %p100 = scmp.eq.s32.totalorder %s20, 0
    %p101 = por %p99, %p100
    %s103 = sadd.s32 %s102, 1
    %p106 = scmp.eq.s32.totalorder %s14, 1
    %p107 = scmp.ne.s32.totalorder %s102, %s104
    %p108 = scmp.eq.s32.totalorder %s14, 0
    %p109 = por %p107, %p108
    %p110 = scmp.ne.s32.totalorder %s102, %s104
    %p111 = scmp.eq.s32.totalorder %s19, 1
    %p112 = por %p110, %p111
    %p113 = scmp.ne.s32.totalorder %s104, %s105
    %p114 = scmp.eq.s32.totalorder %s19, 0
    %p115 = por %p113, %p114
    %p116 = scmp.ne.s32.totalorder %s104, %s105
    %p117 = scmp.eq.s32.totalorder %s20, 1
    %p118 = por %p116, %p117
    %p120 = scmp.ne.s32.totalorder %s105, %s119
    %p121 = scmp.eq.s32.totalorder %s20, 0
    %p122 = por %p120, %p121
    %s123 = ssub.s32 %s21, %s33
    %p124 = scmp.eq.s32.totalorder %s123, 0
    %s126 = sadd.s32 %s125, 1
    %s127 = scalar_select %p124, %s125, %s126
    %p130 = pneg %p124
    %p131 = scmp.eq.s32.totalorder %s14, 1
    %p132 = por %p130, %p131
    %p133 = scmp.ne.s32.totalorder %s125, %s128
    %p134 = scmp.eq.s32.totalorder %s14, 0
    %p135 = por %p133, %p134
    %p136 = scmp.ne.s32.totalorder %s125, %s128
    %p137 = scmp.eq.s32.totalorder %s19, 1
    %p138 = por %p136, %p137
    %p139 = scmp.ne.s32.totalorder %s128, %s129
    %p140 = scmp.eq.s32.totalorder %s19, 0
    %p141 = por %p139, %p140
    %p142 = scmp.ne.s32.totalorder %s128, %s129
    %p143 = scmp.eq.s32.totalorder %s20, 1
    %p144 = por %p142, %p143
    %p146 = scmp.ne.s32.totalorder %s129, %s145
    %p147 = scmp.eq.s32.totalorder %s20, 0
    %p148 = por %p146, %p147
    %s149 = ssub.s32 %s21, %s33
    %p150 = scmp.eq.s32.totalorder %s149, 0
    %s152 = sadd.s32 %s151, 1
    %s153 = scalar_select %p150, %s151, %s152
    %p156 = pneg %p150
    %p157 = scmp.eq.s32.totalorder %s14, 1
    %p158 = por %p156, %p157
    %p159 = scmp.ne.s32.totalorder %s151, %s154
    %p160 = scmp.eq.s32.totalorder %s14, 0
    %p161 = por %p159, %p160
    %p162 = scmp.ne.s32.totalorder %s151, %s154
    %p163 = scmp.eq.s32.totalorder %s19, 1
    %p164 = por %p162, %p163
    %p165 = scmp.ne.s32.totalorder %s154, %s155
    %p166 = scmp.eq.s32.totalorder %s19, 0
    %p167 = por %p165, %p166
    %p168 = scmp.ne.s32.totalorder %s154, %s155
    %p169 = scmp.eq.s32.totalorder %s20, 1
    %p170 = por %p168, %p169
    %p172 = scmp.ne.s32.totalorder %s155, %s171
    %p173 = scmp.eq.s32.totalorder %s20, 0
    %p174 = por %p172, %p173
    %s175 = ssub.s32 %s21, %s33
    %s176 = ssub.s32 %s22, %s29
    %s177 = sor.u32 %s175, %s176
    %p178 = scmp.eq.s32.totalorder %s177, 0
    %s180 = sadd.s32 %s179, 1
    %s181 = scalar_select %p178, %s179, %s180
    %p184 = pneg %p178
    %p185 = scmp.eq.s32.totalorder %s14, 1
    %p186 = por %p184, %p185
    %p187 = scmp.ne.s32.totalorder %s179, %s182
    %p188 = scmp.eq.s32.totalorder %s14, 0
    %p189 = por %p187, %p188
    %p190 = scmp.ne.s32.totalorder %s179, %s182
    %p191 = scmp.eq.s32.totalorder %s19, 1
    %p192 = por %p190, %p191
    %p193 = scmp.ne.s32.totalorder %s182, %s183
    %p194 = scmp.eq.s32.totalorder %s19, 0
    %p195 = por %p193, %p194
    %p196 = scmp.ne.s32.totalorder %s182, %s183
    %p197 = scmp.eq.s32.totalorder %s20, 1
    %p198 = por %p196, %p197
    %p200 = scmp.ne.s32.totalorder %s183, %s199
    %p201 = scmp.eq.s32.totalorder %s20, 0
    %p202 = por %p200, %p201
    %s203 = ssub.s32 %s21, %s33
    %s204 = ssub.s32 %s22, %s29
    %s205 = sor.u32 %s203, %s204
    %p206 = scmp.eq.s32.totalorder %s205, 0
    %s208 = sadd.s32 %s207, 1
    %s209 = scalar_select %p206, %s207, %s208
    %p212 = pneg %p206
    %p213 = scmp.eq.s32.totalorder %s14, 1
    %p214 = por %p212, %p213
    %p215 = scmp.ne.s32.totalorder %s207, %s210
    %p216 = scmp.eq.s32.totalorder %s14, 0
    %p217 = por %p215, %p216
    %p218 = scmp.ne.s32.totalorder %s207, %s210
    %p219 = scmp.eq.s32.totalorder %s19, 1
    %p220 = por %p218, %p219
    %p221 = scmp.ne.s32.totalorder %s210, %s211
    %p222 = scmp.eq.s32.totalorder %s19, 0
    %p223 = por %p221, %p222
    %p224 = scmp.ne.s32.totalorder %s210, %s211
    %p225 = scmp.eq.s32.totalorder %s20, 1
    %p226 = por %p224, %p225
    %p228 = scmp.ne.s32.totalorder %s211, %s227
    %p229 = scmp.eq.s32.totalorder %s20, 0
    %p230 = por %p228, %p229
    %p231 = scmp.le.s32.totalorder 1, %s14
    %p232 = scmp.lt.s32.totalorder %s14, 3
    %p233 = pnand %p231, %p232
    %p234 = pneg %p233
    // Predicated region
    $region9: #{rbdp_forward.2} parent=5 // pred_check
      _
    $region10: #{rbdp_forward.2} parent=5 // pred_check_branch
      %236 = sbr.rel (%p233) target = $region12
    $region11: #{rbdp_forward.2} parent=5 // pred_region
      %s237 = ssub.s32 %s14, 1
      // Predicated region
      $region13: #{rbdp_forward.2} parent=11 // pred_check
        %p238 = pneg %p73
      $region14: #{rbdp_forward.2} parent=11 // pred_check_branch
        %240 = sbr.rel (%p238) target = $region16
      $region15: #{rbdp_forward.2} parent=11 // pred_region
        _
      $region16: #{rbdp_forward.2} parent=11 // pred_fallthru
        _
      // Predicated region
      $region17: #{rbdp_forward.2} parent=11 // pred_check
        %p241 = pneg %p94
      $region18: #{rbdp_forward.2} parent=11 // pred_check_branch
        %243 = sbr.rel (%p241) target = $region20
      $region19: #{rbdp_forward.2} parent=11 // pred_region
        _
      $region20: #{rbdp_forward.2} parent=11 // pred_fallthru
        _
      // Predicated region
      $region21: #{rbdp_forward.2} parent=11 // pred_check
        %p244 = pneg %p115
      $region22: #{rbdp_forward.2} parent=11 // pred_check_branch
        %246 = sbr.rel (%p244) target = $region24
      $region23: #{rbdp_forward.2} parent=11 // pred_region
        _
      $region24: #{rbdp_forward.2} parent=11 // pred_fallthru
        _
    $region12: #{rbdp_forward.2} parent=5 // pred_fallthru
      _
    %p247 = scmp.lt.s32.totalorder %s14, 2
    // Predicated region
    $region25: #{rbdp_forward.2} parent=5 // pred_check
      %p248 = pneg %p247
    $region26: #{rbdp_forward.2} parent=5 // pred_check_branch
      %250 = sbr.rel (%p248) target = $region28
    $region27: #{rbdp_forward.2} parent=5 // pred_region
      // Predicated region
      $region29: #{rbdp_forward.2} parent=27 // pred_check
        %p251 = pneg %p46
      $region30: #{rbdp_forward.2} parent=27 // pred_check_branch
        %253 = sbr.rel (%p251) target = $region32
      $region31: #{rbdp_forward.2} parent=27 // pred_region
        %p254 = scmp.lt.s32.totalorder %s21, 1
        %s255 = scalar_select %p254, %s21, 1
        %s256 = smul.addr %s255, 22
        %s257 = smul.addr %s256, 2
        %s258 = scalar_lea.vmem %s0, %s257
      $region32: #{rbdp_forward.2} parent=27 // pred_fallthru
        _
      // Predicated region
      $region33: #{rbdp_forward.2} parent=27 // pred_check
        %p259 = pneg %p135
      $region34: #{rbdp_forward.2} parent=27 // pred_check_branch
        %261 = sbr.rel (%p259) target = $region36
      $region35: #{rbdp_forward.2} parent=27 // pred_region
        %p262 = scmp.lt.s32.totalorder %s21, 1
        %s263 = scalar_select %p262, %s21, 1
        %s264 = smul.addr %s263, 2
        %s265 = smul.addr %s264, 2
        %s266 = scalar_lea.vmem %s4, %s265
      $region36: #{rbdp_forward.2} parent=27 // pred_fallthru
        _
      // Predicated region
      $region37: #{rbdp_forward.2} parent=27 // pred_check
        %p267 = pneg %p161
      $region38: #{rbdp_forward.2} parent=27 // pred_check_branch
        %269 = sbr.rel (%p267) target = $region40
      $region39: #{rbdp_forward.2} parent=27 // pred_region
        %p270 = scmp.lt.s32.totalorder %s21, 1
        %s271 = scalar_select %p270, %s21, 1
        %s272 = smul.addr %s271, 4
        %s273 = scalar_lea.vmem %s5, %s272
      $region40: #{rbdp_forward.2} parent=27 // pred_fallthru
        _
    $region28: #{rbdp_forward.2} parent=5 // pred_fallthru
      _
    %p274 = scmp.le.s32.totalorder 1, %s14
    %p275 = scmp.lt.s32.totalorder %s14, 3
    %p276 = pnand %p274, %p275
    %p277 = pneg %p276
    // Predicated region
    $region41: #{rbdp_forward.2} parent=5 // pred_check
      _
    $region42: #{rbdp_forward.2} parent=5 // pred_check_branch
      %279 = sbr.rel (%p276) target = $region44
    $region43: #{rbdp_forward.2} parent=5 // pred_region
      %s280 = ssub.s32 %s14, 1
      %p281 = scmp.lt.s32.totalorder %s23, 1
      %s282 = scalar_select %p281, %s23, 1
      %s283 = smul.addr %s282, 22
      %s284 = smul.addr %s283, 2
      %s285 = scalar_lea.vmem %s0, %s284
      %p286 = pneg %p52
      %p287 = pneg %p49
      %p288 = pneg %p73
      %p289 = pneg %p70
      %p290 = pneg %p94
      %p291 = pneg %p91
      %p292 = pneg %p115
      %p293 = pneg %p112
      %p294 = scmp.lt.s32.totalorder %s23, 1
      %s295 = scalar_select %p294, %s23, 1
      %s296 = smul.addr %s295, 2
      %s297 = smul.addr %s296, 2
      %s298 = scalar_lea.vmem %s4, %s297
      %p299 = pneg %p141
      %p300 = pneg %p138
      %p301 = scmp.lt.s32.totalorder %s23, 1
      %s302 = scalar_select %p301, %s23, 1
      %s303 = smul.addr %s302, 4
      %s304 = scalar_lea.vmem %s5, %s303
      %p305 = pneg %p167
      %p306 = pneg %p164
      %p307 = pneg %p195
      %p308 = pneg %p192
      %s309 = smul.u32 16, %s24
      %p310 = scmp.lt.s32.totalorder %s23, 1
      %s311 = scalar_select %p310, %s23, 1
      %p312 = scmp.lt.s32.totalorder %s309, 15
      %s313 = scalar_select %p312, %s309, 15
      %s314 = smul.addr %s311, 16
      %s315 = sadd.s32 %s313, %s314
      %s316 = smul.addr %s315, 2
      %s317 = scalar_lea.vmem %s6, %s316
      %p318 = pneg %p223
      %p319 = pneg %p220
      %p320 = scmp.lt.s32.totalorder %s23, 1
      %s321 = scalar_select %p320, %s23, 1
      %p322 = scmp.lt.s32.totalorder %s24, 0
      %s323 = scalar_select %p322, %s24, 0
      %s324 = sadd.s32 %s323, %s321
      %s325 = smul.addr %s324, 4
      %s326 = scalar_lea.vmem %s7, %s325
      %p327 = scmp.lt.s32.totalorder %s23, 1
      %s328 = scalar_select %p327, %s23, 1
      %s329 = smul.addr %s328, 22
      %s330 = smul.addr %s329, 2
      %s331 = scalar_lea.vmem %s0, %s330
      %p332 = scmp.lt.s32.totalorder %s23, 1
      %s333 = scalar_select %p332, %s23, 1
      %s334 = smul.addr %s333, 2
      %s335 = smul.addr %s334, 2
      %s336 = scalar_lea.vmem %s4, %s335
      %p337 = scmp.lt.s32.totalorder %s23, 1
      %s338 = scalar_select %p337, %s23, 1
      %s339 = smul.addr %s338, 4
      %s340 = scalar_lea.vmem %s5, %s339
      %s341 = smul.u32 16, %s24
      %p342 = scmp.lt.s32.totalorder %s23, 1
      %s343 = scalar_select %p342, %s23, 1
      %p344 = scmp.lt.s32.totalorder %s341, 15
      %s345 = scalar_select %p344, %s341, 15
      %s346 = smul.addr %s343, 16
      %s347 = sadd.s32 %s345, %s346
      %s348 = smul.addr %s347, 2
      %s349 = scalar_lea.vmem %s6, %s348
      %s350 = smul.u32 16, %s24
      %p351 = scmp.lt.s32.totalorder %s23, 1
      %s352 = scalar_select %p351, %s23, 1
      %p353 = scmp.lt.s32.totalorder %s24, 0
      %s354 = scalar_select %p353, %s24, 0
      %s355 = sadd.s32 %s354, %s352
      %s356 = smul.addr %s355, 4
      %s357 = scalar_lea.vmem %s7, %s356
      %s359 = smul.u32 %s24, 2048
      %360 = vst [vmem:[#allocation2] sm:$0x3] 0
      %361 = vst [vmem:[#allocation2 + $0x2e] sm:$0x3] 0
      %s362 = sshra.s32 %s359, 7
      %s363 = sand.u32 %s359, 127
      %s364 = smul.addr %s362, 2
      %s365 = scalar_lea.vmem %s331, %s364
      %v366 = vld [vmem:[%s365] sm:$0xff]
      %v367 = vld [vmem:[%s365 + $0x8] sm:$0xff]
      %v368 = vld [vmem:[%s365 + $0x10] sm:$0xff]
      %v369 = vld [vmem:[%s365 + $0x18] sm:$0xff]
      %v370 = vld [vmem:[%s365 + $0x20] sm:$0xff]
      %v371 = vld [vmem:[%s365 + $0x28] sm:$0xf]
      %s372 = scalar_lea.vmem %s1, %s362
      %v373 = vld [vmem:[%s372] sm:$0xff]
      %v374 = vld [vmem:[%s372 + $0x8] sm:$0xff]
      %v375 = vld [vmem:[%s372 + $0x10] sm:$0x3f]
      %v376 = vld [vmem:[%s2] sm:$0x3]
      %v377 = vld [vmem:[%s3] sm:$0xf]
      %379 = vset.pattern.permute.xlu0 0
      %380 = vperm.xlu0 %379, %v377
      %v381 = vpop.permute.xlu0 %380
      %v389 = vcombine.high %v366, %v366
      %v391 = vunpack.c.l.s4 1983009808
      %v392 = vunpack.c.0.s8 %v391
      %v393 = vlaneseq
      %v394 = vshrl.u32 %v393, 7
      %v395 = vsub.s32 %v392, %v394
      %v396 = vrot.slane %v366, %v395
      %v398 = vunpack.c.l.s4 1983009808
      %v399 = vunpack.c.0.s8 %v398
      %v400 = vlaneseq
      %v401 = vshrl.u32 %v400, 7
      %v402 = vsub.s32 %v399, %v401
      %v403 = vrot.slane %v389, %v402
      %v404 = vcombine.high %v396, %v396
      %v405 = vcombine.high %v403, %v403
      %v406 = vcombine.high %v367, %v367
      %v408 = vunpack.c.l.s4 1983009808
      %v409 = vunpack.c.0.s8 %v408
      %v410 = vlaneseq
      %v411 = vshrl.u32 %v410, 7
      %v412 = vsub.s32 %v409, %v411
      %v413 = vrot.slane %v367, %v412
      %v415 = vunpack.c.l.s4 1983009808
      %v416 = vunpack.c.0.s8 %v415
      %v417 = vlaneseq
      %v418 = vshrl.u32 %v417, 7
      %v419 = vsub.s32 %v416, %v418
      %v420 = vrot.slane %v406, %v419
      %v421 = vcombine.high %v413, %v413
      %v422 = vcombine.high %v420, %v420
      %v423 = vcombine.high %v368, %v368
      %v425 = vunpack.c.l.s4 1983009808
      %v426 = vunpack.c.0.s8 %v425
      %v427 = vlaneseq
      %v428 = vshrl.u32 %v427, 7
      %v429 = vsub.s32 %v426, %v428
      %v430 = vrot.slane %v368, %v429
      %v432 = vunpack.c.l.s4 1983009808
      %v433 = vunpack.c.0.s8 %v432
      %v434 = vlaneseq
      %v435 = vshrl.u32 %v434, 7
      %v436 = vsub.s32 %v433, %v435
      %v437 = vrot.slane %v423, %v436
      %v438 = vcombine.high %v430, %v430
      %v439 = vcombine.high %v437, %v437
      %v440 = vcombine.high %v369, %v369
      %v442 = vunpack.c.l.s4 1983009808
      %v443 = vunpack.c.0.s8 %v442
      %v444 = vlaneseq
      %v445 = vshrl.u32 %v444, 7
      %v446 = vsub.s32 %v443, %v445
      %v447 = vrot.slane %v369, %v446
      %v449 = vunpack.c.l.s4 1983009808
      %v450 = vunpack.c.0.s8 %v449
      %v451 = vlaneseq
      %v452 = vshrl.u32 %v451, 7
      %v453 = vsub.s32 %v450, %v452
      %v454 = vrot.slane %v440, %v453
      %v455 = vcombine.high %v447, %v447
      %v456 = vcombine.high %v454, %v454
      %v457 = vcombine.high %v370, %v370
      %v459 = vunpack.c.l.s4 1983009808
      %v460 = vunpack.c.0.s8 %v459
      %v461 = vlaneseq
      %v462 = vshrl.u32 %v461, 7
      %v463 = vsub.s32 %v460, %v462
      %v464 = vrot.slane %v370, %v463
      %v466 = vunpack.c.l.s4 1983009808
      %v467 = vunpack.c.0.s8 %v466
      %v468 = vlaneseq
      %v469 = vshrl.u32 %v468, 7
      %v470 = vsub.s32 %v467, %v469
      %v471 = vrot.slane %v457, %v470
      %v472 = vcombine.high %v464, %v464
      %v473 = vcombine.high %v471, %v471
      %v475 = vunpack.c.l.s4 1983009808
      %v476 = vunpack.c.0.s8 %v475
      %v477 = vlaneseq
      %v478 = vshrl.u32 %v477, 7
      %v479 = vsub.s32 %v476, %v478
      %v480 = vrot.slane %v371, %v479
      %v481 = vcombine.high %v480, %v480
      %vm482 = vcmask 23552
      %v484 = vsel %vm482, %v376, 0
      %vm486 = vcmask 1040384
      %vm487 = vcmask 1041408
      %v488 = vsel %vm486, 4294967295, 65535
      %v489 = vsel %vm487, %v488, 0
      %v491 = vand.u32 %v396, %v489
      %v494 = vand.u32 %v404, %v489
      %v497 = vand.u32 %v403, %v489
      %v500 = vand.u32 %v405, %v489
      %v503 = vand.u32 %v413, %v489
      %v506 = vand.u32 %v421, %v489
      %v509 = vand.u32 %v420, %v489
      %v512 = vand.u32 %v422, %v489
      %v515 = vand.u32 %v430, %v489
      %v518 = vand.u32 %v438, %v489
      %v521 = vand.u32 %v437, %v489
      %v524 = vand.u32 %v439, %v489
      %v527 = vand.u32 %v447, %v489
      %v530 = vand.u32 %v455, %v489
      %v533 = vand.u32 %v454, %v489
      %v536 = vand.u32 %v456, %v489
      %v539 = vand.u32 %v464, %v489
      %v542 = vand.u32 %v472, %v489
      %v545 = vand.u32 %v471, %v489
      %v548 = vand.u32 %v473, %v489
      %v551 = vand.u32 %v480, %v489
      %v554 = vand.u32 %v481, %v489
      %556 = vmatprep.subr.bf16.mxu0 %v494
      %557 = vmatpush1.bf16.msra.mxu0 %v491
      %558 = vmatprep.subr.bf16.mxu0 0
      %559 = vmatpush1.bf16.msra.mxu0 0
      %560 = vmatprep.subr.bf16.mxu0 0
      %561 = vmatpush1.bf16.msra.mxu0 0
      %562 = vmatprep.subr.bf16.mxu0 0
      %563 = vmatpush1.bf16.msra.mxu0 0
      %564 = vmatprep.subr.bf16.mxu0 0
      %565 = vmatpush1.bf16.msra.mxu0 0
      %566 = vmatprep.subr.bf16.mxu0 0
      %567 = vmatpush1.bf16.msra.mxu0 0
      %568 = vmatprep.subr.bf16.mxu0 0
      %569 = vmatpush1.bf16.msra.mxu0 0
      %570 = vmatprep.subr.bf16.mxu0 0
      %571 = vmatpush1.bf16.msra.mxu0 0
      %572 = vmatprep.subr.bf16.mxu0 0
      %573 = vmatpush1.bf16.msra.mxu0 0
      %574 = vmatprep.subr.bf16.mxu0 0
      %575 = vmatpush1.bf16.msra.mxu0 0
      %576 = vmatprep.subr.bf16.mxu0 0
      %577 = vmatpush1.bf16.msra.mxu0 0
      %578 = vmatprep.subr.bf16.mxu0 0
      %579 = vmatpush1.bf16.msra.mxu0 0
      %580 = vmatprep.subr.bf16.mxu0 0
      %581 = vmatpush1.bf16.msra.mxu0 0
      %582 = vmatprep.subr.bf16.mxu0 0
      %583 = vmatpush1.bf16.msra.mxu0 0
      %584 = vmatprep.subr.bf16.mxu0 0
      %585 = vmatpush1.bf16.msra.mxu0 0
      %586 = vmatprep.subr.bf16.mxu0 0
      %587 = vmatpush1.bf16.msra.mxu0 0
      %588 = vmatprep.mubr.bf16.mxu0 0
      %589 = vmatmul.mubr.bf16.gmra.mrb[0].mxu0 %v484
      %v590 = vpop.f32.mrb[0].mxu0
      %v591 = vadd.f32 %v381, %v590
      %v592 = vpop.f32.mrb[0].mxu0
      %v593 = vadd.f32 %v381, %v592
      %v594 = vpop.f32.mrb[0].mxu0
      %v595 = vpop.f32.mrb[0].mxu0
      %596 = vdwg.mxu0
      %597 = vmatprep.subr.bf16.mxu0 %v500
      %598 = vmatpush1.bf16.msra.mxu0 %v497
      %599 = vmatprep.subr.bf16.mxu0 0
      %600 = vmatpush1.bf16.msra.mxu0 0
      %601 = vmatprep.subr.bf16.mxu0 0
      %602 = vmatpush1.bf16.msra.mxu0 0
      %603 = vmatprep.subr.bf16.mxu0 0
      %604 = vmatpush1.bf16.msra.mxu0 0
      %605 = vmatprep.subr.bf16.mxu0 0
      %606 = vmatpush1.bf16.msra.mxu0 0
      %607 = vmatprep.subr.bf16.mxu0 0
      %608 = vmatpush1.bf16.msra.mxu0 0
      %609 = vmatprep.subr.bf16.mxu0 0
      %610 = vmatpush1.bf16.msra.mxu0 0
      %611 = vmatprep.subr.bf16.mxu0 0
      %612 = vmatpush1.bf16.msra.mxu0 0
      %613 = vmatprep.subr.bf16.mxu0 0
      %614 = vmatpush1.bf16.msra.mxu0 0
      %615 = vmatprep.subr.bf16.mxu0 0
      %616 = vmatpush1.bf16.msra.mxu0 0
      %617 = vmatprep.subr.bf16.mxu0 0
      %618 = vmatpush1.bf16.msra.mxu0 0
      %619 = vmatprep.subr.bf16.mxu0 0
      %620 = vmatpush1.bf16.msra.mxu0 0
      %621 = vmatprep.subr.bf16.mxu0 0
      %622 = vmatpush1.bf16.msra.mxu0 0
      %623 = vmatprep.subr.bf16.mxu0 0
      %624 = vmatpush1.bf16.msra.mxu0 0
      %625 = vmatprep.subr.bf16.mxu0 0
      %626 = vmatpush1.bf16.msra.mxu0 0
      %627 = vmatprep.subr.bf16.mxu0 0
      %628 = vmatpush1.bf16.msra.mxu0 0
      %629 = vmatprep.mubr.bf16.mxu0 0
      %630 = vmatmul.mubr.bf16.gmra.mrb[0].mxu0 %v484
      %v631 = vpop.f32.mrb[0].mxu0
      %v632 = vadd.f32 %v381, %v631
      %v633 = vpop.f32.mrb[0].mxu0
      %v634 = vadd.f32 %v381, %v633
      %v635 = vpop.f32.mrb[0].mxu0
      %v636 = vpop.f32.mrb[0].mxu0
      %637 = vdwg.mxu0
      %638 = vmatprep.subr.bf16.mxu0 %v506
      %639 = vmatpush1.bf16.msra.mxu0 %v503
      %640 = vmatprep.subr.bf16.mxu0 0
      %641 = vmatpush1.bf16.msra.mxu0 0
      %642 = vmatprep.subr.bf16.mxu0 0
      %643 = vmatpush1.bf16.msra.mxu0 0
      %644 = vmatprep.subr.bf16.mxu0 0
      %645 = vmatpush1.bf16.msra.mxu0 0
      %646 = vmatprep.subr.bf16.mxu0 0
      %647 = vmatpush1.bf16.msra.mxu0 0
      %648 = vmatprep.subr.bf16.mxu0 0
      %649 = vmatpush1.bf16.msra.mxu0 0
      %650 = vmatprep.subr.bf16.mxu0 0
      %651 = vmatpush1.bf16.msra.mxu0 0
      %652 = vmatprep.subr.bf16.mxu0 0
      %653 = vmatpush1.bf16.msra.mxu0 0
      %654 = vmatprep.subr.bf16.mxu0 0
      %655 = vmatpush1.bf16.msra.mxu0 0
      %656 = vmatprep.subr.bf16.mxu0 0
      %657 = vmatpush1.bf16.msra.mxu0 0
      %658 = vmatprep.subr.bf16.mxu0 0
      %659 = vmatpush1.bf16.msra.mxu0 0
      %660 = vmatprep.subr.bf16.mxu0 0
      %661 = vmatpush1.bf16.msra.mxu0 0
      %662 = vmatprep.subr.bf16.mxu0 0
      %663 = vmatpush1.bf16.msra.mxu0 0
      %664 = vmatprep.subr.bf16.mxu0 0
      %665 = vmatpush1.bf16.msra.mxu0 0
      %666 = vmatprep.subr.bf16.mxu0 0
      %667 = vmatpush1.bf16.msra.mxu0 0
      %668 = vmatprep.subr.bf16.mxu0 0
      %669 = vmatpush1.bf16.msra.mxu0 0
      %670 = vmatprep.mubr.bf16.mxu0 0
      %671 = vmatmul.mubr.bf16.gmra.mrb[0].mxu0 %v484
      %v672 = vpop.f32.mrb[0].mxu0
      %v673 = vadd.f32 %v381, %v672
      %v674 = vpop.f32.mrb[0].mxu0
      %v675 = vadd.f32 %v381, %v674
      %v676 = vpop.f32.mrb[0].mxu0
      %v677 = vpop.f32.mrb[0].mxu0
      %678 = vdwg.mxu0
      %679 = vmatprep.subr.bf16.mxu0 %v512
      %680 = vmatpush1.bf16.msra.mxu0 %v509
      %681 = vmatprep.subr.bf16.mxu0 0
      %682 = vmatpush1.bf16.msra.mxu0 0
      %683 = vmatprep.subr.bf16.mxu0 0
      %684 = vmatpush1.bf16.msra.mxu0 0
      %685 = vmatprep.subr.bf16.mxu0 0
      %686 = vmatpush1.bf16.msra.mxu0 0
      %687 = vmatprep.subr.bf16.mxu0 0
      %688 = vmatpush1.bf16.msra.mxu0 0
      %689 = vmatprep.subr.bf16.mxu0 0
      %690 = vmatpush1.bf16.msra.mxu0 0
      %691 = vmatprep.subr.bf16.mxu0 0
      %692 = vmatpush1.bf16.msra.mxu0 0
      %693 = vmatprep.subr.bf16.mxu0 0
      %694 = vmatpush1.bf16.msra.mxu0 0
      %695 = vmatprep.subr.bf16.mxu0 0
      %696 = vmatpush1.bf16.msra.mxu0 0
      %697 = vmatprep.subr.bf16.mxu0 0
      %698 = vmatpush1.bf16.msra.mxu0 0
      %699 = vmatprep.subr.bf16.mxu0 0
      %700 = vmatpush1.bf16.msra.mxu0 0
      %701 = vmatprep.subr.bf16.mxu0 0
      %702 = vmatpush1.bf16.msra.mxu0 0
      %703 = vmatprep.subr.bf16.mxu0 0
      %704 = vmatpush1.bf16.msra.mxu0 0
      %705 = vmatprep.subr.bf16.mxu0 0
      %706 = vmatpush1.bf16.msra.mxu0 0
      %707 = vmatprep.subr.bf16.mxu0 0
      %708 = vmatpush1.bf16.msra.mxu0 0
      %709 = vmatprep.subr.bf16.mxu0 0
      %710 = vmatpush1.bf16.msra.mxu0 0
      %711 = vmatprep.mubr.bf16.mxu0 0
      %712 = vmatmul.mubr.bf16.gmra.mrb[0].mxu0 %v484
      %v713 = vpop.f32.mrb[0].mxu0
      %v714 = vadd.f32 %v381, %v713
      %v715 = vpop.f32.mrb[0].mxu0
      %v716 = vadd.f32 %v381, %v715
      %v717 = vpop.f32.mrb[0].mxu0
      %v718 = vpop.f32.mrb[0].mxu0
      %719 = vdwg.mxu0
      %720 = vmatprep.subr.bf16.mxu0 %v518
      %721 = vmatpush1.bf16.msra.mxu0 %v515
      %722 = vmatprep.subr.bf16.mxu0 0
      %723 = vmatpush1.bf16.msra.mxu0 0
      %724 = vmatprep.subr.bf16.mxu0 0
      %725 = vmatpush1.bf16.msra.mxu0 0
      %726 = vmatprep.subr.bf16.mxu0 0
      %727 = vmatpush1.bf16.msra.mxu0 0
      %728 = vmatprep.subr.bf16.mxu0 0
      %729 = vmatpush1.bf16.msra.mxu0 0
      %730 = vmatprep.subr.bf16.mxu0 0
      %731 = vmatpush1.bf16.msra.mxu0 0
      %732 = vmatprep.subr.bf16.mxu0 0
      %733 = vmatpush1.bf16.msra.mxu0 0
      %734 = vmatprep.subr.bf16.mxu0 0
      %735 = vmatpush1.bf16.msra.mxu0 0
      %736 = vmatprep.subr.bf16.mxu0 0
      %737 = vmatpush1.bf16.msra.mxu0 0
      %738 = vmatprep.subr.bf16.mxu0 0
      %739 = vmatpush1.bf16.msra.mxu0 0
      %740 = vmatprep.subr.bf16.mxu0 0
      %741 = vmatpush1.bf16.msra.mxu0 0
      %742 = vmatprep.subr.bf16.mxu0 0
      %743 = vmatpush1.bf16.msra.mxu0 0
      %744 = vmatprep.subr.bf16.mxu0 0
      %745 = vmatpush1.bf16.msra.mxu0 0
      %746 = vmatprep.subr.bf16.mxu0 0
      %747 = vmatpush1.bf16.msra.mxu0 0
      %748 = vmatprep.subr.bf16.mxu0 0
      %749 = vmatpush1.bf16.msra.mxu0 0
      %750 = vmatprep.subr.bf16.mxu0 0
      %751 = vmatpush1.bf16.msra.mxu0 0
      %752 = vmatprep.mubr.bf16.mxu0 0
      %753 = vmatmul.mubr.bf16.gmra.mrb[0].mxu0 %v484
      %v754 = vpop.f32.mrb[0].mxu0
      %v755 = vadd.f32 %v381, %v754
      %v756 = vpop.f32.mrb[0].mxu0
      %v757 = vadd.f32 %v381, %v756
      %v758 = vpop.f32.mrb[0].mxu0
      %v759 = vpop.f32.mrb[0].mxu0
      %760 = vdwg.mxu0
      %761 = vmatprep.subr.bf16.mxu0 %v524
      %762 = vmatpush1.bf16.msra.mxu0 %v521
      %763 = vmatprep.subr.bf16.mxu0 0
      %764 = vmatpush1.bf16.msra.mxu0 0
      %765 = vmatprep.subr.bf16.mxu0 0
      %766 = vmatpush1.bf16.msra.mxu0 0
      %767 = vmatprep.subr.bf16.mxu0 0
      %768 = vmatpush1.bf16.msra.mxu0 0
      %769 = vmatprep.subr.bf16.mxu0 0
      %770 = vmatpush1.bf16.msra.mxu0 0
      %771 = vmatprep.subr.bf16.mxu0 0
      %772 = vmatpush1.bf16.msra.mxu0 0
      %773 = vmatprep.subr.bf16.mxu0 0
      %774 = vmatpush1.bf16.msra.mxu0 0
      %775 = vmatprep.subr.bf16.mxu0 0
      %776 = vmatpush1.bf16.msra.mxu0 0
      %777 = vmatprep.subr.bf16.mxu0 0
      %778 = vmatpush1.bf16.msra.mxu0 0
      %779 = vmatprep.subr.bf16.mxu0 0
      %780 = vmatpush1.bf16.msra.mxu0 0
      %781 = vmatprep.subr.bf16.mxu0 0
      %782 = vmatpush1.bf16.msra.mxu0 0
      %783 = vmatprep.subr.bf16.mxu0 0
      %784 = vmatpush1.bf16.msra.mxu0 0
      %785 = vmatprep.subr.bf16.mxu0 0
      %786 = vmatpush1.bf16.msra.mxu0 0
      %787 = vmatprep.subr.bf16.mxu0 0
      %788 = vmatpush1.bf16.msra.mxu0 0
      %789 = vmatprep.subr.bf16.mxu0 0
      %790 = vmatpush1.bf16.msra.mxu0 0
      %791 = vmatprep.subr.bf16.mxu0 0
      %792 = vmatpush1.bf16.msra.mxu0 0
      %793 = vmatprep.mubr.bf16.mxu0 0
      %794 = vmatmul.mubr.bf16.gmra.mrb[0].mxu0 %v484
      %v795 = vpop.f32.mrb[0].mxu0
      %v796 = vadd.f32 %v381, %v795
      %v797 = vpop.f32.mrb[0].mxu0
      %v798 = vadd.f32 %v381, %v797
      %v799 = vpop.f32.mrb[0].mxu0
      %v800 = vpop.f32.mrb[0].mxu0
      %801 = vdwg.mxu0
      %802 = vmatprep.subr.bf16.mxu0 %v530
      %803 = vmatpush1.bf16.msra.mxu0 %v527
      %804 = vmatprep.subr.bf16.mxu0 0
      %805 = vmatpush1.bf16.msra.mxu0 0
      %806 = vmatprep.subr.bf16.mxu0 0
      %807 = vmatpush1.bf16.msra.mxu0 0
      %808 = vmatprep.subr.bf16.mxu0 0
      %809 = vmatpush1.bf16.msra.mxu0 0
      %810 = vmatprep.subr.bf16.mxu0 0
      %811 = vmatpush1.bf16.msra.mxu0 0
      %812 = vmatprep.subr.bf16.mxu0 0
      %813 = vmatpush1.bf16.msra.mxu0 0
      %814 = vmatprep.subr.bf16.mxu0 0
      %815 = vmatpush1.bf16.msra.mxu0 0
      %816 = vmatprep.subr.bf16.mxu0 0
      %817 = vmatpush1.bf16.msra.mxu0 0
      %818 = vmatprep.subr.bf16.mxu0 0
      %819 = vmatpush1.bf16.msra.mxu0 0
      %820 = vmatprep.subr.bf16.mxu0 0
      %821 = vmatpush1.bf16.msra.mxu0 0
      %822 = vmatprep.subr.bf16.mxu0 0
      %823 = vmatpush1.bf16.msra.mxu0 0
      %824 = vmatprep.subr.bf16.mxu0 0
      %825 = vmatpush1.bf16.msra.mxu0 0
      %826 = vmatprep.subr.bf16.mxu0 0
      %827 = vmatpush1.bf16.msra.mxu0 0
      %828 = vmatprep.subr.bf16.mxu0 0
      %829 = vmatpush1.bf16.msra.mxu0 0
      %830 = vmatprep.subr.bf16.mxu0 0
      %831 = vmatpush1.bf16.msra.mxu0 0
      %832 = vmatprep.subr.bf16.mxu0 0
      %833 = vmatpush1.bf16.msra.mxu0 0
      %834 = vmatprep.mubr.bf16.mxu0 0
      %835 = vmatmul.mubr.bf16.gmra.mrb[0].mxu0 %v484
      %v836 = vpop.f32.mrb[0].mxu0
      %v837 = vadd.f32 %v381, %v836
      %v838 = vpop.f32.mrb[0].mxu0
      %v839 = vadd.f32 %v381, %v838
      %v840 = vpop.f32.mrb[0].mxu0
      %v841 = vpop.f32.mrb[0].mxu0
      %842 = vdwg.mxu0
      %843 = vmatprep.subr.bf16.mxu0 %v536
      %844 = vmatpush1.bf16.msra.mxu0 %v533
      %845 = vmatprep.subr.bf16.mxu0 0
      %846 = vmatpush1.bf16.msra.mxu0 0
      %847 = vmatprep.subr.bf16.mxu0 0
      %848 = vmatpush1.bf16.msra.mxu0 0
      %849 = vmatprep.subr.bf16.mxu0 0
      %850 = vmatpush1.bf16.msra.mxu0 0
      %851 = vmatprep.subr.bf16.mxu0 0
      %852 = vmatpush1.bf16.msra.mxu0 0
      %853 = vmatprep.subr.bf16.mxu0 0
      %854 = vmatpush1.bf16.msra.mxu0 0
      %855 = vmatprep.subr.bf16.mxu0 0
      %856 = vmatpush1.bf16.msra.mxu0 0
      %857 = vmatprep.subr.bf16.mxu0 0
      %858 = vmatpush1.bf16.msra.mxu0 0
      %859 = vmatprep.subr.bf16.mxu0 0
      %860 = vmatpush1.bf16.msra.mxu0 0
      %861 = vmatprep.subr.bf16.mxu0 0
      %862 = vmatpush1.bf16.msra.mxu0 0
      %863 = vmatprep.subr.bf16.mxu0 0
      %864 = vmatpush1.bf16.msra.mxu0 0
      %865 = vmatprep.subr.bf16.mxu0 0
      %866 = vmatpush1.bf16.msra.mxu0 0
      %867 = vmatprep.subr.bf16.mxu0 0
      %868 = vmatpush1.bf16.msra.mxu0 0
      %869 = vmatprep.subr.bf16.mxu0 0
      %870 = vmatpush1.bf16.msra.mxu0 0
      %871 = vmatprep.subr.bf16.mxu0 0
      %872 = vmatpush1.bf16.msra.mxu0 0
      %873 = vmatprep.subr.bf16.mxu0 0
      %874 = vmatpush1.bf16.msra.mxu0 0
      %875 = vmatprep.mubr.bf16.mxu0 0
      %876 = vmatmul.mubr.bf16.gmra.mrb[0].mxu0 %v484
      %v877 = vpop.f32.mrb[0].mxu0
      %v878 = vadd.f32 %v381, %v877
      %v879 = vpop.f32.mrb[0].mxu0
      %v880 = vadd.f32 %v381, %v879
      %v881 = vpop.f32.mrb[0].mxu0
      %v882 = vpop.f32.mrb[0].mxu0
      %883 = vdwg.mxu0
      %884 = vmatprep.subr.bf16.mxu0 %v542
      %885 = vmatpush1.bf16.msra.mxu0 %v539
      %886 = vmatprep.subr.bf16.mxu0 0
      %887 = vmatpush1.bf16.msra.mxu0 0
      %888 = vmatprep.subr.bf16.mxu0 0
      %889 = vmatpush1.bf16.msra.mxu0 0
      %890 = vmatprep.subr.bf16.mxu0 0
      %891 = vmatpush1.bf16.msra.mxu0 0
      %892 = vmatprep.subr.bf16.mxu0 0
      %893 = vmatpush1.bf16.msra.mxu0 0
      %894 = vmatprep.subr.bf16.mxu0 0
      %895 = vmatpush1.bf16.msra.mxu0 0
      %896 = vmatprep.subr.bf16.mxu0 0
      %897 = vmatpush1.bf16.msra.mxu0 0
      %898 = vmatprep.subr.bf16.mxu0 0
      %899 = vmatpush1.bf16.msra.mxu0 0
      %900 = vmatprep.subr.bf16.mxu0 0
      %901 = vmatpush1.bf16.msra.mxu0 0
      %902 = vmatprep.subr.bf16.mxu0 0
      %903 = vmatpush1.bf16.msra.mxu0 0
      %904 = vmatprep.subr.bf16.mxu0 0
      %905 = vmatpush1.bf16.msra.mxu0 0
      %906 = vmatprep.subr.bf16.mxu0 0
      %907 = vmatpush1.bf16.msra.mxu0 0
      %908 = vmatprep.subr.bf16.mxu0 0
      %909 = vmatpush1.bf16.msra.mxu0 0
      %910 = vmatprep.subr.bf16.mxu0 0
      %911 = vmatpush1.bf16.msra.mxu0 0
      %912 = vmatprep.subr.bf16.mxu0 0
      %913 = vmatpush1.bf16.msra.mxu0 0
      %914 = vmatprep.subr.bf16.mxu0 0
      %915 = vmatpush1.bf16.msra.mxu0 0
      %916 = vmatprep.mubr.bf16.mxu0 0
      %917 = vmatmul.mubr.bf16.gmra.mrb[0].mxu0 %v484
      %v918 = vpop.f32.mrb[0].mxu0
      %v919 = vadd.f32 %v381, %v918
      %v920 = vpop.f32.mrb[0].mxu0
      %v921 = vadd.f32 %v381, %v920
      %v922 = vpop.f32.mrb[0].mxu0
      %v923 = vpop.f32.mrb[0].mxu0
      %924 = vdwg.mxu0
      %925 = vmatprep.subr.bf16.mxu0 %v548
      %926 = vmatpush1.bf16.msra.mxu0 %v545
      %927 = vmatprep.subr.bf16.mxu0 0
      %928 = vmatpush1.bf16.msra.mxu0 0
      %929 = vmatprep.subr.bf16.mxu0 0
      %930 = vmatpush1.bf16.msra.mxu0 0
      %931 = vmatprep.subr.bf16.mxu0 0
      %932 = vmatpush1.bf16.msra.mxu0 0
      %933 = vmatprep.subr.bf16.mxu0 0
      %934 = vmatpush1.bf16.msra.mxu0 0
      %935 = vmatprep.subr.bf16.mxu0 0
      %936 = vmatpush1.bf16.msra.mxu0 0
      %937 = vmatprep.subr.bf16.mxu0 0
      %938 = vmatpush1.bf16.msra.mxu0 0
      %939 = vmatprep.subr.bf16.mxu0 0
      %940 = vmatpush1.bf16.msra.mxu0 0
      %941 = vmatprep.subr.bf16.mxu0 0
      %942 = vmatpush1.bf16.msra.mxu0 0
      %943 = vmatprep.subr.bf16.mxu0 0
      %944 = vmatpush1.bf16.msra.mxu0 0
      %945 = vmatprep.subr.bf16.mxu0 0
      %946 = vmatpush1.bf16.msra.mxu0 0
      %947 = vmatprep.subr.bf16.mxu0 0
      %948 = vmatpush1.bf16.msra.mxu0 0
      %949 = vmatprep.subr.bf16.mxu0 0
      %950 = vmatpush1.bf16.msra.mxu0 0
      %951 = vmatprep.subr.bf16.mxu0 0
      %952 = vmatpush1.bf16.msra.mxu0 0
      %953 = vmatprep.subr.bf16.mxu0 0
      %954 = vmatpush1.bf16.msra.mxu0 0
      %955 = vmatprep.subr.bf16.mxu0 0
      %956 = vmatpush1.bf16.msra.mxu0 0
      %957 = vmatprep.mubr.bf16.mxu0 0
      %958 = vmatmul.mubr.bf16.gmra.mrb[0].mxu0 %v484
      %v959 = vpop.f32.mrb[0].mxu0
      %v960 = vadd.f32 %v381, %v959
      %v961 = vpop.f32.mrb[0].mxu0
      %v962 = vadd.f32 %v381, %v961
      %v963 = vpop.f32.mrb[0].mxu0
      %v964 = vpop.f32.mrb[0].mxu0
      %965 = vdwg.mxu0
      %966 = vmatprep.subr.bf16.mxu0 %v554
      %967 = vmatpush1.bf16.msra.mxu0 %v551
      %968 = vmatprep.subr.bf16.mxu0 0
      %969 = vmatpush1.bf16.msra.mxu0 0
      %970 = vmatprep.subr.bf16.mxu0 0
      %971 = vmatpush1.bf16.msra.mxu0 0
      %972 = vmatprep.subr.bf16.mxu0 0
      %973 = vmatpush1.bf16.msra.mxu0 0
      %974 = vmatprep.subr.bf16.mxu0 0
      %975 = vmatpush1.bf16.msra.mxu0 0
      %976 = vmatprep.subr.bf16.mxu0 0
      %977 = vmatpush1.bf16.msra.mxu0 0
      %978 = vmatprep.subr.bf16.mxu0 0
      %979 = vmatpush1.bf16.msra.mxu0 0
      %980 = vmatprep.subr.bf16.mxu0 0
      %981 = vmatpush1.bf16.msra.mxu0 0
      %982 = vmatprep.subr.bf16.mxu0 0
      %983 = vmatpush1.bf16.msra.mxu0 0
      %984 = vmatprep.subr.bf16.mxu0 0
      %985 = vmatpush1.bf16.msra.mxu0 0
      %986 = vmatprep.subr.bf16.mxu0 0
      %987 = vmatpush1.bf16.msra.mxu0 0
      %988 = vmatprep.subr.bf16.mxu0 0
      %989 = vmatpush1.bf16.msra.mxu0 0
      %990 = vmatprep.subr.bf16.mxu0 0
      %991 = vmatpush1.bf16.msra.mxu0 0
      %992 = vmatprep.subr.bf16.mxu0 0
      %993 = vmatpush1.bf16.msra.mxu0 0
      %994 = vmatprep.subr.bf16.mxu0 0
      %995 = vmatpush1.bf16.msra.mxu0 0
      %996 = vmatprep.subr.bf16.mxu0 0
      %997 = vmatpush1.bf16.msra.mxu0 0
      %998 = vmatprep.mubr.bf16.mxu0 0
      %999 = vmatmul.mubr.bf16.gmra.mrb[0].mxu0 %v484
      %v1000 = vpop.f32.mrb[0].mxu0
      %v1001 = vadd.f32 %v381, %v1000
      %v1002 = vpop.f32.mrb[0].mxu0
      %v1003 = vadd.f32 %v381, %v1002
      %v1004 = vpop.f32.mrb[0].mxu0
      %v1005 = vpop.f32.mrb[0].mxu0
      %1006 = vdwg.mxu0
      %v1010 = vlaneseq
      %v1011 = vshrl.u32 %v1010, 7
      %v1012 = vsub.s32 0, %v1011
      %v1013 = vrot.slane %v373, %v1012
      %v1014 = vlaneseq
      %v1015 = vshrl.u32 %v1014, 7
      %v1016 = vsub.s32 1, %v1015
      %v1017 = vrot.slane %v373, %v1016
      %v1018 = vlaneseq
      %v1019 = vshrl.u32 %v1018, 7
      %v1020 = vsub.s32 2, %v1019
      %v1021 = vrot.slane %v373, %v1020
      %v1022 = vlaneseq
      %v1023 = vshrl.u32 %v1022, 7
      %v1024 = vsub.s32 3, %v1023
      %v1025 = vrot.slane %v373, %v1024
      %v1026 = vlaneseq
      %v1027 = vshrl.u32 %v1026, 7
      %v1028 = vsub.s32 4, %v1027
      %v1029 = vrot.slane %v373, %v1028
      %v1030 = vlaneseq
      %v1031 = vshrl.u32 %v1030, 7
      %v1032 = vsub.s32 5, %v1031
      %v1033 = vrot.slane %v373, %v1032
      %v1034 = vlaneseq
      %v1035 = vshrl.u32 %v1034, 7
      %v1036 = vsub.s32 6, %v1035
      %v1037 = vrot.slane %v373, %v1036
      %v1038 = vlaneseq
      %v1039 = vshrl.u32 %v1038, 7
      %v1040 = vsub.s32 7, %v1039
      %v1041 = vrot.slane %v373, %v1040
      %v1042 = vlaneseq
      %v1043 = vshrl.u32 %v1042, 7
      %v1044 = vsub.s32 0, %v1043
      %v1045 = vrot.slane %v374, %v1044
      %v1046 = vlaneseq
      %v1047 = vshrl.u32 %v1046, 7
      %v1048 = vsub.s32 1, %v1047
      %v1049 = vrot.slane %v374, %v1048
      %v1050 = vlaneseq
      %v1051 = vshrl.u32 %v1050, 7
      %v1052 = vsub.s32 2, %v1051
      %v1053 = vrot.slane %v374, %v1052
      %v1054 = vlaneseq
      %v1055 = vshrl.u32 %v1054, 7
      %v1056 = vsub.s32 3, %v1055
      %v1057 = vrot.slane %v374, %v1056
      %v1058 = vlaneseq
      %v1059 = vshrl.u32 %v1058, 7
      %v1060 = vsub.s32 4, %v1059
      %v1061 = vrot.slane %v374, %v1060
      %v1062 = vlaneseq
      %v1063 = vshrl.u32 %v1062, 7
      %v1064 = vsub.s32 5, %v1063
      %v1065 = vrot.slane %v374, %v1064
      %v1066 = vlaneseq
      %v1067 = vshrl.u32 %v1066, 7
      %v1068 = vsub.s32 6, %v1067
      %v1069 = vrot.slane %v374, %v1068
      %v1070 = vlaneseq
      %v1071 = vshrl.u32 %v1070, 7
      %v1072 = vsub.s32 7, %v1071
      %v1073 = vrot.slane %v374, %v1072
      %v1074 = vlaneseq
      %v1075 = vshrl.u32 %v1074, 7
      %v1076 = vsub.s32 0, %v1075
      %v1077 = vrot.slane %v375, %v1076
      %v1078 = vlaneseq
      %v1079 = vshrl.u32 %v1078, 7
      %v1080 = vsub.s32 1, %v1079
      %v1081 = vrot.slane %v375, %v1080
      %v1082 = vlaneseq
      %v1083 = vshrl.u32 %v1082, 7
      %v1084 = vsub.s32 2, %v1083
      %v1085 = vrot.slane %v375, %v1084
      %v1086 = vlaneseq
      %v1087 = vshrl.u32 %v1086, 7
      %v1088 = vsub.s32 3, %v1087
      %v1089 = vrot.slane %v375, %v1088
      %v1090 = vlaneseq
      %v1091 = vshrl.u32 %v1090, 7
      %v1092 = vsub.s32 4, %v1091
      %v1093 = vrot.slane %v375, %v1092
      %v1094 = vlaneseq
      %v1095 = vshrl.u32 %v1094, 7
      %v1096 = vsub.s32 5, %v1095
      %v1097 = vrot.slane %v375, %v1096
      %v1120 = vmul.f32 %v591, %v1013
      %v1121 = vmul.f32 %v593, %v1017
      %v1122 = vmul.f32 %v632, %v1021
      %v1123 = vmul.f32 %v634, %v1025
      %v1124 = vmul.f32 %v673, %v1029
      %v1125 = vmul.f32 %v675, %v1033
      %v1126 = vmul.f32 %v714, %v1037
      %v1127 = vmul.f32 %v716, %v1041
      %v1128 = vmul.f32 %v755, %v1045
      %v1129 = vmul.f32 %v757, %v1049
      %v1130 = vmul.f32 %v796, %v1053
      %v1131 = vmul.f32 %v798, %v1057
      %v1132 = vmul.f32 %v837, %v1061
      %v1133 = vmul.f32 %v839, %v1065
      %v1134 = vmul.f32 %v878, %v1069
      %v1135 = vmul.f32 %v880, %v1073
      %v1136 = vmul.f32 %v919, %v1077
      %v1137 = vmul.f32 %v921, %v1081
      %v1138 = vmul.f32 %v960, %v1085
      %v1139 = vmul.f32 %v962, %v1089
      %v1140 = vmul.f32 %v1001, %v1093
      %v1141 = vmul.f32 %v1003, %v1097
      %v1142 = vpack.c.bf16 %v1120, %v1120
      %v1143 = vpack.c.bf16 %v1121, %v1121
      %v1144 = vpack.c.bf16 %v1122, %v1122
      %v1145 = vpack.c.bf16 %v1123, %v1123
      %v1146 = vpack.c.bf16 %v1124, %v1124
      %v1147 = vpack.c.bf16 %v1125, %v1125
      %v1148 = vpack.c.bf16 %v1126, %v1126
      %v1149 = vpack.c.bf16 %v1127, %v1127
      %v1150 = vpack.c.bf16 %v1128, %v1128
      %v1151 = vpack.c.bf16 %v1129, %v1129
      %v1152 = vpack.c.bf16 %v1130, %v1130
      %v1153 = vpack.c.bf16 %v1131, %v1131
      %v1154 = vpack.c.bf16 %v1132, %v1132
      %v1155 = vpack.c.bf16 %v1133, %v1133
      %v1156 = vpack.c.bf16 %v1134, %v1134
      %v1157 = vpack.c.bf16 %v1135, %v1135
      %v1158 = vpack.c.bf16 %v1136, %v1136
      %v1159 = vpack.c.bf16 %v1137, %v1137
      %v1160 = vpack.c.bf16 %v1138, %v1138
      %v1161 = vpack.c.bf16 %v1139, %v1139
      %v1162 = vpack.c.bf16 %v1140, %v1140
      %v1163 = vpack.c.bf16 %v1141, %v1141
      %v1186 = vcombine.low %v1142, %v1143
      %v1187 = vcombine.low %v1144, %v1145
      %v1189 = vunpack.c.l.s4 1983009808
      %v1190 = vunpack.c.0.s8 %v1189
      %v1191 = vlaneseq
      %v1192 = vshrl.u32 %v1191, 7
      %v1193 = vsub.s32 %v1190, %v1192
      %v1194 = vrot.slane %v1186, %v1193
      %v1196 = vunpack.c.l.s4 1983009808
      %v1197 = vunpack.c.0.s8 %v1196
      %v1198 = vlaneseq
      %v1199 = vshrl.u32 %v1198, 7
      %v1200 = vsub.s32 %v1197, %v1199
      %v1201 = vrot.slane %v1187, %v1200
      %v1202 = vcombine.low %v1194, %v1201
      %v1203 = vcombine.low %v1146, %v1147
      %v1204 = vcombine.low %v1148, %v1149
      %v1206 = vunpack.c.l.s4 1983009808
      %v1207 = vunpack.c.0.s8 %v1206
      %v1208 = vlaneseq
      %v1209 = vshrl.u32 %v1208, 7
      %v1210 = vsub.s32 %v1207, %v1209
      %v1211 = vrot.slane %v1203, %v1210
      %v1213 = vunpack.c.l.s4 1983009808
      %v1214 = vunpack.c.0.s8 %v1213
      %v1215 = vlaneseq
      %v1216 = vshrl.u32 %v1215, 7
      %v1217 = vsub.s32 %v1214, %v1216
      %v1218 = vrot.slane %v1204, %v1217
      %v1219 = vcombine.low %v1211, %v1218
      %v1220 = vcombine.low %v1150, %v1151
      %v1221 = vcombine.low %v1152, %v1153
      %v1223 = vunpack.c.l.s4 1983009808
      %v1224 = vunpack.c.0.s8 %v1223
      %v1225 = vlaneseq
      %v1226 = vshrl.u32 %v1225, 7
      %v1227 = vsub.s32 %v1224, %v1226
      %v1228 = vrot.slane %v1220, %v1227
      %v1230 = vunpack.c.l.s4 1983009808
      %v1231 = vunpack.c.0.s8 %v1230
      %v1232 = vlaneseq
      %v1233 = vshrl.u32 %v1232, 7
      %v1234 = vsub.s32 %v1231, %v1233
      %v1235 = vrot.slane %v1221, %v1234
      %v1236 = vcombine.low %v1228, %v1235
      %v1237 = vcombine.low %v1154, %v1155
      %v1238 = vcombine.low %v1156, %v1157
      %v1240 = vunpack.c.l.s4 1983009808
      %v1241 = vunpack.c.0.s8 %v1240
      %v1242 = vlaneseq
      %v1243 = vshrl.u32 %v1242, 7
      %v1244 = vsub.s32 %v1241, %v1243
      %v1245 = vrot.slane %v1237, %v1244
      %v1247 = vunpack.c.l.s4 1983009808
      %v1248 = vunpack.c.0.s8 %v1247
      %v1249 = vlaneseq
      %v1250 = vshrl.u32 %v1249, 7
      %v1251 = vsub.s32 %v1248, %v1250
      %v1252 = vrot.slane %v1238, %v1251
      %v1253 = vcombine.low %v1245, %v1252
      %v1254 = vcombine.low %v1158, %v1159
      %v1255 = vcombine.low %v1160, %v1161
      %v1257 = vunpack.c.l.s4 1983009808
      %v1258 = vunpack.c.0.s8 %v1257
      %v1259 = vlaneseq
      %v1260 = vshrl.u32 %v1259, 7
      %v1261 = vsub.s32 %v1258, %v1260
      %v1262 = vrot.slane %v1254, %v1261
      %v1264 = vunpack.c.l.s4 1983009808
      %v1265 = vunpack.c.0.s8 %v1264
      %v1266 = vlaneseq
      %v1267 = vshrl.u32 %v1266, 7
      %v1268 = vsub.s32 %v1265, %v1267
      %v1269 = vrot.slane %v1255, %v1268
      %v1270 = vcombine.low %v1262, %v1269
      %v1271 = vcombine.low %v1162, %v1163
      %v1273 = vunpack.c.l.s4 1983009808
      %v1274 = vunpack.c.0.s8 %v1273
      %v1275 = vlaneseq
      %v1276 = vshrl.u32 %v1275, 7
      %v1277 = vsub.s32 %v1274, %v1276
      %v1278 = vrot.slane %v1271, %v1277
      %1285 = vst [vmem:[#allocation2 + $0x2] sm:$0xff] %v1202
      %1286 = vst [vmem:[#allocation2 + $0xa] sm:$0xff] %v1219
      %1287 = vst [vmem:[#allocation2 + $0x12] sm:$0xff] %v1236
      %1288 = vst [vmem:[#allocation2 + $0x1a] sm:$0xff] %v1253
      %1289 = vst [vmem:[#allocation2 + $0x22] sm:$0xff] %v1270
      %1290 = vst [vmem:[#allocation2 + $0x2a] sm:$0xf] %v1278
      %v1291 = vld [vmem:[#allocation2] sm:$0xff]
      %v1292 = vld [vmem:[#allocation2 + $0x8] sm:$0xff]
      %v1293 = vld [vmem:[#allocation2 + $0x10] sm:$0xff]
      %v1294 = vld [vmem:[#allocation2 + $0x18] sm:$0xff]
      %v1295 = vld [vmem:[#allocation2 + $0x20] sm:$0xff]
      %v1296 = vld [vmem:[#allocation2 + $0x28] sm:$0x3f]
      %1303 = vrot.lane.b32.xlu0 %v1291, 3
      %v1304 = vpop.permute.xlu0 %1303
      %1305 = vrot.lane.b32.xlu0 %v1292, 3
      %v1306 = vpop.permute.xlu0 %1305
      %1307 = vrot.lane.b32.xlu0 %v1293, 3
      %v1308 = vpop.permute.xlu0 %1307
      %1309 = vrot.lane.b32.xlu0 %v1294, 3
      %v1310 = vpop.permute.xlu0 %1309
      %1311 = vrot.lane.b32.xlu0 %v1295, 3
      %v1312 = vpop.permute.xlu0 %1311
      %1313 = vrot.lane.b32.xlu0 %v1296, 3
      %v1314 = vpop.permute.xlu0 %1313
      %v1315 = vrot.slane %v1304, 2
      %v1316 = vrot.slane %v1306, 2
      %v1317 = vrot.slane %v1308, 2
      %v1318 = vrot.slane %v1310, 2
      %v1319 = vrot.slane %v1312, 2
      %v1320 = vrot.slane %v1314, 2
      %vm1321 = vcmask 1045504
      %v1322 = vsel %vm1321, %v1315, %v1316
      %vm1323 = vcmask 23552
      %v1324 = vsel %vm1323, %v1304, %v1322
      %v1325 = vsel %vm1321, %v1316, %v1317
      %v1326 = vsel %vm1323, %v1306, %v1325
      %v1327 = vsel %vm1321, %v1317, %v1318
      %v1328 = vsel %vm1323, %v1308, %v1327
      %v1329 = vsel %vm1321, %v1318, %v1319
      %v1330 = vsel %vm1323, %v1310, %v1329
      %v1331 = vsel %vm1321, %v1319, %v1320
      %v1332 = vsel %vm1323, %v1312, %v1331
      %v1333 = vsel %vm1323, %v1314, %v1320
      %1340 = vst [vmem:[#allocation3] sm:$0xff] %v1324
      %1341 = vst [vmem:[#allocation3 + $0x8] sm:$0xff] %v1326
      %1342 = vst [vmem:[#allocation3 + $0x10] sm:$0xff] %v1328
      %1343 = vst [vmem:[#allocation3 + $0x18] sm:$0xff] %v1330
      %1344 = vst [vmem:[#allocation3 + $0x20] sm:$0xff] %v1332
      %1345 = vst [vmem:[#allocation3 + $0x28] sm:$0xf] %v1333
      %v1346 = vld [vmem:[#allocation3] sm:$0xff]
      %v1347 = vld [vmem:[#allocation3 + $0x8] sm:$0xff]
      %v1348 = vld [vmem:[#allocation3 + $0x10] sm:$0xff]
      %v1349 = vld [vmem:[#allocation3 + $0x18] sm:$0xff]
      %v1354 = vcombine.high %v1346, %v1346
      %v1356 = vunpack.c.l.s4 1983009808
      %v1357 = vunpack.c.0.s8 %v1356
      %v1358 = vlaneseq
      %v1359 = vshrl.u32 %v1358, 7
      %v1360 = vsub.s32 %v1357, %v1359
      %v1361 = vrot.slane %v1346, %v1360
      %v1363 = vunpack.c.l.s4 1983009808
      %v1364 = vunpack.c.0.s8 %v1363
      %v1365 = vlaneseq
      %v1366 = vshrl.u32 %v1365, 7
      %v1367 = vsub.s32 %v1364, %v1366
      %v1368 = vrot.slane %v1354, %v1367
      %v1369 = vcombine.high %v1347, %v1347
      %v1371 = vunpack.c.l.s4 1983009808
      %v1372 = vunpack.c.0.s8 %v1371
      %v1373 = vlaneseq
      %v1374 = vshrl.u32 %v1373, 7
      %v1375 = vsub.s32 %v1372, %v1374
      %v1376 = vrot.slane %v1347, %v1375
      %v1378 = vunpack.c.l.s4 1983009808
      %v1379 = vunpack.c.0.s8 %v1378
      %v1380 = vlaneseq
      %v1381 = vshrl.u32 %v1380, 7
      %v1382 = vsub.s32 %v1379, %v1381
      %v1383 = vrot.slane %v1369, %v1382
      %v1384 = vcombine.high %v1348, %v1348
      %v1386 = vunpack.c.l.s4 1983009808
      %v1387 = vunpack.c.0.s8 %v1386
      %v1388 = vlaneseq
      %v1389 = vshrl.u32 %v1388, 7
      %v1390 = vsub.s32 %v1387, %v1389
      %v1391 = vrot.slane %v1348, %v1390
      %v1393 = vunpack.c.l.s4 1983009808
      %v1394 = vunpack.c.0.s8 %v1393
      %v1395 = vlaneseq
      %v1396 = vshrl.u32 %v1395, 7
      %v1397 = vsub.s32 %v1394, %v1396
      %v1398 = vrot.slane %v1384, %v1397
      %v1399 = vcombine.high %v1349, %v1349
      %v1401 = vunpack.c.l.s4 1983009808
      %v1402 = vunpack.c.0.s8 %v1401
      %v1403 = vlaneseq
      %v1404 = vshrl.u32 %v1403, 7
      %v1405 = vsub.s32 %v1402, %v1404
      %v1406 = vrot.slane %v1349, %v1405
      %v1408 = vunpack.c.l.s4 1983009808
      %v1409 = vunpack.c.0.s8 %v1408
      %v1410 = vlaneseq
      %v1411 = vshrl.u32 %v1410, 7
      %v1412 = vsub.s32 %v1409, %v1411
      %v1413 = vrot.slane %v1399, %v1412
      %1422 = vst [vmem:[#allocation4] sm:$0x33] %v1361
      %1423 = vst [vmem:[#allocation4 + $0x8] sm:$0x33] %v1368
      %1424 = vst [vmem:[#allocation4 + $0x10] sm:$0x33] %v1376
      %1425 = vst [vmem:[#allocation4 + $0x18] sm:$0x33] %v1383
      %1426 = vst [vmem:[#allocation4 + $0x20] sm:$0x33] %v1391
      %1427 = vst [vmem:[#allocation4 + $0x28] sm:$0x33] %v1398
      %1428 = vst [vmem:[#allocation4 + $0x30] sm:$0x33] %v1406
      %1429 = vst [vmem:[#allocation4 + $0x38] sm:$0x33] %v1413
      %v1430 = vld [vmem:[#allocation3 + $0x2] sm:$0xff]
      %v1431 = vld [vmem:[#allocation3 + $0xa] sm:$0xff]
      %v1432 = vld [vmem:[#allocation3 + $0x12] sm:$0xff]
      %v1433 = vld [vmem:[#allocation3 + $0x1a] sm:$0xff]
      %v1438 = vcombine.low %v1430, %v1430
      %v1440 = vunpack.c.l.s4 1983009808
      %v1441 = vunpack.c.0.s8 %v1440
      %v1442 = vlaneseq
      %v1443 = vshrl.u32 %v1442, 7
      %v1444 = vsub.s32 %v1441, %v1443
      %v1445 = vrot.slane %v1438, %v1444
      %v1447 = vunpack.c.l.s4 1983009808
      %v1448 = vunpack.c.0.s8 %v1447
      %v1449 = vlaneseq
      %v1450 = vshrl.u32 %v1449, 7
      %v1451 = vsub.s32 %v1448, %v1450
      %v1452 = vrot.slane %v1430, %v1451
      %v1453 = vcombine.low %v1431, %v1431
      %v1455 = vunpack.c.l.s4 1983009808
      %v1456 = vunpack.c.0.s8 %v1455
      %v1457 = vlaneseq
      %v1458 = vshrl.u32 %v1457, 7
      %v1459 = vsub.s32 %v1456, %v1458
      %v1460 = vrot.slane %v1453, %v1459
      %v1462 = vunpack.c.l.s4 1983009808
      %v1463 = vunpack.c.0.s8 %v1462
      %v1464 = vlaneseq
      %v1465 = vshrl.u32 %v1464, 7
      %v1466 = vsub.s32 %v1463, %v1465
      %v1467 = vrot.slane %v1431, %v1466
      %v1468 = vcombine.low %v1432, %v1432
      %v1470 = vunpack.c.l.s4 1983009808
      %v1471 = vunpack.c.0.s8 %v1470
      %v1472 = vlaneseq
      %v1473 = vshrl.u32 %v1472, 7
      %v1474 = vsub.s32 %v1471, %v1473
      %v1475 = vrot.slane %v1468, %v1474
      %v1477 = vunpack.c.l.s4 1983009808
      %v1478 = vunpack.c.0.s8 %v1477
      %v1479 = vlaneseq
      %v1480 = vshrl.u32 %v1479, 7
      %v1481 = vsub.s32 %v1478, %v1480
      %v1482 = vrot.slane %v1432, %v1481
      %v1483 = vcombine.low %v1433, %v1433
      %v1485 = vunpack.c.l.s4 1983009808
      %v1486 = vunpack.c.0.s8 %v1485
      %v1487 = vlaneseq
      %v1488 = vshrl.u32 %v1487, 7
      %v1489 = vsub.s32 %v1486, %v1488
      %v1490 = vrot.slane %v1483, %v1489
      %v1492 = vunpack.c.l.s4 1983009808
      %v1493 = vunpack.c.0.s8 %v1492
      %v1494 = vlaneseq
      %v1495 = vshrl.u32 %v1494, 7
      %v1496 = vsub.s32 %v1493, %v1495
      %v1497 = vrot.slane %v1433, %v1496
      %1506 = vst [vmem:[#allocation4 + $0xc0] sm:$0xcc] %v1445
      %1507 = vst [vmem:[#allocation4 + $0xc8] sm:$0xcc] %v1452
      %1508 = vst [vmem:[#allocation4 + $0xd0] sm:$0xcc] %v1460
      %1509 = vst [vmem:[#allocation4 + $0xd8] sm:$0xcc] %v1467
      %1510 = vst [vmem:[#allocation4 + $0xe0] sm:$0xcc] %v1475
      %1511 = vst [vmem:[#allocation4 + $0xe8] sm:$0xcc] %v1482
      %1512 = vst [vmem:[#allocation4 + $0xf0] sm:$0xcc] %v1490
      %1513 = vst [vmem:[#allocation4 + $0xf8] sm:$0xcc] %v1497
      %v1514 = vld [vmem:[#allocation3 + $0x4] sm:$0xff]
      %v1515 = vld [vmem:[#allocation3 + $0xc] sm:$0xff]
      %v1516 = vld [vmem:[#allocation3 + $0x14] sm:$0xff]
      %v1517 = vld [vmem:[#allocation3 + $0x1c] sm:$0xff]
      %v1522 = vcombine.high %v1514, %v1514
      %v1524 = vunpack.c.l.s4 1983009808
      %v1525 = vunpack.c.0.s8 %v1524
      %v1526 = vlaneseq
      %v1527 = vshrl.u32 %v1526, 7
      %v1528 = vsub.s32 %v1525, %v1527
      %v1529 = vrot.slane %v1514, %v1528
      %v1531 = vunpack.c.l.s4 1983009808
      %v1532 = vunpack.c.0.s8 %v1531
      %v1533 = vlaneseq
      %v1534 = vshrl.u32 %v1533, 7
      %v1535 = vsub.s32 %v1532, %v1534
      %v1536 = vrot.slane %v1522, %v1535
      %v1537 = vcombine.high %v1515, %v1515
      %v1539 = vunpack.c.l.s4 1983009808
      %v1540 = vunpack.c.0.s8 %v1539
      %v1541 = vlaneseq
      %v1542 = vshrl.u32 %v1541, 7
      %v1543 = vsub.s32 %v1540, %v1542
      %v1544 = vrot.slane %v1515, %v1543
      %v1546 = vunpack.c.l.s4 1983009808
      %v1547 = vunpack.c.0.s8 %v1546
      %v1548 = vlaneseq
      %v1549 = vshrl.u32 %v1548, 7
      %v1550 = vsub.s32 %v1547, %v1549
      %v1551 = vrot.slane %v1537, %v1550
      %v1552 = vcombine.high %v1516, %v1516
      %v1554 = vunpack.c.l.s4 1983009808
      %v1555 = vunpack.c.0.s8 %v1554
      %v1556 = vlaneseq
      %v1557 = vshrl.u32 %v1556, 7
      %v1558 = vsub.s32 %v1555, %v1557
      %v1559 = vrot.slane %v1516, %v1558
      %v1561 = vunpack.c.l.s4 1983009808
      %v1562 = vunpack.c.0.s8 %v1561
      %v1563 = vlaneseq
      %v1564 = vshrl.u32 %v1563, 7
      %v1565 = vsub.s32 %v1562, %v1564
      %v1566 = vrot.slane %v1552, %v1565
      %v1567 = vcombine.high %v1517, %v1517
      %v1569 = vunpack.c.l.s4 1983009808
      %v1570 = vunpack.c.0.s8 %v1569
      %v1571 = vlaneseq
      %v1572 = vshrl.u32 %v1571, 7
      %v1573 = vsub.s32 %v1570, %v1572
      %v1574 = vrot.slane %v1517, %v1573
      %v1576 = vunpack.c.l.s4 1983009808
      %v1577 = vunpack.c.0.s8 %v1576
      %v1578 = vlaneseq
      %v1579 = vshrl.u32 %v1578, 7
      %v1580 = vsub.s32 %v1577, %v1579
      %v1581 = vrot.slane %v1567, %v1580
      %1590 = vst [vmem:[#allocation4 + $0x1c0] sm:$0x33] %v1529
      %1591 = vst [vmem:[#allocation4 + $0x1c8] sm:$0x33] %v1536
      %1592 = vst [vmem:[#allocation4 + $0x1d0] sm:$0x33] %v1544
      %1593 = vst [vmem:[#allocation4 + $0x1d8] sm:$0x33] %v1551
      %1594 = vst [vmem:[#allocation4 + $0x1e0] sm:$0x33] %v1559
      %1595 = vst [vmem:[#allocation4 + $0x1e8] sm:$0x33] %v1566
      %1596 = vst [vmem:[#allocation4 + $0x1f0] sm:$0x33] %v1574
      %1597 = vst [vmem:[#allocation4 + $0x1f8] sm:$0x33] %v1581
      %v1598 = vld [vmem:[#allocation3 + $0x6] sm:$0xff]
      %v1599 = vld [vmem:[#allocation3 + $0xe] sm:$0xff]
      %v1600 = vld [vmem:[#allocation3 + $0x16] sm:$0xff]
      %v1601 = vld [vmem:[#allocation3 + $0x1e] sm:$0xff]
      %v1606 = vcombine.low %v1598, %v1598
      %v1608 = vunpack.c.l.s4 1983009808
      %v1609 = vunpack.c.0.s8 %v1608
      %v1610 = vlaneseq
      %v1611 = vshrl.u32 %v1610, 7
      %v1612 = vsub.s32 %v1609, %v1611
      %v1613 = vrot.slane %v1606, %v1612
      %v1615 = vunpack.c.l.s4 1983009808
      %v1616 = vunpack.c.0.s8 %v1615
      %v1617 = vlaneseq
      %v1618 = vshrl.u32 %v1617, 7
      %v1619 = vsub.s32 %v1616, %v1618
      %v1620 = vrot.slane %v1598, %v1619
      %v1621 = vcombine.low %v1599, %v1599
      %v1623 = vunpack.c.l.s4 1983009808
      %v1624 = vunpack.c.0.s8 %v1623
      %v1625 = vlaneseq
      %v1626 = vshrl.u32 %v1625, 7
      %v1627 = vsub.s32 %v1624, %v1626
      %v1628 = vrot.slane %v1621, %v1627
      %v1630 = vunpack.c.l.s4 1983009808
      %v1631 = vunpack.c.0.s8 %v1630
      %v1632 = vlaneseq
      %v1633 = vshrl.u32 %v1632, 7
      %v1634 = vsub.s32 %v1631, %v1633
      %v1635 = vrot.slane %v1599, %v1634
      %v1636 = vcombine.low %v1600, %v1600
      %v1638 = vunpack.c.l.s4 1983009808
      %v1639 = vunpack.c.0.s8 %v1638
      %v1640 = vlaneseq
      %v1641 = vshrl.u32 %v1640, 7
      %v1642 = vsub.s32 %v1639, %v1641
      %v1643 = vrot.slane %v1636, %v1642
      %v1645 = vunpack.c.l.s4 1983009808
      %v1646 = vunpack.c.0.s8 %v1645
      %v1647 = vlaneseq
      %v1648 = vshrl.u32 %v1647, 7
      %v1649 = vsub.s32 %v1646, %v1648
      %v1650 = vrot.slane %v1600, %v1649
      %v1651 = vcombine.low %v1601, %v1601
      %v1653 = vunpack.c.l.s4 1983009808
      %v1654 = vunpack.c.0.s8 %v1653
      %v1655 = vlaneseq
      %v1656 = vshrl.u32 %v1655, 7
      %v1657 = vsub.s32 %v1654, %v1656
      %v1658 = vrot.slane %v1651, %v1657
      %v1660 = vunpack.c.l.s4 1983009808
      %v1661 = vunpack.c.0.s8 %v1660
      %v1662 = vlaneseq
      %v1663 = vshrl.u32 %v1662, 7
      %v1664 = vsub.s32 %v1661, %v1663
      %v1665 = vrot.slane %v1601, %v1664
      %1674 = vst [vmem:[#allocation4 + $0x280] sm:$0xcc] %v1613
      %1675 = vst [vmem:[#allocation4 + $0x288] sm:$0xcc] %v1620
      %1676 = vst [vmem:[#allocation4 + $0x290] sm:$0xcc] %v1628
      %1677 = vst [vmem:[#allocation4 + $0x298] sm:$0xcc] %v1635
      %1678 = vst [vmem:[#allocation4 + $0x2a0] sm:$0xcc] %v1643
      %1679 = vst [vmem:[#allocation4 + $0x2a8] sm:$0xcc] %v1650
      %1680 = vst [vmem:[#allocation4 + $0x2b0] sm:$0xcc] %v1658
      %1681 = vst [vmem:[#allocation4 + $0x2b8] sm:$0xcc] %v1665
      %v1682 = vld [vmem:[#allocation3 + $0x8] sm:$0xff]
      %v1683 = vld [vmem:[#allocation3 + $0x10] sm:$0xff]
      %v1684 = vld [vmem:[#allocation3 + $0x18] sm:$0xff]
      %v1685 = vld [vmem:[#allocation3 + $0x20] sm:$0xff]
      %v1690 = vcombine.high %v1682, %v1682
      %v1692 = vunpack.c.l.s4 1983009808
      %v1693 = vunpack.c.0.s8 %v1692
      %v1694 = vlaneseq
      %v1695 = vshrl.u32 %v1694, 7
      %v1696 = vsub.s32 %v1693, %v1695
      %v1697 = vrot.slane %v1682, %v1696
      %v1699 = vunpack.c.l.s4 1983009808
      %v1700 = vunpack.c.0.s8 %v1699
      %v1701 = vlaneseq
      %v1702 = vshrl.u32 %v1701, 7
      %v1703 = vsub.s32 %v1700, %v1702
      %v1704 = vrot.slane %v1690, %v1703
      %v1705 = vcombine.high %v1683, %v1683
      %v1707 = vunpack.c.l.s4 1983009808
      %v1708 = vunpack.c.0.s8 %v1707
      %v1709 = vlaneseq
      %v1710 = vshrl.u32 %v1709, 7
      %v1711 = vsub.s32 %v1708, %v1710
      %v1712 = vrot.slane %v1683, %v1711
      %v1714 = vunpack.c.l.s4 1983009808
      %v1715 = vunpack.c.0.s8 %v1714
      %v1716 = vlaneseq
      %v1717 = vshrl.u32 %v1716, 7
      %v1718 = vsub.s32 %v1715, %v1717
      %v1719 = vrot.slane %v1705, %v1718
      %v1720 = vcombine.high %v1684, %v1684
      %v1722 = vunpack.c.l.s4 1983009808
      %v1723 = vunpack.c.0.s8 %v1722
      %v1724 = vlaneseq
      %v1725 = vshrl.u32 %v1724, 7
      %v1726 = vsub.s32 %v1723, %v1725
      %v1727 = vrot.slane %v1684, %v1726
      %v1729 = vunpack.c.l.s4 1983009808
      %v1730 = vunpack.c.0.s8 %v1729
      %v1731 = vlaneseq
      %v1732 = vshrl.u32 %v1731, 7
      %v1733 = vsub.s32 %v1730, %v1732
      %v1734 = vrot.slane %v1720, %v1733
      %v1735 = vcombine.high %v1685, %v1685
      %v1737 = vunpack.c.l.s4 1983009808
      %v1738 = vunpack.c.0.s8 %v1737
      %v1739 = vlaneseq
      %v1740 = vshrl.u32 %v1739, 7
      %v1741 = vsub.s32 %v1738, %v1740
      %v1742 = vrot.slane %v1685, %v1741
      %v1744 = vunpack.c.l.s4 1983009808
      %v1745 = vunpack.c.0.s8 %v1744
      %v1746 = vlaneseq
      %v1747 = vshrl.u32 %v1746, 7
      %v1748 = vsub.s32 %v1745, %v1747
      %v1749 = vrot.slane %v1735, %v1748
      %1758 = vst [vmem:[#allocation4 + $0x380] sm:$0x33] %v1697
      %1759 = vst [vmem:[#allocation4 + $0x388] sm:$0x33] %v1704
      %1760 = vst [vmem:[#allocation4 + $0x390] sm:$0x33] %v1712
      %1761 = vst [vmem:[#allocation4 + $0x398] sm:$0x33] %v1719
      %1762 = vst [vmem:[#allocation4 + $0x3a0] sm:$0x33] %v1727
      %1763 = vst [vmem:[#allocation4 + $0x3a8] sm:$0x33] %v1734
      %1764 = vst [vmem:[#allocation4 + $0x3b0] sm:$0x33] %v1742
      %1765 = vst [vmem:[#allocation4 + $0x3b8] sm:$0x33] %v1749
      %v1766 = vld [vmem:[#allocation3 + $0xa] sm:$0xff]
      %v1767 = vld [vmem:[#allocation3 + $0x12] sm:$0xff]
      %v1768 = vld [vmem:[#allocation3 + $0x1a] sm:$0xff]
      %v1769 = vld [vmem:[#allocation3 + $0x22] sm:$0xff]
      %v1774 = vcombine.low %v1766, %v1766
      %v1776 = vunpack.c.l.s4 1983009808
      %v1777 = vunpack.c.0.s8 %v1776
      %v1778 = vlaneseq
      %v1779 = vshrl.u32 %v1778, 7
      %v1780 = vsub.s32 %v1777, %v1779
      %v1781 = vrot.slane %v1774, %v1780
      %v1783 = vunpack.c.l.s4 1983009808
      %v1784 = vunpack.c.0.s8 %v1783
      %v1785 = vlaneseq
      %v1786 = vshrl.u32 %v1785, 7
      %v1787 = vsub.s32 %v1784, %v1786
      %v1788 = vrot.slane %v1766, %v1787
      %v1789 = vcombine.low %v1767, %v1767
      %v1791 = vunpack.c.l.s4 1983009808
      %v1792 = vunpack.c.0.s8 %v1791
      %v1793 = vlaneseq
      %v1794 = vshrl.u32 %v1793, 7
      %v1795 = vsub.s32 %v1792, %v1794
      %v1796 = vrot.slane %v1789, %v1795
      %v1798 = vunpack.c.l.s4 1983009808
      %v1799 = vunpack.c.0.s8 %v1798
      %v1800 = vlaneseq
      %v1801 = vshrl.u32 %v1800, 7
      %v1802 = vsub.s32 %v1799, %v1801
      %v1803 = vrot.slane %v1767, %v1802
      %v1804 = vcombine.low %v1768, %v1768
      %v1806 = vunpack.c.l.s4 1983009808
      %v1807 = vunpack.c.0.s8 %v1806
      %v1808 = vlaneseq
      %v1809 = vshrl.u32 %v1808, 7
      %v1810 = vsub.s32 %v1807, %v1809
      %v1811 = vrot.slane %v1804, %v1810
      %v1813 = vunpack.c.l.s4 1983009808
      %v1814 = vunpack.c.0.s8 %v1813
      %v1815 = vlaneseq
      %v1816 = vshrl.u32 %v1815, 7
      %v1817 = vsub.s32 %v1814, %v1816
      %v1818 = vrot.slane %v1768, %v1817
      %v1819 = vcombine.low %v1769, %v1769
      %v1821 = vunpack.c.l.s4 1983009808
      %v1822 = vunpack.c.0.s8 %v1821
      %v1823 = vlaneseq
      %v1824 = vshrl.u32 %v1823, 7
      %v1825 = vsub.s32 %v1822, %v1824
      %v1826 = vrot.slane %v1819, %v1825
      %v1828 = vunpack.c.l.s4 1983009808
      %v1829 = vunpack.c.0.s8 %v1828
      %v1830 = vlaneseq
      %v1831 = vshrl.u32 %v1830, 7
      %v1832 = vsub.s32 %v1829, %v1831
      %v1833 = vrot.slane %v1769, %v1832
      %1842 = vst [vmem:[#allocation4 + $0x440] sm:$0xcc] %v1781
      %1843 = vst [vmem:[#allocation4 + $0x448] sm:$0xcc] %v1788
      %1844 = vst [vmem:[#allocation4 + $0x450] sm:$0xcc] %v1796
      %1845 = vst [vmem:[#allocation4 + $0x458] sm:$0xcc] %v1803
      %1846 = vst [vmem:[#allocation4 + $0x460] sm:$0xcc] %v1811
      %1847 = vst [vmem:[#allocation4 + $0x468] sm:$0xcc] %v1818
      %1848 = vst [vmem:[#allocation4 + $0x470] sm:$0xcc] %v1826
      %1849 = vst [vmem:[#allocation4 + $0x478] sm:$0xcc] %v1833
      %v1850 = vld [vmem:[#allocation3 + $0xc] sm:$0xff]
      %v1851 = vld [vmem:[#allocation3 + $0x14] sm:$0xff]
      %v1852 = vld [vmem:[#allocation3 + $0x1c] sm:$0xff]
      %v1853 = vld [vmem:[#allocation3 + $0x24] sm:$0xff]
      %v1858 = vcombine.high %v1850, %v1850
      %v1860 = vunpack.c.l.s4 1983009808
      %v1861 = vunpack.c.0.s8 %v1860
      %v1862 = vlaneseq
      %v1863 = vshrl.u32 %v1862, 7
      %v1864 = vsub.s32 %v1861, %v1863
      %v1865 = vrot.slane %v1850, %v1864
      %v1867 = vunpack.c.l.s4 1983009808
      %v1868 = vunpack.c.0.s8 %v1867
      %v1869 = vlaneseq
      %v1870 = vshrl.u32 %v1869, 7
      %v1871 = vsub.s32 %v1868, %v1870
      %v1872 = vrot.slane %v1858, %v1871
      %v1873 = vcombine.high %v1851, %v1851
      %v1875 = vunpack.c.l.s4 1983009808
      %v1876 = vunpack.c.0.s8 %v1875
      %v1877 = vlaneseq
      %v1878 = vshrl.u32 %v1877, 7
      %v1879 = vsub.s32 %v1876, %v1878
      %v1880 = vrot.slane %v1851, %v1879
      %v1882 = vunpack.c.l.s4 1983009808
      %v1883 = vunpack.c.0.s8 %v1882
      %v1884 = vlaneseq
      %v1885 = vshrl.u32 %v1884, 7
      %v1886 = vsub.s32 %v1883, %v1885
      %v1887 = vrot.slane %v1873, %v1886
      %v1888 = vcombine.high %v1852, %v1852
      %v1890 = vunpack.c.l.s4 1983009808
      %v1891 = vunpack.c.0.s8 %v1890
      %v1892 = vlaneseq
      %v1893 = vshrl.u32 %v1892, 7
      %v1894 = vsub.s32 %v1891, %v1893
      %v1895 = vrot.slane %v1852, %v1894
      %v1897 = vunpack.c.l.s4 1983009808
      %v1898 = vunpack.c.0.s8 %v1897
      %v1899 = vlaneseq
      %v1900 = vshrl.u32 %v1899, 7
      %v1901 = vsub.s32 %v1898, %v1900
      %v1902 = vrot.slane %v1888, %v1901
      %v1903 = vcombine.high %v1853, %v1853
      %v1905 = vunpack.c.l.s4 1983009808
      %v1906 = vunpack.c.0.s8 %v1905
      %v1907 = vlaneseq
      %v1908 = vshrl.u32 %v1907, 7
      %v1909 = vsub.s32 %v1906, %v1908
      %v1910 = vrot.slane %v1853, %v1909
      %v1912 = vunpack.c.l.s4 1983009808
      %v1913 = vunpack.c.0.s8 %v1912
      %v1914 = vlaneseq
      %v1915 = vshrl.u32 %v1914, 7
      %v1916 = vsub.s32 %v1913, %v1915
      %v1917 = vrot.slane %v1903, %v1916
      %1926 = vst [vmem:[#allocation4 + $0x540] sm:$0x33] %v1865
      %1927 = vst [vmem:[#allocation4 + $0x548] sm:$0x33] %v1872
      %1928 = vst [vmem:[#allocation4 + $0x550] sm:$0x33] %v1880
      %1929 = vst [vmem:[#allocation4 + $0x558] sm:$0x33] %v1887
      %1930 = vst [vmem:[#allocation4 + $0x560] sm:$0x33] %v1895
      %1931 = vst [vmem:[#allocation4 + $0x568] sm:$0x33] %v1902
      %1932 = vst [vmem:[#allocation4 + $0x570] sm:$0x33] %v1910
      %1933 = vst [vmem:[#allocation4 + $0x578] sm:$0x33] %v1917
      %v1934 = vld [vmem:[#allocation2] sm:$0xff]
      %v1935 = vld [vmem:[#allocation2 + $0x8] sm:$0xff]
      %v1936 = vld [vmem:[#allocation2 + $0x10] sm:$0xff]
      %v1937 = vld [vmem:[#allocation2 + $0x18] sm:$0xff]
      %v1938 = vld [vmem:[#allocation2 + $0x20] sm:$0xff]
      %v1939 = vld [vmem:[#allocation2 + $0x28] sm:$0x3f]
      %1946 = vrot.lane.b32.xlu0 %v1934, 2
      %v1947 = vpop.permute.xlu0 %1946
      %1948 = vrot.lane.b32.xlu0 %v1935, 2
      %v1949 = vpop.permute.xlu0 %1948
      %1950 = vrot.lane.b32.xlu0 %v1936, 2
      %v1951 = vpop.permute.xlu0 %1950
      %1952 = vrot.lane.b32.xlu0 %v1937, 2
      %v1953 = vpop.permute.xlu0 %1952
      %1954 = vrot.lane.b32.xlu0 %v1938, 2
      %v1955 = vpop.permute.xlu0 %1954
      %1956 = vrot.lane.b32.xlu0 %v1939, 2
      %v1957 = vpop.permute.xlu0 %1956
      %v1958 = vrot.slane %v1947, 2
      %v1959 = vrot.slane %v1949, 2
      %v1960 = vrot.slane %v1951, 2
      %v1961 = vrot.slane %v1953, 2
      %v1962 = vrot.slane %v1955, 2
      %v1963 = vrot.slane %v1957, 2
      %v1964 = vsel %vm1321, %v1958, %v1959
      %vm1965 = vcmask 15360
      %v1966 = vsel %vm1965, %v1947, %v1964
      %v1967 = vsel %vm1321, %v1959, %v1960
      %v1968 = vsel %vm1965, %v1949, %v1967
      %v1969 = vsel %vm1321, %v1960, %v1961
      %v1970 = vsel %vm1965, %v1951, %v1969
      %v1971 = vsel %vm1321, %v1961, %v1962
      %v1972 = vsel %vm1965, %v1953, %v1971
      %v1973 = vsel %vm1321, %v1962, %v1963
      %v1974 = vsel %vm1965, %v1955, %v1973
      %v1975 = vsel %vm1965, %v1957, %v1963
      %1982 = vst [vmem:[#allocation3] sm:$0xff] %v1966
      %1983 = vst [vmem:[#allocation3 + $0x8] sm:$0xff] %v1968
      %1984 = vst [vmem:[#allocation3 + $0x10] sm:$0xff] %v1970
      %1985 = vst [vmem:[#allocation3 + $0x18] sm:$0xff] %v1972
      %1986 = vst [vmem:[#allocation3 + $0x20] sm:$0xff] %v1974
      %1987 = vst [vmem:[#allocation3 + $0x28] sm:$0xf] %v1975
      %v1988 = vld [vmem:[#allocation3] sm:$0xff]
      %v1989 = vld [vmem:[#allocation3 + $0x8] sm:$0xff]
      %v1990 = vld [vmem:[#allocation3 + $0x10] sm:$0xff]
      %v1991 = vld [vmem:[#allocation3 + $0x18] sm:$0xff]
      %v1996 = vcombine.low %v1988, %v1988
      %v1998 = vunpack.c.l.s4 1983009808
      %v1999 = vunpack.c.0.s8 %v1998
      %v2000 = vlaneseq
      %v2001 = vshrl.u32 %v2000, 7
      %v2002 = vsub.s32 %v1999, %v2001
      %v2003 = vrot.slane %v1996, %v2002
      %v2005 = vunpack.c.l.s4 1983009808
      %v2006 = vunpack.c.0.s8 %v2005
      %v2007 = vlaneseq
      %v2008 = vshrl.u32 %v2007, 7
      %v2009 = vsub.s32 %v2006, %v2008
      %v2010 = vrot.slane %v1988, %v2009
      %v2011 = vcombine.low %v1989, %v1989
      %v2013 = vunpack.c.l.s4 1983009808
      %v2014 = vunpack.c.0.s8 %v2013
      %v2015 = vlaneseq
      %v2016 = vshrl.u32 %v2015, 7
      %v2017 = vsub.s32 %v2014, %v2016
      %v2018 = vrot.slane %v2011, %v2017
      %v2020 = vunpack.c.l.s4 1983009808
      %v2021 = vunpack.c.0.s8 %v2020
      %v2022 = vlaneseq
      %v2023 = vshrl.u32 %v2022, 7
      %v2024 = vsub.s32 %v2021, %v2023
      %v2025 = vrot.slane %v1989, %v2024
      %v2026 = vcombine.low %v1990, %v1990
      %v2028 = vunpack.c.l.s4 1983009808
      %v2029 = vunpack.c.0.s8 %v2028
      %v2030 = vlaneseq
      %v2031 = vshrl.u32 %v2030, 7
      %v2032 = vsub.s32 %v2029, %v2031
      %v2033 = vrot.slane %v2026, %v2032
      %v2035 = vunpack.c.l.s4 1983009808
      %v2036 = vunpack.c.0.s8 %v2035
      %v2037 = vlaneseq
      %v2038 = vshrl.u32 %v2037, 7
      %v2039 = vsub.s32 %v2036, %v2038
      %v2040 = vrot.slane %v1990, %v2039
      %v2041 = vcombine.low %v1991, %v1991
      %v2043 = vunpack.c.l.s4 1983009808
      %v2044 = vunpack.c.0.s8 %v2043
      %v2045 = vlaneseq
      %v2046 = vshrl.u32 %v2045, 7
      %v2047 = vsub.s32 %v2044, %v2046
      %v2048 = vrot.slane %v2041, %v2047
      %v2050 = vunpack.c.l.s4 1983009808
      %v2051 = vunpack.c.0.s8 %v2050
      %v2052 = vlaneseq
      %v2053 = vshrl.u32 %v2052, 7
      %v2054 = vsub.s32 %v2051, %v2053
      %v2055 = vrot.slane %v1991, %v2054
      %2064 = vst [vmem:[#allocation4] sm:$0xcc] %v2003
      %2065 = vst [vmem:[#allocation4 + $0x8] sm:$0xcc] %v2010
      %2066 = vst [vmem:[#allocation4 + $0x10] sm:$0xcc] %v2018
      %2067 = vst [vmem:[#allocation4 + $0x18] sm:$0xcc] %v2025
      %2068 = vst [vmem:[#allocation4 + $0x20] sm:$0xcc] %v2033
      %2069 = vst [vmem:[#allocation4 + $0x28] sm:$0xcc] %v2040
      %2070 = vst [vmem:[#allocation4 + $0x30] sm:$0xcc] %v2048
      %2071 = vst [vmem:[#allocation4 + $0x38] sm:$0xcc] %v2055
      %v2072 = vld [vmem:[#allocation3 + $0x2] sm:$0xff]
      %v2073 = vld [vmem:[#allocation3 + $0xa] sm:$0xff]
      %v2074 = vld [vmem:[#allocation3 + $0x12] sm:$0xff]
      %v2075 = vld [vmem:[#allocation3 + $0x1a] sm:$0xff]
      %v2080 = vcombine.high %v2072, %v2072
      %v2082 = vunpack.c.l.s4 1983009808
      %v2083 = vunpack.c.0.s8 %v2082
      %v2084 = vlaneseq
      %v2085 = vshrl.u32 %v2084, 7
      %v2086 = vsub.s32 %v2083, %v2085
      %v2087 = vrot.slane %v2072, %v2086
      %v2089 = vunpack.c.l.s4 1983009808
      %v2090 = vunpack.c.0.s8 %v2089
      %v2091 = vlaneseq
      %v2092 = vshrl.u32 %v2091, 7
      %v2093 = vsub.s32 %v2090, %v2092
      %v2094 = vrot.slane %v2080, %v2093
      %v2095 = vcombine.high %v2073, %v2073
      %v2097 = vunpack.c.l.s4 1983009808
      %v2098 = vunpack.c.0.s8 %v2097
      %v2099 = vlaneseq
      %v2100 = vshrl.u32 %v2099, 7
      %v2101 = vsub.s32 %v2098, %v2100
      %v2102 = vrot.slane %v2073, %v2101
      %v2104 = vunpack.c.l.s4 1983009808
      %v2105 = vunpack.c.0.s8 %v2104
      %v2106 = vlaneseq
      %v2107 = vshrl.u32 %v2106, 7
      %v2108 = vsub.s32 %v2105, %v2107
      %v2109 = vrot.slane %v2095, %v2108
      %v2110 = vcombine.high %v2074, %v2074
      %v2112 = vunpack.c.l.s4 1983009808
      %v2113 = vunpack.c.0.s8 %v2112
      %v2114 = vlaneseq
      %v2115 = vshrl.u32 %v2114, 7
      %v2116 = vsub.s32 %v2113, %v2115
      %v2117 = vrot.slane %v2074, %v2116
      %v2119 = vunpack.c.l.s4 1983009808
      %v2120 = vunpack.c.0.s8 %v2119
      %v2121 = vlaneseq
      %v2122 = vshrl.u32 %v2121, 7
      %v2123 = vsub.s32 %v2120, %v2122
      %v2124 = vrot.slane %v2110, %v2123
      %v2125 = vcombine.high %v2075, %v2075
      %v2127 = vunpack.c.l.s4 1983009808
      %v2128 = vunpack.c.0.s8 %v2127
      %v2129 = vlaneseq
      %v2130 = vshrl.u32 %v2129, 7
      %v2131 = vsub.s32 %v2128, %v2130
      %v2132 = vrot.slane %v2075, %v2131
      %v2134 = vunpack.c.l.s4 1983009808
      %v2135 = vunpack.c.0.s8 %v2134
      %v2136 = vlaneseq
      %v2137 = vshrl.u32 %v2136, 7
      %v2138 = vsub.s32 %v2135, %v2137
      %v2139 = vrot.slane %v2125, %v2138
      %2148 = vst [vmem:[#allocation4 + $0x100] sm:$0x33] %v2087
      %2149 = vst [vmem:[#allocation4 + $0x108] sm:$0x33] %v2094
      %2150 = vst [vmem:[#allocation4 + $0x110] sm:$0x33] %v2102
      %2151 = vst [vmem:[#allocation4 + $0x118] sm:$0x33] %v2109
      %2152 = vst [vmem:[#allocation4 + $0x120] sm:$0x33] %v2117
      %2153 = vst [vmem:[#allocation4 + $0x128] sm:$0x33] %v2124
      %2154 = vst [vmem:[#allocation4 + $0x130] sm:$0x33] %v2132
      %2155 = vst [vmem:[#allocation4 + $0x138] sm:$0x33] %v2139
      %v2156 = vld [vmem:[#allocation3 + $0x4] sm:$0xff]
      %v2157 = vld [vmem:[#allocation3 + $0xc] sm:$0xff]
      %v2158 = vld [vmem:[#allocation3 + $0x14] sm:$0xff]
      %v2159 = vld [vmem:[#allocation3 + $0x1c] sm:$0xff]
      %v2164 = vcombine.low %v2156, %v2156
      %v2166 = vunpack.c.l.s4 1983009808
      %v2167 = vunpack.c.0.s8 %v2166
      %v2168 = vlaneseq
      %v2169 = vshrl.u32 %v2168, 7
      %v2170 = vsub.s32 %v2167, %v2169
      %v2171 = vrot.slane %v2164, %v2170
      %v2173 = vunpack.c.l.s4 1983009808
      %v2174 = vunpack.c.0.s8 %v2173
      %v2175 = vlaneseq
      %v2176 = vshrl.u32 %v2175, 7
      %v2177 = vsub.s32 %v2174, %v2176
      %v2178 = vrot.slane %v2156, %v2177
      %v2179 = vcombine.low %v2157, %v2157
      %v2181 = vunpack.c.l.s4 1983009808
      %v2182 = vunpack.c.0.s8 %v2181
      %v2183 = vlaneseq
      %v2184 = vshrl.u32 %v2183, 7
      %v2185 = vsub.s32 %v2182, %v2184
      %v2186 = vrot.slane %v2179, %v2185
      %v2188 = vunpack.c.l.s4 1983009808
      %v2189 = vunpack.c.0.s8 %v2188
      %v2190 = vlaneseq
      %v2191 = vshrl.u32 %v2190, 7
      %v2192 = vsub.s32 %v2189, %v2191
      %v2193 = vrot.slane %v2157, %v2192
      %v2194 = vcombine.low %v2158, %v2158
      %v2196 = vunpack.c.l.s4 1983009808
      %v2197 = vunpack.c.0.s8 %v2196
      %v2198 = vlaneseq
      %v2199 = vshrl.u32 %v2198, 7
      %v2200 = vsub.s32 %v2197, %v2199
      %v2201 = vrot.slane %v2194, %v2200
      %v2203 = vunpack.c.l.s4 1983009808
      %v2204 = vunpack.c.0.s8 %v2203
      %v2205 = vlaneseq
      %v2206 = vshrl.u32 %v2205, 7
      %v2207 = vsub.s32 %v2204, %v2206
      %v2208 = vrot.slane %v2158, %v2207
      %v2209 = vcombine.low %v2159, %v2159
      %v2211 = vunpack.c.l.s4 1983009808
      %v2212 = vunpack.c.0.s8 %v2211
      %v2213 = vlaneseq
      %v2214 = vshrl.u32 %v2213, 7
      %v2215 = vsub.s32 %v2212, %v2214
      %v2216 = vrot.slane %v2209, %v2215
      %v2218 = vunpack.c.l.s4 1983009808
      %v2219 = vunpack.c.0.s8 %v2218
      %v2220 = vlaneseq
      %v2221 = vshrl.u32 %v2220, 7
      %v2222 = vsub.s32 %v2219, %v2221
      %v2223 = vrot.slane %v2159, %v2222
      %2232 = vst [vmem:[#allocation4 + $0x1c0] sm:$0xcc] %v2171
      %2233 = vst [vmem:[#allocation4 + $0x1c8] sm:$0xcc] %v2178
      %2234 = vst [vmem:[#allocation4 + $0x1d0] sm:$0xcc] %v2186
      %2235 = vst [vmem:[#allocation4 + $0x1d8] sm:$0xcc] %v2193
      %2236 = vst [vmem:[#allocation4 + $0x1e0] sm:$0xcc] %v2201
      %2237 = vst [vmem:[#allocation4 + $0x1e8] sm:$0xcc] %v2208
      %2238 = vst [vmem:[#allocation4 + $0x1f0] sm:$0xcc] %v2216
      %2239 = vst [vmem:[#allocation4 + $0x1f8] sm:$0xcc] %v2223
      %v2240 = vld [vmem:[#allocation3 + $0x6] sm:$0xff]
      %v2241 = vld [vmem:[#allocation3 + $0xe] sm:$0xff]
      %v2242 = vld [vmem:[#allocation3 + $0x16] sm:$0xff]
      %v2243 = vld [vmem:[#allocation3 + $0x1e] sm:$0xff]
      %v2248 = vcombine.high %v2240, %v2240
      %v2250 = vunpack.c.l.s4 1983009808
      %v2251 = vunpack.c.0.s8 %v2250
      %v2252 = vlaneseq
      %v2253 = vshrl.u32 %v2252, 7
      %v2254 = vsub.s32 %v2251, %v2253
      %v2255 = vrot.slane %v2240, %v2254
      %v2257 = vunpack.c.l.s4 1983009808
      %v2258 = vunpack.c.0.s8 %v2257
      %v2259 = vlaneseq
      %v2260 = vshrl.u32 %v2259, 7
      %v2261 = vsub.s32 %v2258, %v2260
      %v2262 = vrot.slane %v2248, %v2261
      %v2263 = vcombine.high %v2241, %v2241
      %v2265 = vunpack.c.l.s4 1983009808
      %v2266 = vunpack.c.0.s8 %v2265
      %v2267 = vlaneseq
      %v2268 = vshrl.u32 %v2267, 7
      %v2269 = vsub.s32 %v2266, %v2268
      %v2270 = vrot.slane %v2241, %v2269
      %v2272 = vunpack.c.l.s4 1983009808
      %v2273 = vunpack.c.0.s8 %v2272
      %v2274 = vlaneseq
      %v2275 = vshrl.u32 %v2274, 7
      %v2276 = vsub.s32 %v2273, %v2275
      %v2277 = vrot.slane %v2263, %v2276
      %v2278 = vcombine.high %v2242, %v2242
      %v2280 = vunpack.c.l.s4 1983009808
      %v2281 = vunpack.c.0.s8 %v2280
      %v2282 = vlaneseq
      %v2283 = vshrl.u32 %v2282, 7
      %v2284 = vsub.s32 %v2281, %v2283
      %v2285 = vrot.slane %v2242, %v2284
      %v2287 = vunpack.c.l.s4 1983009808
      %v2288 = vunpack.c.0.s8 %v2287
      %v2289 = vlaneseq
      %v2290 = vshrl.u32 %v2289, 7
      %v2291 = vsub.s32 %v2288, %v2290
      %v2292 = vrot.slane %v2278, %v2291
      %v2293 = vcombine.high %v2243, %v2243
      %v2295 = vunpack.c.l.s4 1983009808
      %v2296 = vunpack.c.0.s8 %v2295
      %v2297 = vlaneseq
      %v2298 = vshrl.u32 %v2297, 7
      %v2299 = vsub.s32 %v2296, %v2298
      %v2300 = vrot.slane %v2243, %v2299
      %v2302 = vunpack.c.l.s4 1983009808
      %v2303 = vunpack.c.0.s8 %v2302
      %v2304 = vlaneseq
      %v2305 = vshrl.u32 %v2304, 7
      %v2306 = vsub.s32 %v2303, %v2305
      %v2307 = vrot.slane %v2293, %v2306
      %2316 = vst [vmem:[#allocation4 + $0x2c0] sm:$0x33] %v2255
      %2317 = vst [vmem:[#allocation4 + $0x2c8] sm:$0x33] %v2262
      %2318 = vst [vmem:[#allocation4 + $0x2d0] sm:$0x33] %v2270
      %2319 = vst [vmem:[#allocation4 + $0x2d8] sm:$0x33] %v2277
      %2320 = vst [vmem:[#allocation4 + $0x2e0] sm:$0x33] %v2285
      %2321 = vst [vmem:[#allocation4 + $0x2e8] sm:$0x33] %v2292
      %2322 = vst [vmem:[#allocation4 + $0x2f0] sm:$0x33] %v2300
      %2323 = vst [vmem:[#allocation4 + $0x2f8] sm:$0x33] %v2307
      %v2324 = vld [vmem:[#allocation3 + $0x8] sm:$0xff]
      %v2325 = vld [vmem:[#allocation3 + $0x10] sm:$0xff]
      %v2326 = vld [vmem:[#allocation3 + $0x18] sm:$0xff]
      %v2327 = vld [vmem:[#allocation3 + $0x20] sm:$0xff]
      %v2332 = vcombine.low %v2324, %v2324
      %v2334 = vunpack.c.l.s4 1983009808
      %v2335 = vunpack.c.0.s8 %v2334
      %v2336 = vlaneseq
      %v2337 = vshrl.u32 %v2336, 7
      %v2338 = vsub.s32 %v2335, %v2337
      %v2339 = vrot.slane %v2332, %v2338
      %v2341 = vunpack.c.l.s4 1983009808
      %v2342 = vunpack.c.0.s8 %v2341
      %v2343 = vlaneseq
      %v2344 = vshrl.u32 %v2343, 7
      %v2345 = vsub.s32 %v2342, %v2344
      %v2346 = vrot.slane %v2324, %v2345
      %v2347 = vcombine.low %v2325, %v2325
      %v2349 = vunpack.c.l.s4 1983009808
      %v2350 = vunpack.c.0.s8 %v2349
      %v2351 = vlaneseq
      %v2352 = vshrl.u32 %v2351, 7
      %v2353 = vsub.s32 %v2350, %v2352
      %v2354 = vrot.slane %v2347, %v2353
      %v2356 = vunpack.c.l.s4 1983009808
      %v2357 = vunpack.c.0.s8 %v2356
      %v2358 = vlaneseq
      %v2359 = vshrl.u32 %v2358, 7
      %v2360 = vsub.s32 %v2357, %v2359
      %v2361 = vrot.slane %v2325, %v2360
      %v2362 = vcombine.low %v2326, %v2326
      %v2364 = vunpack.c.l.s4 1983009808
      %v2365 = vunpack.c.0.s8 %v2364
      %v2366 = vlaneseq
      %v2367 = vshrl.u32 %v2366, 7
      %v2368 = vsub.s32 %v2365, %v2367
      %v2369 = vrot.slane %v2362, %v2368
      %v2371 = vunpack.c.l.s4 1983009808
      %v2372 = vunpack.c.0.s8 %v2371
      %v2373 = vlaneseq
      %v2374 = vshrl.u32 %v2373, 7
      %v2375 = vsub.s32 %v2372, %v2374
      %v2376 = vrot.slane %v2326, %v2375
      %v2377 = vcombine.low %v2327, %v2327
      %v2379 = vunpack.c.l.s4 1983009808
      %v2380 = vunpack.c.0.s8 %v2379
      %v2381 = vlaneseq
      %v2382 = vshrl.u32 %v2381, 7
      %v2383 = vsub.s32 %v2380, %v2382
      %v2384 = vrot.slane %v2377, %v2383
      %v2386 = vunpack.c.l.s4 1983009808
      %v2387 = vunpack.c.0.s8 %v2386
      %v2388 = vlaneseq
      %v2389 = vshrl.u32 %v2388, 7
      %v2390 = vsub.s32 %v2387, %v2389
      %v2391 = vrot.slane %v2327, %v2390
      %2400 = vst [vmem:[#allocation4 + $0x380] sm:$0xcc] %v2339
      %2401 = vst [vmem:[#allocation4 + $0x388] sm:$0xcc] %v2346
      %2402 = vst [vmem:[#allocation4 + $0x390] sm:$0xcc] %v2354
      %2403 = vst [vmem:[#allocation4 + $0x398] sm:$0xcc] %v2361
      %2404 = vst [vmem:[#allocation4 + $0x3a0] sm:$0xcc] %v2369
      %2405 = vst [vmem:[#allocation4 + $0x3a8] sm:$0xcc] %v2376
      %2406 = vst [vmem:[#allocation4 + $0x3b0] sm:$0xcc] %v2384
      %2407 = vst [vmem:[#allocation4 + $0x3b8] sm:$0xcc] %v2391
      %v2408 = vld [vmem:[#allocation3 + $0xa] sm:$0xff]
      %v2409 = vld [vmem:[#allocation3 + $0x12] sm:$0xff]
      %v2410 = vld [vmem:[#allocation3 + $0x1a] sm:$0xff]
      %v2411 = vld [vmem:[#allocation3 + $0x22] sm:$0xff]
      %v2416 = vcombine.high %v2408, %v2408
      %v2418 = vunpack.c.l.s4 1983009808
      %v2419 = vunpack.c.0.s8 %v2418
      %v2420 = vlaneseq
      %v2421 = vshrl.u32 %v2420, 7
      %v2422 = vsub.s32 %v2419, %v2421
      %v2423 = vrot.slane %v2408, %v2422
      %v2425 = vunpack.c.l.s4 1983009808
      %v2426 = vunpack.c.0.s8 %v2425
      %v2427 = vlaneseq
      %v2428 = vshrl.u32 %v2427, 7
      %v2429 = vsub.s32 %v2426, %v2428
      %v2430 = vrot.slane %v2416, %v2429
      %v2431 = vcombine.high %v2409, %v2409
      %v2433 = vunpack.c.l.s4 1983009808
      %v2434 = vunpack.c.0.s8 %v2433
      %v2435 = vlaneseq
      %v2436 = vshrl.u32 %v2435, 7
      %v2437 = vsub.s32 %v2434, %v2436
      %v2438 = vrot.slane %v2409, %v2437
      %v2440 = vunpack.c.l.s4 1983009808
      %v2441 = vunpack.c.0.s8 %v2440
      %v2442 = vlaneseq
      %v2443 = vshrl.u32 %v2442, 7
      %v2444 = vsub.s32 %v2441, %v2443
      %v2445 = vrot.slane %v2431, %v2444
      %v2446 = vcombine.high %v2410, %v2410
      %v2448 = vunpack.c.l.s4 1983009808
      %v2449 = vunpack.c.0.s8 %v2448
      %v2450 = vlaneseq
      %v2451 = vshrl.u32 %v2450, 7
      %v2452 = vsub.s32 %v2449, %v2451
      %v2453 = vrot.slane %v2410, %v2452
      %v2455 = vunpack.c.l.s4 1983009808
      %v2456 = vunpack.c.0.s8 %v2455
      %v2457 = vlaneseq
      %v2458 = vshrl.u32 %v2457, 7
      %v2459 = vsub.s32 %v2456, %v2458
      %v2460 = vrot.slane %v2446, %v2459
      %v2461 = vcombine.high %v2411, %v2411
      %v2463 = vunpack.c.l.s4 1983009808
      %v2464 = vunpack.c.0.s8 %v2463
      %v2465 = vlaneseq
      %v2466 = vshrl.u32 %v2465, 7
      %v2467 = vsub.s32 %v2464, %v2466
      %v2468 = vrot.slane %v2411, %v2467
      %v2470 = vunpack.c.l.s4 1983009808
      %v2471 = vunpack.c.0.s8 %v2470
      %v2472 = vlaneseq
      %v2473 = vshrl.u32 %v2472, 7
      %v2474 = vsub.s32 %v2471, %v2473
      %v2475 = vrot.slane %v2461, %v2474
      %2484 = vst [vmem:[#allocation4 + $0x480] sm:$0x33] %v2423
      %2485 = vst [vmem:[#allocation4 + $0x488] sm:$0x33] %v2430
      %2486 = vst [vmem:[#allocation4 + $0x490] sm:$0x33] %v2438
      %2487 = vst [vmem:[#allocation4 + $0x498] sm:$0x33] %v2445
      %2488 = vst [vmem:[#allocation4 + $0x4a0] sm:$0x33] %v2453
      %2489 = vst [vmem:[#allocation4 + $0x4a8] sm:$0x33] %v2460
      %2490 = vst [vmem:[#allocation4 + $0x4b0] sm:$0x33] %v2468
      %2491 = vst [vmem:[#allocation4 + $0x4b8] sm:$0x33] %v2475
      %v2492 = vld [vmem:[#allocation3 + $0xc] sm:$0xff]
      %v2493 = vld [vmem:[#allocation3 + $0x14] sm:$0xff]
      %v2494 = vld [vmem:[#allocation3 + $0x1c] sm:$0xff]
      %v2495 = vld [vmem:[#allocation3 + $0x24] sm:$0xff]
      %v2500 = vcombine.low %v2492, %v2492
      %v2502 = vunpack.c.l.s4 1983009808
      %v2503 = vunpack.c.0.s8 %v2502
      %v2504 = vlaneseq
      %v2505 = vshrl.u32 %v2504, 7
      %v2506 = vsub.s32 %v2503, %v2505
      %v2507 = vrot.slane %v2500, %v2506
      %v2509 = vunpack.c.l.s4 1983009808
      %v2510 = vunpack.c.0.s8 %v2509
      %v2511 = vlaneseq
      %v2512 = vshrl.u32 %v2511, 7
      %v2513 = vsub.s32 %v2510, %v2512
      %v2514 = vrot.slane %v2492, %v2513
      %v2515 = vcombine.low %v2493, %v2493
      %v2517 = vunpack.c.l.s4 1983009808
      %v2518 = vunpack.c.0.s8 %v2517
      %v2519 = vlaneseq
      %v2520 = vshrl.u32 %v2519, 7
      %v2521 = vsub.s32 %v2518, %v2520
      %v2522 = vrot.slane %v2515, %v2521
      %v2524 = vunpack.c.l.s4 1983009808
      %v2525 = vunpack.c.0.s8 %v2524
      %v2526 = vlaneseq
      %v2527 = vshrl.u32 %v2526, 7
      %v2528 = vsub.s32 %v2525, %v2527
      %v2529 = vrot.slane %v2493, %v2528
      %v2530 = vcombine.low %v2494, %v2494
      %v2532 = vunpack.c.l.s4 1983009808
      %v2533 = vunpack.c.0.s8 %v2532
      %v2534 = vlaneseq
      %v2535 = vshrl.u32 %v2534, 7
      %v2536 = vsub.s32 %v2533, %v2535
      %v2537 = vrot.slane %v2530, %v2536
      %v2539 = vunpack.c.l.s4 1983009808
      %v2540 = vunpack.c.0.s8 %v2539
      %v2541 = vlaneseq
      %v2542 = vshrl.u32 %v2541, 7
      %v2543 = vsub.s32 %v2540, %v2542
      %v2544 = vrot.slane %v2494, %v2543
      %v2545 = vcombine.low %v2495, %v2495
      %v2547 = vunpack.c.l.s4 1983009808
      %v2548 = vunpack.c.0.s8 %v2547
      %v2549 = vlaneseq
      %v2550 = vshrl.u32 %v2549, 7
      %v2551 = vsub.s32 %v2548, %v2550
      %v2552 = vrot.slane %v2545, %v2551
      %v2554 = vunpack.c.l.s4 1983009808
      %v2555 = vunpack.c.0.s8 %v2554
      %v2556 = vlaneseq
      %v2557 = vshrl.u32 %v2556, 7
      %v2558 = vsub.s32 %v2555, %v2557
      %v2559 = vrot.slane %v2495, %v2558
      %2568 = vst [vmem:[#allocation4 + $0x540] sm:$0xcc] %v2507
      %2569 = vst [vmem:[#allocation4 + $0x548] sm:$0xcc] %v2514
      %2570 = vst [vmem:[#allocation4 + $0x550] sm:$0xcc] %v2522
      %2571 = vst [vmem:[#allocation4 + $0x558] sm:$0xcc] %v2529
      %2572 = vst [vmem:[#allocation4 + $0x560] sm:$0xcc] %v2537
      %2573 = vst [vmem:[#allocation4 + $0x568] sm:$0xcc] %v2544
      %2574 = vst [vmem:[#allocation4 + $0x570] sm:$0xcc] %v2552
      %2575 = vst [vmem:[#allocation4 + $0x578] sm:$0xcc] %v2559
      %v2576 = vld [vmem:[#allocation2] sm:$0xff]
      %v2577 = vld [vmem:[#allocation2 + $0x8] sm:$0xff]
      %v2578 = vld [vmem:[#allocation2 + $0x10] sm:$0xff]
      %v2579 = vld [vmem:[#allocation2 + $0x18] sm:$0xff]
      %v2580 = vld [vmem:[#allocation2 + $0x20] sm:$0xff]
      %v2581 = vld [vmem:[#allocation2 + $0x28] sm:$0x3f]
      %2588 = vrot.lane.b32.xlu0 %v2576, 1
      %v2589 = vpop.permute.xlu0 %2588
      %2590 = vrot.lane.b32.xlu0 %v2577, 1
      %v2591 = vpop.permute.xlu0 %2590
      %2592 = vrot.lane.b32.xlu0 %v2578, 1
      %v2593 = vpop.permute.xlu0 %2592
      %2594 = vrot.lane.b32.xlu0 %v2579, 1
      %v2595 = vpop.permute.xlu0 %2594
      %2596 = vrot.lane.b32.xlu0 %v2580, 1
      %v2597 = vpop.permute.xlu0 %2596
      %2598 = vrot.lane.b32.xlu0 %v2581, 1
      %v2599 = vpop.permute.xlu0 %2598
      %v2600 = vrot.slane %v2589, 2
      %v2601 = vrot.slane %v2591, 2
      %v2602 = vrot.slane %v2593, 2
      %v2603 = vrot.slane %v2595, 2
      %v2604 = vrot.slane %v2597, 2
      %v2605 = vrot.slane %v2599, 2
      %v2606 = vsel %vm1321, %v2600, %v2601
      %vm2607 = vcmask 7168
      %v2608 = vsel %vm2607, %v2589, %v2606
      %v2609 = vsel %vm1321, %v2601, %v2602
      %v2610 = vsel %vm2607, %v2591, %v2609
      %v2611 = vsel %vm1321, %v2602, %v2603
      %v2612 = vsel %vm2607, %v2593, %v2611
      %v2613 = vsel %vm1321, %v2603, %v2604
      %v2614 = vsel %vm2607, %v2595, %v2613
      %v2615 = vsel %vm1321, %v2604, %v2605
      %v2616 = vsel %vm2607, %v2597, %v2615
      %v2617 = vsel %vm2607, %v2599, %v2605
      %2624 = vst [vmem:[#allocation3] sm:$0xff] %v2608
      %2625 = vst [vmem:[#allocation3 + $0x8] sm:$0xff] %v2610
      %2626 = vst [vmem:[#allocation3 + $0x10] sm:$0xff] %v2612
      %2627 = vst [vmem:[#allocation3 + $0x18] sm:$0xff] %v2614
      %2628 = vst [vmem:[#allocation3 + $0x20] sm:$0xff] %v2616
      %2629 = vst [vmem:[#allocation3 + $0x28] sm:$0xf] %v2617
      %v2630 = vld [vmem:[#allocation3] sm:$0xff]
      %v2631 = vld [vmem:[#allocation3 + $0x8] sm:$0xff]
      %v2632 = vld [vmem:[#allocation3 + $0x10] sm:$0xff]
      %v2633 = vld [vmem:[#allocation3 + $0x18] sm:$0xff]
      %v2638 = vcombine.high %v2630, %v2630
      %v2640 = vunpack.c.l.s4 1983009808
      %v2641 = vunpack.c.0.s8 %v2640
      %v2642 = vlaneseq
      %v2643 = vshrl.u32 %v2642, 7
      %v2644 = vsub.s32 %v2641, %v2643
      %v2645 = vrot.slane %v2630, %v2644
      %v2647 = vunpack.c.l.s4 1983009808
      %v2648 = vunpack.c.0.s8 %v2647
      %v2649 = vlaneseq
      %v2650 = vshrl.u32 %v2649, 7
      %v2651 = vsub.s32 %v2648, %v2650
      %v2652 = vrot.slane %v2638, %v2651
      %v2653 = vcombine.high %v2631, %v2631
      %v2655 = vunpack.c.l.s4 1983009808
      %v2656 = vunpack.c.0.s8 %v2655
      %v2657 = vlaneseq
      %v2658 = vshrl.u32 %v2657, 7
      %v2659 = vsub.s32 %v2656, %v2658
      %v2660 = vrot.slane %v2631, %v2659
      %v2662 = vunpack.c.l.s4 1983009808
      %v2663 = vunpack.c.0.s8 %v2662
      %v2664 = vlaneseq
      %v2665 = vshrl.u32 %v2664, 7
      %v2666 = vsub.s32 %v2663, %v2665
      %v2667 = vrot.slane %v2653, %v2666
      %v2668 = vcombine.high %v2632, %v2632
      %v2670 = vunpack.c.l.s4 1983009808
      %v2671 = vunpack.c.0.s8 %v2670
      %v2672 = vlaneseq
      %v2673 = vshrl.u32 %v2672, 7
      %v2674 = vsub.s32 %v2671, %v2673
      %v2675 = vrot.slane %v2632, %v2674
      %v2677 = vunpack.c.l.s4 1983009808
      %v2678 = vunpack.c.0.s8 %v2677
      %v2679 = vlaneseq
      %v2680 = vshrl.u32 %v2679, 7
      %v2681 = vsub.s32 %v2678, %v2680
      %v2682 = vrot.slane %v2668, %v2681
      %v2683 = vcombine.high %v2633, %v2633
      %v2685 = vunpack.c.l.s4 1983009808
      %v2686 = vunpack.c.0.s8 %v2685
      %v2687 = vlaneseq
      %v2688 = vshrl.u32 %v2687, 7
      %v2689 = vsub.s32 %v2686, %v2688
      %v2690 = vrot.slane %v2633, %v2689
      %v2692 = vunpack.c.l.s4 1983009808
      %v2693 = vunpack.c.0.s8 %v2692
      %v2694 = vlaneseq
      %v2695 = vshrl.u32 %v2694, 7
      %v2696 = vsub.s32 %v2693, %v2695
      %v2697 = vrot.slane %v2683, %v2696
      %2706 = vst [vmem:[#allocation4 + $0x40] sm:$0x33] %v2645
      %2707 = vst [vmem:[#allocation4 + $0x48] sm:$0x33] %v2652
      %2708 = vst [vmem:[#allocation4 + $0x50] sm:$0x33] %v2660
      %2709 = vst [vmem:[#allocation4 + $0x58] sm:$0x33] %v2667
      %2710 = vst [vmem:[#allocation4 + $0x60] sm:$0x33] %v2675
      %2711 = vst [vmem:[#allocation4 + $0x68] sm:$0x33] %v2682
      %2712 = vst [vmem:[#allocation4 + $0x70] sm:$0x33] %v2690
      %2713 = vst [vmem:[#allocation4 + $0x78] sm:$0x33] %v2697
      %v2714 = vld [vmem:[#allocation3 + $0x2] sm:$0xff]
      %v2715 = vld [vmem:[#allocation3 + $0xa] sm:$0xff]
      %v2716 = vld [vmem:[#allocation3 + $0x12] sm:$0xff]
      %v2717 = vld [vmem:[#allocation3 + $0x1a] sm:$0xff]
      %v2722 = vcombine.low %v2714, %v2714
      %v2724 = vunpack.c.l.s4 1983009808
      %v2725 = vunpack.c.0.s8 %v2724
      %v2726 = vlaneseq
      %v2727 = vshrl.u32 %v2726, 7
      %v2728 = vsub.s32 %v2725, %v2727
      %v2729 = vrot.slane %v2722, %v2728
      %v2731 = vunpack.c.l.s4 1983009808
      %v2732 = vunpack.c.0.s8 %v2731
      %v2733 = vlaneseq
      %v2734 = vshrl.u32 %v2733, 7
      %v2735 = vsub.s32 %v2732, %v2734
      %v2736 = vrot.slane %v2714, %v2735
      %v2737 = vcombine.low %v2715, %v2715
      %v2739 = vunpack.c.l.s4 1983009808
      %v2740 = vunpack.c.0.s8 %v2739
      %v2741 = vlaneseq
      %v2742 = vshrl.u32 %v2741, 7
      %v2743 = vsub.s32 %v2740, %v2742
      %v2744 = vrot.slane %v2737, %v2743
      %v2746 = vunpack.c.l.s4 1983009808
      %v2747 = vunpack.c.0.s8 %v2746
      %v2748 = vlaneseq
      %v2749 = vshrl.u32 %v2748, 7
      %v2750 = vsub.s32 %v2747, %v2749
      %v2751 = vrot.slane %v2715, %v2750
      %v2752 = vcombine.low %v2716, %v2716
      %v2754 = vunpack.c.l.s4 1983009808
      %v2755 = vunpack.c.0.s8 %v2754
      %v2756 = vlaneseq
      %v2757 = vshrl.u32 %v2756, 7
      %v2758 = vsub.s32 %v2755, %v2757
      %v2759 = vrot.slane %v2752, %v2758
      %v2761 = vunpack.c.l.s4 1983009808
      %v2762 = vunpack.c.0.s8 %v2761
      %v2763 = vlaneseq
      %v2764 = vshrl.u32 %v2763, 7
      %v2765 = vsub.s32 %v2762, %v2764
      %v2766 = vrot.slane %v2716, %v2765
      %v2767 = vcombine.low %v2717, %v2717
      %v2769 = vunpack.c.l.s4 1983009808
      %v2770 = vunpack.c.0.s8 %v2769
      %v2771 = vlaneseq
      %v2772 = vshrl.u32 %v2771, 7
      %v2773 = vsub.s32 %v2770, %v2772
      %v2774 = vrot.slane %v2767, %v2773
      %v2776 = vunpack.c.l.s4 1983009808
      %v2777 = vunpack.c.0.s8 %v2776
      %v2778 = vlaneseq
      %v2779 = vshrl.u32 %v2778, 7
      %v2780 = vsub.s32 %v2777, %v2779
      %v2781 = vrot.slane %v2717, %v2780
      %2790 = vst [vmem:[#allocation4 + $0x100] sm:$0xcc] %v2729
      %2791 = vst [vmem:[#allocation4 + $0x108] sm:$0xcc] %v2736
      %2792 = vst [vmem:[#allocation4 + $0x110] sm:$0xcc] %v2744
      %2793 = vst [vmem:[#allocation4 + $0x118] sm:$0xcc] %v2751
      %2794 = vst [vmem:[#allocation4 + $0x120] sm:$0xcc] %v2759
      %2795 = vst [vmem:[#allocation4 + $0x128] sm:$0xcc] %v2766
      %2796 = vst [vmem:[#allocation4 + $0x130] sm:$0xcc] %v2774
      %2797 = vst [vmem:[#allocation4 + $0x138] sm:$0xcc] %v2781
      %v2798 = vld [vmem:[#allocation3 + $0x4] sm:$0xff]
      %v2799 = vld [vmem:[#allocation3 + $0xc] sm:$0xff]
      %v2800 = vld [vmem:[#allocation3 + $0x14] sm:$0xff]
      %v2801 = vld [vmem:[#allocation3 + $0x1c] sm:$0xff]
      %v2806 = vcombine.high %v2798, %v2798
      %v2808 = vunpack.c.l.s4 1983009808
      %v2809 = vunpack.c.0.s8 %v2808
      %v2810 = vlaneseq
      %v2811 = vshrl.u32 %v2810, 7
      %v2812 = vsub.s32 %v2809, %v2811
      %v2813 = vrot.slane %v2798, %v2812
      %v2815 = vunpack.c.l.s4 1983009808
      %v2816 = vunpack.c.0.s8 %v2815
      %v2817 = vlaneseq
      %v2818 = vshrl.u32 %v2817, 7
      %v2819 = vsub.s32 %v2816, %v2818
      %v2820 = vrot.slane %v2806, %v2819
      %v2821 = vcombine.high %v2799, %v2799
      %v2823 = vunpack.c.l.s4 1983009808
      %v2824 = vunpack.c.0.s8 %v2823
      %v2825 = vlaneseq
      %v2826 = vshrl.u32 %v2825, 7
      %v2827 = vsub.s32 %v2824, %v2826
      %v2828 = vrot.slane %v2799, %v2827
      %v2830 = vunpack.c.l.s4 1983009808
      %v2831 = vunpack.c.0.s8 %v2830
      %v2832 = vlaneseq
      %v2833 = vshrl.u32 %v2832, 7
      %v2834 = vsub.s32 %v2831, %v2833
      %v2835 = vrot.slane %v2821, %v2834
      %v2836 = vcombine.high %v2800, %v2800
      %v2838 = vunpack.c.l.s4 1983009808
      %v2839 = vunpack.c.0.s8 %v2838
      %v2840 = vlaneseq
      %v2841 = vshrl.u32 %v2840, 7
      %v2842 = vsub.s32 %v2839, %v2841
      %v2843 = vrot.slane %v2800, %v2842
      %v2845 = vunpack.c.l.s4 1983009808
      %v2846 = vunpack.c.0.s8 %v2845
      %v2847 = vlaneseq
      %v2848 = vshrl.u32 %v2847, 7
      %v2849 = vsub.s32 %v2846, %v2848
      %v2850 = vrot.slane %v2836, %v2849
      %v2851 = vcombine.high %v2801, %v2801
      %v2853 = vunpack.c.l.s4 1983009808
      %v2854 = vunpack.c.0.s8 %v2853
      %v2855 = vlaneseq
      %v2856 = vshrl.u32 %v2855, 7
      %v2857 = vsub.s32 %v2854, %v2856
      %v2858 = vrot.slane %v2801, %v2857
      %v2860 = vunpack.c.l.s4 1983009808
      %v2861 = vunpack.c.0.s8 %v2860
      %v2862 = vlaneseq
      %v2863 = vshrl.u32 %v2862, 7
      %v2864 = vsub.s32 %v2861, %v2863
      %v2865 = vrot.slane %v2851, %v2864
      %2874 = vst [vmem:[#allocation4 + $0x200] sm:$0x33] %v2813
      %2875 = vst [vmem:[#allocation4 + $0x208] sm:$0x33] %v2820
      %2876 = vst [vmem:[#allocation4 + $0x210] sm:$0x33] %v2828
      %2877 = vst [vmem:[#allocation4 + $0x218] sm:$0x33] %v2835
      %2878 = vst [vmem:[#allocation4 + $0x220] sm:$0x33] %v2843
      %2879 = vst [vmem:[#allocation4 + $0x228] sm:$0x33] %v2850
      %2880 = vst [vmem:[#allocation4 + $0x230] sm:$0x33] %v2858
      %2881 = vst [vmem:[#allocation4 + $0x238] sm:$0x33] %v2865
      %v2882 = vld [vmem:[#allocation3 + $0x6] sm:$0xff]
      %v2883 = vld [vmem:[#allocation3 + $0xe] sm:$0xff]
      %v2884 = vld [vmem:[#allocation3 + $0x16] sm:$0xff]
      %v2885 = vld [vmem:[#allocation3 + $0x1e] sm:$0xff]
      %v2890 = vcombine.low %v2882, %v2882
      %v2892 = vunpack.c.l.s4 1983009808
      %v2893 = vunpack.c.0.s8 %v2892
      %v2894 = vlaneseq
      %v2895 = vshrl.u32 %v2894, 7
      %v2896 = vsub.s32 %v2893, %v2895
      %v2897 = vrot.slane %v2890, %v2896
      %v2899 = vunpack.c.l.s4 1983009808
      %v2900 = vunpack.c.0.s8 %v2899
      %v2901 = vlaneseq
      %v2902 = vshrl.u32 %v2901, 7
      %v2903 = vsub.s32 %v2900, %v2902
      %v2904 = vrot.slane %v2882, %v2903
      %v2905 = vcombine.low %v2883, %v2883
      %v2907 = vunpack.c.l.s4 1983009808
      %v2908 = vunpack.c.0.s8 %v2907
      %v2909 = vlaneseq
      %v2910 = vshrl.u32 %v2909, 7
      %v2911 = vsub.s32 %v2908, %v2910
      %v2912 = vrot.slane %v2905, %v2911
      %v2914 = vunpack.c.l.s4 1983009808
      %v2915 = vunpack.c.0.s8 %v2914
      %v2916 = vlaneseq
      %v2917 = vshrl.u32 %v2916, 7
      %v2918 = vsub.s32 %v2915, %v2917
      %v2919 = vrot.slane %v2883, %v2918
      %v2920 = vcombine.low %v2884, %v2884
      %v2922 = vunpack.c.l.s4 1983009808
      %v2923 = vunpack.c.0.s8 %v2922
      %v2924 = vlaneseq
      %v2925 = vshrl.u32 %v2924, 7
      %v2926 = vsub.s32 %v2923, %v2925
      %v2927 = vrot.slane %v2920, %v2926
      %v2929 = vunpack.c.l.s4 1983009808
      %v2930 = vunpack.c.0.s8 %v2929
      %v2931 = vlaneseq
      %v2932 = vshrl.u32 %v2931, 7
      %v2933 = vsub.s32 %v2930, %v2932
      %v2934 = vrot.slane %v2884, %v2933
      %v2935 = vcombine.low %v2885, %v2885
      %v2937 = vunpack.c.l.s4 1983009808
      %v2938 = vunpack.c.0.s8 %v2937
      %v2939 = vlaneseq
      %v2940 = vshrl.u32 %v2939, 7
      %v2941 = vsub.s32 %v2938, %v2940
      %v2942 = vrot.slane %v2935, %v2941
      %v2944 = vunpack.c.l.s4 1983009808
      %v2945 = vunpack.c.0.s8 %v2944
      %v2946 = vlaneseq
      %v2947 = vshrl.u32 %v2946, 7
      %v2948 = vsub.s32 %v2945, %v2947
      %v2949 = vrot.slane %v2885, %v2948
      %2958 = vst [vmem:[#allocation4 + $0x2c0] sm:$0xcc] %v2897
      %2959 = vst [vmem:[#allocation4 + $0x2c8] sm:$0xcc] %v2904
      %2960 = vst [vmem:[#allocation4 + $0x2d0] sm:$0xcc] %v2912
      %2961 = vst [vmem:[#allocation4 + $0x2d8] sm:$0xcc] %v2919
      %2962 = vst [vmem:[#allocation4 + $0x2e0] sm:$0xcc] %v2927
      %2963 = vst [vmem:[#allocation4 + $0x2e8] sm:$0xcc] %v2934
      %2964 = vst [vmem:[#allocation4 + $0x2f0] sm:$0xcc] %v2942
      %2965 = vst [vmem:[#allocation4 + $0x2f8] sm:$0xcc] %v2949
      %v2966 = vld [vmem:[#allocation3 + $0x8] sm:$0xff]
      %v2967 = vld [vmem:[#allocation3 + $0x10] sm:$0xff]
      %v2968 = vld [vmem:[#allocation3 + $0x18] sm:$0xff]
      %v2969 = vld [vmem:[#allocation3 + $0x20] sm:$0xff]
      %v2974 = vcombine.high %v2966, %v2966
      %v2976 = vunpack.c.l.s4 1983009808
      %v2977 = vunpack.c.0.s8 %v2976
      %v2978 = vlaneseq
      %v2979 = vshrl.u32 %v2978, 7
      %v2980 = vsub.s32 %v2977, %v2979
      %v2981 = vrot.slane %v2966, %v2980
      %v2983 = vunpack.c.l.s4 1983009808
      %v2984 = vunpack.c.0.s8 %v2983
      %v2985 = vlaneseq
      %v2986 = vshrl.u32 %v2985, 7
      %v2987 = vsub.s32 %v2984, %v2986
      %v2988 = vrot.slane %v2974, %v2987
      %v2989 = vcombine.high %v2967, %v2967
      %v2991 = vunpack.c.l.s4 1983009808
      %v2992 = vunpack.c.0.s8 %v2991
      %v2993 = vlaneseq
      %v2994 = vshrl.u32 %v2993, 7
      %v2995 = vsub.s32 %v2992, %v2994
      %v2996 = vrot.slane %v2967, %v2995
      %v2998 = vunpack.c.l.s4 1983009808
      %v2999 = vunpack.c.0.s8 %v2998
      %v3000 = vlaneseq
      %v3001 = vshrl.u32 %v3000, 7
      %v3002 = vsub.s32 %v2999, %v3001
      %v3003 = vrot.slane %v2989, %v3002
      %v3004 = vcombine.high %v2968, %v2968
      %v3006 = vunpack.c.l.s4 1983009808
      %v3007 = vunpack.c.0.s8 %v3006
      %v3008 = vlaneseq
      %v3009 = vshrl.u32 %v3008, 7
      %v3010 = vsub.s32 %v3007, %v3009
      %v3011 = vrot.slane %v2968, %v3010
      %v3013 = vunpack.c.l.s4 1983009808
      %v3014 = vunpack.c.0.s8 %v3013
      %v3015 = vlaneseq
      %v3016 = vshrl.u32 %v3015, 7
      %v3017 = vsub.s32 %v3014, %v3016
      %v3018 = vrot.slane %v3004, %v3017
      %v3019 = vcombine.high %v2969, %v2969
      %v3021 = vunpack.c.l.s4 1983009808
      %v3022 = vunpack.c.0.s8 %v3021
      %v3023 = vlaneseq
      %v3024 = vshrl.u32 %v3023, 7
      %v3025 = vsub.s32 %v3022, %v3024
      %v3026 = vrot.slane %v2969, %v3025
      %v3028 = vunpack.c.l.s4 1983009808
      %v3029 = vunpack.c.0.s8 %v3028
      %v3030 = vlaneseq
      %v3031 = vshrl.u32 %v3030, 7
      %v3032 = vsub.s32 %v3029, %v3031
      %v3033 = vrot.slane %v3019, %v3032
      %3042 = vst [vmem:[#allocation4 + $0x3c0] sm:$0x33] %v2981
      %3043 = vst [vmem:[#allocation4 + $0x3c8] sm:$0x33] %v2988
      %3044 = vst [vmem:[#allocation4 + $0x3d0] sm:$0x33] %v2996
      %3045 = vst [vmem:[#allocation4 + $0x3d8] sm:$0x33] %v3003
      %3046 = vst [vmem:[#allocation4 + $0x3e0] sm:$0x33] %v3011
      %3047 = vst [vmem:[#allocation4 + $0x3e8] sm:$0x33] %v3018
      %3048 = vst [vmem:[#allocation4 + $0x3f0] sm:$0x33] %v3026
      %3049 = vst [vmem:[#allocation4 + $0x3f8] sm:$0x33] %v3033
      %v3050 = vld [vmem:[#allocation3 + $0xa] sm:$0xff]
      %v3051 = vld [vmem:[#allocation3 + $0x12] sm:$0xff]
      %v3052 = vld [vmem:[#allocation3 + $0x1a] sm:$0xff]
      %v3053 = vld [vmem:[#allocation3 + $0x22] sm:$0xff]
      %v3058 = vcombine.low %v3050, %v3050
      %v3060 = vunpack.c.l.s4 1983009808
      %v3061 = vunpack.c.0.s8 %v3060
      %v3062 = vlaneseq
      %v3063 = vshrl.u32 %v3062, 7
      %v3064 = vsub.s32 %v3061, %v3063
      %v3065 = vrot.slane %v3058, %v3064
      %v3067 = vunpack.c.l.s4 1983009808
      %v3068 = vunpack.c.0.s8 %v3067
      %v3069 = vlaneseq
      %v3070 = vshrl.u32 %v3069, 7
      %v3071 = vsub.s32 %v3068, %v3070
      %v3072 = vrot.slane %v3050, %v3071
      %v3073 = vcombine.low %v3051, %v3051
      %v3075 = vunpack.c.l.s4 1983009808
      %v3076 = vunpack.c.0.s8 %v3075
      %v3077 = vlaneseq
      %v3078 = vshrl.u32 %v3077, 7
      %v3079 = vsub.s32 %v3076, %v3078
      %v3080 = vrot.slane %v3073, %v3079
      %v3082 = vunpack.c.l.s4 1983009808
      %v3083 = vunpack.c.0.s8 %v3082
      %v3084 = vlaneseq
      %v3085 = vshrl.u32 %v3084, 7
      %v3086 = vsub.s32 %v3083, %v3085
      %v3087 = vrot.slane %v3051, %v3086
      %v3088 = vcombine.low %v3052, %v3052
      %v3090 = vunpack.c.l.s4 1983009808
      %v3091 = vunpack.c.0.s8 %v3090
      %v3092 = vlaneseq
      %v3093 = vshrl.u32 %v3092, 7
      %v3094 = vsub.s32 %v3091, %v3093
      %v3095 = vrot.slane %v3088, %v3094
      %v3097 = vunpack.c.l.s4 1983009808
      %v3098 = vunpack.c.0.s8 %v3097
      %v3099 = vlaneseq
      %v3100 = vshrl.u32 %v3099, 7
      %v3101 = vsub.s32 %v3098, %v3100
      %v3102 = vrot.slane %v3052, %v3101
      %v3103 = vcombine.low %v3053, %v3053
      %v3105 = vunpack.c.l.s4 1983009808
      %v3106 = vunpack.c.0.s8 %v3105
      %v3107 = vlaneseq
      %v3108 = vshrl.u32 %v3107, 7
      %v3109 = vsub.s32 %v3106, %v3108
      %v3110 = vrot.slane %v3103, %v3109
      %v3112 = vunpack.c.l.s4 1983009808
      %v3113 = vunpack.c.0.s8 %v3112
      %v3114 = vlaneseq
      %v3115 = vshrl.u32 %v3114, 7
      %v3116 = vsub.s32 %v3113, %v3115
      %v3117 = vrot.slane %v3053, %v3116
      %3126 = vst [vmem:[#allocation4 + $0x480] sm:$0xcc] %v3065
      %3127 = vst [vmem:[#allocation4 + $0x488] sm:$0xcc] %v3072
      %3128 = vst [vmem:[#allocation4 + $0x490] sm:$0xcc] %v3080
      %3129 = vst [vmem:[#allocation4 + $0x498] sm:$0xcc] %v3087
      %3130 = vst [vmem:[#allocation4 + $0x4a0] sm:$0xcc] %v3095
      %3131 = vst [vmem:[#allocation4 + $0x4a8] sm:$0xcc] %v3102
      %3132 = vst [vmem:[#allocation4 + $0x4b0] sm:$0xcc] %v3110
      %3133 = vst [vmem:[#allocation4 + $0x4b8] sm:$0xcc] %v3117
      %v3134 = vld [vmem:[#allocation3 + $0xc] sm:$0xff]
      %v3135 = vld [vmem:[#allocation3 + $0x14] sm:$0xff]
      %v3136 = vld [vmem:[#allocation3 + $0x1c] sm:$0xff]
      %v3137 = vld [vmem:[#allocation3 + $0x24] sm:$0xff]
      %v3142 = vcombine.high %v3134, %v3134
      %v3144 = vunpack.c.l.s4 1983009808
      %v3145 = vunpack.c.0.s8 %v3144
      %v3146 = vlaneseq
      %v3147 = vshrl.u32 %v3146, 7
      %v3148 = vsub.s32 %v3145, %v3147
      %v3149 = vrot.slane %v3134, %v3148
      %v3151 = vunpack.c.l.s4 1983009808
      %v3152 = vunpack.c.0.s8 %v3151
      %v3153 = vlaneseq
      %v3154 = vshrl.u32 %v3153, 7
      %v3155 = vsub.s32 %v3152, %v3154
      %v3156 = vrot.slane %v3142, %v3155
      %v3157 = vcombine.high %v3135, %v3135
      %v3159 = vunpack.c.l.s4 1983009808
      %v3160 = vunpack.c.0.s8 %v3159
      %v3161 = vlaneseq
      %v3162 = vshrl.u32 %v3161, 7
      %v3163 = vsub.s32 %v3160, %v3162
      %v3164 = vrot.slane %v3135, %v3163
      %v3166 = vunpack.c.l.s4 1983009808
      %v3167 = vunpack.c.0.s8 %v3166
      %v3168 = vlaneseq
      %v3169 = vshrl.u32 %v3168, 7
      %v3170 = vsub.s32 %v3167, %v3169
      %v3171 = vrot.slane %v3157, %v3170
      %v3172 = vcombine.high %v3136, %v3136
      %v3174 = vunpack.c.l.s4 1983009808
      %v3175 = vunpack.c.0.s8 %v3174
      %v3176 = vlaneseq
      %v3177 = vshrl.u32 %v3176, 7
      %v3178 = vsub.s32 %v3175, %v3177
      %v3179 = vrot.slane %v3136, %v3178
      %v3181 = vunpack.c.l.s4 1983009808
      %v3182 = vunpack.c.0.s8 %v3181
      %v3183 = vlaneseq
      %v3184 = vshrl.u32 %v3183, 7
      %v3185 = vsub.s32 %v3182, %v3184
      %v3186 = vrot.slane %v3172, %v3185
      %v3187 = vcombine.high %v3137, %v3137
      %v3189 = vunpack.c.l.s4 1983009808
      %v3190 = vunpack.c.0.s8 %v3189
      %v3191 = vlaneseq
      %v3192 = vshrl.u32 %v3191, 7
      %v3193 = vsub.s32 %v3190, %v3192
      %v3194 = vrot.slane %v3137, %v3193
      %v3196 = vunpack.c.l.s4 1983009808
      %v3197 = vunpack.c.0.s8 %v3196
      %v3198 = vlaneseq
      %v3199 = vshrl.u32 %v3198, 7
      %v3200 = vsub.s32 %v3197, %v3199
      %v3201 = vrot.slane %v3187, %v3200
      %3210 = vst [vmem:[#allocation4 + $0x580] sm:$0x33] %v3149
      %3211 = vst [vmem:[#allocation4 + $0x588] sm:$0x33] %v3156
      %3212 = vst [vmem:[#allocation4 + $0x590] sm:$0x33] %v3164
      %3213 = vst [vmem:[#allocation4 + $0x598] sm:$0x33] %v3171
      %3214 = vst [vmem:[#allocation4 + $0x5a0] sm:$0x33] %v3179
      %3215 = vst [vmem:[#allocation4 + $0x5a8] sm:$0x33] %v3186
      %3216 = vst [vmem:[#allocation4 + $0x5b0] sm:$0x33] %v3194
      %3217 = vst [vmem:[#allocation4 + $0x5b8] sm:$0x33] %v3201
      %v3218 = vld [vmem:[#allocation2 + $0x2] sm:$0xff]
      %v3219 = vld [vmem:[#allocation2 + $0xa] sm:$0xff]
      %v3220 = vld [vmem:[#allocation2 + $0x12] sm:$0xff]
      %v3221 = vld [vmem:[#allocation2 + $0x1a] sm:$0xff]
      %v3222 = vld [vmem:[#allocation2 + $0x22] sm:$0xff]
      %v3223 = vld [vmem:[#allocation2 + $0x2a] sm:$0xf]
      %3224 = vst [vmem:[#allocation3] sm:$0xff] %v3218
      %3225 = vst [vmem:[#allocation3 + $0x8] sm:$0xff] %v3219
      %3226 = vst [vmem:[#allocation3 + $0x10] sm:$0xff] %v3220
      %3227 = vst [vmem:[#allocation3 + $0x18] sm:$0xff] %v3221
      %3228 = vst [vmem:[#allocation3 + $0x20] sm:$0xff] %v3222
      %3229 = vst [vmem:[#allocation3 + $0x28] sm:$0xf] %v3223
      %v3230 = vld [vmem:[#allocation3] sm:$0xff]
      %v3231 = vld [vmem:[#allocation3 + $0x8] sm:$0xff]
      %v3232 = vld [vmem:[#allocation3 + $0x10] sm:$0xff]
      %v3233 = vld [vmem:[#allocation3 + $0x18] sm:$0xff]
      %v3238 = vcombine.low %v3230, %v3230
      %v3240 = vunpack.c.l.s4 1983009808
      %v3241 = vunpack.c.0.s8 %v3240
      %v3242 = vlaneseq
      %v3243 = vshrl.u32 %v3242, 7
      %v3244 = vsub.s32 %v3241, %v3243
      %v3245 = vrot.slane %v3238, %v3244
      %v3247 = vunpack.c.l.s4 1983009808
      %v3248 = vunpack.c.0.s8 %v3247
      %v3249 = vlaneseq
      %v3250 = vshrl.u32 %v3249, 7
      %v3251 = vsub.s32 %v3248, %v3250
      %v3252 = vrot.slane %v3230, %v3251
      %v3253 = vcombine.low %v3231, %v3231
      %v3255 = vunpack.c.l.s4 1983009808
      %v3256 = vunpack.c.0.s8 %v3255
      %v3257 = vlaneseq
      %v3258 = vshrl.u32 %v3257, 7
      %v3259 = vsub.s32 %v3256, %v3258
      %v3260 = vrot.slane %v3253, %v3259
      %v3262 = vunpack.c.l.s4 1983009808
      %v3263 = vunpack.c.0.s8 %v3262
      %v3264 = vlaneseq
      %v3265 = vshrl.u32 %v3264, 7
      %v3266 = vsub.s32 %v3263, %v3265
      %v3267 = vrot.slane %v3231, %v3266
      %v3268 = vcombine.low %v3232, %v3232
      %v3270 = vunpack.c.l.s4 1983009808
      %v3271 = vunpack.c.0.s8 %v3270
      %v3272 = vlaneseq
      %v3273 = vshrl.u32 %v3272, 7
      %v3274 = vsub.s32 %v3271, %v3273
      %v3275 = vrot.slane %v3268, %v3274
      %v3277 = vunpack.c.l.s4 1983009808
      %v3278 = vunpack.c.0.s8 %v3277
      %v3279 = vlaneseq
      %v3280 = vshrl.u32 %v3279, 7
      %v3281 = vsub.s32 %v3278, %v3280
      %v3282 = vrot.slane %v3232, %v3281
      %v3283 = vcombine.low %v3233, %v3233
      %v3285 = vunpack.c.l.s4 1983009808
      %v3286 = vunpack.c.0.s8 %v3285
      %v3287 = vlaneseq
      %v3288 = vshrl.u32 %v3287, 7
      %v3289 = vsub.s32 %v3286, %v3288
      %v3290 = vrot.slane %v3283, %v3289
      %v3292 = vunpack.c.l.s4 1983009808
      %v3293 = vunpack.c.0.s8 %v3292
      %v3294 = vlaneseq
      %v3295 = vshrl.u32 %v3294, 7
      %v3296 = vsub.s32 %v3293, %v3295
      %v3297 = vrot.slane %v3233, %v3296
      %3306 = vst [vmem:[#allocation4 + $0x40] sm:$0xcc] %v3245
      %3307 = vst [vmem:[#allocation4 + $0x48] sm:$0xcc] %v3252
      %3308 = vst [vmem:[#allocation4 + $0x50] sm:$0xcc] %v3260
      %3309 = vst [vmem:[#allocation4 + $0x58] sm:$0xcc] %v3267
      %3310 = vst [vmem:[#allocation4 + $0x60] sm:$0xcc] %v3275
      %3311 = vst [vmem:[#allocation4 + $0x68] sm:$0xcc] %v3282
      %3312 = vst [vmem:[#allocation4 + $0x70] sm:$0xcc] %v3290
      %3313 = vst [vmem:[#allocation4 + $0x78] sm:$0xcc] %v3297
      %v3314 = vld [vmem:[#allocation3 + $0x2] sm:$0xff]
      %v3315 = vld [vmem:[#allocation3 + $0xa] sm:$0xff]
      %v3316 = vld [vmem:[#allocation3 + $0x12] sm:$0xff]
      %v3317 = vld [vmem:[#allocation3 + $0x1a] sm:$0xff]
      %v3322 = vcombine.high %v3314, %v3314
      %v3324 = vunpack.c.l.s4 1983009808
      %v3325 = vunpack.c.0.s8 %v3324
      %v3326 = vlaneseq
      %v3327 = vshrl.u32 %v3326, 7
      %v3328 = vsub.s32 %v3325, %v3327
      %v3329 = vrot.slane %v3314, %v3328
      %v3331 = vunpack.c.l.s4 1983009808
      %v3332 = vunpack.c.0.s8 %v3331
      %v3333 = vlaneseq
      %v3334 = vshrl.u32 %v3333, 7
      %v3335 = vsub.s32 %v3332, %v3334
      %v3336 = vrot.slane %v3322, %v3335
      %v3337 = vcombine.high %v3315, %v3315
      %v3339 = vunpack.c.l.s4 1983009808
      %v3340 = vunpack.c.0.s8 %v3339
      %v3341 = vlaneseq
      %v3342 = vshrl.u32 %v3341, 7
      %v3343 = vsub.s32 %v3340, %v3342
      %v3344 = vrot.slane %v3315, %v3343
      %v3346 = vunpack.c.l.s4 1983009808
      %v3347 = vunpack.c.0.s8 %v3346
      %v3348 = vlaneseq
      %v3349 = vshrl.u32 %v3348, 7
      %v3350 = vsub.s32 %v3347, %v3349
      %v3351 = vrot.slane %v3337, %v3350
      %v3352 = vcombine.high %v3316, %v3316
      %v3354 = vunpack.c.l.s4 1983009808
      %v3355 = vunpack.c.0.s8 %v3354
      %v3356 = vlaneseq
      %v3357 = vshrl.u32 %v3356, 7
      %v3358 = vsub.s32 %v3355, %v3357
      %v3359 = vrot.slane %v3316, %v3358
      %v3361 = vunpack.c.l.s4 1983009808
      %v3362 = vunpack.c.0.s8 %v3361
      %v3363 = vlaneseq
      %v3364 = vshrl.u32 %v3363, 7
      %v3365 = vsub.s32 %v3362, %v3364
      %v3366 = vrot.slane %v3352, %v3365
      %v3367 = vcombine.high %v3317, %v3317
      %v3369 = vunpack.c.l.s4 1983009808
      %v3370 = vunpack.c.0.s8 %v3369
      %v3371 = vlaneseq
      %v3372 = vshrl.u32 %v3371, 7
      %v3373 = vsub.s32 %v3370, %v3372
      %v3374 = vrot.slane %v3317, %v3373
      %v3376 = vunpack.c.l.s4 1983009808
      %v3377 = vunpack.c.0.s8 %v3376
      %v3378 = vlaneseq
      %v3379 = vshrl.u32 %v3378, 7
      %v3380 = vsub.s32 %v3377, %v3379
      %v3381 = vrot.slane %v3367, %v3380
      %3390 = vst [vmem:[#allocation4 + $0x140] sm:$0x33] %v3329
      %3391 = vst [vmem:[#allocation4 + $0x148] sm:$0x33] %v3336
      %3392 = vst [vmem:[#allocation4 + $0x150] sm:$0x33] %v3344
      %3393 = vst [vmem:[#allocation4 + $0x158] sm:$0x33] %v3351
      %3394 = vst [vmem:[#allocation4 + $0x160] sm:$0x33] %v3359
      %3395 = vst [vmem:[#allocation4 + $0x168] sm:$0x33] %v3366
      %3396 = vst [vmem:[#allocation4 + $0x170] sm:$0x33] %v3374
      %3397 = vst [vmem:[#allocation4 + $0x178] sm:$0x33] %v3381
      %v3398 = vld [vmem:[#allocation3 + $0x4] sm:$0xff]
      %v3399 = vld [vmem:[#allocation3 + $0xc] sm:$0xff]
      %v3400 = vld [vmem:[#allocation3 + $0x14] sm:$0xff]
      %v3401 = vld [vmem:[#allocation3 + $0x1c] sm:$0xff]
      %v3406 = vcombine.low %v3398, %v3398
      %v3408 = vunpack.c.l.s4 1983009808
      %v3409 = vunpack.c.0.s8 %v3408
      %v3410 = vlaneseq
      %v3411 = vshrl.u32 %v3410, 7
      %v3412 = vsub.s32 %v3409, %v3411
      %v3413 = vrot.slane %v3406, %v3412
      %v3415 = vunpack.c.l.s4 1983009808
      %v3416 = vunpack.c.0.s8 %v3415
      %v3417 = vlaneseq
      %v3418 = vshrl.u32 %v3417, 7
      %v3419 = vsub.s32 %v3416, %v3418
      %v3420 = vrot.slane %v3398, %v3419
      %v3421 = vcombine.low %v3399, %v3399
      %v3423 = vunpack.c.l.s4 1983009808
      %v3424 = vunpack.c.0.s8 %v3423
      %v3425 = vlaneseq
      %v3426 = vshrl.u32 %v3425, 7
      %v3427 = vsub.s32 %v3424, %v3426
      %v3428 = vrot.slane %v3421, %v3427
      %v3430 = vunpack.c.l.s4 1983009808
      %v3431 = vunpack.c.0.s8 %v3430
      %v3432 = vlaneseq
      %v3433 = vshrl.u32 %v3432, 7
      %v3434 = vsub.s32 %v3431, %v3433
      %v3435 = vrot.slane %v3399, %v3434
      %v3436 = vcombine.low %v3400, %v3400
      %v3438 = vunpack.c.l.s4 1983009808
      %v3439 = vunpack.c.0.s8 %v3438
      %v3440 = vlaneseq
      %v3441 = vshrl.u32 %v3440, 7
      %v3442 = vsub.s32 %v3439, %v3441
      %v3443 = vrot.slane %v3436, %v3442
      %v3445 = vunpack.c.l.s4 1983009808
      %v3446 = vunpack.c.0.s8 %v3445
      %v3447 = vlaneseq
      %v3448 = vshrl.u32 %v3447, 7
      %v3449 = vsub.s32 %v3446, %v3448
      %v3450 = vrot.slane %v3400, %v3449
      %v3451 = vcombine.low %v3401, %v3401
      %v3453 = vunpack.c.l.s4 1983009808
      %v3454 = vunpack.c.0.s8 %v3453
      %v3455 = vlaneseq
      %v3456 = vshrl.u32 %v3455, 7
      %v3457 = vsub.s32 %v3454, %v3456
      %v3458 = vrot.slane %v3451, %v3457
      %v3460 = vunpack.c.l.s4 1983009808
      %v3461 = vunpack.c.0.s8 %v3460
      %v3462 = vlaneseq
      %v3463 = vshrl.u32 %v3462, 7
      %v3464 = vsub.s32 %v3461, %v3463
      %v3465 = vrot.slane %v3401, %v3464
      %3474 = vst [vmem:[#allocation4 + $0x200] sm:$0xcc] %v3413
      %3475 = vst [vmem:[#allocation4 + $0x208] sm:$0xcc] %v3420
      %3476 = vst [vmem:[#allocation4 + $0x210] sm:$0xcc] %v3428
      %3477 = vst [vmem:[#allocation4 + $0x218] sm:$0xcc] %v3435
      %3478 = vst [vmem:[#allocation4 + $0x220] sm:$0xcc] %v3443
      %3479 = vst [vmem:[#allocation4 + $0x228] sm:$0xcc] %v3450
      %3480 = vst [vmem:[#allocation4 + $0x230] sm:$0xcc] %v3458
      %3481 = vst [vmem:[#allocation4 + $0x238] sm:$0xcc] %v3465
      %v3482 = vld [vmem:[#allocation3 + $0x6] sm:$0xff]
      %v3483 = vld [vmem:[#allocation3 + $0xe] sm:$0xff]
      %v3484 = vld [vmem:[#allocation3 + $0x16] sm:$0xff]
      %v3485 = vld [vmem:[#allocation3 + $0x1e] sm:$0xff]
      %v3490 = vcombine.high %v3482, %v3482
      %v3492 = vunpack.c.l.s4 1983009808
      %v3493 = vunpack.c.0.s8 %v3492
      %v3494 = vlaneseq
      %v3495 = vshrl.u32 %v3494, 7
      %v3496 = vsub.s32 %v3493, %v3495
      %v3497 = vrot.slane %v3482, %v3496
      %v3499 = vunpack.c.l.s4 1983009808
      %v3500 = vunpack.c.0.s8 %v3499
      %v3501 = vlaneseq
      %v3502 = vshrl.u32 %v3501, 7
      %v3503 = vsub.s32 %v3500, %v3502
      %v3504 = vrot.slane %v3490, %v3503
      %v3505 = vcombine.high %v3483, %v3483
      %v3507 = vunpack.c.l.s4 1983009808
      %v3508 = vunpack.c.0.s8 %v3507
      %v3509 = vlaneseq
      %v3510 = vshrl.u32 %v3509, 7
      %v3511 = vsub.s32 %v3508, %v3510
      %v3512 = vrot.slane %v3483, %v3511
      %v3514 = vunpack.c.l.s4 1983009808
      %v3515 = vunpack.c.0.s8 %v3514
      %v3516 = vlaneseq
      %v3517 = vshrl.u32 %v3516, 7
      %v3518 = vsub.s32 %v3515, %v3517
      %v3519 = vrot.slane %v3505, %v3518
      %v3520 = vcombine.high %v3484, %v3484
      %v3522 = vunpack.c.l.s4 1983009808
      %v3523 = vunpack.c.0.s8 %v3522
      %v3524 = vlaneseq
      %v3525 = vshrl.u32 %v3524, 7
      %v3526 = vsub.s32 %v3523, %v3525
      %v3527 = vrot.slane %v3484, %v3526
      %v3529 = vunpack.c.l.s4 1983009808
      %v3530 = vunpack.c.0.s8 %v3529
      %v3531 = vlaneseq
      %v3532 = vshrl.u32 %v3531, 7
      %v3533 = vsub.s32 %v3530, %v3532
      %v3534 = vrot.slane %v3520, %v3533
      %v3535 = vcombine.high %v3485, %v3485
      %v3537 = vunpack.c.l.s4 1983009808
      %v3538 = vunpack.c.0.s8 %v3537
      %v3539 = vlaneseq
      %v3540 = vshrl.u32 %v3539, 7
      %v3541 = vsub.s32 %v3538, %v3540
      %v3542 = vrot.slane %v3485, %v3541
      %v3544 = vunpack.c.l.s4 1983009808
      %v3545 = vunpack.c.0.s8 %v3544
      %v3546 = vlaneseq
      %v3547 = vshrl.u32 %v3546, 7
      %v3548 = vsub.s32 %v3545, %v3547
      %v3549 = vrot.slane %v3535, %v3548
      %3558 = vst [vmem:[#allocation4 + $0x300] sm:$0x33] %v3497
      %3559 = vst [vmem:[#allocation4 + $0x308] sm:$0x33] %v3504
      %3560 = vst [vmem:[#allocation4 + $0x310] sm:$0x33] %v3512
      %3561 = vst [vmem:[#allocation4 + $0x318] sm:$0x33] %v3519
      %3562 = vst [vmem:[#allocation4 + $0x320] sm:$0x33] %v3527
      %3563 = vst [vmem:[#allocation4 + $0x328] sm:$0x33] %v3534
      %3564 = vst [vmem:[#allocation4 + $0x330] sm:$0x33] %v3542
      %3565 = vst [vmem:[#allocation4 + $0x338] sm:$0x33] %v3549
      %v3566 = vld [vmem:[#allocation3 + $0x8] sm:$0xff]
      %v3567 = vld [vmem:[#allocation3 + $0x10] sm:$0xff]
      %v3568 = vld [vmem:[#allocation3 + $0x18] sm:$0xff]
      %v3569 = vld [vmem:[#allocation3 + $0x20] sm:$0xff]
      %v3574 = vcombine.low %v3566, %v3566
      %v3576 = vunpack.c.l.s4 1983009808
      %v3577 = vunpack.c.0.s8 %v3576
      %v3578 = vlaneseq
      %v3579 = vshrl.u32 %v3578, 7
      %v3580 = vsub.s32 %v3577, %v3579
      %v3581 = vrot.slane %v3574, %v3580
      %v3583 = vunpack.c.l.s4 1983009808
      %v3584 = vunpack.c.0.s8 %v3583
      %v3585 = vlaneseq
      %v3586 = vshrl.u32 %v3585, 7
      %v3587 = vsub.s32 %v3584, %v3586
      %v3588 = vrot.slane %v3566, %v3587
      %v3589 = vcombine.low %v3567, %v3567
      %v3591 = vunpack.c.l.s4 1983009808
      %v3592 = vunpack.c.0.s8 %v3591
      %v3593 = vlaneseq
      %v3594 = vshrl.u32 %v3593, 7
      %v3595 = vsub.s32 %v3592, %v3594
      %v3596 = vrot.slane %v3589, %v3595
      %v3598 = vunpack.c.l.s4 1983009808
      %v3599 = vunpack.c.0.s8 %v3598
      %v3600 = vlaneseq
      %v3601 = vshrl.u32 %v3600, 7
      %v3602 = vsub.s32 %v3599, %v3601
      %v3603 = vrot.slane %v3567, %v3602
      %v3604 = vcombine.low %v3568, %v3568
      %v3606 = vunpack.c.l.s4 1983009808
      %v3607 = vunpack.c.0.s8 %v3606
      %v3608 = vlaneseq
      %v3609 = vshrl.u32 %v3608, 7
      %v3610 = vsub.s32 %v3607, %v3609
      %v3611 = vrot.slane %v3604, %v3610
      %v3613 = vunpack.c.l.s4 1983009808
      %v3614 = vunpack.c.0.s8 %v3613
      %v3615 = vlaneseq
      %v3616 = vshrl.u32 %v3615, 7
      %v3617 = vsub.s32 %v3614, %v3616
      %v3618 = vrot.slane %v3568, %v3617
      %v3619 = vcombine.low %v3569, %v3569
      %v3621 = vunpack.c.l.s4 1983009808
      %v3622 = vunpack.c.0.s8 %v3621
      %v3623 = vlaneseq
      %v3624 = vshrl.u32 %v3623, 7
      %v3625 = vsub.s32 %v3622, %v3624
      %v3626 = vrot.slane %v3619, %v3625
      %v3628 = vunpack.c.l.s4 1983009808
      %v3629 = vunpack.c.0.s8 %v3628
      %v3630 = vlaneseq
      %v3631 = vshrl.u32 %v3630, 7
      %v3632 = vsub.s32 %v3629, %v3631
      %v3633 = vrot.slane %v3569, %v3632
      %3642 = vst [vmem:[#allocation4 + $0x3c0] sm:$0xcc] %v3581
      %3643 = vst [vmem:[#allocation4 + $0x3c8] sm:$0xcc] %v3588
      %3644 = vst [vmem:[#allocation4 + $0x3d0] sm:$0xcc] %v3596
      %3645 = vst [vmem:[#allocation4 + $0x3d8] sm:$0xcc] %v3603
      %3646 = vst [vmem:[#allocation4 + $0x3e0] sm:$0xcc] %v3611
      %3647 = vst [vmem:[#allocation4 + $0x3e8] sm:$0xcc] %v3618
      %3648 = vst [vmem:[#allocation4 + $0x3f0] sm:$0xcc] %v3626
      %3649 = vst [vmem:[#allocation4 + $0x3f8] sm:$0xcc] %v3633
      %v3650 = vld [vmem:[#allocation3 + $0xa] sm:$0xff]
      %v3651 = vld [vmem:[#allocation3 + $0x12] sm:$0xff]
      %v3652 = vld [vmem:[#allocation3 + $0x1a] sm:$0xff]
      %v3653 = vld [vmem:[#allocation3 + $0x22] sm:$0xff]
      %v3658 = vcombine.high %v3650, %v3650
      %v3660 = vunpack.c.l.s4 1983009808
      %v3661 = vunpack.c.0.s8 %v3660
      %v3662 = vlaneseq
      %v3663 = vshrl.u32 %v3662, 7
      %v3664 = vsub.s32 %v3661, %v3663
      %v3665 = vrot.slane %v3650, %v3664
      %v3667 = vunpack.c.l.s4 1983009808
      %v3668 = vunpack.c.0.s8 %v3667
      %v3669 = vlaneseq
      %v3670 = vshrl.u32 %v3669, 7
      %v3671 = vsub.s32 %v3668, %v3670
      %v3672 = vrot.slane %v3658, %v3671
      %v3673 = vcombine.high %v3651, %v3651
      %v3675 = vunpack.c.l.s4 1983009808
      %v3676 = vunpack.c.0.s8 %v3675
      %v3677 = vlaneseq
      %v3678 = vshrl.u32 %v3677, 7
      %v3679 = vsub.s32 %v3676, %v3678
      %v3680 = vrot.slane %v3651, %v3679
      %v3682 = vunpack.c.l.s4 1983009808
      %v3683 = vunpack.c.0.s8 %v3682
      %v3684 = vlaneseq
      %v3685 = vshrl.u32 %v3684, 7
      %v3686 = vsub.s32 %v3683, %v3685
      %v3687 = vrot.slane %v3673, %v3686
      %v3688 = vcombine.high %v3652, %v3652
      %v3690 = vunpack.c.l.s4 1983009808
      %v3691 = vunpack.c.0.s8 %v3690
      %v3692 = vlaneseq
      %v3693 = vshrl.u32 %v3692, 7
      %v3694 = vsub.s32 %v3691, %v3693
      %v3695 = vrot.slane %v3652, %v3694
      %v3697 = vunpack.c.l.s4 1983009808
      %v3698 = vunpack.c.0.s8 %v3697
      %v3699 = vlaneseq
      %v3700 = vshrl.u32 %v3699, 7
      %v3701 = vsub.s32 %v3698, %v3700
      %v3702 = vrot.slane %v3688, %v3701
      %v3703 = vcombine.high %v3653, %v3653
      %v3705 = vunpack.c.l.s4 1983009808
      %v3706 = vunpack.c.0.s8 %v3705
      %v3707 = vlaneseq
      %v3708 = vshrl.u32 %v3707, 7
      %v3709 = vsub.s32 %v3706, %v3708
      %v3710 = vrot.slane %v3653, %v3709
      %v3712 = vunpack.c.l.s4 1983009808
      %v3713 = vunpack.c.0.s8 %v3712
      %v3714 = vlaneseq
      %v3715 = vshrl.u32 %v3714, 7
      %v3716 = vsub.s32 %v3713, %v3715
      %v3717 = vrot.slane %v3703, %v3716
      %3726 = vst [vmem:[#allocation4 + $0x4c0] sm:$0x33] %v3665
      %3727 = vst [vmem:[#allocation4 + $0x4c8] sm:$0x33] %v3672
      %3728 = vst [vmem:[#allocation4 + $0x4d0] sm:$0x33] %v3680
      %3729 = vst [vmem:[#allocation4 + $0x4d8] sm:$0x33] %v3687
      %3730 = vst [vmem:[#allocation4 + $0x4e0] sm:$0x33] %v3695
      %3731 = vst [vmem:[#allocation4 + $0x4e8] sm:$0x33] %v3702
      %3732 = vst [vmem:[#allocation4 + $0x4f0] sm:$0x33] %v3710
      %3733 = vst [vmem:[#allocation4 + $0x4f8] sm:$0x33] %v3717
      %v3734 = vld [vmem:[#allocation3 + $0xc] sm:$0xff]
      %v3735 = vld [vmem:[#allocation3 + $0x14] sm:$0xff]
      %v3736 = vld [vmem:[#allocation3 + $0x1c] sm:$0xff]
      %v3737 = vld [vmem:[#allocation3 + $0x24] sm:$0xff]
      %v3742 = vcombine.low %v3734, %v3734
      %v3744 = vunpack.c.l.s4 1983009808
      %v3745 = vunpack.c.0.s8 %v3744
      %v3746 = vlaneseq
      %v3747 = vshrl.u32 %v3746, 7
      %v3748 = vsub.s32 %v3745, %v3747
      %v3749 = vrot.slane %v3742, %v3748
      %v3751 = vunpack.c.l.s4 1983009808
      %v3752 = vunpack.c.0.s8 %v3751
      %v3753 = vlaneseq
      %v3754 = vshrl.u32 %v3753, 7
      %v3755 = vsub.s32 %v3752, %v3754
      %v3756 = vrot.slane %v3734, %v3755
      %v3757 = vcombine.low %v3735, %v3735
      %v3759 = vunpack.c.l.s4 1983009808
      %v3760 = vunpack.c.0.s8 %v3759
      %v3761 = vlaneseq
      %v3762 = vshrl.u32 %v3761, 7
      %v3763 = vsub.s32 %v3760, %v3762
      %v3764 = vrot.slane %v3757, %v3763
      %v3766 = vunpack.c.l.s4 1983009808
      %v3767 = vunpack.c.0.s8 %v3766
      %v3768 = vlaneseq
      %v3769 = vshrl.u32 %v3768, 7
      %v3770 = vsub.s32 %v3767, %v3769
      %v3771 = vrot.slane %v3735, %v3770
      %v3772 = vcombine.low %v3736, %v3736
      %v3774 = vunpack.c.l.s4 1983009808
      %v3775 = vunpack.c.0.s8 %v3774
      %v3776 = vlaneseq
      %v3777 = vshrl.u32 %v3776, 7
      %v3778 = vsub.s32 %v3775, %v3777
      %v3779 = vrot.slane %v3772, %v3778
      %v3781 = vunpack.c.l.s4 1983009808
      %v3782 = vunpack.c.0.s8 %v3781
      %v3783 = vlaneseq
      %v3784 = vshrl.u32 %v3783, 7
      %v3785 = vsub.s32 %v3782, %v3784
      %v3786 = vrot.slane %v3736, %v3785
      %v3787 = vcombine.low %v3737, %v3737
      %v3789 = vunpack.c.l.s4 1983009808
      %v3790 = vunpack.c.0.s8 %v3789
      %v3791 = vlaneseq
      %v3792 = vshrl.u32 %v3791, 7
      %v3793 = vsub.s32 %v3790, %v3792
      %v3794 = vrot.slane %v3787, %v3793
      %v3796 = vunpack.c.l.s4 1983009808
      %v3797 = vunpack.c.0.s8 %v3796
      %v3798 = vlaneseq
      %v3799 = vshrl.u32 %v3798, 7
      %v3800 = vsub.s32 %v3797, %v3799
      %v3801 = vrot.slane %v3737, %v3800
      %3810 = vst [vmem:[#allocation4 + $0x580] sm:$0xcc] %v3749
      %3811 = vst [vmem:[#allocation4 + $0x588] sm:$0xcc] %v3756
      %3812 = vst [vmem:[#allocation4 + $0x590] sm:$0xcc] %v3764
      %3813 = vst [vmem:[#allocation4 + $0x598] sm:$0xcc] %v3771
      %3814 = vst [vmem:[#allocation4 + $0x5a0] sm:$0xcc] %v3779
      %3815 = vst [vmem:[#allocation4 + $0x5a8] sm:$0xcc] %v3786
      %3816 = vst [vmem:[#allocation4 + $0x5b0] sm:$0xcc] %v3794
      %3817 = vst [vmem:[#allocation4 + $0x5b8] sm:$0xcc] %v3801
      %v3818 = vld [vmem:[#allocation2 + $0x2] sm:$0xff]
      %v3819 = vld [vmem:[#allocation2 + $0xa] sm:$0xff]
      %v3820 = vld [vmem:[#allocation2 + $0x12] sm:$0xff]
      %v3821 = vld [vmem:[#allocation2 + $0x1a] sm:$0xff]
      %v3822 = vld [vmem:[#allocation2 + $0x22] sm:$0xff]
      %v3823 = vld [vmem:[#allocation2 + $0x2a] sm:$0x3f]
      %3830 = vrot.lane.b32.xlu0 %v3818, 127
      %v3831 = vpop.permute.xlu0 %3830
      %3832 = vrot.lane.b32.xlu0 %v3819, 127
      %v3833 = vpop.permute.xlu0 %3832
      %3834 = vrot.lane.b32.xlu0 %v3820, 127
      %v3835 = vpop.permute.xlu0 %3834
      %3836 = vrot.lane.b32.xlu0 %v3821, 127
      %v3837 = vpop.permute.xlu0 %3836
      %3838 = vrot.lane.b32.xlu0 %v3822, 127
      %v3839 = vpop.permute.xlu0 %3838
      %3840 = vrot.lane.b32.xlu0 %v3823, 127
      %v3841 = vpop.permute.xlu0 %3840
      %v3842 = vrot.slane %v3831, 2
      %v3843 = vrot.slane %v3833, 2
      %v3844 = vrot.slane %v3835, 2
      %v3845 = vrot.slane %v3837, 2
      %v3846 = vrot.slane %v3839, 2
      %v3847 = vrot.slane %v3841, 2
      %v3848 = vsel %vm1321, %v3842, %v3843
      %vm3849 = vcmask 1039360
      %v3850 = vsel %vm3849, %v3831, %v3848
      %v3851 = vsel %vm1321, %v3843, %v3844
      %v3852 = vsel %vm3849, %v3833, %v3851
      %v3853 = vsel %vm1321, %v3844, %v3845
      %v3854 = vsel %vm3849, %v3835, %v3853
      %v3855 = vsel %vm1321, %v3845, %v3846
      %v3856 = vsel %vm3849, %v3837, %v3855
      %v3857 = vsel %vm1321, %v3846, %v3847
      %v3858 = vsel %vm3849, %v3839, %v3857
      %v3859 = vsel %vm3849, %v3841, %v3847
      %3866 = vst [vmem:[#allocation3] sm:$0xff] %v3850
      %3867 = vst [vmem:[#allocation3 + $0x8] sm:$0xff] %v3852
      %3868 = vst [vmem:[#allocation3 + $0x10] sm:$0xff] %v3854
      %3869 = vst [vmem:[#allocation3 + $0x18] sm:$0xff] %v3856
      %3870 = vst [vmem:[#allocation3 + $0x20] sm:$0xff] %v3858
      %3871 = vst [vmem:[#allocation3 + $0x28] sm:$0xf] %v3859
      %v3872 = vld [vmem:[#allocation3] sm:$0xff]
      %v3873 = vld [vmem:[#allocation3 + $0x8] sm:$0xff]
      %v3874 = vld [vmem:[#allocation3 + $0x10] sm:$0xff]
      %v3875 = vld [vmem:[#allocation3 + $0x18] sm:$0xff]
      %v3880 = vcombine.high %v3872, %v3872
      %v3882 = vunpack.c.l.s4 1983009808
      %v3883 = vunpack.c.0.s8 %v3882
      %v3884 = vlaneseq
      %v3885 = vshrl.u32 %v3884, 7
      %v3886 = vsub.s32 %v3883, %v3885
      %v3887 = vrot.slane %v3872, %v3886
      %v3889 = vunpack.c.l.s4 1983009808
      %v3890 = vunpack.c.0.s8 %v3889
      %v3891 = vlaneseq
      %v3892 = vshrl.u32 %v3891, 7
      %v3893 = vsub.s32 %v3890, %v3892
      %v3894 = vrot.slane %v3880, %v3893
      %v3895 = vcombine.high %v3873, %v3873
      %v3897 = vunpack.c.l.s4 1983009808
      %v3898 = vunpack.c.0.s8 %v3897
      %v3899 = vlaneseq
      %v3900 = vshrl.u32 %v3899, 7
      %v3901 = vsub.s32 %v3898, %v3900
      %v3902 = vrot.slane %v3873, %v3901
      %v3904 = vunpack.c.l.s4 1983009808
      %v3905 = vunpack.c.0.s8 %v3904
      %v3906 = vlaneseq
      %v3907 = vshrl.u32 %v3906, 7
      %v3908 = vsub.s32 %v3905, %v3907
      %v3909 = vrot.slane %v3895, %v3908
      %v3910 = vcombine.high %v3874, %v3874
      %v3912 = vunpack.c.l.s4 1983009808
      %v3913 = vunpack.c.0.s8 %v3912
      %v3914 = vlaneseq
      %v3915 = vshrl.u32 %v3914, 7
      %v3916 = vsub.s32 %v3913, %v3915
      %v3917 = vrot.slane %v3874, %v3916
      %v3919 = vunpack.c.l.s4 1983009808
      %v3920 = vunpack.c.0.s8 %v3919
      %v3921 = vlaneseq
      %v3922 = vshrl.u32 %v3921, 7
      %v3923 = vsub.s32 %v3920, %v3922
      %v3924 = vrot.slane %v3910, %v3923
      %v3925 = vcombine.high %v3875, %v3875
      %v3927 = vunpack.c.l.s4 1983009808
      %v3928 = vunpack.c.0.s8 %v3927
      %v3929 = vlaneseq
      %v3930 = vshrl.u32 %v3929, 7
      %v3931 = vsub.s32 %v3928, %v3930
      %v3932 = vrot.slane %v3875, %v3931
      %v3934 = vunpack.c.l.s4 1983009808
      %v3935 = vunpack.c.0.s8 %v3934
      %v3936 = vlaneseq
      %v3937 = vshrl.u32 %v3936, 7
      %v3938 = vsub.s32 %v3935, %v3937
      %v3939 = vrot.slane %v3925, %v3938
      %3948 = vst [vmem:[#allocation4 + $0x80] sm:$0x33] %v3887
      %3949 = vst [vmem:[#allocation4 + $0x88] sm:$0x33] %v3894
      %3950 = vst [vmem:[#allocation4 + $0x90] sm:$0x33] %v3902
      %3951 = vst [vmem:[#allocation4 + $0x98] sm:$0x33] %v3909
      %3952 = vst [vmem:[#allocation4 + $0xa0] sm:$0x33] %v3917
      %3953 = vst [vmem:[#allocation4 + $0xa8] sm:$0x33] %v3924
      %3954 = vst [vmem:[#allocation4 + $0xb0] sm:$0x33] %v3932
      %3955 = vst [vmem:[#allocation4 + $0xb8] sm:$0x33] %v3939
      %v3956 = vld [vmem:[#allocation3 + $0x2] sm:$0xff]
      %v3957 = vld [vmem:[#allocation3 + $0xa] sm:$0xff]
      %v3958 = vld [vmem:[#allocation3 + $0x12] sm:$0xff]
      %v3959 = vld [vmem:[#allocation3 + $0x1a] sm:$0xff]
      %v3964 = vcombine.low %v3956, %v3956
      %v3966 = vunpack.c.l.s4 1983009808
      %v3967 = vunpack.c.0.s8 %v3966
      %v3968 = vlaneseq
      %v3969 = vshrl.u32 %v3968, 7
      %v3970 = vsub.s32 %v3967, %v3969
      %v3971 = vrot.slane %v3964, %v3970
      %v3973 = vunpack.c.l.s4 1983009808
      %v3974 = vunpack.c.0.s8 %v3973
      %v3975 = vlaneseq
      %v3976 = vshrl.u32 %v3975, 7
      %v3977 = vsub.s32 %v3974, %v3976
      %v3978 = vrot.slane %v3956, %v3977
      %v3979 = vcombine.low %v3957, %v3957
      %v3981 = vunpack.c.l.s4 1983009808
      %v3982 = vunpack.c.0.s8 %v3981
      %v3983 = vlaneseq
      %v3984 = vshrl.u32 %v3983, 7
      %v3985 = vsub.s32 %v3982, %v3984
      %v3986 = vrot.slane %v3979, %v3985
      %v3988 = vunpack.c.l.s4 1983009808
      %v3989 = vunpack.c.0.s8 %v3988
      %v3990 = vlaneseq
      %v3991 = vshrl.u32 %v3990, 7
      %v3992 = vsub.s32 %v3989, %v3991
      %v3993 = vrot.slane %v3957, %v3992
      %v3994 = vcombine.low %v3958, %v3958
      %v3996 = vunpack.c.l.s4 1983009808
      %v3997 = vunpack.c.0.s8 %v3996
      %v3998 = vlaneseq
      %v3999 = vshrl.u32 %v3998, 7
      %v4000 = vsub.s32 %v3997, %v3999
      %v4001 = vrot.slane %v3994, %v4000
      %v4003 = vunpack.c.l.s4 1983009808
      %v4004 = vunpack.c.0.s8 %v4003
      %v4005 = vlaneseq
      %v4006 = vshrl.u32 %v4005, 7
      %v4007 = vsub.s32 %v4004, %v4006
      %v4008 = vrot.slane %v3958, %v4007
      %v4009 = vcombine.low %v3959, %v3959
      %v4011 = vunpack.c.l.s4 1983009808
      %v4012 = vunpack.c.0.s8 %v4011
      %v4013 = vlaneseq
      %v4014 = vshrl.u32 %v4013, 7
      %v4015 = vsub.s32 %v4012, %v4014
      %v4016 = vrot.slane %v4009, %v4015
      %v4018 = vunpack.c.l.s4 1983009808
      %v4019 = vunpack.c.0.s8 %v4018
      %v4020 = vlaneseq
      %v4021 = vshrl.u32 %v4020, 7
      %v4022 = vsub.s32 %v4019, %v4021
      %v4023 = vrot.slane %v3959, %v4022
      %4032 = vst [vmem:[#allocation4 + $0x140] sm:$0xcc] %v3971
      %4033 = vst [vmem:[#allocation4 + $0x148] sm:$0xcc] %v3978
      %4034 = vst [vmem:[#allocation4 + $0x150] sm:$0xcc] %v3986
      %4035 = vst [vmem:[#allocation4 + $0x158] sm:$0xcc] %v3993
      %4036 = vst [vmem:[#allocation4 + $0x160] sm:$0xcc] %v4001
      %4037 = vst [vmem:[#allocation4 + $0x168] sm:$0xcc] %v4008
      %4038 = vst [vmem:[#allocation4 + $0x170] sm:$0xcc] %v4016
      %4039 = vst [vmem:[#allocation4 + $0x178] sm:$0xcc] %v4023
      %v4040 = vld [vmem:[#allocation3 + $0x4] sm:$0xff]
      %v4041 = vld [vmem:[#allocation3 + $0xc] sm:$0xff]
      %v4042 = vld [vmem:[#allocation3 + $0x14] sm:$0xff]
      %v4043 = vld [vmem:[#allocation3 + $0x1c] sm:$0xff]
      %v4048 = vcombine.high %v4040, %v4040
      %v4050 = vunpack.c.l.s4 1983009808
      %v4051 = vunpack.c.0.s8 %v4050
      %v4052 = vlaneseq
      %v4053 = vshrl.u32 %v4052, 7
      %v4054 = vsub.s32 %v4051, %v4053
      %v4055 = vrot.slane %v4040, %v4054
      %v4057 = vunpack.c.l.s4 1983009808
      %v4058 = vunpack.c.0.s8 %v4057
      %v4059 = vlaneseq
      %v4060 = vshrl.u32 %v4059, 7
      %v4061 = vsub.s32 %v4058, %v4060
      %v4062 = vrot.slane %v4048, %v4061
      %v4063 = vcombine.high %v4041, %v4041
      %v4065 = vunpack.c.l.s4 1983009808
      %v4066 = vunpack.c.0.s8 %v4065
      %v4067 = vlaneseq
      %v4068 = vshrl.u32 %v4067, 7
      %v4069 = vsub.s32 %v4066, %v4068
      %v4070 = vrot.slane %v4041, %v4069
      %v4072 = vunpack.c.l.s4 1983009808
      %v4073 = vunpack.c.0.s8 %v4072
      %v4074 = vlaneseq
      %v4075 = vshrl.u32 %v4074, 7
      %v4076 = vsub.s32 %v4073, %v4075
      %v4077 = vrot.slane %v4063, %v4076
      %v4078 = vcombine.high %v4042, %v4042
      %v4080 = vunpack.c.l.s4 1983009808
      %v4081 = vunpack.c.0.s8 %v4080
      %v4082 = vlaneseq
      %v4083 = vshrl.u32 %v4082, 7
      %v4084 = vsub.s32 %v4081, %v4083
      %v4085 = vrot.slane %v4042, %v4084
      %v4087 = vunpack.c.l.s4 1983009808
      %v4088 = vunpack.c.0.s8 %v4087
      %v4089 = vlaneseq
      %v4090 = vshrl.u32 %v4089, 7
      %v4091 = vsub.s32 %v4088, %v4090
      %v4092 = vrot.slane %v4078, %v4091
      %v4093 = vcombine.high %v4043, %v4043
      %v4095 = vunpack.c.l.s4 1983009808
      %v4096 = vunpack.c.0.s8 %v4095
      %v4097 = vlaneseq
      %v4098 = vshrl.u32 %v4097, 7
      %v4099 = vsub.s32 %v4096, %v4098
      %v4100 = vrot.slane %v4043, %v4099
      %v4102 = vunpack.c.l.s4 1983009808
      %v4103 = vunpack.c.0.s8 %v4102
      %v4104 = vlaneseq
      %v4105 = vshrl.u32 %v4104, 7
      %v4106 = vsub.s32 %v4103, %v4105
      %v4107 = vrot.slane %v4093, %v4106
      %4116 = vst [vmem:[#allocation4 + $0x240] sm:$0x33] %v4055
      %4117 = vst [vmem:[#allocation4 + $0x248] sm:$0x33] %v4062
      %4118 = vst [vmem:[#allocation4 + $0x250] sm:$0x33] %v4070
      %4119 = vst [vmem:[#allocation4 + $0x258] sm:$0x33] %v4077
      %4120 = vst [vmem:[#allocation4 + $0x260] sm:$0x33] %v4085
      %4121 = vst [vmem:[#allocation4 + $0x268] sm:$0x33] %v4092
      %4122 = vst [vmem:[#allocation4 + $0x270] sm:$0x33] %v4100
      %4123 = vst [vmem:[#allocation4 + $0x278] sm:$0x33] %v4107
      %v4124 = vld [vmem:[#allocation3 + $0x6] sm:$0xff]
      %v4125 = vld [vmem:[#allocation3 + $0xe] sm:$0xff]
      %v4126 = vld [vmem:[#allocation3 + $0x16] sm:$0xff]
      %v4127 = vld [vmem:[#allocation3 + $0x1e] sm:$0xff]
      %v4132 = vcombine.low %v4124, %v4124
      %v4134 = vunpack.c.l.s4 1983009808
      %v4135 = vunpack.c.0.s8 %v4134
      %v4136 = vlaneseq
      %v4137 = vshrl.u32 %v4136, 7
      %v4138 = vsub.s32 %v4135, %v4137
      %v4139 = vrot.slane %v4132, %v4138
      %v4141 = vunpack.c.l.s4 1983009808
      %v4142 = vunpack.c.0.s8 %v4141
      %v4143 = vlaneseq
      %v4144 = vshrl.u32 %v4143, 7
      %v4145 = vsub.s32 %v4142, %v4144
      %v4146 = vrot.slane %v4124, %v4145
      %v4147 = vcombine.low %v4125, %v4125
      %v4149 = vunpack.c.l.s4 1983009808
      %v4150 = vunpack.c.0.s8 %v4149
      %v4151 = vlaneseq
      %v4152 = vshrl.u32 %v4151, 7
      %v4153 = vsub.s32 %v4150, %v4152
      %v4154 = vrot.slane %v4147, %v4153
      %v4156 = vunpack.c.l.s4 1983009808
      %v4157 = vunpack.c.0.s8 %v4156
      %v4158 = vlaneseq
      %v4159 = vshrl.u32 %v4158, 7
      %v4160 = vsub.s32 %v4157, %v4159
      %v4161 = vrot.slane %v4125, %v4160
      %v4162 = vcombine.low %v4126, %v4126
      %v4164 = vunpack.c.l.s4 1983009808
      %v4165 = vunpack.c.0.s8 %v4164
      %v4166 = vlaneseq
      %v4167 = vshrl.u32 %v4166, 7
      %v4168 = vsub.s32 %v4165, %v4167
      %v4169 = vrot.slane %v4162, %v4168
      %v4171 = vunpack.c.l.s4 1983009808
      %v4172 = vunpack.c.0.s8 %v4171
      %v4173 = vlaneseq
      %v4174 = vshrl.u32 %v4173, 7
      %v4175 = vsub.s32 %v4172, %v4174
      %v4176 = vrot.slane %v4126, %v4175
      %v4177 = vcombine.low %v4127, %v4127
      %v4179 = vunpack.c.l.s4 1983009808
      %v4180 = vunpack.c.0.s8 %v4179
      %v4181 = vlaneseq
      %v4182 = vshrl.u32 %v4181, 7
      %v4183 = vsub.s32 %v4180, %v4182
      %v4184 = vrot.slane %v4177, %v4183
      %v4186 = vunpack.c.l.s4 1983009808
      %v4187 = vunpack.c.0.s8 %v4186
      %v4188 = vlaneseq
      %v4189 = vshrl.u32 %v4188, 7
      %v4190 = vsub.s32 %v4187, %v4189
      %v4191 = vrot.slane %v4127, %v4190
      %4200 = vst [vmem:[#allocation4 + $0x300] sm:$0xcc] %v4139
      %4201 = vst [vmem:[#allocation4 + $0x308] sm:$0xcc] %v4146
      %4202 = vst [vmem:[#allocation4 + $0x310] sm:$0xcc] %v4154
      %4203 = vst [vmem:[#allocation4 + $0x318] sm:$0xcc] %v4161
      %4204 = vst [vmem:[#allocation4 + $0x320] sm:$0xcc] %v4169
      %4205 = vst [vmem:[#allocation4 + $0x328] sm:$0xcc] %v4176
      %4206 = vst [vmem:[#allocation4 + $0x330] sm:$0xcc] %v4184
      %4207 = vst [vmem:[#allocation4 + $0x338] sm:$0xcc] %v4191
      %v4208 = vld [vmem:[#allocation3 + $0x8] sm:$0xff]
      %v4209 = vld [vmem:[#allocation3 + $0x10] sm:$0xff]
      %v4210 = vld [vmem:[#allocation3 + $0x18] sm:$0xff]
      %v4211 = vld [vmem:[#allocation3 + $0x20] sm:$0xff]
      %v4216 = vcombine.high %v4208, %v4208
      %v4218 = vunpack.c.l.s4 1983009808
      %v4219 = vunpack.c.0.s8 %v4218
      %v4220 = vlaneseq
      %v4221 = vshrl.u32 %v4220, 7
      %v4222 = vsub.s32 %v4219, %v4221
      %v4223 = vrot.slane %v4208, %v4222
      %v4225 = vunpack.c.l.s4 1983009808
      %v4226 = vunpack.c.0.s8 %v4225
      %v4227 = vlaneseq
      %v4228 = vshrl.u32 %v4227, 7
      %v4229 = vsub.s32 %v4226, %v4228
      %v4230 = vrot.slane %v4216, %v4229
      %v4231 = vcombine.high %v4209, %v4209
      %v4233 = vunpack.c.l.s4 1983009808
      %v4234 = vunpack.c.0.s8 %v4233
      %v4235 = vlaneseq
      %v4236 = vshrl.u32 %v4235, 7
      %v4237 = vsub.s32 %v4234, %v4236
      %v4238 = vrot.slane %v4209, %v4237
      %v4240 = vunpack.c.l.s4 1983009808
      %v4241 = vunpack.c.0.s8 %v4240
      %v4242 = vlaneseq
      %v4243 = vshrl.u32 %v4242, 7
      %v4244 = vsub.s32 %v4241, %v4243
      %v4245 = vrot.slane %v4231, %v4244
      %v4246 = vcombine.high %v4210, %v4210
      %v4248 = vunpack.c.l.s4 1983009808
      %v4249 = vunpack.c.0.s8 %v4248
      %v4250 = vlaneseq
      %v4251 = vshrl.u32 %v4250, 7
      %v4252 = vsub.s32 %v4249, %v4251
      %v4253 = vrot.slane %v4210, %v4252
      %v4255 = vunpack.c.l.s4 1983009808
      %v4256 = vunpack.c.0.s8 %v4255
      %v4257 = vlaneseq
      %v4258 = vshrl.u32 %v4257, 7
      %v4259 = vsub.s32 %v4256, %v4258
      %v4260 = vrot.slane %v4246, %v4259
      %v4261 = vcombine.high %v4211, %v4211
      %v4263 = vunpack.c.l.s4 1983009808
      %v4264 = vunpack.c.0.s8 %v4263
      %v4265 = vlaneseq
      %v4266 = vshrl.u32 %v4265, 7
      %v4267 = vsub.s32 %v4264, %v4266
      %v4268 = vrot.slane %v4211, %v4267
      %v4270 = vunpack.c.l.s4 1983009808
      %v4271 = vunpack.c.0.s8 %v4270
      %v4272 = vlaneseq
      %v4273 = vshrl.u32 %v4272, 7
      %v4274 = vsub.s32 %v4271, %v4273
      %v4275 = vrot.slane %v4261, %v4274
      %4284 = vst [vmem:[#allocation4 + $0x400] sm:$0x33] %v4223
      %4285 = vst [vmem:[#allocation4 + $0x408] sm:$0x33] %v4230
      %4286 = vst [vmem:[#allocation4 + $0x410] sm:$0x33] %v4238
      %4287 = vst [vmem:[#allocation4 + $0x418] sm:$0x33] %v4245
      %4288 = vst [vmem:[#allocation4 + $0x420] sm:$0x33] %v4253
      %4289 = vst [vmem:[#allocation4 + $0x428] sm:$0x33] %v4260
      %4290 = vst [vmem:[#allocation4 + $0x430] sm:$0x33] %v4268
      %4291 = vst [vmem:[#allocation4 + $0x438] sm:$0x33] %v4275
      %v4292 = vld [vmem:[#allocation3 + $0xa] sm:$0xff]
      %v4293 = vld [vmem:[#allocation3 + $0x12] sm:$0xff]
      %v4294 = vld [vmem:[#allocation3 + $0x1a] sm:$0xff]
      %v4295 = vld [vmem:[#allocation3 + $0x22] sm:$0xff]
      %v4300 = vcombine.low %v4292, %v4292
      %v4302 = vunpack.c.l.s4 1983009808
      %v4303 = vunpack.c.0.s8 %v4302
      %v4304 = vlaneseq
      %v4305 = vshrl.u32 %v4304, 7
      %v4306 = vsub.s32 %v4303, %v4305
      %v4307 = vrot.slane %v4300, %v4306
      %v4309 = vunpack.c.l.s4 1983009808
      %v4310 = vunpack.c.0.s8 %v4309
      %v4311 = vlaneseq
      %v4312 = vshrl.u32 %v4311, 7
      %v4313 = vsub.s32 %v4310, %v4312
      %v4314 = vrot.slane %v4292, %v4313
      %v4315 = vcombine.low %v4293, %v4293
      %v4317 = vunpack.c.l.s4 1983009808
      %v4318 = vunpack.c.0.s8 %v4317
      %v4319 = vlaneseq
      %v4320 = vshrl.u32 %v4319, 7
      %v4321 = vsub.s32 %v4318, %v4320
      %v4322 = vrot.slane %v4315, %v4321
      %v4324 = vunpack.c.l.s4 1983009808
      %v4325 = vunpack.c.0.s8 %v4324
      %v4326 = vlaneseq
      %v4327 = vshrl.u32 %v4326, 7
      %v4328 = vsub.s32 %v4325, %v4327
      %v4329 = vrot.slane %v4293, %v4328
      %v4330 = vcombine.low %v4294, %v4294
      %v4332 = vunpack.c.l.s4 1983009808
      %v4333 = vunpack.c.0.s8 %v4332
      %v4334 = vlaneseq
      %v4335 = vshrl.u32 %v4334, 7
      %v4336 = vsub.s32 %v4333, %v4335
      %v4337 = vrot.slane %v4330, %v4336
      %v4339 = vunpack.c.l.s4 1983009808
      %v4340 = vunpack.c.0.s8 %v4339
      %v4341 = vlaneseq
      %v4342 = vshrl.u32 %v4341, 7
      %v4343 = vsub.s32 %v4340, %v4342
      %v4344 = vrot.slane %v4294, %v4343
      %v4345 = vcombine.low %v4295, %v4295
      %v4347 = vunpack.c.l.s4 1983009808
      %v4348 = vunpack.c.0.s8 %v4347
      %v4349 = vlaneseq
      %v4350 = vshrl.u32 %v4349, 7
      %v4351 = vsub.s32 %v4348, %v4350
      %v4352 = vrot.slane %v4345, %v4351
      %v4354 = vunpack.c.l.s4 1983009808
      %v4355 = vunpack.c.0.s8 %v4354
      %v4356 = vlaneseq
      %v4357 = vshrl.u32 %v4356, 7
      %v4358 = vsub.s32 %v4355, %v4357
      %v4359 = vrot.slane %v4295, %v4358
      %4368 = vst [vmem:[#allocation4 + $0x4c0] sm:$0xcc] %v4307
      %4369 = vst [vmem:[#allocation4 + $0x4c8] sm:$0xcc] %v4314
      %4370 = vst [vmem:[#allocation4 + $0x4d0] sm:$0xcc] %v4322
      %4371 = vst [vmem:[#allocation4 + $0x4d8] sm:$0xcc] %v4329
      %4372 = vst [vmem:[#allocation4 + $0x4e0] sm:$0xcc] %v4337
      %4373 = vst [vmem:[#allocation4 + $0x4e8] sm:$0xcc] %v4344
      %4374 = vst [vmem:[#allocation4 + $0x4f0] sm:$0xcc] %v4352
      %4375 = vst [vmem:[#allocation4 + $0x4f8] sm:$0xcc] %v4359
      %v4376 = vld [vmem:[#allocation3 + $0xc] sm:$0xff]
      %v4377 = vld [vmem:[#allocation3 + $0x14] sm:$0xff]
      %v4378 = vld [vmem:[#allocation3 + $0x1c] sm:$0xff]
      %v4379 = vld [vmem:[#allocation3 + $0x24] sm:$0xff]
      %v4384 = vcombine.high %v4376, %v4376
      %v4386 = vunpack.c.l.s4 1983009808
      %v4387 = vunpack.c.0.s8 %v4386
      %v4388 = vlaneseq
      %v4389 = vshrl.u32 %v4388, 7
      %v4390 = vsub.s32 %v4387, %v4389
      %v4391 = vrot.slane %v4376, %v4390
      %v4393 = vunpack.c.l.s4 1983009808
      %v4394 = vunpack.c.0.s8 %v4393
      %v4395 = vlaneseq
      %v4396 = vshrl.u32 %v4395, 7
      %v4397 = vsub.s32 %v4394, %v4396
      %v4398 = vrot.slane %v4384, %v4397
      %v4399 = vcombine.high %v4377, %v4377
      %v4401 = vunpack.c.l.s4 1983009808
      %v4402 = vunpack.c.0.s8 %v4401
      %v4403 = vlaneseq
      %v4404 = vshrl.u32 %v4403, 7
      %v4405 = vsub.s32 %v4402, %v4404
      %v4406 = vrot.slane %v4377, %v4405
      %v4408 = vunpack.c.l.s4 1983009808
      %v4409 = vunpack.c.0.s8 %v4408
      %v4410 = vlaneseq
      %v4411 = vshrl.u32 %v4410, 7
      %v4412 = vsub.s32 %v4409, %v4411
      %v4413 = vrot.slane %v4399, %v4412
      %v4414 = vcombine.high %v4378, %v4378
      %v4416 = vunpack.c.l.s4 1983009808
      %v4417 = vunpack.c.0.s8 %v4416
      %v4418 = vlaneseq
      %v4419 = vshrl.u32 %v4418, 7
      %v4420 = vsub.s32 %v4417, %v4419
      %v4421 = vrot.slane %v4378, %v4420
      %v4423 = vunpack.c.l.s4 1983009808
      %v4424 = vunpack.c.0.s8 %v4423
      %v4425 = vlaneseq
      %v4426 = vshrl.u32 %v4425, 7
      %v4427 = vsub.s32 %v4424, %v4426
      %v4428 = vrot.slane %v4414, %v4427
      %v4429 = vcombine.high %v4379, %v4379
      %v4431 = vunpack.c.l.s4 1983009808
      %v4432 = vunpack.c.0.s8 %v4431
      %v4433 = vlaneseq
      %v4434 = vshrl.u32 %v4433, 7
      %v4435 = vsub.s32 %v4432, %v4434
      %v4436 = vrot.slane %v4379, %v4435
      %v4438 = vunpack.c.l.s4 1983009808
      %v4439 = vunpack.c.0.s8 %v4438
      %v4440 = vlaneseq
      %v4441 = vshrl.u32 %v4440, 7
      %v4442 = vsub.s32 %v4439, %v4441
      %v4443 = vrot.slane %v4429, %v4442
      %4452 = vst [vmem:[#allocation4 + $0x5c0] sm:$0x33] %v4391
      %4453 = vst [vmem:[#allocation4 + $0x5c8] sm:$0x33] %v4398
      %4454 = vst [vmem:[#allocation4 + $0x5d0] sm:$0x33] %v4406
      %4455 = vst [vmem:[#allocation4 + $0x5d8] sm:$0x33] %v4413
      %4456 = vst [vmem:[#allocation4 + $0x5e0] sm:$0x33] %v4421
      %4457 = vst [vmem:[#allocation4 + $0x5e8] sm:$0x33] %v4428
      %4458 = vst [vmem:[#allocation4 + $0x5f0] sm:$0x33] %v4436
      %4459 = vst [vmem:[#allocation4 + $0x5f8] sm:$0x33] %v4443
      %v4460 = vld [vmem:[#allocation2 + $0x2] sm:$0xff]
      %v4461 = vld [vmem:[#allocation2 + $0xa] sm:$0xff]
      %v4462 = vld [vmem:[#allocation2 + $0x12] sm:$0xff]
      %v4463 = vld [vmem:[#allocation2 + $0x1a] sm:$0xff]
      %v4464 = vld [vmem:[#allocation2 + $0x22] sm:$0xff]
      %v4465 = vld [vmem:[#allocation2 + $0x2a] sm:$0x3f]
      %4472 = vrot.lane.b32.xlu0 %v4460, 126
      %v4473 = vpop.permute.xlu0 %4472
      %4474 = vrot.lane.b32.xlu0 %v4461, 126
      %v4475 = vpop.permute.xlu0 %4474
      %4476 = vrot.lane.b32.xlu0 %v4462, 126
      %v4477 = vpop.permute.xlu0 %4476
      %4478 = vrot.lane.b32.xlu0 %v4463, 126
      %v4479 = vpop.permute.xlu0 %4478
      %4480 = vrot.lane.b32.xlu0 %v4464, 126
      %v4481 = vpop.permute.xlu0 %4480
      %4482 = vrot.lane.b32.xlu0 %v4465, 126
      %v4483 = vpop.permute.xlu0 %4482
      %v4484 = vrot.slane %v4473, 2
      %v4485 = vrot.slane %v4475, 2
      %v4486 = vrot.slane %v4477, 2
      %v4487 = vrot.slane %v4479, 2
      %v4488 = vrot.slane %v4481, 2
      %v4489 = vrot.slane %v4483, 2
      %v4490 = vsel %vm1321, %v4484, %v4485
      %vm4491 = vcmask 1031168
      %v4492 = vsel %vm4491, %v4473, %v4490
      %v4493 = vsel %vm1321, %v4485, %v4486
      %v4494 = vsel %vm4491, %v4475, %v4493
      %v4495 = vsel %vm1321, %v4486, %v4487
      %v4496 = vsel %vm4491, %v4477, %v4495
      %v4497 = vsel %vm1321, %v4487, %v4488
      %v4498 = vsel %vm4491, %v4479, %v4497
      %v4499 = vsel %vm1321, %v4488, %v4489
      %v4500 = vsel %vm4491, %v4481, %v4499
      %v4501 = vsel %vm4491, %v4483, %v4489
      %4508 = vst [vmem:[#allocation3] sm:$0xff] %v4492
      %4509 = vst [vmem:[#allocation3 + $0x8] sm:$0xff] %v4494
      %4510 = vst [vmem:[#allocation3 + $0x10] sm:$0xff] %v4496
      %4511 = vst [vmem:[#allocation3 + $0x18] sm:$0xff] %v4498
      %4512 = vst [vmem:[#allocation3 + $0x20] sm:$0xff] %v4500
      %4513 = vst [vmem:[#allocation3 + $0x28] sm:$0xf] %v4501
      %v4514 = vld [vmem:[#allocation3] sm:$0xff]
      %v4515 = vld [vmem:[#allocation3 + $0x8] sm:$0xff]
      %v4516 = vld [vmem:[#allocation3 + $0x10] sm:$0xff]
      %v4517 = vld [vmem:[#allocation3 + $0x18] sm:$0xff]
      %v4522 = vcombine.low %v4514, %v4514
      %v4524 = vunpack.c.l.s4 1983009808
      %v4525 = vunpack.c.0.s8 %v4524
      %v4526 = vlaneseq
      %v4527 = vshrl.u32 %v4526, 7
      %v4528 = vsub.s32 %v4525, %v4527
      %v4529 = vrot.slane %v4522, %v4528
      %v4531 = vunpack.c.l.s4 1983009808
      %v4532 = vunpack.c.0.s8 %v4531
      %v4533 = vlaneseq
      %v4534 = vshrl.u32 %v4533, 7
      %v4535 = vsub.s32 %v4532, %v4534
      %v4536 = vrot.slane %v4514, %v4535
      %v4537 = vcombine.low %v4515, %v4515
      %v4539 = vunpack.c.l.s4 1983009808
      %v4540 = vunpack.c.0.s8 %v4539
      %v4541 = vlaneseq
      %v4542 = vshrl.u32 %v4541, 7
      %v4543 = vsub.s32 %v4540, %v4542
      %v4544 = vrot.slane %v4537, %v4543
      %v4546 = vunpack.c.l.s4 1983009808
      %v4547 = vunpack.c.0.s8 %v4546
      %v4548 = vlaneseq
      %v4549 = vshrl.u32 %v4548, 7
      %v4550 = vsub.s32 %v4547, %v4549
      %v4551 = vrot.slane %v4515, %v4550
      %v4552 = vcombine.low %v4516, %v4516
      %v4554 = vunpack.c.l.s4 1983009808
      %v4555 = vunpack.c.0.s8 %v4554
      %v4556 = vlaneseq
      %v4557 = vshrl.u32 %v4556, 7
      %v4558 = vsub.s32 %v4555, %v4557
      %v4559 = vrot.slane %v4552, %v4558
      %v4561 = vunpack.c.l.s4 1983009808
      %v4562 = vunpack.c.0.s8 %v4561
      %v4563 = vlaneseq
      %v4564 = vshrl.u32 %v4563, 7
      %v4565 = vsub.s32 %v4562, %v4564
      %v4566 = vrot.slane %v4516, %v4565
      %v4567 = vcombine.low %v4517, %v4517
      %v4569 = vunpack.c.l.s4 1983009808
      %v4570 = vunpack.c.0.s8 %v4569
      %v4571 = vlaneseq
      %v4572 = vshrl.u32 %v4571, 7
      %v4573 = vsub.s32 %v4570, %v4572
      %v4574 = vrot.slane %v4567, %v4573
      %v4576 = vunpack.c.l.s4 1983009808
      %v4577 = vunpack.c.0.s8 %v4576
      %v4578 = vlaneseq
      %v4579 = vshrl.u32 %v4578, 7
      %v4580 = vsub.s32 %v4577, %v4579
      %v4581 = vrot.slane %v4517, %v4580
      %4590 = vst [vmem:[#allocation4 + $0x80] sm:$0xcc] %v4529
      %4591 = vst [vmem:[#allocation4 + $0x88] sm:$0xcc] %v4536
      %4592 = vst [vmem:[#allocation4 + $0x90] sm:$0xcc] %v4544
      %4593 = vst [vmem:[#allocation4 + $0x98] sm:$0xcc] %v4551
      %4594 = vst [vmem:[#allocation4 + $0xa0] sm:$0xcc] %v4559
      %4595 = vst [vmem:[#allocation4 + $0xa8] sm:$0xcc] %v4566
      %4596 = vst [vmem:[#allocation4 + $0xb0] sm:$0xcc] %v4574
      %4597 = vst [vmem:[#allocation4 + $0xb8] sm:$0xcc] %v4581
      %v4598 = vld [vmem:[#allocation3 + $0x2] sm:$0xff]
      %v4599 = vld [vmem:[#allocation3 + $0xa] sm:$0xff]
      %v4600 = vld [vmem:[#allocation3 + $0x12] sm:$0xff]
      %v4601 = vld [vmem:[#allocation3 + $0x1a] sm:$0xff]
      %v4606 = vcombine.high %v4598, %v4598
      %v4608 = vunpack.c.l.s4 1983009808
      %v4609 = vunpack.c.0.s8 %v4608
      %v4610 = vlaneseq
      %v4611 = vshrl.u32 %v4610, 7
      %v4612 = vsub.s32 %v4609, %v4611
      %v4613 = vrot.slane %v4598, %v4612
      %v4615 = vunpack.c.l.s4 1983009808
      %v4616 = vunpack.c.0.s8 %v4615
      %v4617 = vlaneseq
      %v4618 = vshrl.u32 %v4617, 7
      %v4619 = vsub.s32 %v4616, %v4618
      %v4620 = vrot.slane %v4606, %v4619
      %v4621 = vcombine.high %v4599, %v4599
      %v4623 = vunpack.c.l.s4 1983009808
      %v4624 = vunpack.c.0.s8 %v4623
      %v4625 = vlaneseq
      %v4626 = vshrl.u32 %v4625, 7
      %v4627 = vsub.s32 %v4624, %v4626
      %v4628 = vrot.slane %v4599, %v4627
      %v4630 = vunpack.c.l.s4 1983009808
      %v4631 = vunpack.c.0.s8 %v4630
      %v4632 = vlaneseq
      %v4633 = vshrl.u32 %v4632, 7
      %v4634 = vsub.s32 %v4631, %v4633
      %v4635 = vrot.slane %v4621, %v4634
      %v4636 = vcombine.high %v4600, %v4600
      %v4638 = vunpack.c.l.s4 1983009808
      %v4639 = vunpack.c.0.s8 %v4638
      %v4640 = vlaneseq
      %v4641 = vshrl.u32 %v4640, 7
      %v4642 = vsub.s32 %v4639, %v4641
      %v4643 = vrot.slane %v4600, %v4642
      %v4645 = vunpack.c.l.s4 1983009808
      %v4646 = vunpack.c.0.s8 %v4645
      %v4647 = vlaneseq
      %v4648 = vshrl.u32 %v4647, 7
      %v4649 = vsub.s32 %v4646, %v4648
      %v4650 = vrot.slane %v4636, %v4649
      %v4651 = vcombine.high %v4601, %v4601
      %v4653 = vunpack.c.l.s4 1983009808
      %v4654 = vunpack.c.0.s8 %v4653
      %v4655 = vlaneseq
      %v4656 = vshrl.u32 %v4655, 7
      %v4657 = vsub.s32 %v4654, %v4656
      %v4658 = vrot.slane %v4601, %v4657
      %v4660 = vunpack.c.l.s4 1983009808
      %v4661 = vunpack.c.0.s8 %v4660
      %v4662 = vlaneseq
      %v4663 = vshrl.u32 %v4662, 7
      %v4664 = vsub.s32 %v4661, %v4663
      %v4665 = vrot.slane %v4651, %v4664
      %4674 = vst [vmem:[#allocation4 + $0x180] sm:$0x33] %v4613
      %4675 = vst [vmem:[#allocation4 + $0x188] sm:$0x33] %v4620
      %4676 = vst [vmem:[#allocation4 + $0x190] sm:$0x33] %v4628
      %4677 = vst [vmem:[#allocation4 + $0x198] sm:$0x33] %v4635
      %4678 = vst [vmem:[#allocation4 + $0x1a0] sm:$0x33] %v4643
      %4679 = vst [vmem:[#allocation4 + $0x1a8] sm:$0x33] %v4650
      %4680 = vst [vmem:[#allocation4 + $0x1b0] sm:$0x33] %v4658
      %4681 = vst [vmem:[#allocation4 + $0x1b8] sm:$0x33] %v4665
      %v4682 = vld [vmem:[#allocation3 + $0x4] sm:$0xff]
      %v4683 = vld [vmem:[#allocation3 + $0xc] sm:$0xff]
      %v4684 = vld [vmem:[#allocation3 + $0x14] sm:$0xff]
      %v4685 = vld [vmem:[#allocation3 + $0x1c] sm:$0xff]
      %v4690 = vcombine.low %v4682, %v4682
      %v4692 = vunpack.c.l.s4 1983009808
      %v4693 = vunpack.c.0.s8 %v4692
      %v4694 = vlaneseq
      %v4695 = vshrl.u32 %v4694, 7
      %v4696 = vsub.s32 %v4693, %v4695
      %v4697 = vrot.slane %v4690, %v4696
      %v4699 = vunpack.c.l.s4 1983009808
      %v4700 = vunpack.c.0.s8 %v4699
      %v4701 = vlaneseq
      %v4702 = vshrl.u32 %v4701, 7
      %v4703 = vsub.s32 %v4700, %v4702
      %v4704 = vrot.slane %v4682, %v4703
      %v4705 = vcombine.low %v4683, %v4683
      %v4707 = vunpack.c.l.s4 1983009808
      %v4708 = vunpack.c.0.s8 %v4707
      %v4709 = vlaneseq
      %v4710 = vshrl.u32 %v4709, 7
      %v4711 = vsub.s32 %v4708, %v4710
      %v4712 = vrot.slane %v4705, %v4711
      %v4714 = vunpack.c.l.s4 1983009808
      %v4715 = vunpack.c.0.s8 %v4714
      %v4716 = vlaneseq
      %v4717 = vshrl.u32 %v4716, 7
      %v4718 = vsub.s32 %v4715, %v4717
      %v4719 = vrot.slane %v4683, %v4718
      %v4720 = vcombine.low %v4684, %v4684
      %v4722 = vunpack.c.l.s4 1983009808
      %v4723 = vunpack.c.0.s8 %v4722
      %v4724 = vlaneseq
      %v4725 = vshrl.u32 %v4724, 7
      %v4726 = vsub.s32 %v4723, %v4725
      %v4727 = vrot.slane %v4720, %v4726
      %v4729 = vunpack.c.l.s4 1983009808
      %v4730 = vunpack.c.0.s8 %v4729
      %v4731 = vlaneseq
      %v4732 = vshrl.u32 %v4731, 7
      %v4733 = vsub.s32 %v4730, %v4732
      %v4734 = vrot.slane %v4684, %v4733
      %v4735 = vcombine.low %v4685, %v4685
      %v4737 = vunpack.c.l.s4 1983009808
      %v4738 = vunpack.c.0.s8 %v4737
      %v4739 = vlaneseq
      %v4740 = vshrl.u32 %v4739, 7
      %v4741 = vsub.s32 %v4738, %v4740
      %v4742 = vrot.slane %v4735, %v4741
      %v4744 = vunpack.c.l.s4 1983009808
      %v4745 = vunpack.c.0.s8 %v4744
      %v4746 = vlaneseq
      %v4747 = vshrl.u32 %v4746, 7
      %v4748 = vsub.s32 %v4745, %v4747
      %v4749 = vrot.slane %v4685, %v4748
      %4758 = vst [vmem:[#allocation4 + $0x240] sm:$0xcc] %v4697
      %4759 = vst [vmem:[#allocation4 + $0x248] sm:$0xcc] %v4704
      %4760 = vst [vmem:[#allocation4 + $0x250] sm:$0xcc] %v4712
      %4761 = vst [vmem:[#allocation4 + $0x258] sm:$0xcc] %v4719
      %4762 = vst [vmem:[#allocation4 + $0x260] sm:$0xcc] %v4727
      %4763 = vst [vmem:[#allocation4 + $0x268] sm:$0xcc] %v4734
      %4764 = vst [vmem:[#allocation4 + $0x270] sm:$0xcc] %v4742
      %4765 = vst [vmem:[#allocation4 + $0x278] sm:$0xcc] %v4749
      %v4766 = vld [vmem:[#allocation3 + $0x6] sm:$0xff]
      %v4767 = vld [vmem:[#allocation3 + $0xe] sm:$0xff]
      %v4768 = vld [vmem:[#allocation3 + $0x16] sm:$0xff]
      %v4769 = vld [vmem:[#allocation3 + $0x1e] sm:$0xff]
      %v4774 = vcombine.high %v4766, %v4766
      %v4776 = vunpack.c.l.s4 1983009808
      %v4777 = vunpack.c.0.s8 %v4776
      %v4778 = vlaneseq
      %v4779 = vshrl.u32 %v4778, 7
      %v4780 = vsub.s32 %v4777, %v4779
      %v4781 = vrot.slane %v4766, %v4780
      %v4783 = vunpack.c.l.s4 1983009808
      %v4784 = vunpack.c.0.s8 %v4783
      %v4785 = vlaneseq
      %v4786 = vshrl.u32 %v4785, 7
      %v4787 = vsub.s32 %v4784, %v4786
      %v4788 = vrot.slane %v4774, %v4787
      %v4789 = vcombine.high %v4767, %v4767
      %v4791 = vunpack.c.l.s4 1983009808
      %v4792 = vunpack.c.0.s8 %v4791
      %v4793 = vlaneseq
      %v4794 = vshrl.u32 %v4793, 7
      %v4795 = vsub.s32 %v4792, %v4794
      %v4796 = vrot.slane %v4767, %v4795
      %v4798 = vunpack.c.l.s4 1983009808
      %v4799 = vunpack.c.0.s8 %v4798
      %v4800 = vlaneseq
      %v4801 = vshrl.u32 %v4800, 7
      %v4802 = vsub.s32 %v4799, %v4801
      %v4803 = vrot.slane %v4789, %v4802
      %v4804 = vcombine.high %v4768, %v4768
      %v4806 = vunpack.c.l.s4 1983009808
      %v4807 = vunpack.c.0.s8 %v4806
      %v4808 = vlaneseq
      %v4809 = vshrl.u32 %v4808, 7
      %v4810 = vsub.s32 %v4807, %v4809
      %v4811 = vrot.slane %v4768, %v4810
      %v4813 = vunpack.c.l.s4 1983009808
      %v4814 = vunpack.c.0.s8 %v4813
      %v4815 = vlaneseq
      %v4816 = vshrl.u32 %v4815, 7
      %v4817 = vsub.s32 %v4814, %v4816
      %v4818 = vrot.slane %v4804, %v4817
      %v4819 = vcombine.high %v4769, %v4769
      %v4821 = vunpack.c.l.s4 1983009808
      %v4822 = vunpack.c.0.s8 %v4821
      %v4823 = vlaneseq
      %v4824 = vshrl.u32 %v4823, 7
      %v4825 = vsub.s32 %v4822, %v4824
      %v4826 = vrot.slane %v4769, %v4825
      %v4828 = vunpack.c.l.s4 1983009808
      %v4829 = vunpack.c.0.s8 %v4828
      %v4830 = vlaneseq
      %v4831 = vshrl.u32 %v4830, 7
      %v4832 = vsub.s32 %v4829, %v4831
      %v4833 = vrot.slane %v4819, %v4832
      %4842 = vst [vmem:[#allocation4 + $0x340] sm:$0x33] %v4781
      %4843 = vst [vmem:[#allocation4 + $0x348] sm:$0x33] %v4788
      %4844 = vst [vmem:[#allocation4 + $0x350] sm:$0x33] %v4796
      %4845 = vst [vmem:[#allocation4 + $0x358] sm:$0x33] %v4803
      %4846 = vst [vmem:[#allocation4 + $0x360] sm:$0x33] %v4811
      %4847 = vst [vmem:[#allocation4 + $0x368] sm:$0x33] %v4818
      %4848 = vst [vmem:[#allocation4 + $0x370] sm:$0x33] %v4826
      %4849 = vst [vmem:[#allocation4 + $0x378] sm:$0x33] %v4833
      %v4850 = vld [vmem:[#allocation3 + $0x8] sm:$0xff]
      %v4851 = vld [vmem:[#allocation3 + $0x10] sm:$0xff]
      %v4852 = vld [vmem:[#allocation3 + $0x18] sm:$0xff]
      %v4853 = vld [vmem:[#allocation3 + $0x20] sm:$0xff]
      %v4858 = vcombine.low %v4850, %v4850
      %v4860 = vunpack.c.l.s4 1983009808
      %v4861 = vunpack.c.0.s8 %v4860
      %v4862 = vlaneseq
      %v4863 = vshrl.u32 %v4862, 7
      %v4864 = vsub.s32 %v4861, %v4863
      %v4865 = vrot.slane %v4858, %v4864
      %v4867 = vunpack.c.l.s4 1983009808
      %v4868 = vunpack.c.0.s8 %v4867
      %v4869 = vlaneseq
      %v4870 = vshrl.u32 %v4869, 7
      %v4871 = vsub.s32 %v4868, %v4870
      %v4872 = vrot.slane %v4850, %v4871
      %v4873 = vcombine.low %v4851, %v4851
      %v4875 = vunpack.c.l.s4 1983009808
      %v4876 = vunpack.c.0.s8 %v4875
      %v4877 = vlaneseq
      %v4878 = vshrl.u32 %v4877, 7
      %v4879 = vsub.s32 %v4876, %v4878
      %v4880 = vrot.slane %v4873, %v4879
      %v4882 = vunpack.c.l.s4 1983009808
      %v4883 = vunpack.c.0.s8 %v4882
      %v4884 = vlaneseq
      %v4885 = vshrl.u32 %v4884, 7
      %v4886 = vsub.s32 %v4883, %v4885
      %v4887 = vrot.slane %v4851, %v4886
      %v4888 = vcombine.low %v4852, %v4852
      %v4890 = vunpack.c.l.s4 1983009808
      %v4891 = vunpack.c.0.s8 %v4890
      %v4892 = vlaneseq
      %v4893 = vshrl.u32 %v4892, 7
      %v4894 = vsub.s32 %v4891, %v4893
      %v4895 = vrot.slane %v4888, %v4894
      %v4897 = vunpack.c.l.s4 1983009808
      %v4898 = vunpack.c.0.s8 %v4897
      %v4899 = vlaneseq
      %v4900 = vshrl.u32 %v4899, 7
      %v4901 = vsub.s32 %v4898, %v4900
      %v4902 = vrot.slane %v4852, %v4901
      %v4903 = vcombine.low %v4853, %v4853
      %v4905 = vunpack.c.l.s4 1983009808
      %v4906 = vunpack.c.0.s8 %v4905
      %v4907 = vlaneseq
      %v4908 = vshrl.u32 %v4907, 7
      %v4909 = vsub.s32 %v4906, %v4908
      %v4910 = vrot.slane %v4903, %v4909
      %v4912 = vunpack.c.l.s4 1983009808
      %v4913 = vunpack.c.0.s8 %v4912
      %v4914 = vlaneseq
      %v4915 = vshrl.u32 %v4914, 7
      %v4916 = vsub.s32 %v4913, %v4915
      %v4917 = vrot.slane %v4853, %v4916
      %4926 = vst [vmem:[#allocation4 + $0x400] sm:$0xcc] %v4865
      %4927 = vst [vmem:[#allocation4 + $0x408] sm:$0xcc] %v4872
      %4928 = vst [vmem:[#allocation4 + $0x410] sm:$0xcc] %v4880
      %4929 = vst [vmem:[#allocation4 + $0x418] sm:$0xcc] %v4887
      %4930 = vst [vmem:[#allocation4 + $0x420] sm:$0xcc] %v4895
      %4931 = vst [vmem:[#allocation4 + $0x428] sm:$0xcc] %v4902
      %4932 = vst [vmem:[#allocation4 + $0x430] sm:$0xcc] %v4910
      %4933 = vst [vmem:[#allocation4 + $0x438] sm:$0xcc] %v4917
      %v4934 = vld [vmem:[#allocation3 + $0xa] sm:$0xff]
      %v4935 = vld [vmem:[#allocation3 + $0x12] sm:$0xff]
      %v4936 = vld [vmem:[#allocation3 + $0x1a] sm:$0xff]
      %v4937 = vld [vmem:[#allocation3 + $0x22] sm:$0xff]
      %v4942 = vcombine.high %v4934, %v4934
      %v4944 = vunpack.c.l.s4 1983009808
      %v4945 = vunpack.c.0.s8 %v4944
      %v4946 = vlaneseq
      %v4947 = vshrl.u32 %v4946, 7
      %v4948 = vsub.s32 %v4945, %v4947
      %v4949 = vrot.slane %v4934, %v4948
      %v4951 = vunpack.c.l.s4 1983009808
      %v4952 = vunpack.c.0.s8 %v4951
      %v4953 = vlaneseq
      %v4954 = vshrl.u32 %v4953, 7
      %v4955 = vsub.s32 %v4952, %v4954
      %v4956 = vrot.slane %v4942, %v4955
      %v4957 = vcombine.high %v4935, %v4935
      %v4959 = vunpack.c.l.s4 1983009808
      %v4960 = vunpack.c.0.s8 %v4959
      %v4961 = vlaneseq
      %v4962 = vshrl.u32 %v4961, 7
      %v4963 = vsub.s32 %v4960, %v4962
      %v4964 = vrot.slane %v4935, %v4963
      %v4966 = vunpack.c.l.s4 1983009808
      %v4967 = vunpack.c.0.s8 %v4966
      %v4968 = vlaneseq
      %v4969 = vshrl.u32 %v4968, 7
      %v4970 = vsub.s32 %v4967, %v4969
      %v4971 = vrot.slane %v4957, %v4970
      %v4972 = vcombine.high %v4936, %v4936
      %v4974 = vunpack.c.l.s4 1983009808
      %v4975 = vunpack.c.0.s8 %v4974
      %v4976 = vlaneseq
      %v4977 = vshrl.u32 %v4976, 7
      %v4978 = vsub.s32 %v4975, %v4977
      %v4979 = vrot.slane %v4936, %v4978
      %v4981 = vunpack.c.l.s4 1983009808
      %v4982 = vunpack.c.0.s8 %v4981
      %v4983 = vlaneseq
      %v4984 = vshrl.u32 %v4983, 7
      %v4985 = vsub.s32 %v4982, %v4984
      %v4986 = vrot.slane %v4972, %v4985
      %v4987 = vcombine.high %v4937, %v4937
      %v4989 = vunpack.c.l.s4 1983009808
      %v4990 = vunpack.c.0.s8 %v4989
      %v4991 = vlaneseq
      %v4992 = vshrl.u32 %v4991, 7
      %v4993 = vsub.s32 %v4990, %v4992
      %v4994 = vrot.slane %v4937, %v4993
      %v4996 = vunpack.c.l.s4 1983009808
      %v4997 = vunpack.c.0.s8 %v4996
      %v4998 = vlaneseq
      %v4999 = vshrl.u32 %v4998, 7
      %v5000 = vsub.s32 %v4997, %v4999
      %v5001 = vrot.slane %v4987, %v5000
      %5010 = vst [vmem:[#allocation4 + $0x500] sm:$0x33] %v4949
      %5011 = vst [vmem:[#allocation4 + $0x508] sm:$0x33] %v4956
      %5012 = vst [vmem:[#allocation4 + $0x510] sm:$0x33] %v4964
      %5013 = vst [vmem:[#allocation4 + $0x518] sm:$0x33] %v4971
      %5014 = vst [vmem:[#allocation4 + $0x520] sm:$0x33] %v4979
      %5015 = vst [vmem:[#allocation4 + $0x528] sm:$0x33] %v4986
      %5016 = vst [vmem:[#allocation4 + $0x530] sm:$0x33] %v4994
      %5017 = vst [vmem:[#allocation4 + $0x538] sm:$0x33] %v5001
      %v5018 = vld [vmem:[#allocation3 + $0xc] sm:$0xff]
      %v5019 = vld [vmem:[#allocation3 + $0x14] sm:$0xff]
      %v5020 = vld [vmem:[#allocation3 + $0x1c] sm:$0xff]
      %v5021 = vld [vmem:[#allocation3 + $0x24] sm:$0xff]
      %v5026 = vcombine.low %v5018, %v5018
      %v5028 = vunpack.c.l.s4 1983009808
      %v5029 = vunpack.c.0.s8 %v5028
      %v5030 = vlaneseq
      %v5031 = vshrl.u32 %v5030, 7
      %v5032 = vsub.s32 %v5029, %v5031
      %v5033 = vrot.slane %v5026, %v5032
      %v5035 = vunpack.c.l.s4 1983009808
      %v5036 = vunpack.c.0.s8 %v5035
      %v5037 = vlaneseq
      %v5038 = vshrl.u32 %v5037, 7
      %v5039 = vsub.s32 %v5036, %v5038
      %v5040 = vrot.slane %v5018, %v5039
      %v5041 = vcombine.low %v5019, %v5019
      %v5043 = vunpack.c.l.s4 1983009808
      %v5044 = vunpack.c.0.s8 %v5043
      %v5045 = vlaneseq
      %v5046 = vshrl.u32 %v5045, 7
      %v5047 = vsub.s32 %v5044, %v5046
      %v5048 = vrot.slane %v5041, %v5047
      %v5050 = vunpack.c.l.s4 1983009808
      %v5051 = vunpack.c.0.s8 %v5050
      %v5052 = vlaneseq
      %v5053 = vshrl.u32 %v5052, 7
      %v5054 = vsub.s32 %v5051, %v5053
      %v5055 = vrot.slane %v5019, %v5054
      %v5056 = vcombine.low %v5020, %v5020
      %v5058 = vunpack.c.l.s4 1983009808
      %v5059 = vunpack.c.0.s8 %v5058
      %v5060 = vlaneseq
      %v5061 = vshrl.u32 %v5060, 7
      %v5062 = vsub.s32 %v5059, %v5061
      %v5063 = vrot.slane %v5056, %v5062
      %v5065 = vunpack.c.l.s4 1983009808
      %v5066 = vunpack.c.0.s8 %v5065
      %v5067 = vlaneseq
      %v5068 = vshrl.u32 %v5067, 7
      %v5069 = vsub.s32 %v5066, %v5068
      %v5070 = vrot.slane %v5020, %v5069
      %v5071 = vcombine.low %v5021, %v5021
      %v5073 = vunpack.c.l.s4 1983009808
      %v5074 = vunpack.c.0.s8 %v5073
      %v5075 = vlaneseq
      %v5076 = vshrl.u32 %v5075, 7
      %v5077 = vsub.s32 %v5074, %v5076
      %v5078 = vrot.slane %v5071, %v5077
      %v5080 = vunpack.c.l.s4 1983009808
      %v5081 = vunpack.c.0.s8 %v5080
      %v5082 = vlaneseq
      %v5083 = vshrl.u32 %v5082, 7
      %v5084 = vsub.s32 %v5081, %v5083
      %v5085 = vrot.slane %v5021, %v5084
      %5094 = vst [vmem:[#allocation4 + $0x5c0] sm:$0xcc] %v5033
      %5095 = vst [vmem:[#allocation4 + $0x5c8] sm:$0xcc] %v5040
      %5096 = vst [vmem:[#allocation4 + $0x5d0] sm:$0xcc] %v5048
      %5097 = vst [vmem:[#allocation4 + $0x5d8] sm:$0xcc] %v5055
      %5098 = vst [vmem:[#allocation4 + $0x5e0] sm:$0xcc] %v5063
      %5099 = vst [vmem:[#allocation4 + $0x5e8] sm:$0xcc] %v5070
      %5100 = vst [vmem:[#allocation4 + $0x5f0] sm:$0xcc] %v5078
      %5101 = vst [vmem:[#allocation4 + $0x5f8] sm:$0xcc] %v5085
      %v5102 = vld [vmem:[#allocation2 + $0x2] sm:$0xff]
      %v5103 = vld [vmem:[#allocation2 + $0xa] sm:$0xff]
      %v5104 = vld [vmem:[#allocation2 + $0x12] sm:$0xff]
      %v5105 = vld [vmem:[#allocation2 + $0x1a] sm:$0xff]
      %v5106 = vld [vmem:[#allocation2 + $0x22] sm:$0xff]
      %v5107 = vld [vmem:[#allocation2 + $0x2a] sm:$0x3f]
      %5114 = vrot.lane.b32.xlu0 %v5102, 125
      %v5115 = vpop.permute.xlu0 %5114
      %5116 = vrot.lane.b32.xlu0 %v5103, 125
      %v5117 = vpop.permute.xlu0 %5116
      %5118 = vrot.lane.b32.xlu0 %v5104, 125
      %v5119 = vpop.permute.xlu0 %5118
      %5120 = vrot.lane.b32.xlu0 %v5105, 125
      %v5121 = vpop.permute.xlu0 %5120
      %5122 = vrot.lane.b32.xlu0 %v5106, 125
      %v5123 = vpop.permute.xlu0 %5122
      %5124 = vrot.lane.b32.xlu0 %v5107, 125
      %v5125 = vpop.permute.xlu0 %5124
      %v5126 = vrot.slane %v5115, 2
      %v5127 = vrot.slane %v5117, 2
      %v5128 = vrot.slane %v5119, 2
      %v5129 = vrot.slane %v5121, 2
      %v5130 = vrot.slane %v5123, 2
      %v5131 = vrot.slane %v5125, 2
      %v5132 = vsel %vm1321, %v5126, %v5127
      %vm5133 = vcmask 1022976
      %v5134 = vsel %vm5133, %v5115, %v5132
      %v5135 = vsel %vm1321, %v5127, %v5128
      %v5136 = vsel %vm5133, %v5117, %v5135
      %v5137 = vsel %vm1321, %v5128, %v5129
      %v5138 = vsel %vm5133, %v5119, %v5137
      %v5139 = vsel %vm1321, %v5129, %v5130
      %v5140 = vsel %vm5133, %v5121, %v5139
      %v5141 = vsel %vm1321, %v5130, %v5131
      %v5142 = vsel %vm5133, %v5123, %v5141
      %v5143 = vsel %vm5133, %v5125, %v5131
      %5150 = vst [vmem:[#allocation3] sm:$0xff] %v5134
      %5151 = vst [vmem:[#allocation3 + $0x8] sm:$0xff] %v5136
      %5152 = vst [vmem:[#allocation3 + $0x10] sm:$0xff] %v5138
      %5153 = vst [vmem:[#allocation3 + $0x18] sm:$0xff] %v5140
      %5154 = vst [vmem:[#allocation3 + $0x20] sm:$0xff] %v5142
      %5155 = vst [vmem:[#allocation3 + $0x28] sm:$0xf] %v5143
      %v5156 = vld [vmem:[#allocation3] sm:$0xff]
      %v5157 = vld [vmem:[#allocation3 + $0x8] sm:$0xff]
      %v5158 = vld [vmem:[#allocation3 + $0x10] sm:$0xff]
      %v5159 = vld [vmem:[#allocation3 + $0x18] sm:$0xff]
      %v5164 = vcombine.high %v5156, %v5156
      %v5166 = vunpack.c.l.s4 1983009808
      %v5167 = vunpack.c.0.s8 %v5166
      %v5168 = vlaneseq
      %v5169 = vshrl.u32 %v5168, 7
      %v5170 = vsub.s32 %v5167, %v5169
      %v5171 = vrot.slane %v5156, %v5170
      %v5173 = vunpack.c.l.s4 1983009808
      %v5174 = vunpack.c.0.s8 %v5173
      %v5175 = vlaneseq
      %v5176 = vshrl.u32 %v5175, 7
      %v5177 = vsub.s32 %v5174, %v5176
      %v5178 = vrot.slane %v5164, %v5177
      %v5179 = vcombine.high %v5157, %v5157
      %v5181 = vunpack.c.l.s4 1983009808
      %v5182 = vunpack.c.0.s8 %v5181
      %v5183 = vlaneseq
      %v5184 = vshrl.u32 %v5183, 7
      %v5185 = vsub.s32 %v5182, %v5184
      %v5186 = vrot.slane %v5157, %v5185
      %v5188 = vunpack.c.l.s4 1983009808
      %v5189 = vunpack.c.0.s8 %v5188
      %v5190 = vlaneseq
      %v5191 = vshrl.u32 %v5190, 7
      %v5192 = vsub.s32 %v5189, %v5191
      %v5193 = vrot.slane %v5179, %v5192
      %v5194 = vcombine.high %v5158, %v5158
      %v5196 = vunpack.c.l.s4 1983009808
      %v5197 = vunpack.c.0.s8 %v5196
      %v5198 = vlaneseq
      %v5199 = vshrl.u32 %v5198, 7
      %v5200 = vsub.s32 %v5197, %v5199
      %v5201 = vrot.slane %v5158, %v5200
      %v5203 = vunpack.c.l.s4 1983009808
      %v5204 = vunpack.c.0.s8 %v5203
      %v5205 = vlaneseq
      %v5206 = vshrl.u32 %v5205, 7
      %v5207 = vsub.s32 %v5204, %v5206
      %v5208 = vrot.slane %v5194, %v5207
      %v5209 = vcombine.high %v5159, %v5159
      %v5211 = vunpack.c.l.s4 1983009808
      %v5212 = vunpack.c.0.s8 %v5211
      %v5213 = vlaneseq
      %v5214 = vshrl.u32 %v5213, 7
      %v5215 = vsub.s32 %v5212, %v5214
      %v5216 = vrot.slane %v5159, %v5215
      %v5218 = vunpack.c.l.s4 1983009808
      %v5219 = vunpack.c.0.s8 %v5218
      %v5220 = vlaneseq
      %v5221 = vshrl.u32 %v5220, 7
      %v5222 = vsub.s32 %v5219, %v5221
      %v5223 = vrot.slane %v5209, %v5222
      %5232 = vst [vmem:[#allocation4 + $0xc0] sm:$0x33] %v5171
      %5233 = vst [vmem:[#allocation4 + $0xc8] sm:$0x33] %v5178
      %5234 = vst [vmem:[#allocation4 + $0xd0] sm:$0x33] %v5186
      %5235 = vst [vmem:[#allocation4 + $0xd8] sm:$0x33] %v5193
      %5236 = vst [vmem:[#allocation4 + $0xe0] sm:$0x33] %v5201
      %5237 = vst [vmem:[#allocation4 + $0xe8] sm:$0x33] %v5208
      %5238 = vst [vmem:[#allocation4 + $0xf0] sm:$0x33] %v5216
      %5239 = vst [vmem:[#allocation4 + $0xf8] sm:$0x33] %v5223
      %v5240 = vld [vmem:[#allocation3 + $0x2] sm:$0xff]
      %v5241 = vld [vmem:[#allocation3 + $0xa] sm:$0xff]
      %v5242 = vld [vmem:[#allocation3 + $0x12] sm:$0xff]
      %v5243 = vld [vmem:[#allocation3 + $0x1a] sm:$0xff]
      %v5248 = vcombine.low %v5240, %v5240
      %v5250 = vunpack.c.l.s4 1983009808
      %v5251 = vunpack.c.0.s8 %v5250
      %v5252 = vlaneseq
      %v5253 = vshrl.u32 %v5252, 7
      %v5254 = vsub.s32 %v5251, %v5253
      %v5255 = vrot.slane %v5248, %v5254
      %v5257 = vunpack.c.l.s4 1983009808
      %v5258 = vunpack.c.0.s8 %v5257
      %v5259 = vlaneseq
      %v5260 = vshrl.u32 %v5259, 7
      %v5261 = vsub.s32 %v5258, %v5260
      %v5262 = vrot.slane %v5240, %v5261
      %v5263 = vcombine.low %v5241, %v5241
      %v5265 = vunpack.c.l.s4 1983009808
      %v5266 = vunpack.c.0.s8 %v5265
      %v5267 = vlaneseq
      %v5268 = vshrl.u32 %v5267, 7
      %v5269 = vsub.s32 %v5266, %v5268
      %v5270 = vrot.slane %v5263, %v5269
      %v5272 = vunpack.c.l.s4 1983009808
      %v5273 = vunpack.c.0.s8 %v5272
      %v5274 = vlaneseq
      %v5275 = vshrl.u32 %v5274, 7
      %v5276 = vsub.s32 %v5273, %v5275
      %v5277 = vrot.slane %v5241, %v5276
      %v5278 = vcombine.low %v5242, %v5242
      %v5280 = vunpack.c.l.s4 1983009808
      %v5281 = vunpack.c.0.s8 %v5280
      %v5282 = vlaneseq
      %v5283 = vshrl.u32 %v5282, 7
      %v5284 = vsub.s32 %v5281, %v5283
      %v5285 = vrot.slane %v5278, %v5284
      %v5287 = vunpack.c.l.s4 1983009808
      %v5288 = vunpack.c.0.s8 %v5287
      %v5289 = vlaneseq
      %v5290 = vshrl.u32 %v5289, 7
      %v5291 = vsub.s32 %v5288, %v5290
      %v5292 = vrot.slane %v5242, %v5291
      %v5293 = vcombine.low %v5243, %v5243
      %v5295 = vunpack.c.l.s4 1983009808
      %v5296 = vunpack.c.0.s8 %v5295
      %v5297 = vlaneseq
      %v5298 = vshrl.u32 %v5297, 7
      %v5299 = vsub.s32 %v5296, %v5298
      %v5300 = vrot.slane %v5293, %v5299
      %v5302 = vunpack.c.l.s4 1983009808
      %v5303 = vunpack.c.0.s8 %v5302
      %v5304 = vlaneseq
      %v5305 = vshrl.u32 %v5304, 7
      %v5306 = vsub.s32 %v5303, %v5305
      %v5307 = vrot.slane %v5243, %v5306
      %5316 = vst [vmem:[#allocation4 + $0x180] sm:$0xcc] %v5255
      %5317 = vst [vmem:[#allocation4 + $0x188] sm:$0xcc] %v5262
      %5318 = vst [vmem:[#allocation4 + $0x190] sm:$0xcc] %v5270
      %5319 = vst [vmem:[#allocation4 + $0x198] sm:$0xcc] %v5277
      %5320 = vst [vmem:[#allocation4 + $0x1a0] sm:$0xcc] %v5285
      %5321 = vst [vmem:[#allocation4 + $0x1a8] sm:$0xcc] %v5292
      %5322 = vst [vmem:[#allocation4 + $0x1b0] sm:$0xcc] %v5300
      %5323 = vst [vmem:[#allocation4 + $0x1b8] sm:$0xcc] %v5307
      %v5324 = vld [vmem:[#allocation3 + $0x4] sm:$0xff]
      %v5325 = vld [vmem:[#allocation3 + $0xc] sm:$0xff]
      %v5326 = vld [vmem:[#allocation3 + $0x14] sm:$0xff]
      %v5327 = vld [vmem:[#allocation3 + $0x1c] sm:$0xff]
      %v5332 = vcombine.high %v5324, %v5324
      %v5334 = vunpack.c.l.s4 1983009808
      %v5335 = vunpack.c.0.s8 %v5334
      %v5336 = vlaneseq
      %v5337 = vshrl.u32 %v5336, 7
      %v5338 = vsub.s32 %v5335, %v5337
      %v5339 = vrot.slane %v5324, %v5338
      %v5341 = vunpack.c.l.s4 1983009808
      %v5342 = vunpack.c.0.s8 %v5341
      %v5343 = vlaneseq
      %v5344 = vshrl.u32 %v5343, 7
      %v5345 = vsub.s32 %v5342, %v5344
      %v5346 = vrot.slane %v5332, %v5345
      %v5347 = vcombine.high %v5325, %v5325
      %v5349 = vunpack.c.l.s4 1983009808
      %v5350 = vunpack.c.0.s8 %v5349
      %v5351 = vlaneseq
      %v5352 = vshrl.u32 %v5351, 7
      %v5353 = vsub.s32 %v5350, %v5352
      %v5354 = vrot.slane %v5325, %v5353
      %v5356 = vunpack.c.l.s4 1983009808
      %v5357 = vunpack.c.0.s8 %v5356
      %v5358 = vlaneseq
      %v5359 = vshrl.u32 %v5358, 7
      %v5360 = vsub.s32 %v5357, %v5359
      %v5361 = vrot.slane %v5347, %v5360
      %v5362 = vcombine.high %v5326, %v5326
      %v5364 = vunpack.c.l.s4 1983009808
      %v5365 = vunpack.c.0.s8 %v5364
      %v5366 = vlaneseq
      %v5367 = vshrl.u32 %v5366, 7
      %v5368 = vsub.s32 %v5365, %v5367
      %v5369 = vrot.slane %v5326, %v5368
      %v5371 = vunpack.c.l.s4 1983009808
      %v5372 = vunpack.c.0.s8 %v5371
      %v5373 = vlaneseq
      %v5374 = vshrl.u32 %v5373, 7
      %v5375 = vsub.s32 %v5372, %v5374
      %v5376 = vrot.slane %v5362, %v5375
      %v5377 = vcombine.high %v5327, %v5327
      %v5379 = vunpack.c.l.s4 1983009808
      %v5380 = vunpack.c.0.s8 %v5379
      %v5381 = vlaneseq
      %v5382 = vshrl.u32 %v5381, 7
      %v5383 = vsub.s32 %v5380, %v5382
      %v5384 = vrot.slane %v5327, %v5383
      %v5386 = vunpack.c.l.s4 1983009808
      %v5387 = vunpack.c.0.s8 %v5386
      %v5388 = vlaneseq
      %v5389 = vshrl.u32 %v5388, 7
      %v5390 = vsub.s32 %v5387, %v5389
      %v5391 = vrot.slane %v5377, %v5390
      %5400 = vst [vmem:[#allocation4 + $0x280] sm:$0x33] %v5339
      %5401 = vst [vmem:[#allocation4 + $0x288] sm:$0x33] %v5346
      %5402 = vst [vmem:[#allocation4 + $0x290] sm:$0x33] %v5354
      %5403 = vst [vmem:[#allocation4 + $0x298] sm:$0x33] %v5361
      %5404 = vst [vmem:[#allocation4 + $0x2a0] sm:$0x33] %v5369
      %5405 = vst [vmem:[#allocation4 + $0x2a8] sm:$0x33] %v5376
      %5406 = vst [vmem:[#allocation4 + $0x2b0] sm:$0x33] %v5384
      %5407 = vst [vmem:[#allocation4 + $0x2b8] sm:$0x33] %v5391
      %v5408 = vld [vmem:[#allocation3 + $0x6] sm:$0xff]
      %v5409 = vld [vmem:[#allocation3 + $0xe] sm:$0xff]
      %v5410 = vld [vmem:[#allocation3 + $0x16] sm:$0xff]
      %v5411 = vld [vmem:[#allocation3 + $0x1e] sm:$0xff]
      %v5416 = vcombine.low %v5408, %v5408
      %v5418 = vunpack.c.l.s4 1983009808
      %v5419 = vunpack.c.0.s8 %v5418
      %v5420 = vlaneseq
      %v5421 = vshrl.u32 %v5420, 7
      %v5422 = vsub.s32 %v5419, %v5421
      %v5423 = vrot.slane %v5416, %v5422
      %v5425 = vunpack.c.l.s4 1983009808
      %v5426 = vunpack.c.0.s8 %v5425
      %v5427 = vlaneseq
      %v5428 = vshrl.u32 %v5427, 7
      %v5429 = vsub.s32 %v5426, %v5428
      %v5430 = vrot.slane %v5408, %v5429
      %v5431 = vcombine.low %v5409, %v5409
      %v5433 = vunpack.c.l.s4 1983009808
      %v5434 = vunpack.c.0.s8 %v5433
      %v5435 = vlaneseq
      %v5436 = vshrl.u32 %v5435, 7
      %v5437 = vsub.s32 %v5434, %v5436
      %v5438 = vrot.slane %v5431, %v5437
      %v5440 = vunpack.c.l.s4 1983009808
      %v5441 = vunpack.c.0.s8 %v5440
      %v5442 = vlaneseq
      %v5443 = vshrl.u32 %v5442, 7
      %v5444 = vsub.s32 %v5441, %v5443
      %v5445 = vrot.slane %v5409, %v5444
      %v5446 = vcombine.low %v5410, %v5410
      %v5448 = vunpack.c.l.s4 1983009808
      %v5449 = vunpack.c.0.s8 %v5448
      %v5450 = vlaneseq
      %v5451 = vshrl.u32 %v5450, 7
      %v5452 = vsub.s32 %v5449, %v5451
      %v5453 = vrot.slane %v5446, %v5452
      %v5455 = vunpack.c.l.s4 1983009808
      %v5456 = vunpack.c.0.s8 %v5455
      %v5457 = vlaneseq
      %v5458 = vshrl.u32 %v5457, 7
      %v5459 = vsub.s32 %v5456, %v5458
      %v5460 = vrot.slane %v5410, %v5459
      %v5461 = vcombine.low %v5411, %v5411
      %v5463 = vunpack.c.l.s4 1983009808
      %v5464 = vunpack.c.0.s8 %v5463
      %v5465 = vlaneseq
      %v5466 = vshrl.u32 %v5465, 7
      %v5467 = vsub.s32 %v5464, %v5466
      %v5468 = vrot.slane %v5461, %v5467
      %v5470 = vunpack.c.l.s4 1983009808
      %v5471 = vunpack.c.0.s8 %v5470
      %v5472 = vlaneseq
      %v5473 = vshrl.u32 %v5472, 7
      %v5474 = vsub.s32 %v5471, %v5473
      %v5475 = vrot.slane %v5411, %v5474
      %5484 = vst [vmem:[#allocation4 + $0x340] sm:$0xcc] %v5423
      %5485 = vst [vmem:[#allocation4 + $0x348] sm:$0xcc] %v5430
      %5486 = vst [vmem:[#allocation4 + $0x350] sm:$0xcc] %v5438
      %5487 = vst [vmem:[#allocation4 + $0x358] sm:$0xcc] %v5445
      %5488 = vst [vmem:[#allocation4 + $0x360] sm:$0xcc] %v5453
      %5489 = vst [vmem:[#allocation4 + $0x368] sm:$0xcc] %v5460
      %5490 = vst [vmem:[#allocation4 + $0x370] sm:$0xcc] %v5468
      %5491 = vst [vmem:[#allocation4 + $0x378] sm:$0xcc] %v5475
      %v5492 = vld [vmem:[#allocation3 + $0x8] sm:$0xff]
      %v5493 = vld [vmem:[#allocation3 + $0x10] sm:$0xff]
      %v5494 = vld [vmem:[#allocation3 + $0x18] sm:$0xff]
      %v5495 = vld [vmem:[#allocation3 + $0x20] sm:$0xff]
      %v5500 = vcombine.high %v5492, %v5492
      %v5502 = vunpack.c.l.s4 1983009808
      %v5503 = vunpack.c.0.s8 %v5502
      %v5504 = vlaneseq
      %v5505 = vshrl.u32 %v5504, 7
      %v5506 = vsub.s32 %v5503, %v5505
      %v5507 = vrot.slane %v5492, %v5506
      %v5509 = vunpack.c.l.s4 1983009808
      %v5510 = vunpack.c.0.s8 %v5509
      %v5511 = vlaneseq
      %v5512 = vshrl.u32 %v5511, 7
      %v5513 = vsub.s32 %v5510, %v5512
      %v5514 = vrot.slane %v5500, %v5513
      %v5515 = vcombine.high %v5493, %v5493
      %v5517 = vunpack.c.l.s4 1983009808
      %v5518 = vunpack.c.0.s8 %v5517
      %v5519 = vlaneseq
      %v5520 = vshrl.u32 %v5519, 7
      %v5521 = vsub.s32 %v5518, %v5520
      %v5522 = vrot.slane %v5493, %v5521
      %v5524 = vunpack.c.l.s4 1983009808
      %v5525 = vunpack.c.0.s8 %v5524
      %v5526 = vlaneseq
      %v5527 = vshrl.u32 %v5526, 7
      %v5528 = vsub.s32 %v5525, %v5527
      %v5529 = vrot.slane %v5515, %v5528
      %v5530 = vcombine.high %v5494, %v5494
      %v5532 = vunpack.c.l.s4 1983009808
      %v5533 = vunpack.c.0.s8 %v5532
      %v5534 = vlaneseq
      %v5535 = vshrl.u32 %v5534, 7
      %v5536 = vsub.s32 %v5533, %v5535
      %v5537 = vrot.slane %v5494, %v5536
      %v5539 = vunpack.c.l.s4 1983009808
      %v5540 = vunpack.c.0.s8 %v5539
      %v5541 = vlaneseq
      %v5542 = vshrl.u32 %v5541, 7
      %v5543 = vsub.s32 %v5540, %v5542
      %v5544 = vrot.slane %v5530, %v5543
      %v5545 = vcombine.high %v5495, %v5495
      %v5547 = vunpack.c.l.s4 1983009808
      %v5548 = vunpack.c.0.s8 %v5547
      %v5549 = vlaneseq
      %v5550 = vshrl.u32 %v5549, 7
      %v5551 = vsub.s32 %v5548, %v5550
      %v5552 = vrot.slane %v5495, %v5551
      %v5554 = vunpack.c.l.s4 1983009808
      %v5555 = vunpack.c.0.s8 %v5554
      %v5556 = vlaneseq
      %v5557 = vshrl.u32 %v5556, 7
      %v5558 = vsub.s32 %v5555, %v5557
      %v5559 = vrot.slane %v5545, %v5558
      %5568 = vst [vmem:[#allocation4 + $0x440] sm:$0x33] %v5507
      %5569 = vst [vmem:[#allocation4 + $0x448] sm:$0x33] %v5514
      %5570 = vst [vmem:[#allocation4 + $0x450] sm:$0x33] %v5522
      %5571 = vst [vmem:[#allocation4 + $0x458] sm:$0x33] %v5529
      %5572 = vst [vmem:[#allocation4 + $0x460] sm:$0x33] %v5537
      %5573 = vst [vmem:[#allocation4 + $0x468] sm:$0x33] %v5544
      %5574 = vst [vmem:[#allocation4 + $0x470] sm:$0x33] %v5552
      %5575 = vst [vmem:[#allocation4 + $0x478] sm:$0x33] %v5559
      %v5576 = vld [vmem:[#allocation3 + $0xa] sm:$0xff]
      %v5577 = vld [vmem:[#allocation3 + $0x12] sm:$0xff]
      %v5578 = vld [vmem:[#allocation3 + $0x1a] sm:$0xff]
      %v5579 = vld [vmem:[#allocation3 + $0x22] sm:$0xff]
      %v5584 = vcombine.low %v5576, %v5576
      %v5586 = vunpack.c.l.s4 1983009808
      %v5587 = vunpack.c.0.s8 %v5586
      %v5588 = vlaneseq
      %v5589 = vshrl.u32 %v5588, 7
      %v5590 = vsub.s32 %v5587, %v5589
      %v5591 = vrot.slane %v5584, %v5590
      %v5593 = vunpack.c.l.s4 1983009808
      %v5594 = vunpack.c.0.s8 %v5593
      %v5595 = vlaneseq
      %v5596 = vshrl.u32 %v5595, 7
      %v5597 = vsub.s32 %v5594, %v5596
      %v5598 = vrot.slane %v5576, %v5597
      %v5599 = vcombine.low %v5577, %v5577
      %v5601 = vunpack.c.l.s4 1983009808
      %v5602 = vunpack.c.0.s8 %v5601
      %v5603 = vlaneseq
      %v5604 = vshrl.u32 %v5603, 7
      %v5605 = vsub.s32 %v5602, %v5604
      %v5606 = vrot.slane %v5599, %v5605
      %v5608 = vunpack.c.l.s4 1983009808
      %v5609 = vunpack.c.0.s8 %v5608
      %v5610 = vlaneseq
      %v5611 = vshrl.u32 %v5610, 7
      %v5612 = vsub.s32 %v5609, %v5611
      %v5613 = vrot.slane %v5577, %v5612
      %v5614 = vcombine.low %v5578, %v5578
      %v5616 = vunpack.c.l.s4 1983009808
      %v5617 = vunpack.c.0.s8 %v5616
      %v5618 = vlaneseq
      %v5619 = vshrl.u32 %v5618, 7
      %v5620 = vsub.s32 %v5617, %v5619
      %v5621 = vrot.slane %v5614, %v5620
      %v5623 = vunpack.c.l.s4 1983009808
      %v5624 = vunpack.c.0.s8 %v5623
      %v5625 = vlaneseq
      %v5626 = vshrl.u32 %v5625, 7
      %v5627 = vsub.s32 %v5624, %v5626
      %v5628 = vrot.slane %v5578, %v5627
      %v5629 = vcombine.low %v5579, %v5579
      %v5631 = vunpack.c.l.s4 1983009808
      %v5632 = vunpack.c.0.s8 %v5631
      %v5633 = vlaneseq
      %v5634 = vshrl.u32 %v5633, 7
      %v5635 = vsub.s32 %v5632, %v5634
      %v5636 = vrot.slane %v5629, %v5635
      %v5638 = vunpack.c.l.s4 1983009808
      %v5639 = vunpack.c.0.s8 %v5638
      %v5640 = vlaneseq
      %v5641 = vshrl.u32 %v5640, 7
      %v5642 = vsub.s32 %v5639, %v5641
      %v5643 = vrot.slane %v5579, %v5642
      %5652 = vst [vmem:[#allocation4 + $0x500] sm:$0xcc] %v5591
      %5653 = vst [vmem:[#allocation4 + $0x508] sm:$0xcc] %v5598
      %5654 = vst [vmem:[#allocation4 + $0x510] sm:$0xcc] %v5606
      %5655 = vst [vmem:[#allocation4 + $0x518] sm:$0xcc] %v5613
      %5656 = vst [vmem:[#allocation4 + $0x520] sm:$0xcc] %v5621
      %5657 = vst [vmem:[#allocation4 + $0x528] sm:$0xcc] %v5628
      %5658 = vst [vmem:[#allocation4 + $0x530] sm:$0xcc] %v5636
      %5659 = vst [vmem:[#allocation4 + $0x538] sm:$0xcc] %v5643
      %v5660 = vld [vmem:[#allocation3 + $0xc] sm:$0xff]
      %v5661 = vld [vmem:[#allocation3 + $0x14] sm:$0xff]
      %v5662 = vld [vmem:[#allocation3 + $0x1c] sm:$0xff]
      %v5663 = vld [vmem:[#allocation3 + $0x24] sm:$0xff]
      %v5668 = vcombine.high %v5660, %v5660
      %v5670 = vunpack.c.l.s4 1983009808
      %v5671 = vunpack.c.0.s8 %v5670
      %v5672 = vlaneseq
      %v5673 = vshrl.u32 %v5672, 7
      %v5674 = vsub.s32 %v5671, %v5673
      %v5675 = vrot.slane %v5660, %v5674
      %v5677 = vunpack.c.l.s4 1983009808
      %v5678 = vunpack.c.0.s8 %v5677
      %v5679 = vlaneseq
      %v5680 = vshrl.u32 %v5679, 7
      %v5681 = vsub.s32 %v5678, %v5680
      %v5682 = vrot.slane %v5668, %v5681
      %v5683 = vcombine.high %v5661, %v5661
      %v5685 = vunpack.c.l.s4 1983009808
      %v5686 = vunpack.c.0.s8 %v5685
      %v5687 = vlaneseq
      %v5688 = vshrl.u32 %v5687, 7
      %v5689 = vsub.s32 %v5686, %v5688
      %v5690 = vrot.slane %v5661, %v5689
      %v5692 = vunpack.c.l.s4 1983009808
      %v5693 = vunpack.c.0.s8 %v5692
      %v5694 = vlaneseq
      %v5695 = vshrl.u32 %v5694, 7
      %v5696 = vsub.s32 %v5693, %v5695
      %v5697 = vrot.slane %v5683, %v5696
      %v5698 = vcombine.high %v5662, %v5662
      %v5700 = vunpack.c.l.s4 1983009808
      %v5701 = vunpack.c.0.s8 %v5700
      %v5702 = vlaneseq
      %v5703 = vshrl.u32 %v5702, 7
      %v5704 = vsub.s32 %v5701, %v5703
      %v5705 = vrot.slane %v5662, %v5704
      %v5707 = vunpack.c.l.s4 1983009808
      %v5708 = vunpack.c.0.s8 %v5707
      %v5709 = vlaneseq
      %v5710 = vshrl.u32 %v5709, 7
      %v5711 = vsub.s32 %v5708, %v5710
      %v5712 = vrot.slane %v5698, %v5711
      %v5713 = vcombine.high %v5663, %v5663
      %v5715 = vunpack.c.l.s4 1983009808
      %v5716 = vunpack.c.0.s8 %v5715
      %v5717 = vlaneseq
      %v5718 = vshrl.u32 %v5717, 7
      %v5719 = vsub.s32 %v5716, %v5718
      %v5720 = vrot.slane %v5663, %v5719
      %v5722 = vunpack.c.l.s4 1983009808
      %v5723 = vunpack.c.0.s8 %v5722
      %v5724 = vlaneseq
      %v5725 = vshrl.u32 %v5724, 7
      %v5726 = vsub.s32 %v5723, %v5725
      %v5727 = vrot.slane %v5713, %v5726
      %5736 = vst [vmem:[#allocation4 + $0x600] sm:$0x33] %v5675
      %5737 = vst [vmem:[#allocation4 + $0x608] sm:$0x33] %v5682
      %5738 = vst [vmem:[#allocation4 + $0x610] sm:$0x33] %v5690
      %5739 = vst [vmem:[#allocation4 + $0x618] sm:$0x33] %v5697
      %5740 = vst [vmem:[#allocation4 + $0x620] sm:$0x33] %v5705
      %5741 = vst [vmem:[#allocation4 + $0x628] sm:$0x33] %v5712
      %5742 = vst [vmem:[#allocation4 + $0x630] sm:$0x33] %v5720
      %5743 = vst [vmem:[#allocation4 + $0x638] sm:$0x33] %v5727
      %v5744 = vld [vmem:[#allocation2 + $0x8] sm:$0xff]
      %v5745 = vld [vmem:[#allocation2 + $0x10] sm:$0xff]
      %v5746 = vld [vmem:[#allocation2 + $0x18] sm:$0xff]
      %v5747 = vld [vmem:[#allocation2 + $0x20] sm:$0xff]
      %v5752 = vcombine.low %v5744, %v5744
      %v5754 = vunpack.c.l.s4 1983009808
      %v5755 = vunpack.c.0.s8 %v5754
      %v5756 = vlaneseq
      %v5757 = vshrl.u32 %v5756, 7
      %v5758 = vsub.s32 %v5755, %v5757
      %v5759 = vrot.slane %v5752, %v5758
      %v5761 = vunpack.c.l.s4 1983009808
      %v5762 = vunpack.c.0.s8 %v5761
      %v5763 = vlaneseq
      %v5764 = vshrl.u32 %v5763, 7
      %v5765 = vsub.s32 %v5762, %v5764
      %v5766 = vrot.slane %v5744, %v5765
      %v5767 = vcombine.low %v5745, %v5745
      %v5769 = vunpack.c.l.s4 1983009808
      %v5770 = vunpack.c.0.s8 %v5769
      %v5771 = vlaneseq
      %v5772 = vshrl.u32 %v5771, 7
      %v5773 = vsub.s32 %v5770, %v5772
      %v5774 = vrot.slane %v5767, %v5773
      %v5776 = vunpack.c.l.s4 1983009808
      %v5777 = vunpack.c.0.s8 %v5776
      %v5778 = vlaneseq
      %v5779 = vshrl.u32 %v5778, 7
      %v5780 = vsub.s32 %v5777, %v5779
      %v5781 = vrot.slane %v5745, %v5780
      %v5782 = vcombine.low %v5746, %v5746
      %v5784 = vunpack.c.l.s4 1983009808
      %v5785 = vunpack.c.0.s8 %v5784
      %v5786 = vlaneseq
      %v5787 = vshrl.u32 %v5786, 7
      %v5788 = vsub.s32 %v5785, %v5787
      %v5789 = vrot.slane %v5782, %v5788
      %v5791 = vunpack.c.l.s4 1983009808
      %v5792 = vunpack.c.0.s8 %v5791
      %v5793 = vlaneseq
      %v5794 = vshrl.u32 %v5793, 7
      %v5795 = vsub.s32 %v5792, %v5794
      %v5796 = vrot.slane %v5746, %v5795
      %v5797 = vcombine.low %v5747, %v5747
      %v5799 = vunpack.c.l.s4 1983009808
      %v5800 = vunpack.c.0.s8 %v5799
      %v5801 = vlaneseq
      %v5802 = vshrl.u32 %v5801, 7
      %v5803 = vsub.s32 %v5800, %v5802
      %v5804 = vrot.slane %v5797, %v5803
      %v5806 = vunpack.c.l.s4 1983009808
      %v5807 = vunpack.c.0.s8 %v5806
      %v5808 = vlaneseq
      %v5809 = vshrl.u32 %v5808, 7
      %v5810 = vsub.s32 %v5807, %v5809
      %v5811 = vrot.slane %v5747, %v5810
      %5820 = vst [vmem:[#allocation4 + $0x600] sm:$0xcc] %v5759
      %5821 = vst [vmem:[#allocation4 + $0x608] sm:$0xcc] %v5766
      %5822 = vst [vmem:[#allocation4 + $0x610] sm:$0xcc] %v5774
      %5823 = vst [vmem:[#allocation4 + $0x618] sm:$0xcc] %v5781
      %5824 = vst [vmem:[#allocation4 + $0x620] sm:$0xcc] %v5789
      %5825 = vst [vmem:[#allocation4 + $0x628] sm:$0xcc] %v5796
      %5826 = vst [vmem:[#allocation4 + $0x630] sm:$0xcc] %v5804
      %5827 = vst [vmem:[#allocation4 + $0x638] sm:$0xcc] %v5811
      %v5828 = vld [vmem:[%s336] sm:$0xf]
      %v5829 = vld [vmem:[#allocation4] sm:$0xff]
      %v5830 = vld [vmem:[#allocation4 + $0x8] sm:$0xff]
      %v5831 = vld [vmem:[#allocation4 + $0x10] sm:$0xff]
      %v5832 = vld [vmem:[#allocation4 + $0x18] sm:$0xff]
      %v5833 = vld [vmem:[#allocation4 + $0x20] sm:$0xff]
      %v5834 = vld [vmem:[#allocation4 + $0x28] sm:$0xff]
      %v5835 = vld [vmem:[#allocation4 + $0x30] sm:$0xff]
      %v5836 = vld [vmem:[#allocation4 + $0x38] sm:$0xff]
      %v5837 = vld [vmem:[#allocation4 + $0x40] sm:$0xff]
      %v5838 = vld [vmem:[#allocation4 + $0x48] sm:$0xff]
      %v5839 = vld [vmem:[#allocation4 + $0x50] sm:$0xff]
      %v5840 = vld [vmem:[#allocation4 + $0x58] sm:$0xff]
      %v5841 = vld [vmem:[#allocation4 + $0x60] sm:$0xff]
      %v5842 = vld [vmem:[#allocation4 + $0x68] sm:$0xff]
      %v5843 = vld [vmem:[#allocation4 + $0x70] sm:$0xff]
      %v5844 = vld [vmem:[#allocation4 + $0x78] sm:$0xff]
      %v5845 = vld [vmem:[#allocation4 + $0x80] sm:$0xff]
      %v5846 = vld [vmem:[#allocation4 + $0x88] sm:$0xff]
      %v5847 = vld [vmem:[#allocation4 + $0x90] sm:$0xff]
      %v5848 = vld [vmem:[#allocation4 + $0x98] sm:$0xff]
      %v5849 = vld [vmem:[#allocation4 + $0xa0] sm:$0xff]
      %v5850 = vld [vmem:[#allocation4 + $0xa8] sm:$0xff]
      %v5851 = vld [vmem:[#allocation4 + $0xb0] sm:$0xff]
      %v5852 = vld [vmem:[#allocation4 + $0xb8] sm:$0xff]
      %v5853 = vld [vmem:[#allocation4 + $0xc0] sm:$0xff]
      %v5854 = vld [vmem:[#allocation4 + $0xc8] sm:$0xff]
      %v5855 = vld [vmem:[#allocation4 + $0xd0] sm:$0xff]
      %v5856 = vld [vmem:[#allocation4 + $0xd8] sm:$0xff]
      %v5857 = vld [vmem:[#allocation4 + $0xe0] sm:$0xff]
      %v5858 = vld [vmem:[#allocation4 + $0xe8] sm:$0xff]
      %v5859 = vld [vmem:[#allocation4 + $0xf0] sm:$0xff]
      %v5860 = vld [vmem:[#allocation4 + $0xf8] sm:$0xff]
      %v5861 = vld [vmem:[#allocation4 + $0x100] sm:$0xff]
      %v5862 = vld [vmem:[#allocation4 + $0x108] sm:$0xff]
      %v5863 = vld [vmem:[#allocation4 + $0x110] sm:$0xff]
      %v5864 = vld [vmem:[#allocation4 + $0x118] sm:$0xff]
      %v5865 = vld [vmem:[#allocation4 + $0x120] sm:$0xff]
      %v5866 = vld [vmem:[#allocation4 + $0x128] sm:$0xff]
      %v5867 = vld [vmem:[#allocation4 + $0x130] sm:$0xff]
      %v5868 = vld [vmem:[#allocation4 + $0x138] sm:$0xff]
      %v5869 = vld [vmem:[#allocation4 + $0x140] sm:$0xff]
      %v5870 = vld [vmem:[#allocation4 + $0x148] sm:$0xff]
      %v5871 = vld [vmem:[#allocation4 + $0x150] sm:$0xff]
      %v5872 = vld [vmem:[#allocation4 + $0x158] sm:$0xff]
      %v5873 = vld [vmem:[#allocation4 + $0x160] sm:$0xff]
      %v5874 = vld [vmem:[#allocation4 + $0x168] sm:$0xff]
      %v5875 = vld [vmem:[#allocation4 + $0x170] sm:$0xff]
      %v5876 = vld [vmem:[#allocation4 + $0x178] sm:$0xff]
      %v5877 = vld [vmem:[#allocation4 + $0x180] sm:$0xff]
      %v5878 = vld [vmem:[#allocation4 + $0x188] sm:$0xff]
      %v5879 = vld [vmem:[#allocation4 + $0x190] sm:$0xff]
      %v5880 = vld [vmem:[#allocation4 + $0x198] sm:$0xff]
      %v5881 = vld [vmem:[#allocation4 + $0x1a0] sm:$0xff]
      %v5882 = vld [vmem:[#allocation4 + $0x1a8] sm:$0xff]
      %v5883 = vld [vmem:[#allocation4 + $0x1b0] sm:$0xff]
      %v5884 = vld [vmem:[#allocation4 + $0x1b8] sm:$0xff]
      %v5885 = vld [vmem:[#allocation4 + $0x1c0] sm:$0xff]
      %v5886 = vld [vmem:[#allocation4 + $0x1c8] sm:$0xff]
      %v5887 = vld [vmem:[#allocation4 + $0x1d0] sm:$0xff]
      %v5888 = vld [vmem:[#allocation4 + $0x1d8] sm:$0xff]
      %v5889 = vld [vmem:[#allocation4 + $0x1e0] sm:$0xff]
      %v5890 = vld [vmem:[#allocation4 + $0x1e8] sm:$0xff]
      %v5891 = vld [vmem:[#allocation4 + $0x1f0] sm:$0xff]
      %v5892 = vld [vmem:[#allocation4 + $0x1f8] sm:$0xff]
      %v5893 = vld [vmem:[#allocation4 + $0x200] sm:$0xff]
      %v5894 = vld [vmem:[#allocation4 + $0x208] sm:$0xff]
      %v5895 = vld [vmem:[#allocation4 + $0x210] sm:$0xff]
      %v5896 = vld [vmem:[#allocation4 + $0x218] sm:$0xff]
      %v5897 = vld [vmem:[#allocation4 + $0x220] sm:$0xff]
      %v5898 = vld [vmem:[#allocation4 + $0x228] sm:$0xff]
      %v5899 = vld [vmem:[#allocation4 + $0x230] sm:$0xff]
      %v5900 = vld [vmem:[#allocation4 + $0x238] sm:$0xff]
      %v5901 = vld [vmem:[#allocation4 + $0x240] sm:$0xff]
      %v5902 = vld [vmem:[#allocation4 + $0x248] sm:$0xff]
      %v5903 = vld [vmem:[#allocation4 + $0x250] sm:$0xff]
      %v5904 = vld [vmem:[#allocation4 + $0x258] sm:$0xff]
      %v5905 = vld [vmem:[#allocation4 + $0x260] sm:$0xff]
      %v5906 = vld [vmem:[#allocation4 + $0x268] sm:$0xff]
      %v5907 = vld [vmem:[#allocation4 + $0x270] sm:$0xff]
      %v5908 = vld [vmem:[#allocation4 + $0x278] sm:$0xff]
      %v5909 = vld [vmem:[#allocation4 + $0x280] sm:$0xff]
      %v5910 = vld [vmem:[#allocation4 + $0x288] sm:$0xff]
      %v5911 = vld [vmem:[#allocation4 + $0x290] sm:$0xff]
      %v5912 = vld [vmem:[#allocation4 + $0x298] sm:$0xff]
      %v5913 = vld [vmem:[#allocation4 + $0x2a0] sm:$0xff]
      %v5914 = vld [vmem:[#allocation4 + $0x2a8] sm:$0xff]
      %v5915 = vld [vmem:[#allocation4 + $0x2b0] sm:$0xff]
      %v5916 = vld [vmem:[#allocation4 + $0x2b8] sm:$0xff]
      %v5917 = vld [vmem:[#allocation4 + $0x2c0] sm:$0xff]
      %v5918 = vld [vmem:[#allocation4 + $0x2c8] sm:$0xff]
      %v5919 = vld [vmem:[#allocation4 + $0x2d0] sm:$0xff]
      %v5920 = vld [vmem:[#allocation4 + $0x2d8] sm:$0xff]
      %v5921 = vld [vmem:[#allocation4 + $0x2e0] sm:$0xff]
      %v5922 = vld [vmem:[#allocation4 + $0x2e8] sm:$0xff]
      %v5923 = vld [vmem:[#allocation4 + $0x2f0] sm:$0xff]
      %v5924 = vld [vmem:[#allocation4 + $0x2f8] sm:$0xff]
      %v5925 = vld [vmem:[#allocation4 + $0x300] sm:$0xff]
      %v5926 = vld [vmem:[#allocation4 + $0x308] sm:$0xff]
      %v5927 = vld [vmem:[#allocation4 + $0x310] sm:$0xff]
      %v5928 = vld [vmem:[#allocation4 + $0x318] sm:$0xff]
      %v5929 = vld [vmem:[#allocation4 + $0x320] sm:$0xff]
      %v5930 = vld [vmem:[#allocation4 + $0x328] sm:$0xff]
      %v5931 = vld [vmem:[#allocation4 + $0x330] sm:$0xff]
      %v5932 = vld [vmem:[#allocation4 + $0x338] sm:$0xff]
      %v5933 = vld [vmem:[#allocation4 + $0x340] sm:$0xff]
      %v5934 = vld [vmem:[#allocation4 + $0x348] sm:$0xff]
      %v5935 = vld [vmem:[#allocation4 + $0x350] sm:$0xff]
      %v5936 = vld [vmem:[#allocation4 + $0x358] sm:$0xff]
      %v5937 = vld [vmem:[#allocation4 + $0x360] sm:$0xff]
      %v5938 = vld [vmem:[#allocation4 + $0x368] sm:$0xff]
      %v5939 = vld [vmem:[#allocation4 + $0x370] sm:$0xff]
      %v5940 = vld [vmem:[#allocation4 + $0x378] sm:$0xff]
      %v5941 = vld [vmem:[#allocation4 + $0x380] sm:$0xff]
      %v5942 = vld [vmem:[#allocation4 + $0x388] sm:$0xff]
      %v5943 = vld [vmem:[#allocation4 + $0x390] sm:$0xff]
      %v5944 = vld [vmem:[#allocation4 + $0x398] sm:$0xff]
      %v5945 = vld [vmem:[#allocation4 + $0x3a0] sm:$0xff]
      %v5946 = vld [vmem:[#allocation4 + $0x3a8] sm:$0xff]
      %v5947 = vld [vmem:[#allocation4 + $0x3b0] sm:$0xff]
      %v5948 = vld [vmem:[#allocation4 + $0x3b8] sm:$0xff]
      %v5949 = vld [vmem:[#allocation4 + $0x3c0] sm:$0xff]
      %v5950 = vld [vmem:[#allocation4 + $0x3c8] sm:$0xff]
      %v5951 = vld [vmem:[#allocation4 + $0x3d0] sm:$0xff]
      %v5952 = vld [vmem:[#allocation4 + $0x3d8] sm:$0xff]
      %v5953 = vld [vmem:[#allocation4 + $0x3e0] sm:$0xff]
      %v5954 = vld [vmem:[#allocation4 + $0x3e8] sm:$0xff]
      %v5955 = vld [vmem:[#allocation4 + $0x3f0] sm:$0xff]
      %v5956 = vld [vmem:[#allocation4 + $0x3f8] sm:$0xff]
      %v5957 = vld [vmem:[#allocation4 + $0x400] sm:$0xff]
      %v5958 = vld [vmem:[#allocation4 + $0x408] sm:$0xff]
      %v5959 = vld [vmem:[#allocation4 + $0x410] sm:$0xff]
      %v5960 = vld [vmem:[#allocation4 + $0x418] sm:$0xff]
      %v5961 = vld [vmem:[#allocation4 + $0x420] sm:$0xff]
      %v5962 = vld [vmem:[#allocation4 + $0x428] sm:$0xff]
      %v5963 = vld [vmem:[#allocation4 + $0x430] sm:$0xff]
      %v5964 = vld [vmem:[#allocation4 + $0x438] sm:$0xff]
      %v5965 = vld [vmem:[#allocation4 + $0x440] sm:$0xff]
      %v5966 = vld [vmem:[#allocation4 + $0x448] sm:$0xff]
      %v5967 = vld [vmem:[#allocation4 + $0x450] sm:$0xff]
      %v5968 = vld [vmem:[#allocation4 + $0x458] sm:$0xff]
      %v5969 = vld [vmem:[#allocation4 + $0x460] sm:$0xff]
      %v5970 = vld [vmem:[#allocation4 + $0x468] sm:$0xff]
      %v5971 = vld [vmem:[#allocation4 + $0x470] sm:$0xff]
      %v5972 = vld [vmem:[#allocation4 + $0x478] sm:$0xff]
      %v5973 = vld [vmem:[#allocation4 + $0x480] sm:$0xff]
      %v5974 = vld [vmem:[#allocation4 + $0x488] sm:$0xff]
      %v5975 = vld [vmem:[#allocation4 + $0x490] sm:$0xff]
      %v5976 = vld [vmem:[#allocation4 + $0x498] sm:$0xff]
      %v5977 = vld [vmem:[#allocation4 + $0x4a0] sm:$0xff]
      %v5978 = vld [vmem:[#allocation4 + $0x4a8] sm:$0xff]
      %v5979 = vld [vmem:[#allocation4 + $0x4b0] sm:$0xff]
      %v5980 = vld [vmem:[#allocation4 + $0x4b8] sm:$0xff]
      %v5981 = vld [vmem:[#allocation4 + $0x4c0] sm:$0xff]
      %v5982 = vld [vmem:[#allocation4 + $0x4c8] sm:$0xff]
      %v5983 = vld [vmem:[#allocation4 + $0x4d0] sm:$0xff]
      %v5984 = vld [vmem:[#allocation4 + $0x4d8] sm:$0xff]
      %v5985 = vld [vmem:[#allocation4 + $0x4e0] sm:$0xff]
      %v5986 = vld [vmem:[#allocation4 + $0x4e8] sm:$0xff]
      %v5987 = vld [vmem:[#allocation4 + $0x4f0] sm:$0xff]
      %v5988 = vld [vmem:[#allocation4 + $0x4f8] sm:$0xff]
      %v5989 = vld [vmem:[#allocation4 + $0x500] sm:$0xff]
      %v5990 = vld [vmem:[#allocation4 + $0x508] sm:$0xff]
      %v5991 = vld [vmem:[#allocation4 + $0x510] sm:$0xff]
      %v5992 = vld [vmem:[#allocation4 + $0x518] sm:$0xff]
      %v5993 = vld [vmem:[#allocation4 + $0x520] sm:$0xff]
      %v5994 = vld [vmem:[#allocation4 + $0x528] sm:$0xff]
      %v5995 = vld [vmem:[#allocation4 + $0x530] sm:$0xff]
      %v5996 = vld [vmem:[#allocation4 + $0x538] sm:$0xff]
      %v5997 = vld [vmem:[#allocation4 + $0x540] sm:$0xff]
      %v5998 = vld [vmem:[#allocation4 + $0x548] sm:$0xff]
      %v5999 = vld [vmem:[#allocation4 + $0x550] sm:$0xff]
      %v6000 = vld [vmem:[#allocation4 + $0x558] sm:$0xff]
      %v6001 = vld [vmem:[#allocation4 + $0x560] sm:$0xff]
      %v6002 = vld [vmem:[#allocation4 + $0x568] sm:$0xff]
      %v6003 = vld [vmem:[#allocation4 + $0x570] sm:$0xff]
      %v6004 = vld [vmem:[#allocation4 + $0x578] sm:$0xff]
      %v6005 = vld [vmem:[#allocation4 + $0x580] sm:$0xff]
      %v6006 = vld [vmem:[#allocation4 + $0x588] sm:$0xff]
      %v6007 = vld [vmem:[#allocation4 + $0x590] sm:$0xff]
      %v6008 = vld [vmem:[#allocation4 + $0x598] sm:$0xff]
      %v6009 = vld [vmem:[#allocation4 + $0x5a0] sm:$0xff]
      %v6010 = vld [vmem:[#allocation4 + $0x5a8] sm:$0xff]
      %v6011 = vld [vmem:[#allocation4 + $0x5b0] sm:$0xff]
      %v6012 = vld [vmem:[#allocation4 + $0x5b8] sm:$0xff]
      %v6013 = vld [vmem:[#allocation4 + $0x5c0] sm:$0xff]
      %v6014 = vld [vmem:[#allocation4 + $0x5c8] sm:$0xff]
      %v6015 = vld [vmem:[#allocation4 + $0x5d0] sm:$0xff]
      %v6016 = vld [vmem:[#allocation4 + $0x5d8] sm:$0xff]
      %v6017 = vld [vmem:[#allocation4 + $0x5e0] sm:$0xff]
      %v6018 = vld [vmem:[#allocation4 + $0x5e8] sm:$0xff]
      %v6019 = vld [vmem:[#allocation4 + $0x5f0] sm:$0xff]
      %v6020 = vld [vmem:[#allocation4 + $0x5f8] sm:$0xff]
      %v6021 = vld [vmem:[#allocation4 + $0x600] sm:$0xff]
      %v6022 = vld [vmem:[#allocation4 + $0x608] sm:$0xff]
      %v6023 = vld [vmem:[#allocation4 + $0x610] sm:$0xff]
      %v6024 = vld [vmem:[#allocation4 + $0x618] sm:$0xff]
      %v6025 = vld [vmem:[#allocation4 + $0x620] sm:$0xff]
      %v6026 = vld [vmem:[#allocation4 + $0x628] sm:$0xff]
      %v6027 = vld [vmem:[#allocation4 + $0x630] sm:$0xff]
      %v6028 = vld [vmem:[#allocation4 + $0x638] sm:$0xff]
      %v6029 = vld [vmem:[%s340] sm:$0xf]
      %6031 = vset.pattern.permute.xlu0 0
      %6032 = vperm.xlu0 %6031, %v6029
      %v6033 = vpop.permute.xlu0 %6032
      %v6037 = vunpack.c.l.s4 1983009808
      %v6038 = vunpack.c.0.s8 %v6037
      %v6039 = vlaneseq
      %v6040 = vshrl.u32 %v6039, 7
      %v6041 = vsub.s32 %v6038, %v6040
      %v6042 = vrot.slane %v5828, %v6041
      %v6043 = vcombine.high %v6042, %v6042
      %v6245 = vunpack.c.l.b16 %v5829
      %v6246 = vunpack.c.h.b16 %v5829
      %v6247 = vunpack.c.l.b16 %v5830
      %v6248 = vunpack.c.h.b16 %v5830
      %v6249 = vunpack.c.l.b16 %v5831
      %v6250 = vunpack.c.h.b16 %v5831
      %v6251 = vunpack.c.l.b16 %v5832
      %v6252 = vunpack.c.h.b16 %v5832
      %v6253 = vunpack.c.l.b16 %v5833
      %v6254 = vunpack.c.h.b16 %v5833
      %v6255 = vunpack.c.l.b16 %v5834
      %v6256 = vunpack.c.h.b16 %v5834
      %v6257 = vunpack.c.l.b16 %v5835
      %v6258 = vunpack.c.h.b16 %v5835
      %v6259 = vunpack.c.l.b16 %v5836
      %v6260 = vunpack.c.h.b16 %v5836
      %v6261 = vunpack.c.l.b16 %v5837
      %v6262 = vunpack.c.h.b16 %v5837
      %v6263 = vunpack.c.l.b16 %v5838
      %v6264 = vunpack.c.h.b16 %v5838
      %v6265 = vunpack.c.l.b16 %v5839
      %v6266 = vunpack.c.h.b16 %v5839
      %v6267 = vunpack.c.l.b16 %v5840
      %v6268 = vunpack.c.h.b16 %v5840
      %v6269 = vunpack.c.l.b16 %v5841
      %v6270 = vunpack.c.h.b16 %v5841
      %v6271 = vunpack.c.l.b16 %v5842
      %v6272 = vunpack.c.h.b16 %v5842
      %v6273 = vunpack.c.l.b16 %v5843
      %v6274 = vunpack.c.h.b16 %v5843
      %v6275 = vunpack.c.l.b16 %v5844
      %v6276 = vunpack.c.h.b16 %v5844
      %v6277 = vunpack.c.l.b16 %v5845
      %v6278 = vunpack.c.h.b16 %v5845
      %v6279 = vunpack.c.l.b16 %v5846
      %v6280 = vunpack.c.h.b16 %v5846
      %v6281 = vunpack.c.l.b16 %v5847
      %v6282 = vunpack.c.h.b16 %v5847
      %v6283 = vunpack.c.l.b16 %v5848
      %v6284 = vunpack.c.h.b16 %v5848
      %v6285 = vunpack.c.l.b16 %v5849
      %v6286 = vunpack.c.h.b16 %v5849
      %v6287 = vunpack.c.l.b16 %v5850
      %v6288 = vunpack.c.h.b16 %v5850
      %v6289 = vunpack.c.l.b16 %v5851
      %v6290 = vunpack.c.h.b16 %v5851
      %v6291 = vunpack.c.l.b16 %v5852
      %v6292 = vunpack.c.h.b16 %v5852
      %v6293 = vunpack.c.l.b16 %v5853
      %v6294 = vunpack.c.h.b16 %v5853
      %v6295 = vunpack.c.l.b16 %v5854
      %v6296 = vunpack.c.h.b16 %v5854
      %v6297 = vunpack.c.l.b16 %v5855
      %v6298 = vunpack.c.h.b16 %v5855
      %v6299 = vunpack.c.l.b16 %v5856
      %v6300 = vunpack.c.h.b16 %v5856
      %v6301 = vunpack.c.l.b16 %v5857
      %v6302 = vunpack.c.h.b16 %v5857
      %v6303 = vunpack.c.l.b16 %v5858
      %v6304 = vunpack.c.h.b16 %v5858
      %v6305 = vunpack.c.l.b16 %v5859
      %v6306 = vunpack.c.h.b16 %v5859
      %v6307 = vunpack.c.l.b16 %v5860
      %v6308 = vunpack.c.h.b16 %v5860
      %v6309 = vunpack.c.l.b16 %v5861
      %v6310 = vunpack.c.h.b16 %v5861
      %v6311 = vunpack.c.l.b16 %v5862
      %v6312 = vunpack.c.h.b16 %v5862
      %v6313 = vunpack.c.l.b16 %v5863
      %v6314 = vunpack.c.h.b16 %v5863
      %v6315 = vunpack.c.l.b16 %v5864
      %v6316 = vunpack.c.h.b16 %v5864
      %v6317 = vunpack.c.l.b16 %v5865
      %v6318 = vunpack.c.h.b16 %v5865
      %v6319 = vunpack.c.l.b16 %v5866
      %v6320 = vunpack.c.h.b16 %v5866
      %v6321 = vunpack.c.l.b16 %v5867
      %v6322 = vunpack.c.h.b16 %v5867
      %v6323 = vunpack.c.l.b16 %v5868
      %v6324 = vunpack.c.h.b16 %v5868
      %v6325 = vunpack.c.l.b16 %v5869
      %v6326 = vunpack.c.h.b16 %v5869
      %v6327 = vunpack.c.l.b16 %v5870
      %v6328 = vunpack.c.h.b16 %v5870
      %v6329 = vunpack.c.l.b16 %v5871
      %v6330 = vunpack.c.h.b16 %v5871
      %v6331 = vunpack.c.l.b16 %v5872
      %v6332 = vunpack.c.h.b16 %v5872
      %v6333 = vunpack.c.l.b16 %v5873
      %v6334 = vunpack.c.h.b16 %v5873
      %v6335 = vunpack.c.l.b16 %v5874
      %v6336 = vunpack.c.h.b16 %v5874
      %v6337 = vunpack.c.l.b16 %v5875
      %v6338 = vunpack.c.h.b16 %v5875
      %v6339 = vunpack.c.l.b16 %v5876
      %v6340 = vunpack.c.h.b16 %v5876
      %v6341 = vunpack.c.l.b16 %v5877
      %v6342 = vunpack.c.h.b16 %v5877
      %v6343 = vunpack.c.l.b16 %v5878
      %v6344 = vunpack.c.h.b16 %v5878
      %v6345 = vunpack.c.l.b16 %v5879
      %v6346 = vunpack.c.h.b16 %v5879
      %v6347 = vunpack.c.l.b16 %v5880
      %v6348 = vunpack.c.h.b16 %v5880
      %v6349 = vunpack.c.l.b16 %v5881
      %v6350 = vunpack.c.h.b16 %v5881
      %v6351 = vunpack.c.l.b16 %v5882
      %v6352 = vunpack.c.h.b16 %v5882
      %v6353 = vunpack.c.l.b16 %v5883
      %v6354 = vunpack.c.h.b16 %v5883
      %v6355 = vunpack.c.l.b16 %v5884
      %v6356 = vunpack.c.h.b16 %v5884
      %v6357 = vunpack.c.l.b16 %v5885
      %v6358 = vunpack.c.h.b16 %v5885
      %v6359 = vunpack.c.l.b16 %v5886
      %v6360 = vunpack.c.h.b16 %v5886
      %v6361 = vunpack.c.l.b16 %v5887
      %v6362 = vunpack.c.h.b16 %v5887
      %v6363 = vunpack.c.l.b16 %v5888
      %v6364 = vunpack.c.h.b16 %v5888
      %v6365 = vunpack.c.l.b16 %v5889
      %v6366 = vunpack.c.h.b16 %v5889
      %v6367 = vunpack.c.l.b16 %v5890
      %v6368 = vunpack.c.h.b16 %v5890
      %v6369 = vunpack.c.l.b16 %v5891
      %v6370 = vunpack.c.h.b16 %v5891
      %v6371 = vunpack.c.l.b16 %v5892
      %v6372 = vunpack.c.h.b16 %v5892
      %v6373 = vunpack.c.l.b16 %v5893
      %v6374 = vunpack.c.h.b16 %v5893
      %v6375 = vunpack.c.l.b16 %v5894
      %v6376 = vunpack.c.h.b16 %v5894
      %v6377 = vunpack.c.l.b16 %v5895
      %v6378 = vunpack.c.h.b16 %v5895
      %v6379 = vunpack.c.l.b16 %v5896
      %v6380 = vunpack.c.h.b16 %v5896
      %v6381 = vunpack.c.l.b16 %v5897
      %v6382 = vunpack.c.h.b16 %v5897
      %v6383 = vunpack.c.l.b16 %v5898
      %v6384 = vunpack.c.h.b16 %v5898
      %v6385 = vunpack.c.l.b16 %v5899
      %v6386 = vunpack.c.h.b16 %v5899
      %v6387 = vunpack.c.l.b16 %v5900
      %v6388 = vunpack.c.h.b16 %v5900
      %v6389 = vunpack.c.l.b16 %v5901
      %v6390 = vunpack.c.h.b16 %v5901
      %v6391 = vunpack.c.l.b16 %v5902
      %v6392 = vunpack.c.h.b16 %v5902
      %v6393 = vunpack.c.l.b16 %v5903
      %v6394 = vunpack.c.h.b16 %v5903
      %v6395 = vunpack.c.l.b16 %v5904
      %v6396 = vunpack.c.h.b16 %v5904
      %v6397 = vunpack.c.l.b16 %v5905
      %v6398 = vunpack.c.h.b16 %v5905
      %v6399 = vunpack.c.l.b16 %v5906
      %v6400 = vunpack.c.h.b16 %v5906
      %v6401 = vunpack.c.l.b16 %v5907
      %v6402 = vunpack.c.h.b16 %v5907
      %v6403 = vunpack.c.l.b16 %v5908
      %v6404 = vunpack.c.h.b16 %v5908
      %v6405 = vunpack.c.l.b16 %v5909
      %v6406 = vunpack.c.h.b16 %v5909
      %v6407 = vunpack.c.l.b16 %v5910
      %v6408 = vunpack.c.h.b16 %v5910
      %v6409 = vunpack.c.l.b16 %v5911
      %v6410 = vunpack.c.h.b16 %v5911
      %v6411 = vunpack.c.l.b16 %v5912
      %v6412 = vunpack.c.h.b16 %v5912
      %v6413 = vunpack.c.l.b16 %v5913
      %v6414 = vunpack.c.h.b16 %v5913
      %v6415 = vunpack.c.l.b16 %v5914
      %v6416 = vunpack.c.h.b16 %v5914
      %v6417 = vunpack.c.l.b16 %v5915
      %v6418 = vunpack.c.h.b16 %v5915
      %v6419 = vunpack.c.l.b16 %v5916
      %v6420 = vunpack.c.h.b16 %v5916
      %v6421 = vunpack.c.l.b16 %v5917
      %v6422 = vunpack.c.h.b16 %v5917
      %v6423 = vunpack.c.l.b16 %v5918
      %v6424 = vunpack.c.h.b16 %v5918
      %v6425 = vunpack.c.l.b16 %v5919
      %v6426 = vunpack.c.h.b16 %v5919
      %v6427 = vunpack.c.l.b16 %v5920
      %v6428 = vunpack.c.h.b16 %v5920
      %v6429 = vunpack.c.l.b16 %v5921
      %v6430 = vunpack.c.h.b16 %v5921
      %v6431 = vunpack.c.l.b16 %v5922
      %v6432 = vunpack.c.h.b16 %v5922
      %v6433 = vunpack.c.l.b16 %v5923
      %v6434 = vunpack.c.h.b16 %v5923
      %v6435 = vunpack.c.l.b16 %v5924
      %v6436 = vunpack.c.h.b16 %v5924
      %v6437 = vunpack.c.l.b16 %v5925
      %v6438 = vunpack.c.h.b16 %v5925
      %v6439 = vunpack.c.l.b16 %v5926
      %v6440 = vunpack.c.h.b16 %v5926
      %v6441 = vunpack.c.l.b16 %v5927
      %v6442 = vunpack.c.h.b16 %v5927
      %v6443 = vunpack.c.l.b16 %v5928
      %v6444 = vunpack.c.h.b16 %v5928
      %v6445 = vunpack.c.l.b16 %v5929
      %v6446 = vunpack.c.h.b16 %v5929
      %v6447 = vunpack.c.l.b16 %v5930
      %v6448 = vunpack.c.h.b16 %v5930
      %v6449 = vunpack.c.l.b16 %v5931
      %v6450 = vunpack.c.h.b16 %v5931
      %v6451 = vunpack.c.l.b16 %v5932
      %v6452 = vunpack.c.h.b16 %v5932
      %v6453 = vunpack.c.l.b16 %v5933
      %v6454 = vunpack.c.h.b16 %v5933
      %v6455 = vunpack.c.l.b16 %v5934
      %v6456 = vunpack.c.h.b16 %v5934
      %v6457 = vunpack.c.l.b16 %v5935
      %v6458 = vunpack.c.h.b16 %v5935
      %v6459 = vunpack.c.l.b16 %v5936
      %v6460 = vunpack.c.h.b16 %v5936
      %v6461 = vunpack.c.l.b16 %v5937
      %v6462 = vunpack.c.h.b16 %v5937
      %v6463 = vunpack.c.l.b16 %v5938
      %v6464 = vunpack.c.h.b16 %v5938
      %v6465 = vunpack.c.l.b16 %v5939
      %v6466 = vunpack.c.h.b16 %v5939
      %v6467 = vunpack.c.l.b16 %v5940
      %v6468 = vunpack.c.h.b16 %v5940
      %v6469 = vunpack.c.l.b16 %v5941
      %v6470 = vunpack.c.h.b16 %v5941
      %v6471 = vunpack.c.l.b16 %v5942
      %v6472 = vunpack.c.h.b16 %v5942
      %v6473 = vunpack.c.l.b16 %v5943
      %v6474 = vunpack.c.h.b16 %v5943
      %v6475 = vunpack.c.l.b16 %v5944
      %v6476 = vunpack.c.h.b16 %v5944
      %v6477 = vunpack.c.l.b16 %v5945
      %v6478 = vunpack.c.h.b16 %v5945
      %v6479 = vunpack.c.l.b16 %v5946
      %v6480 = vunpack.c.h.b16 %v5946
      %v6481 = vunpack.c.l.b16 %v5947
      %v6482 = vunpack.c.h.b16 %v5947
      %v6483 = vunpack.c.l.b16 %v5948
      %v6484 = vunpack.c.h.b16 %v5948
      %v6485 = vunpack.c.l.b16 %v5949
      %v6486 = vunpack.c.h.b16 %v5949
      %v6487 = vunpack.c.l.b16 %v5950
      %v6488 = vunpack.c.h.b16 %v5950
      %v6489 = vunpack.c.l.b16 %v5951
      %v6490 = vunpack.c.h.b16 %v5951
      %v6491 = vunpack.c.l.b16 %v5952
      %v6492 = vunpack.c.h.b16 %v5952
      %v6493 = vunpack.c.l.b16 %v5953
      %v6494 = vunpack.c.h.b16 %v5953
      %v6495 = vunpack.c.l.b16 %v5954
      %v6496 = vunpack.c.h.b16 %v5954
      %v6497 = vunpack.c.l.b16 %v5955
      %v6498 = vunpack.c.h.b16 %v5955
      %v6499 = vunpack.c.l.b16 %v5956
      %v6500 = vunpack.c.h.b16 %v5956
      %v6501 = vunpack.c.l.b16 %v5957
      %v6502 = vunpack.c.h.b16 %v5957
      %v6503 = vunpack.c.l.b16 %v5958
      %v6504 = vunpack.c.h.b16 %v5958
      %v6505 = vunpack.c.l.b16 %v5959
      %v6506 = vunpack.c.h.b16 %v5959
      %v6507 = vunpack.c.l.b16 %v5960
      %v6508 = vunpack.c.h.b16 %v5960
      %v6509 = vunpack.c.l.b16 %v5961
      %v6510 = vunpack.c.h.b16 %v5961
      %v6511 = vunpack.c.l.b16 %v5962
      %v6512 = vunpack.c.h.b16 %v5962
      %v6513 = vunpack.c.l.b16 %v5963
      %v6514 = vunpack.c.h.b16 %v5963
      %v6515 = vunpack.c.l.b16 %v5964
      %v6516 = vunpack.c.h.b16 %v5964
      %v6517 = vunpack.c.l.b16 %v5965
      %v6518 = vunpack.c.h.b16 %v5965
      %v6519 = vunpack.c.l.b16 %v5966
      %v6520 = vunpack.c.h.b16 %v5966
      %v6521 = vunpack.c.l.b16 %v5967
      %v6522 = vunpack.c.h.b16 %v5967
      %v6523 = vunpack.c.l.b16 %v5968
      %v6524 = vunpack.c.h.b16 %v5968
      %v6525 = vunpack.c.l.b16 %v5969
      %v6526 = vunpack.c.h.b16 %v5969
      %v6527 = vunpack.c.l.b16 %v5970
      %v6528 = vunpack.c.h.b16 %v5970
      %v6529 = vunpack.c.l.b16 %v5971
      %v6530 = vunpack.c.h.b16 %v5971
      %v6531 = vunpack.c.l.b16 %v5972
      %v6532 = vunpack.c.h.b16 %v5972
      %v6533 = vunpack.c.l.b16 %v5973
      %v6534 = vunpack.c.h.b16 %v5973
      %v6535 = vunpack.c.l.b16 %v5974
      %v6536 = vunpack.c.h.b16 %v5974
      %v6537 = vunpack.c.l.b16 %v5975
      %v6538 = vunpack.c.h.b16 %v5975
      %v6539 = vunpack.c.l.b16 %v5976
      %v6540 = vunpack.c.h.b16 %v5976
      %v6541 = vunpack.c.l.b16 %v5977
      %v6542 = vunpack.c.h.b16 %v5977
      %v6543 = vunpack.c.l.b16 %v5978
      %v6544 = vunpack.c.h.b16 %v5978
      %v6545 = vunpack.c.l.b16 %v5979
      %v6546 = vunpack.c.h.b16 %v5979
      %v6547 = vunpack.c.l.b16 %v5980
      %v6548 = vunpack.c.h.b16 %v5980
      %v6549 = vunpack.c.l.b16 %v5981
      %v6550 = vunpack.c.h.b16 %v5981
      %v6551 = vunpack.c.l.b16 %v5982
      %v6552 = vunpack.c.h.b16 %v5982
      %v6553 = vunpack.c.l.b16 %v5983
      %v6554 = vunpack.c.h.b16 %v5983
      %v6555 = vunpack.c.l.b16 %v5984
      %v6556 = vunpack.c.h.b16 %v5984
      %v6557 = vunpack.c.l.b16 %v5985
      %v6558 = vunpack.c.h.b16 %v5985
      %v6559 = vunpack.c.l.b16 %v5986
      %v6560 = vunpack.c.h.b16 %v5986
      %v6561 = vunpack.c.l.b16 %v5987
      %v6562 = vunpack.c.h.b16 %v5987
      %v6563 = vunpack.c.l.b16 %v5988
      %v6564 = vunpack.c.h.b16 %v5988
      %v6565 = vunpack.c.l.b16 %v5989
      %v6566 = vunpack.c.h.b16 %v5989
      %v6567 = vunpack.c.l.b16 %v5990
      %v6568 = vunpack.c.h.b16 %v5990
      %v6569 = vunpack.c.l.b16 %v5991
      %v6570 = vunpack.c.h.b16 %v5991
      %v6571 = vunpack.c.l.b16 %v5992
      %v6572 = vunpack.c.h.b16 %v5992
      %v6573 = vunpack.c.l.b16 %v5993
      %v6574 = vunpack.c.h.b16 %v5993
      %v6575 = vunpack.c.l.b16 %v5994
      %v6576 = vunpack.c.h.b16 %v5994
      %v6577 = vunpack.c.l.b16 %v5995
      %v6578 = vunpack.c.h.b16 %v5995
      %v6579 = vunpack.c.l.b16 %v5996
      %v6580 = vunpack.c.h.b16 %v5996
      %v6581 = vunpack.c.l.b16 %v5997
      %v6582 = vunpack.c.h.b16 %v5997
      %v6583 = vunpack.c.l.b16 %v5998
      %v6584 = vunpack.c.h.b16 %v5998
      %v6585 = vunpack.c.l.b16 %v5999
      %v6586 = vunpack.c.h.b16 %v5999
      %v6587 = vunpack.c.l.b16 %v6000
      %v6588 = vunpack.c.h.b16 %v6000
      %v6589 = vunpack.c.l.b16 %v6001
      %v6590 = vunpack.c.h.b16 %v6001
      %v6591 = vunpack.c.l.b16 %v6002
      %v6592 = vunpack.c.h.b16 %v6002
      %v6593 = vunpack.c.l.b16 %v6003
      %v6594 = vunpack.c.h.b16 %v6003
      %v6595 = vunpack.c.l.b16 %v6004
      %v6596 = vunpack.c.h.b16 %v6004
      %v6597 = vunpack.c.l.b16 %v6005
      %v6598 = vunpack.c.h.b16 %v6005
      %v6599 = vunpack.c.l.b16 %v6006
      %v6600 = vunpack.c.h.b16 %v6006
      %v6601 = vunpack.c.l.b16 %v6007
      %v6602 = vunpack.c.h.b16 %v6007
      %v6603 = vunpack.c.l.b16 %v6008
      %v6604 = vunpack.c.h.b16 %v6008
      %v6605 = vunpack.c.l.b16 %v6009
      %v6606 = vunpack.c.h.b16 %v6009
      %v6607 = vunpack.c.l.b16 %v6010
      %v6608 = vunpack.c.h.b16 %v6010
      %v6609 = vunpack.c.l.b16 %v6011
      %v6610 = vunpack.c.h.b16 %v6011
      %v6611 = vunpack.c.l.b16 %v6012
      %v6612 = vunpack.c.h.b16 %v6012
      %v6613 = vunpack.c.l.b16 %v6013
      %v6614 = vunpack.c.h.b16 %v6013
      %v6615 = vunpack.c.l.b16 %v6014
      %v6616 = vunpack.c.h.b16 %v6014
      %v6617 = vunpack.c.l.b16 %v6015
      %v6618 = vunpack.c.h.b16 %v6015
      %v6619 = vunpack.c.l.b16 %v6016
      %v6620 = vunpack.c.h.b16 %v6016
      %v6621 = vunpack.c.l.b16 %v6017
      %v6622 = vunpack.c.h.b16 %v6017
      %v6623 = vunpack.c.l.b16 %v6018
      %v6624 = vunpack.c.h.b16 %v6018
      %v6625 = vunpack.c.l.b16 %v6019
      %v6626 = vunpack.c.h.b16 %v6019
      %v6627 = vunpack.c.l.b16 %v6020
      %v6628 = vunpack.c.h.b16 %v6020
      %v6629 = vunpack.c.l.b16 %v6021
      %v6630 = vunpack.c.h.b16 %v6021
      %v6631 = vunpack.c.l.b16 %v6022
      %v6632 = vunpack.c.h.b16 %v6022
      %v6633 = vunpack.c.l.b16 %v6023
      %v6634 = vunpack.c.h.b16 %v6023
      %v6635 = vunpack.c.l.b16 %v6024
      %v6636 = vunpack.c.h.b16 %v6024
      %v6637 = vunpack.c.l.b16 %v6025
      %v6638 = vunpack.c.h.b16 %v6025
      %v6639 = vunpack.c.l.b16 %v6026
      %v6640 = vunpack.c.h.b16 %v6026
      %v6641 = vunpack.c.l.b16 %v6027
      %v6642 = vunpack.c.h.b16 %v6027
      %v6643 = vunpack.c.l.b16 %v6028
      %v6644 = vunpack.c.h.b16 %v6028
      %v6645 = vpack.c.b16 %v6261, %v6245
      %v6646 = vpack.c.b16 %v6262, %v6246
      %v6647 = vpack.c.b16 %v6263, %v6247
      %v6648 = vpack.c.b16 %v6264, %v6248
      %v6649 = vpack.c.b16 %v6265, %v6249
      %v6650 = vpack.c.b16 %v6266, %v6250
      %v6651 = vpack.c.b16 %v6267, %v6251
      %v6652 = vpack.c.b16 %v6268, %v6252
      %v6653 = vpack.c.b16 %v6269, %v6253
      %v6654 = vpack.c.b16 %v6270, %v6254
      %v6655 = vpack.c.b16 %v6271, %v6255
      %v6656 = vpack.c.b16 %v6272, %v6256
      %v6657 = vpack.c.b16 %v6273, %v6257
      %v6658 = vpack.c.b16 %v6274, %v6258
      %v6659 = vpack.c.b16 %v6275, %v6259
      %v6660 = vpack.c.b16 %v6276, %v6260
      %v6661 = vpack.c.b16 %v6293, %v6277
      %v6662 = vpack.c.b16 %v6294, %v6278
      %v6663 = vpack.c.b16 %v6295, %v6279
      %v6664 = vpack.c.b16 %v6296, %v6280
      %v6665 = vpack.c.b16 %v6297, %v6281
      %v6666 = vpack.c.b16 %v6298, %v6282
      %v6667 = vpack.c.b16 %v6299, %v6283
      %v6668 = vpack.c.b16 %v6300, %v6284
      %v6669 = vpack.c.b16 %v6301, %v6285
      %v6670 = vpack.c.b16 %v6302, %v6286
      %v6671 = vpack.c.b16 %v6303, %v6287
      %v6672 = vpack.c.b16 %v6304, %v6288
      %v6673 = vpack.c.b16 %v6305, %v6289
      %v6674 = vpack.c.b16 %v6306, %v6290
      %v6675 = vpack.c.b16 %v6307, %v6291
      %v6676 = vpack.c.b16 %v6308, %v6292
      %v6677 = vpack.c.b16 %v6325, %v6309
      %v6678 = vpack.c.b16 %v6326, %v6310
      %v6679 = vpack.c.b16 %v6327, %v6311
      %v6680 = vpack.c.b16 %v6328, %v6312
      %v6681 = vpack.c.b16 %v6329, %v6313
      %v6682 = vpack.c.b16 %v6330, %v6314
      %v6683 = vpack.c.b16 %v6331, %v6315
      %v6684 = vpack.c.b16 %v6332, %v6316
      %v6685 = vpack.c.b16 %v6333, %v6317
      %v6686 = vpack.c.b16 %v6334, %v6318
      %v6687 = vpack.c.b16 %v6335, %v6319
      %v6688 = vpack.c.b16 %v6336, %v6320
      %v6689 = vpack.c.b16 %v6337, %v6321
      %v6690 = vpack.c.b16 %v6338, %v6322
      %v6691 = vpack.c.b16 %v6339, %v6323
      %v6692 = vpack.c.b16 %v6340, %v6324
      %v6693 = vpack.c.b16 %v6357, %v6341
      %v6694 = vpack.c.b16 %v6358, %v6342
      %v6695 = vpack.c.b16 %v6359, %v6343
      %v6696 = vpack.c.b16 %v6360, %v6344
      %v6697 = vpack.c.b16 %v6361, %v6345
      %v6698 = vpack.c.b16 %v6362, %v6346
      %v6699 = vpack.c.b16 %v6363, %v6347
      %v6700 = vpack.c.b16 %v6364, %v6348
      %v6701 = vpack.c.b16 %v6365, %v6349
      %v6702 = vpack.c.b16 %v6366, %v6350
      %v6703 = vpack.c.b16 %v6367, %v6351
      %v6704 = vpack.c.b16 %v6368, %v6352
      %v6705 = vpack.c.b16 %v6369, %v6353
      %v6706 = vpack.c.b16 %v6370, %v6354
      %v6707 = vpack.c.b16 %v6371, %v6355
      %v6708 = vpack.c.b16 %v6372, %v6356
      %v6709 = vpack.c.b16 %v6389, %v6373
      %v6710 = vpack.c.b16 %v6390, %v6374
      %v6711 = vpack.c.b16 %v6391, %v6375
      %v6712 = vpack.c.b16 %v6392, %v6376
      %v6713 = vpack.c.b16 %v6393, %v6377
      %v6714 = vpack.c.b16 %v6394, %v6378
      %v6715 = vpack.c.b16 %v6395, %v6379
      %v6716 = vpack.c.b16 %v6396, %v6380
      %v6717 = vpack.c.b16 %v6397, %v6381
      %v6718 = vpack.c.b16 %v6398, %v6382
      %v6719 = vpack.c.b16 %v6399, %v6383
      %v6720 = vpack.c.b16 %v6400, %v6384
      %v6721 = vpack.c.b16 %v6401, %v6385
      %v6722 = vpack.c.b16 %v6402, %v6386
      %v6723 = vpack.c.b16 %v6403, %v6387
      %v6724 = vpack.c.b16 %v6404, %v6388
      %v6725 = vpack.c.b16 %v6421, %v6405
      %v6726 = vpack.c.b16 %v6422, %v6406
      %v6727 = vpack.c.b16 %v6423, %v6407
      %v6728 = vpack.c.b16 %v6424, %v6408
      %v6729 = vpack.c.b16 %v6425, %v6409
      %v6730 = vpack.c.b16 %v6426, %v6410
      %v6731 = vpack.c.b16 %v6427, %v6411
      %v6732 = vpack.c.b16 %v6428, %v6412
      %v6733 = vpack.c.b16 %v6429, %v6413
      %v6734 = vpack.c.b16 %v6430, %v6414
      %v6735 = vpack.c.b16 %v6431, %v6415
      %v6736 = vpack.c.b16 %v6432, %v6416
      %v6737 = vpack.c.b16 %v6433, %v6417
      %v6738 = vpack.c.b16 %v6434, %v6418
      %v6739 = vpack.c.b16 %v6435, %v6419
      %v6740 = vpack.c.b16 %v6436, %v6420
      %v6741 = vpack.c.b16 %v6453, %v6437
      %v6742 = vpack.c.b16 %v6454, %v6438
      %v6743 = vpack.c.b16 %v6455, %v6439
      %v6744 = vpack.c.b16 %v6456, %v6440
      %v6745 = vpack.c.b16 %v6457, %v6441
      %v6746 = vpack.c.b16 %v6458, %v6442
      %v6747 = vpack.c.b16 %v6459, %v6443
      %v6748 = vpack.c.b16 %v6460, %v6444
      %v6749 = vpack.c.b16 %v6461, %v6445
      %v6750 = vpack.c.b16 %v6462, %v6446
      %v6751 = vpack.c.b16 %v6463, %v6447
      %v6752 = vpack.c.b16 %v6464, %v6448
      %v6753 = vpack.c.b16 %v6465, %v6449
      %v6754 = vpack.c.b16 %v6466, %v6450
      %v6755 = vpack.c.b16 %v6467, %v6451
      %v6756 = vpack.c.b16 %v6468, %v6452
      %v6757 = vpack.c.b16 %v6485, %v6469
      %v6758 = vpack.c.b16 %v6486, %v6470
      %v6759 = vpack.c.b16 %v6487, %v6471
      %v6760 = vpack.c.b16 %v6488, %v6472
      %v6761 = vpack.c.b16 %v6489, %v6473
      %v6762 = vpack.c.b16 %v6490, %v6474
      %v6763 = vpack.c.b16 %v6491, %v6475
      %v6764 = vpack.c.b16 %v6492, %v6476
      %v6765 = vpack.c.b16 %v6493, %v6477
      %v6766 = vpack.c.b16 %v6494, %v6478
      %v6767 = vpack.c.b16 %v6495, %v6479
      %v6768 = vpack.c.b16 %v6496, %v6480
      %v6769 = vpack.c.b16 %v6497, %v6481
      %v6770 = vpack.c.b16 %v6498, %v6482
      %v6771 = vpack.c.b16 %v6499, %v6483
      %v6772 = vpack.c.b16 %v6500, %v6484
      %v6773 = vpack.c.b16 %v6517, %v6501
      %v6774 = vpack.c.b16 %v6518, %v6502
      %v6775 = vpack.c.b16 %v6519, %v6503
      %v6776 = vpack.c.b16 %v6520, %v6504
      %v6777 = vpack.c.b16 %v6521, %v6505
      %v6778 = vpack.c.b16 %v6522, %v6506
      %v6779 = vpack.c.b16 %v6523, %v6507
      %v6780 = vpack.c.b16 %v6524, %v6508
      %v6781 = vpack.c.b16 %v6525, %v6509
      %v6782 = vpack.c.b16 %v6526, %v6510
      %v6783 = vpack.c.b16 %v6527, %v6511
      %v6784 = vpack.c.b16 %v6528, %v6512
      %v6785 = vpack.c.b16 %v6529, %v6513
      %v6786 = vpack.c.b16 %v6530, %v6514
      %v6787 = vpack.c.b16 %v6531, %v6515
      %v6788 = vpack.c.b16 %v6532, %v6516
      %v6789 = vpack.c.b16 %v6549, %v6533
      %v6790 = vpack.c.b16 %v6550, %v6534
      %v6791 = vpack.c.b16 %v6551, %v6535
      %v6792 = vpack.c.b16 %v6552, %v6536
      %v6793 = vpack.c.b16 %v6553, %v6537
      %v6794 = vpack.c.b16 %v6554, %v6538
      %v6795 = vpack.c.b16 %v6555, %v6539
      %v6796 = vpack.c.b16 %v6556, %v6540
      %v6797 = vpack.c.b16 %v6557, %v6541
      %v6798 = vpack.c.b16 %v6558, %v6542
      %v6799 = vpack.c.b16 %v6559, %v6543
      %v6800 = vpack.c.b16 %v6560, %v6544
      %v6801 = vpack.c.b16 %v6561, %v6545
      %v6802 = vpack.c.b16 %v6562, %v6546
      %v6803 = vpack.c.b16 %v6563, %v6547
      %v6804 = vpack.c.b16 %v6564, %v6548
      %v6805 = vpack.c.b16 %v6581, %v6565
      %v6806 = vpack.c.b16 %v6582, %v6566
      %v6807 = vpack.c.b16 %v6583, %v6567
      %v6808 = vpack.c.b16 %v6584, %v6568
      %v6809 = vpack.c.b16 %v6585, %v6569
      %v6810 = vpack.c.b16 %v6586, %v6570
      %v6811 = vpack.c.b16 %v6587, %v6571
      %v6812 = vpack.c.b16 %v6588, %v6572
      %v6813 = vpack.c.b16 %v6589, %v6573
      %v6814 = vpack.c.b16 %v6590, %v6574
      %v6815 = vpack.c.b16 %v6591, %v6575
      %v6816 = vpack.c.b16 %v6592, %v6576
      %v6817 = vpack.c.b16 %v6593, %v6577
      %v6818 = vpack.c.b16 %v6594, %v6578
      %v6819 = vpack.c.b16 %v6595, %v6579
      %v6820 = vpack.c.b16 %v6596, %v6580
      %v6821 = vpack.c.b16 %v6613, %v6597
      %v6822 = vpack.c.b16 %v6614, %v6598
      %v6823 = vpack.c.b16 %v6615, %v6599
      %v6824 = vpack.c.b16 %v6616, %v6600
      %v6825 = vpack.c.b16 %v6617, %v6601
      %v6826 = vpack.c.b16 %v6618, %v6602
      %v6827 = vpack.c.b16 %v6619, %v6603
      %v6828 = vpack.c.b16 %v6620, %v6604
      %v6829 = vpack.c.b16 %v6621, %v6605
      %v6830 = vpack.c.b16 %v6622, %v6606
      %v6831 = vpack.c.b16 %v6623, %v6607
      %v6832 = vpack.c.b16 %v6624, %v6608
      %v6833 = vpack.c.b16 %v6625, %v6609
      %v6834 = vpack.c.b16 %v6626, %v6610
      %v6835 = vpack.c.b16 %v6627, %v6611
      %v6836 = vpack.c.b16 %v6628, %v6612
      %v6837 = vpack.c.b16 %v6629, %v6629
      %v6838 = vpack.c.b16 %v6630, %v6630
      %v6839 = vpack.c.b16 %v6631, %v6631
      %v6840 = vpack.c.b16 %v6632, %v6632
      %v6841 = vpack.c.b16 %v6633, %v6633
      %v6842 = vpack.c.b16 %v6634, %v6634
      %v6843 = vpack.c.b16 %v6635, %v6635
      %v6844 = vpack.c.b16 %v6636, %v6636
      %v6845 = vpack.c.b16 %v6637, %v6637
      %v6846 = vpack.c.b16 %v6638, %v6638
      %v6847 = vpack.c.b16 %v6639, %v6639
      %v6848 = vpack.c.b16 %v6640, %v6640
      %v6849 = vpack.c.b16 %v6641, %v6641
      %v6850 = vpack.c.b16 %v6642, %v6642
      %v6851 = vpack.c.b16 %v6643, %v6643
      %v6852 = vpack.c.b16 %v6644, %v6644
      %vm7045 = vcmask 588800
      %v7047 = vsel %vm7045, %v6043, 0
      %vm7049 = vcmask 1043456
      %v7051 = vsel %vm7049, %v6837, 0
      %v7054 = vsel %vm7049, %v6838, 0
      %v7057 = vsel %vm7049, %v6839, 0
      %v7060 = vsel %vm7049, %v6840, 0
      %v7063 = vsel %vm7049, %v6841, 0
      %v7066 = vsel %vm7049, %v6842, 0
      %v7069 = vsel %vm7049, %v6843, 0
      %v7072 = vsel %vm7049, %v6844, 0
      %v7075 = vsel %vm7049, %v6845, 0
      %v7078 = vsel %vm7049, %v6846, 0
      %v7081 = vsel %vm7049, %v6847, 0
      %v7084 = vsel %vm7049, %v6848, 0
      %v7087 = vsel %vm7049, %v6849, 0
      %v7090 = vsel %vm7049, %v6850, 0
      %v7093 = vsel %vm7049, %v6851, 0
      %v7096 = vsel %vm7049, %v6852, 0
      %7098 = vmatprep.subr.bf16.mxu0 %v6646
      %7099 = vmatpush1.bf16.msra.mxu0 %v6645
      %7100 = vmatprep.subr.bf16.mxu0 %v6662
      %7101 = vmatpush1.bf16.msra.mxu0 %v6661
      %7102 = vmatprep.subr.bf16.mxu0 %v6678
      %7103 = vmatpush1.bf16.msra.mxu0 %v6677
      %7104 = vmatprep.subr.bf16.mxu0 %v6694
      %7105 = vmatpush1.bf16.msra.mxu0 %v6693
      %7106 = vmatprep.subr.bf16.mxu0 %v6710
      %7107 = vmatpush1.bf16.msra.mxu0 %v6709
      %7108 = vmatprep.subr.bf16.mxu0 %v6726
      %7109 = vmatpush1.bf16.msra.mxu0 %v6725
      %7110 = vmatprep.subr.bf16.mxu0 %v6742
      %7111 = vmatpush1.bf16.msra.mxu0 %v6741
      %7112 = vmatprep.subr.bf16.mxu0 %v6758
      %7113 = vmatpush1.bf16.msra.mxu0 %v6757
      %7114 = vmatprep.subr.bf16.mxu0 %v6774
      %7115 = vmatpush1.bf16.msra.mxu0 %v6773
      %7116 = vmatprep.subr.bf16.mxu0 %v6790
      %7117 = vmatpush1.bf16.msra.mxu0 %v6789
      %7118 = vmatprep.subr.bf16.mxu0 %v6806
      %7119 = vmatpush1.bf16.msra.mxu0 %v6805
      %7120 = vmatprep.subr.bf16.mxu0 %v6822
      %7121 = vmatpush1.bf16.msra.mxu0 %v6821
      %7122 = vmatprep.subr.bf16.mxu0 %v7054
      %7123 = vmatpush1.bf16.msra.mxu0 %v7051
      %7124 = vmatprep.subr.bf16.mxu0 0
      %7125 = vmatpush1.bf16.msra.mxu0 0
      %7126 = vmatprep.subr.bf16.mxu0 0
      %7127 = vmatpush1.bf16.msra.mxu0 0
      %7128 = vmatprep.subr.bf16.mxu0 0
      %7129 = vmatpush1.bf16.msra.mxu0 0
      %7130 = vmatprep.mubr.bf16.mxu0 %v7047
      %7131 = vmatmul.mubr.bf16.gmra.mrb[0].mxu0 %v6042
      %v7132 = vpop.f32.mrb[0].mxu0
      %v7133 = vadd.f32 %v6033, %v7132
      %v7134 = vpop.f32.mrb[0].mxu0
      %v7135 = vadd.f32 %v6033, %v7134
      %v7136 = vpop.f32.mrb[0].mxu0
      %v7137 = vpop.f32.mrb[0].mxu0
      %7138 = vdwg.mxu0
      %7139 = vmatprep.subr.bf16.mxu0 %v6648
      %7140 = vmatpush1.bf16.msra.mxu0 %v6647
      %7141 = vmatprep.subr.bf16.mxu0 %v6664
      %7142 = vmatpush1.bf16.msra.mxu0 %v6663
      %7143 = vmatprep.subr.bf16.mxu0 %v6680
      %7144 = vmatpush1.bf16.msra.mxu0 %v6679
      %7145 = vmatprep.subr.bf16.mxu0 %v6696
      %7146 = vmatpush1.bf16.msra.mxu0 %v6695
      %7147 = vmatprep.subr.bf16.mxu0 %v6712
      %7148 = vmatpush1.bf16.msra.mxu0 %v6711
      %7149 = vmatprep.subr.bf16.mxu0 %v6728
      %7150 = vmatpush1.bf16.msra.mxu0 %v6727
      %7151 = vmatprep.subr.bf16.mxu0 %v6744
      %7152 = vmatpush1.bf16.msra.mxu0 %v6743
      %7153 = vmatprep.subr.bf16.mxu0 %v6760
      %7154 = vmatpush1.bf16.msra.mxu0 %v6759
      %7155 = vmatprep.subr.bf16.mxu0 %v6776
      %7156 = vmatpush1.bf16.msra.mxu0 %v6775
      %7157 = vmatprep.subr.bf16.mxu0 %v6792
      %7158 = vmatpush1.bf16.msra.mxu0 %v6791
      %7159 = vmatprep.subr.bf16.mxu0 %v6808
      %7160 = vmatpush1.bf16.msra.mxu0 %v6807
      %7161 = vmatprep.subr.bf16.mxu0 %v6824
      %7162 = vmatpush1.bf16.msra.mxu0 %v6823
      %7163 = vmatprep.subr.bf16.mxu0 %v7060
      %7164 = vmatpush1.bf16.msra.mxu0 %v7057
      %7165 = vmatprep.subr.bf16.mxu0 0
      %7166 = vmatpush1.bf16.msra.mxu0 0
      %7167 = vmatprep.subr.bf16.mxu0 0
      %7168 = vmatpush1.bf16.msra.mxu0 0
      %7169 = vmatprep.subr.bf16.mxu0 0
      %7170 = vmatpush1.bf16.msra.mxu0 0
      %7171 = vmatprep.mubr.bf16.mxu0 %v7047
      %7172 = vmatmul.mubr.bf16.gmra.mrb[0].mxu0 %v6042
      %v7173 = vpop.f32.mrb[0].mxu0
      %v7174 = vadd.f32 %v6033, %v7173
      %v7175 = vpop.f32.mrb[0].mxu0
      %v7176 = vadd.f32 %v6033, %v7175
      %v7177 = vpop.f32.mrb[0].mxu0
      %v7178 = vpop.f32.mrb[0].mxu0
      %7179 = vdwg.mxu0
      %7180 = vmatprep.subr.bf16.mxu0 %v6650
      %7181 = vmatpush1.bf16.msra.mxu0 %v6649
      %7182 = vmatprep.subr.bf16.mxu0 %v6666
      %7183 = vmatpush1.bf16.msra.mxu0 %v6665
      %7184 = vmatprep.subr.bf16.mxu0 %v6682
      %7185 = vmatpush1.bf16.msra.mxu0 %v6681
      %7186 = vmatprep.subr.bf16.mxu0 %v6698
      %7187 = vmatpush1.bf16.msra.mxu0 %v6697
      %7188 = vmatprep.subr.bf16.mxu0 %v6714
      %7189 = vmatpush1.bf16.msra.mxu0 %v6713
      %7190 = vmatprep.subr.bf16.mxu0 %v6730
      %7191 = vmatpush1.bf16.msra.mxu0 %v6729
      %7192 = vmatprep.subr.bf16.mxu0 %v6746
      %7193 = vmatpush1.bf16.msra.mxu0 %v6745
      %7194 = vmatprep.subr.bf16.mxu0 %v6762
      %7195 = vmatpush1.bf16.msra.mxu0 %v6761
      %7196 = vmatprep.subr.bf16.mxu0 %v6778
      %7197 = vmatpush1.bf16.msra.mxu0 %v6777
      %7198 = vmatprep.subr.bf16.mxu0 %v6794
      %7199 = vmatpush1.bf16.msra.mxu0 %v6793
      %7200 = vmatprep.subr.bf16.mxu0 %v6810
      %7201 = vmatpush1.bf16.msra.mxu0 %v6809
      %7202 = vmatprep.subr.bf16.mxu0 %v6826
      %7203 = vmatpush1.bf16.msra.mxu0 %v6825
      %7204 = vmatprep.subr.bf16.mxu0 %v7066
      %7205 = vmatpush1.bf16.msra.mxu0 %v7063
      %7206 = vmatprep.subr.bf16.mxu0 0
      %7207 = vmatpush1.bf16.msra.mxu0 0
      %7208 = vmatprep.subr.bf16.mxu0 0
      %7209 = vmatpush1.bf16.msra.mxu0 0
      %7210 = vmatprep.subr.bf16.mxu0 0
      %7211 = vmatpush1.bf16.msra.mxu0 0
      %7212 = vmatprep.mubr.bf16.mxu0 %v7047
      %7213 = vmatmul.mubr.bf16.gmra.mrb[0].mxu0 %v6042
      %v7214 = vpop.f32.mrb[0].mxu0
      %v7215 = vadd.f32 %v6033, %v7214
      %v7216 = vpop.f32.mrb[0].mxu0
      %v7217 = vadd.f32 %v6033, %v7216
      %v7218 = vpop.f32.mrb[0].mxu0
      %v7219 = vpop.f32.mrb[0].mxu0
      %7220 = vdwg.mxu0
      %7221 = vmatprep.subr.bf16.mxu0 %v6652
      %7222 = vmatpush1.bf16.msra.mxu0 %v6651
      %7223 = vmatprep.subr.bf16.mxu0 %v6668
      %7224 = vmatpush1.bf16.msra.mxu0 %v6667
      %7225 = vmatprep.subr.bf16.mxu0 %v6684
      %7226 = vmatpush1.bf16.msra.mxu0 %v6683
      %7227 = vmatprep.subr.bf16.mxu0 %v6700
      %7228 = vmatpush1.bf16.msra.mxu0 %v6699
      %7229 = vmatprep.subr.bf16.mxu0 %v6716
      %7230 = vmatpush1.bf16.msra.mxu0 %v6715
      %7231 = vmatprep.subr.bf16.mxu0 %v6732
      %7232 = vmatpush1.bf16.msra.mxu0 %v6731
      %7233 = vmatprep.subr.bf16.mxu0 %v6748
      %7234 = vmatpush1.bf16.msra.mxu0 %v6747
      %7235 = vmatprep.subr.bf16.mxu0 %v6764
      %7236 = vmatpush1.bf16.msra.mxu0 %v6763
      %7237 = vmatprep.subr.bf16.mxu0 %v6780
      %7238 = vmatpush1.bf16.msra.mxu0 %v6779
      %7239 = vmatprep.subr.bf16.mxu0 %v6796
      %7240 = vmatpush1.bf16.msra.mxu0 %v6795
      %7241 = vmatprep.subr.bf16.mxu0 %v6812
      %7242 = vmatpush1.bf16.msra.mxu0 %v6811
      %7243 = vmatprep.subr.bf16.mxu0 %v6828
      %7244 = vmatpush1.bf16.msra.mxu0 %v6827
      %7245 = vmatprep.subr.bf16.mxu0 %v7072
      %7246 = vmatpush1.bf16.msra.mxu0 %v7069
      %7247 = vmatprep.subr.bf16.mxu0 0
      %7248 = vmatpush1.bf16.msra.mxu0 0
      %7249 = vmatprep.subr.bf16.mxu0 0
      %7250 = vmatpush1.bf16.msra.mxu0 0
      %7251 = vmatprep.subr.bf16.mxu0 0
      %7252 = vmatpush1.bf16.msra.mxu0 0
      %7253 = vmatprep.mubr.bf16.mxu0 %v7047
      %7254 = vmatmul.mubr.bf16.gmra.mrb[0].mxu0 %v6042
      %v7255 = vpop.f32.mrb[0].mxu0
      %v7256 = vadd.f32 %v6033, %v7255
      %v7257 = vpop.f32.mrb[0].mxu0
      %v7258 = vadd.f32 %v6033, %v7257
      %v7259 = vpop.f32.mrb[0].mxu0
      %v7260 = vpop.f32.mrb[0].mxu0
      %7261 = vdwg.mxu0
      %7262 = vmatprep.subr.bf16.mxu0 %v6654
      %7263 = vmatpush1.bf16.msra.mxu0 %v6653
      %7264 = vmatprep.subr.bf16.mxu0 %v6670
      %7265 = vmatpush1.bf16.msra.mxu0 %v6669
      %7266 = vmatprep.subr.bf16.mxu0 %v6686
      %7267 = vmatpush1.bf16.msra.mxu0 %v6685
      %7268 = vmatprep.subr.bf16.mxu0 %v6702
      %7269 = vmatpush1.bf16.msra.mxu0 %v6701
      %7270 = vmatprep.subr.bf16.mxu0 %v6718
      %7271 = vmatpush1.bf16.msra.mxu0 %v6717
      %7272 = vmatprep.subr.bf16.mxu0 %v6734
      %7273 = vmatpush1.bf16.msra.mxu0 %v6733
      %7274 = vmatprep.subr.bf16.mxu0 %v6750
      %7275 = vmatpush1.bf16.msra.mxu0 %v6749
      %7276 = vmatprep.subr.bf16.mxu0 %v6766
      %7277 = vmatpush1.bf16.msra.mxu0 %v6765
      %7278 = vmatprep.subr.bf16.mxu0 %v6782
      %7279 = vmatpush1.bf16.msra.mxu0 %v6781
      %7280 = vmatprep.subr.bf16.mxu0 %v6798
      %7281 = vmatpush1.bf16.msra.mxu0 %v6797
      %7282 = vmatprep.subr.bf16.mxu0 %v6814
      %7283 = vmatpush1.bf16.msra.mxu0 %v6813
      %7284 = vmatprep.subr.bf16.mxu0 %v6830
      %7285 = vmatpush1.bf16.msra.mxu0 %v6829
      %7286 = vmatprep.subr.bf16.mxu0 %v7078
      %7287 = vmatpush1.bf16.msra.mxu0 %v7075
      %7288 = vmatprep.subr.bf16.mxu0 0
      %7289 = vmatpush1.bf16.msra.mxu0 0
      %7290 = vmatprep.subr.bf16.mxu0 0
      %7291 = vmatpush1.bf16.msra.mxu0 0
      %7292 = vmatprep.subr.bf16.mxu0 0
      %7293 = vmatpush1.bf16.msra.mxu0 0
      %7294 = vmatprep.mubr.bf16.mxu0 %v7047
      %7295 = vmatmul.mubr.bf16.gmra.mrb[0].mxu0 %v6042
      %v7296 = vpop.f32.mrb[0].mxu0
      %v7297 = vadd.f32 %v6033, %v7296
      %v7298 = vpop.f32.mrb[0].mxu0
      %v7299 = vadd.f32 %v6033, %v7298
      %v7300 = vpop.f32.mrb[0].mxu0
      %v7301 = vpop.f32.mrb[0].mxu0
      %7302 = vdwg.mxu0
      %7303 = vmatprep.subr.bf16.mxu0 %v6656
      %7304 = vmatpush1.bf16.msra.mxu0 %v6655
      %7305 = vmatprep.subr.bf16.mxu0 %v6672
      %7306 = vmatpush1.bf16.msra.mxu0 %v6671
      %7307 = vmatprep.subr.bf16.mxu0 %v6688
      %7308 = vmatpush1.bf16.msra.mxu0 %v6687
      %7309 = vmatprep.subr.bf16.mxu0 %v6704
      %7310 = vmatpush1.bf16.msra.mxu0 %v6703
      %7311 = vmatprep.subr.bf16.mxu0 %v6720
      %7312 = vmatpush1.bf16.msra.mxu0 %v6719
      %7313 = vmatprep.subr.bf16.mxu0 %v6736
      %7314 = vmatpush1.bf16.msra.mxu0 %v6735
      %7315 = vmatprep.subr.bf16.mxu0 %v6752
      %7316 = vmatpush1.bf16.msra.mxu0 %v6751
      %7317 = vmatprep.subr.bf16.mxu0 %v6768
      %7318 = vmatpush1.bf16.msra.mxu0 %v6767
      %7319 = vmatprep.subr.bf16.mxu0 %v6784
      %7320 = vmatpush1.bf16.msra.mxu0 %v6783
      %7321 = vmatprep.subr.bf16.mxu0 %v6800
      %7322 = vmatpush1.bf16.msra.mxu0 %v6799
      %7323 = vmatprep.subr.bf16.mxu0 %v6816
      %7324 = vmatpush1.bf16.msra.mxu0 %v6815
      %7325 = vmatprep.subr.bf16.mxu0 %v6832
      %7326 = vmatpush1.bf16.msra.mxu0 %v6831
      %7327 = vmatprep.subr.bf16.mxu0 %v7084
      %7328 = vmatpush1.bf16.msra.mxu0 %v7081
      %7329 = vmatprep.subr.bf16.mxu0 0
      %7330 = vmatpush1.bf16.msra.mxu0 0
      %7331 = vmatprep.subr.bf16.mxu0 0
      %7332 = vmatpush1.bf16.msra.mxu0 0
      %7333 = vmatprep.subr.bf16.mxu0 0
      %7334 = vmatpush1.bf16.msra.mxu0 0
      %7335 = vmatprep.mubr.bf16.mxu0 %v7047
      %7336 = vmatmul.mubr.bf16.gmra.mrb[0].mxu0 %v6042
      %v7337 = vpop.f32.mrb[0].mxu0
      %v7338 = vadd.f32 %v6033, %v7337
      %v7339 = vpop.f32.mrb[0].mxu0
      %v7340 = vadd.f32 %v6033, %v7339
      %v7341 = vpop.f32.mrb[0].mxu0
      %v7342 = vpop.f32.mrb[0].mxu0
      %7343 = vdwg.mxu0
      %7344 = vmatprep.subr.bf16.mxu0 %v6658
      %7345 = vmatpush1.bf16.msra.mxu0 %v6657
      %7346 = vmatprep.subr.bf16.mxu0 %v6674
      %7347 = vmatpush1.bf16.msra.mxu0 %v6673
      %7348 = vmatprep.subr.bf16.mxu0 %v6690
      %7349 = vmatpush1.bf16.msra.mxu0 %v6689
      %7350 = vmatprep.subr.bf16.mxu0 %v6706
      %7351 = vmatpush1.bf16.msra.mxu0 %v6705
      %7352 = vmatprep.subr.bf16.mxu0 %v6722
      %7353 = vmatpush1.bf16.msra.mxu0 %v6721
      %7354 = vmatprep.subr.bf16.mxu0 %v6738
      %7355 = vmatpush1.bf16.msra.mxu0 %v6737
      %7356 = vmatprep.subr.bf16.mxu0 %v6754
      %7357 = vmatpush1.bf16.msra.mxu0 %v6753
      %7358 = vmatprep.subr.bf16.mxu0 %v6770
      %7359 = vmatpush1.bf16.msra.mxu0 %v6769
      %7360 = vmatprep.subr.bf16.mxu0 %v6786
      %7361 = vmatpush1.bf16.msra.mxu0 %v6785
      %7362 = vmatprep.subr.bf16.mxu0 %v6802
      %7363 = vmatpush1.bf16.msra.mxu0 %v6801
      %7364 = vmatprep.subr.bf16.mxu0 %v6818
      %7365 = vmatpush1.bf16.msra.mxu0 %v6817
      %7366 = vmatprep.subr.bf16.mxu0 %v6834
      %7367 = vmatpush1.bf16.msra.mxu0 %v6833
      %7368 = vmatprep.subr.bf16.mxu0 %v7090
      %7369 = vmatpush1.bf16.msra.mxu0 %v7087
      %7370 = vmatprep.subr.bf16.mxu0 0
      %7371 = vmatpush1.bf16.msra.mxu0 0
      %7372 = vmatprep.subr.bf16.mxu0 0
      %7373 = vmatpush1.bf16.msra.mxu0 0
      %7374 = vmatprep.subr.bf16.mxu0 0
      %7375 = vmatpush1.bf16.msra.mxu0 0
      %7376 = vmatprep.mubr.bf16.mxu0 %v7047
      %7377 = vmatmul.mubr.bf16.gmra.mrb[0].mxu0 %v6042
      %v7378 = vpop.f32.mrb[0].mxu0
      %v7379 = vadd.f32 %v6033, %v7378
      %v7380 = vpop.f32.mrb[0].mxu0
      %v7381 = vadd.f32 %v6033, %v7380
      %v7382 = vpop.f32.mrb[0].mxu0
      %v7383 = vpop.f32.mrb[0].mxu0
      %7384 = vdwg.mxu0
      %7385 = vmatprep.subr.bf16.mxu0 %v6660
      %7386 = vmatpush1.bf16.msra.mxu0 %v6659
      %7387 = vmatprep.subr.bf16.mxu0 %v6676
      %7388 = vmatpush1.bf16.msra.mxu0 %v6675
      %7389 = vmatprep.subr.bf16.mxu0 %v6692
      %7390 = vmatpush1.bf16.msra.mxu0 %v6691
      %7391 = vmatprep.subr.bf16.mxu0 %v6708
      %7392 = vmatpush1.bf16.msra.mxu0 %v6707
      %7393 = vmatprep.subr.bf16.mxu0 %v6724
      %7394 = vmatpush1.bf16.msra.mxu0 %v6723
      %7395 = vmatprep.subr.bf16.mxu0 %v6740
      %7396 = vmatpush1.bf16.msra.mxu0 %v6739
      %7397 = vmatprep.subr.bf16.mxu0 %v6756
      %7398 = vmatpush1.bf16.msra.mxu0 %v6755
      %7399 = vmatprep.subr.bf16.mxu0 %v6772
      %7400 = vmatpush1.bf16.msra.mxu0 %v6771
      %7401 = vmatprep.subr.bf16.mxu0 %v6788
      %7402 = vmatpush1.bf16.msra.mxu0 %v6787
      %7403 = vmatprep.subr.bf16.mxu0 %v6804
      %7404 = vmatpush1.bf16.msra.mxu0 %v6803
      %7405 = vmatprep.subr.bf16.mxu0 %v6820
      %7406 = vmatpush1.bf16.msra.mxu0 %v6819
      %7407 = vmatprep.subr.bf16.mxu0 %v6836
      %7408 = vmatpush1.bf16.msra.mxu0 %v6835
      %7409 = vmatprep.subr.bf16.mxu0 %v7096
      %7410 = vmatpush1.bf16.msra.mxu0 %v7093
      %7411 = vmatprep.subr.bf16.mxu0 0
      %7412 = vmatpush1.bf16.msra.mxu0 0
      %7413 = vmatprep.subr.bf16.mxu0 0
      %7414 = vmatpush1.bf16.msra.mxu0 0
      %7415 = vmatprep.subr.bf16.mxu0 0
      %7416 = vmatpush1.bf16.msra.mxu0 0
      %7417 = vmatprep.mubr.bf16.mxu0 %v7047
      %7418 = vmatmul.mubr.bf16.gmra.mrb[0].mxu0 %v6042
      %v7419 = vpop.f32.mrb[0].mxu0
      %v7420 = vadd.f32 %v6033, %v7419
      %v7421 = vpop.f32.mrb[0].mxu0
      %v7422 = vadd.f32 %v6033, %v7421
      %v7423 = vpop.f32.mrb[0].mxu0
      %v7424 = vpop.f32.mrb[0].mxu0
      %7425 = vdwg.mxu0
      %v7426 = vpack.c.bf16 %v7133, %v7133
      %v7427 = vpack.c.bf16 %v7135, %v7135
      %v7428 = vpack.c.bf16 %v7174, %v7174
      %v7429 = vpack.c.bf16 %v7176, %v7176
      %v7430 = vpack.c.bf16 %v7215, %v7215
      %v7431 = vpack.c.bf16 %v7217, %v7217
      %v7432 = vpack.c.bf16 %v7256, %v7256
      %v7433 = vpack.c.bf16 %v7258, %v7258
      %v7434 = vpack.c.bf16 %v7297, %v7297
      %v7435 = vpack.c.bf16 %v7299, %v7299
      %v7436 = vpack.c.bf16 %v7338, %v7338
      %v7437 = vpack.c.bf16 %v7340, %v7340
      %v7438 = vpack.c.bf16 %v7379, %v7379
      %v7439 = vpack.c.bf16 %v7381, %v7381
      %v7440 = vpack.c.bf16 %v7420, %v7420
      %v7441 = vpack.c.bf16 %v7422, %v7422
      %v7458 = vcombine.low %v7426, %v7427
      %v7459 = vcombine.low %v7428, %v7429
      %v7461 = vunpack.c.l.s4 1983009808
      %v7462 = vunpack.c.0.s8 %v7461
      %v7463 = vlaneseq
      %v7464 = vshrl.u32 %v7463, 7
      %v7465 = vsub.s32 %v7462, %v7464
      %v7466 = vrot.slane %v7458, %v7465
      %v7468 = vunpack.c.l.s4 1983009808
      %v7469 = vunpack.c.0.s8 %v7468
      %v7470 = vlaneseq
      %v7471 = vshrl.u32 %v7470, 7
      %v7472 = vsub.s32 %v7469, %v7471
      %v7473 = vrot.slane %v7459, %v7472
      %v7474 = vcombine.low %v7466, %v7473
      %v7475 = vcombine.low %v7430, %v7431
      %v7476 = vcombine.low %v7432, %v7433
      %v7478 = vunpack.c.l.s4 1983009808
      %v7479 = vunpack.c.0.s8 %v7478
      %v7480 = vlaneseq
      %v7481 = vshrl.u32 %v7480, 7
      %v7482 = vsub.s32 %v7479, %v7481
      %v7483 = vrot.slane %v7475, %v7482
      %v7485 = vunpack.c.l.s4 1983009808
      %v7486 = vunpack.c.0.s8 %v7485
      %v7487 = vlaneseq
      %v7488 = vshrl.u32 %v7487, 7
      %v7489 = vsub.s32 %v7486, %v7488
      %v7490 = vrot.slane %v7476, %v7489
      %v7491 = vcombine.low %v7483, %v7490
      %v7492 = vcombine.low %v7434, %v7435
      %v7493 = vcombine.low %v7436, %v7437
      %v7495 = vunpack.c.l.s4 1983009808
      %v7496 = vunpack.c.0.s8 %v7495
      %v7497 = vlaneseq
      %v7498 = vshrl.u32 %v7497, 7
      %v7499 = vsub.s32 %v7496, %v7498
      %v7500 = vrot.slane %v7492, %v7499
      %v7502 = vunpack.c.l.s4 1983009808
      %v7503 = vunpack.c.0.s8 %v7502
      %v7504 = vlaneseq
      %v7505 = vshrl.u32 %v7504, 7
      %v7506 = vsub.s32 %v7503, %v7505
      %v7507 = vrot.slane %v7493, %v7506
      %v7508 = vcombine.low %v7500, %v7507
      %v7509 = vcombine.low %v7438, %v7439
      %v7510 = vcombine.low %v7440, %v7441
      %v7512 = vunpack.c.l.s4 1983009808
      %v7513 = vunpack.c.0.s8 %v7512
      %v7514 = vlaneseq
      %v7515 = vshrl.u32 %v7514, 7
      %v7516 = vsub.s32 %v7513, %v7515
      %v7517 = vrot.slane %v7509, %v7516
      %v7519 = vunpack.c.l.s4 1983009808
      %v7520 = vunpack.c.0.s8 %v7519
      %v7521 = vlaneseq
      %v7522 = vshrl.u32 %v7521, 7
      %v7523 = vsub.s32 %v7520, %v7522
      %v7524 = vrot.slane %v7510, %v7523
      %v7525 = vcombine.low %v7517, %v7524
      %7530 = vst [vmem:[%s349] sm:$0xff] %v7474
      %7531 = vst [vmem:[%s349 + $0x8] sm:$0xff] %v7491
      %7532 = vst [vmem:[%s349 + $0x10] sm:$0xff] %v7508
      %7533 = vst [vmem:[%s349 + $0x18] sm:$0xff] %v7525
      %s7534 = sadd.s32 %s359, 384
      %s7535 = sshra.s32 %s7534, 7
      %s7536 = sand.u32 %s7534, 127
      %s7537 = scalar_lea.vmem %s1, %s7535
      %v7538 = vld [vmem:[%s7537] sm:$0xff]
      %v7539 = vld [vmem:[%s7537 + $0x8] sm:$0xff]
      %v7542 = vlaneseq
      %v7543 = vshrl.u32 %v7542, 7
      %v7544 = vsub.s32 0, %v7543
      %v7545 = vrot.slane %v7538, %v7544
      %v7546 = vlaneseq
      %v7547 = vshrl.u32 %v7546, 7
      %v7548 = vsub.s32 1, %v7547
      %v7549 = vrot.slane %v7538, %v7548
      %v7550 = vlaneseq
      %v7551 = vshrl.u32 %v7550, 7
      %v7552 = vsub.s32 2, %v7551
      %v7553 = vrot.slane %v7538, %v7552
      %v7554 = vlaneseq
      %v7555 = vshrl.u32 %v7554, 7
      %v7556 = vsub.s32 3, %v7555
      %v7557 = vrot.slane %v7538, %v7556
      %v7558 = vlaneseq
      %v7559 = vshrl.u32 %v7558, 7
      %v7560 = vsub.s32 4, %v7559
      %v7561 = vrot.slane %v7538, %v7560
      %v7562 = vlaneseq
      %v7563 = vshrl.u32 %v7562, 7
      %v7564 = vsub.s32 5, %v7563
      %v7565 = vrot.slane %v7538, %v7564
      %v7566 = vlaneseq
      %v7567 = vshrl.u32 %v7566, 7
      %v7568 = vsub.s32 6, %v7567
      %v7569 = vrot.slane %v7538, %v7568
      %v7570 = vlaneseq
      %v7571 = vshrl.u32 %v7570, 7
      %v7572 = vsub.s32 7, %v7571
      %v7573 = vrot.slane %v7538, %v7572
      %v7574 = vlaneseq
      %v7575 = vshrl.u32 %v7574, 7
      %v7576 = vsub.s32 0, %v7575
      %v7577 = vrot.slane %v7539, %v7576
      %v7578 = vlaneseq
      %v7579 = vshrl.u32 %v7578, 7
      %v7580 = vsub.s32 1, %v7579
      %v7581 = vrot.slane %v7539, %v7580
      %v7582 = vlaneseq
      %v7583 = vshrl.u32 %v7582, 7
      %v7584 = vsub.s32 2, %v7583
      %v7585 = vrot.slane %v7539, %v7584
      %v7586 = vlaneseq
      %v7587 = vshrl.u32 %v7586, 7
      %v7588 = vsub.s32 3, %v7587
      %v7589 = vrot.slane %v7539, %v7588
      %v7590 = vlaneseq
      %v7591 = vshrl.u32 %v7590, 7
      %v7592 = vsub.s32 4, %v7591
      %v7593 = vrot.slane %v7539, %v7592
      %v7594 = vlaneseq
      %v7595 = vshrl.u32 %v7594, 7
      %v7596 = vsub.s32 5, %v7595
      %v7597 = vrot.slane %v7539, %v7596
      %v7598 = vlaneseq
      %v7599 = vshrl.u32 %v7598, 7
      %v7600 = vsub.s32 6, %v7599
      %v7601 = vrot.slane %v7539, %v7600
      %v7602 = vlaneseq
      %v7603 = vshrl.u32 %v7602, 7
      %v7604 = vsub.s32 7, %v7603
      %v7605 = vrot.slane %v7539, %v7604
      %v7622 = vmul.f32 %v7133, %v7545
      %v7623 = vmul.f32 %v7135, %v7549
      %v7624 = vmul.f32 %v7174, %v7553
      %v7625 = vmul.f32 %v7176, %v7557
      %v7626 = vmul.f32 %v7215, %v7561
      %v7627 = vmul.f32 %v7217, %v7565
      %v7628 = vmul.f32 %v7256, %v7569
      %v7629 = vmul.f32 %v7258, %v7573
      %v7630 = vmul.f32 %v7297, %v7577
      %v7631 = vmul.f32 %v7299, %v7581
      %v7632 = vmul.f32 %v7338, %v7585
      %v7633 = vmul.f32 %v7340, %v7589
      %v7634 = vmul.f32 %v7379, %v7593
      %v7635 = vmul.f32 %v7381, %v7597
      %v7636 = vmul.f32 %v7420, %v7601
      %v7637 = vmul.f32 %v7422, %v7605
      %v7638 = vsel %vm7049, %v7622, 0.0
      %v7639 = vsel %vm7049, %v7623, 0.0
      %v7640 = vadd.f32 %v7638, %v7639
      %v7641 = vsel %vm7049, %v7624, 0.0
      %v7642 = vadd.f32 %v7640, %v7641
      %v7643 = vsel %vm7049, %v7625, 0.0
      %v7644 = vadd.f32 %v7642, %v7643
      %v7645 = vsel %vm7049, %v7626, 0.0
      %v7646 = vadd.f32 %v7644, %v7645
      %v7647 = vsel %vm7049, %v7627, 0.0
      %v7648 = vadd.f32 %v7646, %v7647
      %v7649 = vsel %vm7049, %v7628, 0.0
      %v7650 = vadd.f32 %v7648, %v7649
      %v7651 = vsel %vm7049, %v7629, 0.0
      %v7652 = vadd.f32 %v7650, %v7651
      %v7653 = vsel %vm7049, %v7630, 0.0
      %v7654 = vadd.f32 %v7652, %v7653
      %v7655 = vsel %vm7049, %v7631, 0.0
      %v7656 = vadd.f32 %v7654, %v7655
      %v7657 = vsel %vm7049, %v7632, 0.0
      %v7658 = vadd.f32 %v7656, %v7657
      %v7659 = vsel %vm7049, %v7633, 0.0
      %v7660 = vadd.f32 %v7658, %v7659
      %v7661 = vsel %vm7049, %v7634, 0.0
      %v7662 = vadd.f32 %v7660, %v7661
      %v7663 = vsel %vm7049, %v7635, 0.0
      %v7664 = vadd.f32 %v7662, %v7663
      %v7665 = vsel %vm7049, %v7636, 0.0
      %v7666 = vadd.f32 %v7664, %v7665
      %v7667 = vsel %vm7049, %v7637, 0.0
      %v7668 = vadd.f32 %v7666, %v7667
      %7669 = vadd.xlane.f32.xlu0 %v7668
      %v7670 = vpop.xlane.xlu0 %7669
      %vm7671 = vcmask 3072
      %7672 = vst.msk [vmem:[%s357] sm:$0xf] %vm7671, %v7670
      %v7673 = vmul.f32 %v7622, %v7622
      %v7674 = vmul.f32 %v7623, %v7623
      %v7675 = vmul.f32 %v7624, %v7624
      %v7676 = vmul.f32 %v7625, %v7625
      %v7677 = vmul.f32 %v7626, %v7626
      %v7678 = vmul.f32 %v7627, %v7627
      %v7679 = vmul.f32 %v7628, %v7628
      %v7680 = vmul.f32 %v7629, %v7629
      %v7681 = vmul.f32 %v7630, %v7630
      %v7682 = vmul.f32 %v7631, %v7631
      %v7683 = vmul.f32 %v7632, %v7632
      %v7684 = vmul.f32 %v7633, %v7633
      %v7685 = vmul.f32 %v7634, %v7634
      %v7686 = vmul.f32 %v7635, %v7635
      %v7687 = vmul.f32 %v7636, %v7636
      %v7688 = vmul.f32 %v7637, %v7637
      %v7689 = vsel %vm7049, %v7673, 0.0
      %v7690 = vsel %vm7049, %v7674, 0.0
      %v7691 = vadd.f32 %v7689, %v7690
      %v7692 = vsel %vm7049, %v7675, 0.0
      %v7693 = vadd.f32 %v7691, %v7692
      %v7694 = vsel %vm7049, %v7676, 0.0
      %v7695 = vadd.f32 %v7693, %v7694
      %v7696 = vsel %vm7049, %v7677, 0.0
      %v7697 = vadd.f32 %v7695, %v7696
      %v7698 = vsel %vm7049, %v7678, 0.0
      %v7699 = vadd.f32 %v7697, %v7698
      %v7700 = vsel %vm7049, %v7679, 0.0
      %v7701 = vadd.f32 %v7699, %v7700
      %v7702 = vsel %vm7049, %v7680, 0.0
      %v7703 = vadd.f32 %v7701, %v7702
      %v7704 = vsel %vm7049, %v7681, 0.0
      %v7705 = vadd.f32 %v7703, %v7704
      %v7706 = vsel %vm7049, %v7682, 0.0
      %v7707 = vadd.f32 %v7705, %v7706
      %v7708 = vsel %vm7049, %v7683, 0.0
      %v7709 = vadd.f32 %v7707, %v7708
      %v7710 = vsel %vm7049, %v7684, 0.0
      %v7711 = vadd.f32 %v7709, %v7710
      %v7712 = vsel %vm7049, %v7685, 0.0
      %v7713 = vadd.f32 %v7711, %v7712
      %v7714 = vsel %vm7049, %v7686, 0.0
      %v7715 = vadd.f32 %v7713, %v7714
      %v7716 = vsel %vm7049, %v7687, 0.0
      %v7717 = vadd.f32 %v7715, %v7716
      %v7718 = vsel %vm7049, %v7688, 0.0
      %v7719 = vadd.f32 %v7717, %v7718
      %7720 = vadd.xlane.f32.xlu0 %v7719
      %v7721 = vpop.xlane.xlu0 %7720
      %vm7722 = vcmask 11272
      %7723 = vst.msk [vmem:[%s357] sm:$0xf] %vm7722, %v7721
      %vm7724 = vcmask 60432
      %7725 = vst.msk [vmem:[%s357] sm:$0xf] %vm7724, 0.0
      %s7726 = smul.u32 16, %s24
      %p7727 = scmp.lt.s32.totalorder %s23, 1
      %s7728 = scalar_select %p7727, %s23, 1
      %p7729 = scmp.lt.s32.totalorder %s7726, 15
      %s7730 = scalar_select %p7729, %s7726, 15
      %s7731 = smul.addr %s7728, 16
      %s7732 = sadd.s32 %s7730, %s7731
      %s7733 = smul.addr %s7732, 2
      %s7734 = scalar_lea.vmem %s6, %s7733
      %p7735 = scmp.lt.s32.totalorder %s23, 1
      %s7736 = scalar_select %p7735, %s23, 1
      %p7737 = scmp.lt.s32.totalorder %s24, 0
      %s7738 = scalar_select %p7737, %s24, 0
      %s7739 = sadd.s32 %s7738, %s7736
      %s7740 = smul.addr %s7739, 4
      %s7741 = scalar_lea.vmem %s7, %s7740
      // Predicated region
      $region45: #{rbdp_forward.2} parent=43 // pred_check
        %p7742 = pneg %p192
      $region46: #{rbdp_forward.2} parent=43 // pred_check_branch
        %7744 = sbr.rel (%p7742) target = $region48
      $region47: #{rbdp_forward.2} parent=43 // pred_region
        %s7745 = smul.u32 16, %s24
      $region48: #{rbdp_forward.2} parent=43 // pred_fallthru
        _
      // Predicated region
      $region49: #{rbdp_forward.2} parent=43 // pred_check
        %p7746 = pneg %p220
      $region50: #{rbdp_forward.2} parent=43 // pred_check_branch
        %7748 = sbr.rel (%p7746) target = $region52
      $region51: #{rbdp_forward.2} parent=43 // pred_region
        _
      $region52: #{rbdp_forward.2} parent=43 // pred_fallthru
        _
    $region44: #{rbdp_forward.2} parent=5 // pred_fallthru
      _
    %p7749 = scmp.le.s32.totalorder 2, %s14
    // Predicated region
    $region53: #{rbdp_forward.2} parent=5 // pred_check
      %p7750 = pneg %p7749
    $region54: #{rbdp_forward.2} parent=5 // pred_check_branch
      %7752 = sbr.rel (%p7750) target = $region56
    $region55: #{rbdp_forward.2} parent=5 // pred_region
      %s7753 = ssub.s32 %s14, 2
      // Predicated region
      $region57: #{rbdp_forward.2} parent=55 // pred_check
        %p7754 = pneg %p198
      $region58: #{rbdp_forward.2} parent=55 // pred_check_branch
        %7756 = sbr.rel (%p7754) target = $region60
      $region59: #{rbdp_forward.2} parent=55 // pred_region
        %s7757 = smul.u32 16, %s26
        %p7758 = scmp.lt.s32.totalorder %s25, 1
        %s7759 = scalar_select %p7758, %s25, 1
        %p7760 = scmp.lt.s32.totalorder %s7757, 15
        %s7761 = scalar_select %p7760, %s7757, 15
        %s7762 = smul.addr %s7759, 16
        %s7763 = sadd.s32 %s7761, %s7762
        %s7764 = smul.addr %s7763, 2
        %s7765 = scalar_lea.vmem %s6, %s7764
      $region60: #{rbdp_forward.2} parent=55 // pred_fallthru
        _
      // Predicated region
      $region61: #{rbdp_forward.2} parent=55 // pred_check
        %p7766 = pneg %p226
      $region62: #{rbdp_forward.2} parent=55 // pred_check_branch
        %7768 = sbr.rel (%p7766) target = $region64
      $region63: #{rbdp_forward.2} parent=55 // pred_region
        %p7769 = scmp.lt.s32.totalorder %s25, 1
        %s7770 = scalar_select %p7769, %s25, 1
        %p7771 = scmp.lt.s32.totalorder %s26, 0
        %s7772 = scalar_select %p7771, %s26, 0
        %s7773 = sadd.s32 %s7772, %s7770
        %s7774 = smul.addr %s7773, 4
        %s7775 = scalar_lea.vmem %s7, %s7774
      $region64: #{rbdp_forward.2} parent=55 // pred_fallthru
        _
    $region56: #{rbdp_forward.2} parent=5 // pred_fallthru
      _
  $region6: #{rbdp_forward.2} parent=0 // loop_footer
    %s18 = sadd.s32 1, %s14
  $region7: #{rbdp_forward.2} parent=0 // loop_footer_branch
    %13 = sbr.rel target = $region3
  $region8: #{rbdp_forward.2} parent=0 // loop_exit
    _

</llo_original>
